<compile_context>
chip_gen: v6e
topology: v6e:2x2x1
jax: 0.10.0
libtpu: 0.0.40
codegen_flags: <defaults>
</compile_context>

<pallas_src>
import functools

import numpy as np
import jax
import jax.numpy as jnp
from jax import lax
from jax.experimental import pallas as pl
from jax.experimental.pallas import tpu as pltpu

# ---- synthetic stand-in for the roi_extractor config ------------------------
POOL = 7              # RoIAlign output size (7x7)
SAMPLING_RATIO = 2    # fixed bilinear sampling grid per bin
SPATIAL_SCALE = 0.25  # feature-map stride-4
ALIGNED_OFFSET = 0.5  # mmcv RoIAlign aligned=True
SENTINEL = -4.0       # invalid-sample coordinate: |yc - hh| >= 4 -> weight 0


def _ordered_pairs(n):
    return [(i, j) for i in range(n) for j in range(n) if i != j]


# --------------------- per-RoI sample coordinates (XLA side) ------------------
def _sample_coords(boxes, H, W):
    """boxes (R,4) -> (yc, xc, valid), each (R, 49, S) with S = sampling^2.

    Tiny O(R*49*4) precompute: hoists the box math, the //7 %7 bin indexing,
    clipping and validity masks out of the Pallas kernel."""
    x1, y1, x2, y2 = boxes[:, 0], boxes[:, 1], boxes[:, 2], boxes[:, 3]
    sx1 = x1 * SPATIAL_SCALE - ALIGNED_OFFSET
    sy1 = y1 * SPATIAL_SCALE - ALIGNED_OFFSET
    bin_w = (x2 - x1) * SPATIAL_SCALE / POOL
    bin_h = (y2 - y1) * SPATIAL_SCALE / POOL

    bins = jnp.arange(POOL * POOL)
    ph = (bins // POOL).astype(jnp.float32)   # (49,)
    pw = (bins % POOL).astype(jnp.float32)

    ycs, xcs, vds = [], [], []
    for iy in range(SAMPLING_RATIO):
        for ix in range(SAMPLING_RATIO):
            y = (sy1[:, None] + ph[None, :] * bin_h[:, None]
                 + (iy + 0.5) * bin_h[:, None] / SAMPLING_RATIO)          # (R,49)
            x = (sx1[:, None] + pw[None, :] * bin_w[:, None]
                 + (ix + 0.5) * bin_w[:, None] / SAMPLING_RATIO)
            valid = ((y >= -1.0) & (y <= H) & (x >= -1.0) & (x <= W)).astype(jnp.float32)
            ycs.append(jnp.clip(y, 0.0, H - 1.0))
            xcs.append(jnp.clip(x, 0.0, W - 1.0))
            vds.append(valid)
    return (jnp.stack(ycs, axis=-1),
            jnp.stack(xcs, axis=-1),
            jnp.stack(vds, axis=-1))


def _pad_and_block(arrs, counts, r_block):
    """Pad each per-image contiguous row segment to a multiple of r_block.

    Returns padded arrays, per-block image index, orig->padded row map, R_pad."""
    R = arrs[0].shape[0]
    starts = np.concatenate([[0], np.cumsum(counts)]).astype(np.int64)
    assert int(starts[-1]) == R, (counts, R)
    padded = [[] for _ in arrs]
    block_bidx = []
    orig_to_pad = np.zeros((R,), np.int32)
    pad_pos = 0
    for b, n in enumerate(counts):
        if n == 0:
            continue
        start = int(starts[b])
        n_pad = ((n + r_block - 1) // r_block) * r_block
        orig_to_pad[start:start + n] = pad_pos + np.arange(n, dtype=np.int32)
        for a_idx, a in enumerate(arrs):
            seg = a[start:start + n]
            if n_pad > n:
                pad = jnp.zeros((n_pad - n,) + a.shape[1:], a.dtype)
                seg = jnp.concatenate([seg, pad], axis=0)
            padded[a_idx].append(seg)
        block_bidx.extend([b] * (n_pad // r_block))
        pad_pos += n_pad
    padded = [jnp.concatenate(p, axis=0) for p in padded]
    return padded, np.asarray(block_bidx, np.int32), orig_to_pad, pad_pos


# ---------------------------- Pallas RoIAlign kernel --------------------------
def _roi_align_kernel(n_samples,
                      bidx_ref, k0_ref, klen_ref,
                      hw_ref, ycx_ref, feat_ref, out_ref):
    # bidx/k0/klen : scalar-prefetch SMEM — bidx/k0 consumed only by index_maps
    # hw_ref       : VMEM (2, KT)   flattened (h, w) coordinates of this K tile
    # ycx_ref      : VMEM (M, 2S)   per-(RoI, bin) sample coords [yc | xc],
    #                invalid samples carry a far sentinel (weight 0), M = R_BLOCK*49
    # feat_ref     : VMEM (KT, C)   K tile of the per-image (H*W, C) * (1/S) slab
    # out_ref      : VMEM (M, C)    pooled f32 accumulator, resident across K axis
    del bidx_ref, k0_ref
    rb = pl.program_id(0)
    k = pl.program_id(1)

    @pl.when(k < klen_ref[rb])          # skip tiles outside this block's row band
    def _():
        hh = hw_ref[0:1, :]             # (1, KT)
        ww = hw_ref[1:2, :]             # (1, KT)
        ycx = ycx_ref[...]              # (M, 2S)

        w = None
        for s in range(n_samples):      # static 4-sample loop, f32 on the VPU
            wy = jnp.maximum(0.0, 1.0 - jnp.abs(ycx[:, s:s + 1] - hh))                          # (M,KT)
            wx = jnp.maximum(0.0, 1.0 - jnp.abs(ycx[:, n_samples + s:n_samples + s + 1] - ww))  # (M,KT)
            ws = wy * wx
            w = ws if w is None else w + ws

        # single cast to the feature dtype (bf16 by default) feeding the MXU
        contrib = jnp.dot(w.astype(feat_ref.dtype), feat_ref[...],
                          preferred_element_type=jnp.float32)            # (M, C)

        @pl.when(k == 0)                # k == 0 is always in-band (klen >= 1)
        def _():
            out_ref[...] = contrib

        @pl.when(k != 0)
        def _():
            out_ref[...] = out_ref[...] + contrib


def roi_align_pallas(feat_map, bidx, boxes, counts=None, *, r_block=16,
                     hw_tile=None, feat_dtype=jnp.bfloat16,
                     vmem_limit_bytes=48 * 1024 * 1024):
    """feat_map: (B, C, H, W) f32; bidx: (R,) int32; boxes: (R, 4) f32 image coords.

    counts: per-image RoI counts (boxes must be image-contiguous).  Returns
    pooled RoI features (R, C, POOL, POOL) in f32."""
    B, C, H, W = feat_map.shape
    R = boxes.shape[0]
    HW = H * W
    S = SAMPLING_RATIO * SAMPLING_RATIO

    if counts is None:
        # TODO(synk): host-side bincount — requires concrete bidx (not jit-safe).
        counts = np.bincount(np.asarray(bidx), minlength=B).astype(np.int64).tolist()
    counts = [int(c) for c in counts]

    if hw_tile is None:
        hw_tile = HW
        for cand in (1024, 512, 256, 128):   # bf16 feats: 512-1024 preferred
            if HW % cand == 0:
                hw_tile = cand
                break
    assert HW % hw_tile == 0
    assert hw_tile == HW or hw_tile % 128 == 0
    kmax_tiles = HW // hw_tile

    # (B, C, H, W) -> (B, H*W, C): contraction lands on the RHS sublane dim,
    # MXU-native.  The 1/S RoIAlign normalisation and the bf16 cast are folded
    # into this one relayout pass (XLA fuses), so the kernel has no scale pass.
    # TODO(synk): skip this transpose entirely when the producer emits NHWC.
    feats_flat = (feat_map.transpose(0, 2, 3, 1).reshape(B, HW, C)
                  * (1.0 / S)).astype(feat_dtype)

    # Per-RoI sample coordinates (tiny precompute).  Invalid samples get a far
    # sentinel so max(0, 1-|d|) == 0 naturally — no validity input to the kernel.
    yc, xc, vd = _sample_coords(boxes, H, W)
    yc = jnp.where(vd > 0, yc, SENTINEL)
    ycx = jnp.concatenate([yc, xc], axis=-1)            # (R, 49, 2S) packed table

    # Pad per image so each block of r_block RoIs shares one image.
    (ycx_p, vd_p), block_bidx, orig_to_pad, R_pad = _pad_and_block(
        [ycx, vd], counts, r_block)
    NB = R_pad // r_block
    M = r_block * POOL * POOL
    ycx_p = ycx_p.reshape(NB, M, 2 * S)
    vd_p = vd_p.reshape(NB, M, S)

    # Band-limit the K reduction: per block, the vertical band of feature rows
    # with nonzero bilinear support (support of a sample at yc is rows
    # {floor(yc), floor(yc)+1}).  Padded / invalid samples are excluded.
    yc_blk = ycx_p[:, :, :S]
    row_min = jnp.min(jnp.where(vd_p > 0, yc_blk, jnp.float32(H)), axis=(1, 2))
    row_max = jnp.max(jnp.where(vd_p > 0, yc_blk, jnp.float32(0.0)), axis=(1, 2))
    row_lo = jnp.clip(jnp.floor(row_min), 0, H - 1).astype(jnp.int32)
    row_hi = jnp.clip(jnp.floor(row_max) + 1.0, 0, H - 1).astype(jnp.int32)
    row_hi = jnp.maximum(row_hi, row_lo)
    k0 = ((row_lo * W) // hw_tile).astype(jnp.int32)                 # first K tile
    k_hi = ((row_hi * W + (W - 1)) // hw_tile).astype(jnp.int32)     # last K tile
    klen = (k_hi - k0 + 1).astype(jnp.int32)                         # >= 1 always

    try:
        k_steps = int(jnp.max(klen))      # concrete inputs: tight static K extent
    except jax.errors.ConcretizationTypeError:
        k_steps = kmax_tiles              # traced boxes: fall back to full extent

    # Grid-invariant flattened (h, w) coordinate table.
    idx = np.arange(HW)
    hw_const = jnp.asarray(np.stack([idx // W, idx % W]).astype(np.float32))  # (2, HW)

    def _ktile(k, rb, k0r):
        # clamp so out-of-band (skipped) steps never index past the last tile
        return jnp.minimum(k0r[rb] + k, kmax_tiles - 1)

    kernel = functools.partial(_roi_align_kernel, S)
    grid_spec = pltpu.PrefetchScalarGridSpec(
        num_scalar_prefetch=3,                 # block_bidx, k0, klen in SMEM
        grid=(NB, k_steps),                    # RoI blocks x band-limited K tiles
        in_specs=[
            pl.BlockSpec((2, hw_tile),
                         lambda rb, k, bx, k0r, kl: (0, _ktile(k, rb, k0r))),       # hw table
            pl.BlockSpec((None, M, 2 * S),
                         lambda rb, k, bx, k0r, kl: (rb, 0, 0)),                    # yc|xc
            pl.BlockSpec((None, hw_tile, C),
                         lambda rb, k, bx, k0r, kl: (bx[rb], _ktile(k, rb, k0r), 0)),  # feats
        ],
        out_specs=pl.BlockSpec((None, M, C), lambda rb, k, bx, k0r, kl: (rb, 0, 0)),
    )
    out = pl.pallas_call(
        kernel,
        out_shape=jax.ShapeDtypeStruct((NB, M, C), jnp.float32),
        grid_spec=grid_spec,
        compiler_params=pltpu.CompilerParams(
            dimension_semantics=("parallel", "arbitrary"),
            vmem_limit_bytes=vmem_limit_bytes),
    )(jnp.asarray(block_bidx), k0, klen, hw_const, ycx_p, feats_flat)

    out = out.reshape(R_pad, POOL * POOL, C)[jnp.asarray(orig_to_pad)]   # drop padding
    # (R, 49, C) -> (R, C, 7, 7)  (keep NCHW pooled layout for module semantics)
    return out.transpose(0, 2, 1).reshape(R, C, POOL, POOL)


# ------------------------------ glue layers -----------------------------------
def rois_pair_expand(rois, batch_size, object_num):
    """RoisPairExpandLayer: per image, keep the N single RoIs and append the
    N(N-1) ordered-pair union boxes. rois: (sum_N, 5) [batch_idx, x1,y1,x2,y2]."""
    out = []
    start = 0
    for b in range(batch_size):
        n = int(object_num[b])
        r = rois[start:start + n]
        start += n
        out.append(r)
        pairs = _ordered_pairs(n)
        idx_i = np.array([p[0] for p in pairs], dtype=np.int32)
        idx_j = np.array([p[1] for p in pairs], dtype=np.int32)
        ri, rj = r[idx_i], r[idx_j]
        union = jnp.concatenate(
            [ri[:, :1],
             jnp.minimum(ri[:, 1:3], rj[:, 1:3]),
             jnp.maximum(ri[:, 3:5], rj[:, 3:5])], axis=1)
        out.append(union)
    return jnp.concatenate(out, axis=0)


def object_pair_layer(pooled, batch_size, object_num, isex):
    """ObjectPairLayer: stack <subject, object, union> pooled features -> (P, 3, C, 7, 7)."""
    outs = []
    start = 0
    for b in range(batch_size):
        n = int(object_num[b])
        pairs = _ordered_pairs(n)
        npairs = len(pairs)
        singles = pooled[start:start + n]
        unions = pooled[start + n:start + n + npairs]
        start += n + npairs
        keep = [k for k, (i, j) in enumerate(pairs) if (isex or i < j)]
        idx_i = np.array([pairs[k][0] for k in keep], dtype=np.int32)
        idx_j = np.array([pairs[k][1] for k in keep], dtype=np.int32)
        idx_u = np.array(keep, dtype=np.int32)
        trip = jnp.stack([singles[idx_i], singles[idx_j], unions[idx_u]], axis=1)
        outs.append(trip)
    return jnp.concatenate(outs, axis=0)


class ObjectPairPoolLayer:
    """JAX/Pallas port of mmdet op2l ObjectPairPoolLayer (forward only)."""

    def __init__(self, isex=True, num_inputs=1, r_block=16, hw_tile=None,
                 feat_dtype=jnp.bfloat16, vmem_limit_bytes=48 * 1024 * 1024):
        self.isex = isex
        self.num_inputs = num_inputs   # roi_extractor.num_inputs (single level here)
        self.r_block = r_block
        self.hw_tile = hw_tile
        self.feat_dtype = feat_dtype
        self.vmem_limit_bytes = vmem_limit_bytes

    def init_weights(self):
        pass  # no learnable parameters

    def __call__(self, feats, rois, batch_size, object_num):
        paired_rois = rois_pair_expand(rois, batch_size, object_num)
        bidx = paired_rois[:, 0].astype(jnp.int32)
        boxes = paired_rois[:, 1:5].astype(jnp.float32)
        counts = [int(n) + int(n) * (int(n) - 1) for n in object_num]
        feat_levels = feats[:self.num_inputs]
        pooled_feat = roi_align_pallas(
            feat_levels[0], bidx, boxes, counts=counts,
            r_block=self.r_block, hw_tile=self.hw_tile,
            feat_dtype=self.feat_dtype, vmem_limit_bytes=self.vmem_limit_bytes)
        obj_pair_feats = object_pair_layer(pooled_feat, batch_size, object_num, self.isex)
        return obj_pair_feats, paired_rois


# ------------------------------ pure-JAX reference ----------------------------
def _bin_weights(x1, y1, x2, y2, H, W):
    """RoIAlign expressed as a dense (POOL*POOL, H*W) bilinear weight matrix."""
    sx1 = x1 * SPATIAL_SCALE - ALIGNED_OFFSET
    sy1 = y1 * SPATIAL_SCALE - ALIGNED_OFFSET
    roi_w = (x2 - x1) * SPATIAL_SCALE
    roi_h = (y2 - y1) * SPATIAL_SCALE
    bin_w = roi_w / POOL
    bin_h = roi_h / POOL

    bins = lax.broadcasted_iota(jnp.int32, (POOL * POOL, 1), 0)
    ph = (bins // POOL).astype(jnp.float32)
    pw = (bins % POOL).astype(jnp.float32)

    m = lax.broadcasted_iota(jnp.int32, (1, H * W), 1)
    hh = (m // W).astype(jnp.float32)
    ww = (m % W).astype(jnp.float32)

    acc = jnp.zeros((POOL * POOL, H * W), jnp.float32)
    for iy in range(SAMPLING_RATIO):
        for ix in range(SAMPLING_RATIO):
            y = sy1 + ph * bin_h + (iy + 0.5) * bin_h / SAMPLING_RATIO
            x = sx1 + pw * bin_w + (ix + 0.5) * bin_w / SAMPLING_RATIO
            valid = ((y >= -1.0) & (y <= H) & (x >= -1.0) & (x <= W)).astype(jnp.float32)
            yc = jnp.clip(y, 0.0, H - 1.0)
            xc = jnp.clip(x, 0.0, W - 1.0)
            wy = jnp.maximum(0.0, 1.0 - jnp.abs(yc - hh))
            wx = jnp.maximum(0.0, 1.0 - jnp.abs(xc - ww))
            acc = acc + valid * wy * wx
    return acc * (1.0 / (SAMPLING_RATIO * SAMPLING_RATIO))


def roi_align_ref(feat_map, bidx, boxes):
    B, C, H, W = feat_map.shape
    feats_flat = feat_map.reshape(B, C, H * W)

    def one(b, box):
        w = _bin_weights(box[0], box[1], box[2], box[3], H, W)
        return jnp.dot(w, feats_flat[b].T)  # (49, C)

    out = jax.vmap(one)(bidx, boxes)
    return out.transpose(0, 2, 1).reshape(-1, C, POOL, POOL)


# ----------------------------------- main --------------------------------------
if __name__ == "__main__":
    key = jax.random.PRNGKey(0)
    k1, k2, k3 = jax.random.split(key, 3)

    B, C, H, W = 2, 32, 16, 16   # small synthetic shapes (512 channels in the paper)
    N = 3                        # objects per image
    feat_map = jax.random.normal(k1, (B, C, H, W), dtype=jnp.float32)

    img = H / SPATIAL_SCALE      # 64x64 image coordinates
    xy1 = jax.random.uniform(k2, (B * N, 2), minval=0.0, maxval=img * 0.5)
    wh = jax.random.uniform(k3, (B * N, 2), minval=img * 0.2, maxval=img * 0.5)
    xy2 = jnp.minimum(xy1 + wh, img - 1.0)
    batch_col = jnp.repeat(jnp.arange(B), N).astype(jnp.float32)[:, None]
    rois = jnp.concatenate([batch_col, xy1, xy2], axis=1)   # (B*N, 5)

    # hw_tile=128 exercises the band-limited K accumulation path (H*W=256 -> up
    # to 2 K tiles); default r_block=16 pads each image's 9 paired RoIs to 16.
    layer = ObjectPairPoolLayer(isex=True, hw_tile=128)   # bf16 feats by default
    obj_pair_feats, paired_rois = layer((feat_map,), rois, B, [N] * B)
    obj_pair_feats = jax.block_until_ready(obj_pair_feats)

    # shape contract: N(N-1) pairs per image, each (3, C, 7, 7)
    n_pairs = N * (N - 1)
    assert obj_pair_feats.shape == (B * n_pairs, 3, C, POOL, POOL), obj_pair_feats.shape
    assert paired_rois.shape == (B * (N + n_pairs), 5), paired_rois.shape

    # numeric cross-check of the Pallas RoIAlign against a pure-JAX f32 reference
    bidx = paired_rois[:, 0].astype(jnp.int32)
    boxes = paired_rois[:, 1:5].astype(jnp.float32)
    ref = roi_align_ref(feat_map, bidx, boxes)

    # 1) f32 matmul-operand path: exact check of the band-limited structure
    got32 = jax.block_until_ready(roi_align_pallas(
        feat_map, bidx, boxes, counts=None, r_block=8, hw_tile=128,
        feat_dtype=jnp.float32))
    assert jnp.allclose(got32, ref, atol=1e-4, rtol=1e-4), \
        float(jnp.abs(got32 - ref).max())

    # 2) default bf16 matmul-operand path: looser tolerance (bf16 features)
    got16 = jax.block_until_ready(roi_align_pallas(
        feat_map, bidx, boxes, counts=None, r_block=8, hw_tile=128,
        feat_dtype=jnp.bfloat16))
    assert jnp.allclose(got16, ref, atol=5e-2, rtol=5e-2), \
        float(jnp.abs(got16 - ref).max())

    print("KERNEL_OK")
</pallas_src>

<mosaic_0001>
module attributes {stable_mosaic.version = 11 : i64} {
  func.func @_roi_align_kernel(%arg0: i32, %arg1: i32, %arg2: memref<2xi32, #tpu.memory_space<smem>>, %arg3: memref<2xi32, #tpu.memory_space<smem>>, %arg4: memref<2xi32, #tpu.memory_space<smem>>, %arg5: memref<2x128xf32, #tpu.memory_space<vmem>>, %arg6: memref<1x784x8xf32, #tpu.memory_space<vmem>>, %arg7: memref<1x128x32xbf16, #tpu.memory_space<vmem>>, %arg8: memref<1x784x32xf32, #tpu.memory_space<vmem>>) attributes {dimension_semantics = [#tpu.dimension_semantics<parallel>, #tpu.dimension_semantics<arbitrary>], iteration_bounds = array<i64: 2, 2>, scalar_prefetch = 3 : i64, scratch_operands = 0 : i64, tpu.core_type = #tpu.core_type<tc>, window_params = [{transform_indices = @transform_0, window_bounds = array<i64: 2, 128>}, {transform_indices = @transform_1, window_bounds = array<i64: 1, 784, 8>}, {transform_indices = @transform_2, window_bounds = array<i64: 1, 128, 32>}, {transform_indices = @transform_3, window_bounds = array<i64: 1, 784, 32>}]} {
    %0 = arith.index_cast %arg0 : i32 to index
    %1 = memref.load %arg4[%0] : memref<2xi32, #tpu.memory_space<smem>>
    %2 = arith.cmpi slt, %arg1, %1 : i32
    %3 = arith.extui %2 : i1 to i32
    %c0_i32 = arith.constant 0 : i32
    %4 = arith.cmpi ne, %3, %c0_i32 : i32
    scf.if %4 {
      %c0 = arith.constant 0 : index
      %c0_0 = arith.constant 0 : index
      %5 = vector.load %arg5[%c0, %c0_0] : memref<2x128xf32, #tpu.memory_space<vmem>>, vector<1x128xf32>
      %c1 = arith.constant 1 : index
      %c0_1 = arith.constant 0 : index
      %6 = vector.load %arg5[%c1, %c0_1] : memref<2x128xf32, #tpu.memory_space<vmem>>, vector<1x128xf32>
      %c0_2 = arith.constant 0 : index
      %c0_3 = arith.constant 0 : index
      %c0_4 = arith.constant 0 : index
      %7 = vector.load %arg6[%c0_2, %c0_3, %c0_4] : memref<1x784x8xf32, #tpu.memory_space<vmem>>, vector<1x784x8xf32>
      %8 = vector.shape_cast %7 : vector<1x784x8xf32> to vector<784x8xf32>
      %9 = vector.extract_strided_slice %8 {offsets = [0, 0], sizes = [784, 1], strides = [1, 1]} : vector<784x8xf32> to vector<784x1xf32>
      %10 = vector.broadcast %9 : vector<784x1xf32> to vector<784x128xf32>
      %11 = vector.broadcast %5 : vector<1x128xf32> to vector<784x128xf32>
      %12 = arith.subf %10, %11 : vector<784x128xf32>
      %13 = math.absf %12 : vector<784x128xf32>
      %cst = arith.constant 1.000000e+00 : f32
      %14 = vector.broadcast %cst : f32 to vector<784x128xf32>
      %15 = arith.subf %14, %13 : vector<784x128xf32>
      %cst_5 = arith.constant 0.000000e+00 : f32
      %16 = vector.broadcast %cst_5 : f32 to vector<784x128xf32>
      %17 = arith.maximumf %16, %15 : vector<784x128xf32>
      %18 = vector.extract_strided_slice %8 {offsets = [0, 4], sizes = [784, 1], strides = [1, 1]} : vector<784x8xf32> to vector<784x1xf32>
      %19 = vector.broadcast %18 : vector<784x1xf32> to vector<784x128xf32>
      %20 = vector.broadcast %6 : vector<1x128xf32> to vector<784x128xf32>
      %21 = arith.subf %19, %20 : vector<784x128xf32>
      %22 = math.absf %21 : vector<784x128xf32>
      %cst_6 = arith.constant 1.000000e+00 : f32
      %23 = vector.broadcast %cst_6 : f32 to vector<784x128xf32>
      %24 = arith.subf %23, %22 : vector<784x128xf32>
      %cst_7 = arith.constant 0.000000e+00 : f32
      %25 = vector.broadcast %cst_7 : f32 to vector<784x128xf32>
      %26 = arith.maximumf %25, %24 : vector<784x128xf32>
      %27 = arith.mulf %17, %26 : vector<784x128xf32>
      %28 = vector.extract_strided_slice %8 {offsets = [0, 1], sizes = [784, 1], strides = [1, 1]} : vector<784x8xf32> to vector<784x1xf32>
      %29 = vector.broadcast %28 : vector<784x1xf32> to vector<784x128xf32>
      %30 = vector.broadcast %5 : vector<1x128xf32> to vector<784x128xf32>
      %31 = arith.subf %29, %30 : vector<784x128xf32>
      %32 = math.absf %31 : vector<784x128xf32>
      %cst_8 = arith.constant 1.000000e+00 : f32
      %33 = vector.broadcast %cst_8 : f32 to vector<784x128xf32>
      %34 = arith.subf %33, %32 : vector<784x128xf32>
      %cst_9 = arith.constant 0.000000e+00 : f32
      %35 = vector.broadcast %cst_9 : f32 to vector<784x128xf32>
      %36 = arith.maximumf %35, %34 : vector<784x128xf32>
      %37 = vector.extract_strided_slice %8 {offsets = [0, 5], sizes = [784, 1], strides = [1, 1]} : vector<784x8xf32> to vector<784x1xf32>
      %38 = vector.broadcast %37 : vector<784x1xf32> to vector<784x128xf32>
      %39 = vector.broadcast %6 : vector<1x128xf32> to vector<784x128xf32>
      %40 = arith.subf %38, %39 : vector<784x128xf32>
      %41 = math.absf %40 : vector<784x128xf32>
      %cst_10 = arith.constant 1.000000e+00 : f32
      %42 = vector.broadcast %cst_10 : f32 to vector<784x128xf32>
      %43 = arith.subf %42, %41 : vector<784x128xf32>
      %cst_11 = arith.constant 0.000000e+00 : f32
      %44 = vector.broadcast %cst_11 : f32 to vector<784x128xf32>
      %45 = arith.maximumf %44, %43 : vector<784x128xf32>
      %46 = arith.mulf %36, %45 : vector<784x128xf32>
      %47 = arith.addf %27, %46 : vector<784x128xf32>
      %48 = vector.extract_strided_slice %8 {offsets = [0, 2], sizes = [784, 1], strides = [1, 1]} : vector<784x8xf32> to vector<784x1xf32>
      %49 = vector.broadcast %48 : vector<784x1xf32> to vector<784x128xf32>
      %50 = vector.broadcast %5 : vector<1x128xf32> to vector<784x128xf32>
      %51 = arith.subf %49, %50 : vector<784x128xf32>
      %52 = math.absf %51 : vector<784x128xf32>
      %cst_12 = arith.constant 1.000000e+00 : f32
      %53 = vector.broadcast %cst_12 : f32 to vector<784x128xf32>
      %54 = arith.subf %53, %52 : vector<784x128xf32>
      %cst_13 = arith.constant 0.000000e+00 : f32
      %55 = vector.broadcast %cst_13 : f32 to vector<784x128xf32>
      %56 = arith.maximumf %55, %54 : vector<784x128xf32>
      %57 = vector.extract_strided_slice %8 {offsets = [0, 6], sizes = [784, 1], strides = [1, 1]} : vector<784x8xf32> to vector<784x1xf32>
      %58 = vector.broadcast %57 : vector<784x1xf32> to vector<784x128xf32>
      %59 = vector.broadcast %6 : vector<1x128xf32> to vector<784x128xf32>
      %60 = arith.subf %58, %59 : vector<784x128xf32>
      %61 = math.absf %60 : vector<784x128xf32>
      %cst_14 = arith.constant 1.000000e+00 : f32
      %62 = vector.broadcast %cst_14 : f32 to vector<784x128xf32>
      %63 = arith.subf %62, %61 : vector<784x128xf32>
      %cst_15 = arith.constant 0.000000e+00 : f32
      %64 = vector.broadcast %cst_15 : f32 to vector<784x128xf32>
      %65 = arith.maximumf %64, %63 : vector<784x128xf32>
      %66 = arith.mulf %56, %65 : vector<784x128xf32>
      %67 = arith.addf %47, %66 : vector<784x128xf32>
      %68 = vector.extract_strided_slice %8 {offsets = [0, 3], sizes = [784, 1], strides = [1, 1]} : vector<784x8xf32> to vector<784x1xf32>
      %69 = vector.broadcast %68 : vector<784x1xf32> to vector<784x128xf32>
      %70 = vector.broadcast %5 : vector<1x128xf32> to vector<784x128xf32>
      %71 = arith.subf %69, %70 : vector<784x128xf32>
      %72 = math.absf %71 : vector<784x128xf32>
      %cst_16 = arith.constant 1.000000e+00 : f32
      %73 = vector.broadcast %cst_16 : f32 to vector<784x128xf32>
      %74 = arith.subf %73, %72 : vector<784x128xf32>
      %cst_17 = arith.constant 0.000000e+00 : f32
      %75 = vector.broadcast %cst_17 : f32 to vector<784x128xf32>
      %76 = arith.maximumf %75, %74 : vector<784x128xf32>
      %77 = vector.extract_strided_slice %8 {offsets = [0, 7], sizes = [784, 1], strides = [1, 1]} : vector<784x8xf32> to vector<784x1xf32>
      %78 = vector.broadcast %77 : vector<784x1xf32> to vector<784x128xf32>
      %79 = vector.broadcast %6 : vector<1x128xf32> to vector<784x128xf32>
      %80 = arith.subf %78, %79 : vector<784x128xf32>
      %81 = math.absf %80 : vector<784x128xf32>
      %cst_18 = arith.constant 1.000000e+00 : f32
      %82 = vector.broadcast %cst_18 : f32 to vector<784x128xf32>
      %83 = arith.subf %82, %81 : vector<784x128xf32>
      %cst_19 = arith.constant 0.000000e+00 : f32
      %84 = vector.broadcast %cst_19 : f32 to vector<784x128xf32>
      %85 = arith.maximumf %84, %83 : vector<784x128xf32>
      %86 = arith.mulf %76, %85 : vector<784x128xf32>
      %87 = arith.addf %67, %86 : vector<784x128xf32>
      %88 = arith.truncf %87 : vector<784x128xf32> to vector<784x128xbf16>
      %c0_20 = arith.constant 0 : index
      %c0_21 = arith.constant 0 : index
      %c0_22 = arith.constant 0 : index
      %89 = vector.load %arg7[%c0_20, %c0_21, %c0_22] : memref<1x128x32xbf16, #tpu.memory_space<vmem>>, vector<1x128x32xbf16>
      %90 = vector.shape_cast %89 : vector<1x128x32xbf16> to vector<128x32xbf16>
      %cst_23 = arith.constant dense<0.000000e+00> : vector<784x32xf32>
      %91 = tpu.matmul %88, %90, %cst_23 {dimension_numbers = #tpu.dot_dimension_numbers<[1], [0], [0], [1], [0, 0, 1, 1], [], []>} : vector<784x128xbf16>, vector<128x32xbf16>, vector<784x32xf32> -> vector<784x32xf32>
      %c0_i32_24 = arith.constant 0 : i32
      %92 = arith.cmpi eq, %arg1, %c0_i32_24 : i32
      %93 = arith.extui %92 : i1 to i32
      %c0_i32_25 = arith.constant 0 : i32
      %94 = arith.cmpi ne, %93, %c0_i32_25 : i32
      scf.if %94 {
        %c0_28 = arith.constant 0 : index
        %c0_29 = arith.constant 0 : index
        %c0_30 = arith.constant 0 : index
        %98 = vector.load %arg8[%c0_28, %c0_29, %c0_30] : memref<1x784x32xf32, #tpu.memory_space<vmem>>, vector<1x784x32xf32>
        %99 = vector.shape_cast %98 : vector<1x784x32xf32> to vector<784x32xf32>
        %100 = vector.shape_cast %91 : vector<784x32xf32> to vector<1x784x32xf32>
        tpu.vector_store %arg8[%c0_28, %c0_29, %c0_30], %100 {strides = array<i32>} : memref<1x784x32xf32, #tpu.memory_space<vmem>>, vector<1x784x32xf32>,
      } else {
      }
      %c0_i32_26 = arith.constant 0 : i32
      %95 = arith.cmpi ne, %arg1, %c0_i32_26 : i32
      %96 = arith.extui %95 : i1 to i32
      %c0_i32_27 = arith.constant 0 : i32
      %97 = arith.cmpi ne, %96, %c0_i32_27 : i32
      scf.if %97 {
        %c0_28 = arith.constant 0 : index
        %c0_29 = arith.constant 0 : index
        %c0_30 = arith.constant 0 : index
        %98 = vector.load %arg8[%c0_28, %c0_29, %c0_30] : memref<1x784x32xf32, #tpu.memory_space<vmem>>, vector<1x784x32xf32>
        %99 = vector.shape_cast %98 : vector<1x784x32xf32> to vector<784x32xf32>
        %100 = arith.addf %99, %91 : vector<784x32xf32>
        %c0_31 = arith.constant 0 : index
        %c0_32 = arith.constant 0 : index
        %c0_33 = arith.constant 0 : index
        %101 = vector.load %arg8[%c0_31, %c0_32, %c0_33] : memref<1x784x32xf32, #tpu.memory_space<vmem>>, vector<1x784x32xf32>
        %102 = vector.shape_cast %101 : vector<1x784x32xf32> to vector<784x32xf32>
        %103 = vector.shape_cast %100 : vector<784x32xf32> to vector<1x784x32xf32>
        tpu.vector_store %arg8[%c0_31, %c0_32, %c0_33], %103 {strides = array<i32>} : memref<1x784x32xf32, #tpu.memory_space<vmem>>, vector<1x784x32xf32>,
      } else {
      }
    } else {
    }
    return
  }
  func.func @transform_0(%arg0: i32, %arg1: i32, %arg2: memref<2xi32, #tpu.memory_space<smem>>, %arg3: memref<2xi32, #tpu.memory_space<smem>>, %arg4: memref<2xi32, #tpu.memory_space<smem>>) -> (i32, i32) {
    %0 = arith.index_cast %arg0 : i32 to index
    %1 = memref.load %arg3[%0] : memref<2xi32, #tpu.memory_space<smem>>
    %2 = arith.addi %1, %arg1 : i32
    %c1_i32 = arith.constant 1 : i32
    %3 = arith.minsi %2, %c1_i32 : i32
    %c0_i32 = arith.constant 0 : i32
    %c0_i32_0 = arith.constant 0 : i32
    return %c0_i32, %3 : i32, i32
  }
  func.func @transform_1(%arg0: i32, %arg1: i32, %arg2: memref<2xi32, #tpu.memory_space<smem>>, %arg3: memref<2xi32, #tpu.memory_space<smem>>, %arg4: memref<2xi32, #tpu.memory_space<smem>>) -> (i32, i32, i32) {
    %c0_i32 = arith.constant 0 : i32
    %c0_i32_0 = arith.constant 0 : i32
    %c0_i32_1 = arith.constant 0 : i32
    return %arg0, %c0_i32, %c0_i32_0 : i32, i32, i32
  }
  func.func @transform_2(%arg0: i32, %arg1: i32, %arg2: memref<2xi32, #tpu.memory_space<smem>>, %arg3: memref<2xi32, #tpu.memory_space<smem>>, %arg4: memref<2xi32, #tpu.memory_space<smem>>) -> (i32, i32, i32) {
    %0 = arith.index_cast %arg0 : i32 to index
    %1 = memref.load %arg2[%0] : memref<2xi32, #tpu.memory_space<smem>>
    %2 = arith.index_cast %arg0 : i32 to index
    %3 = memref.load %arg3[%2] : memref<2xi32, #tpu.memory_space<smem>>
    %4 = arith.addi %3, %arg1 : i32
    %c1_i32 = arith.constant 1 : i32
    %5 = arith.minsi %4, %c1_i32 : i32
    %c0_i32 = arith.constant 0 : i32
    %c0_i32_0 = arith.constant 0 : i32
    return %1, %5, %c0_i32 : i32, i32, i32
  }
  func.func @transform_3(%arg0: i32, %arg1: i32, %arg2: memref<2xi32, #tpu.memory_space<smem>>, %arg3: memref<2xi32, #tpu.memory_space<smem>>, %arg4: memref<2xi32, #tpu.memory_space<smem>>) -> (i32, i32, i32) {
    %c0_i32 = arith.constant 0 : i32
    %c0_i32_0 = arith.constant 0 : i32
    %c0_i32_1 = arith.constant 0 : i32
    return %arg0, %c0_i32, %c0_i32_0 : i32, i32, i32
  }
}

</mosaic_0001>

<llo_original>
// kernel: tpu_custom_call.1
$region0: #{tpu_custom_call.1}
  #allocation0 [shape = 'u32[]', space=smem, size = 0x4, offset = 0x4, fixed_abs, tag = 'smem constant byte address 0x4 - core index']
  #allocation1 [shape = 'u32[144,128]{1,0:T(1,128)}', space=vmem, size = 0x12000, scoped, tag = 'internal scratch']
  #allocation2 [shape = 's32[1]{0}', space=sflag, size = 0x4, scoped, tag = 'scoped memory for tpu_custom_call.1']
  #allocation3 [shape = 'u8[512]{0}', space=smem, size = 0x200, scoped, tag = 'prefetched SMEM operand 0']
  #allocation4 [shape = 'u8[512]{0}', space=smem, size = 0x200, scoped, tag = 'prefetched SMEM operand 1']
  #allocation5 [shape = 'u8[512]{0}', space=smem, size = 0x200, scoped, tag = 'prefetched SMEM operand 2']
  %s0 = inlined_call_operand.vmem [shape: s32[2], index: 0, kind: input, shape index: {}]
  %s1 = inlined_call_operand.vmem [shape: s32[2], index: 1, kind: input, shape index: {}]
  %s2 = inlined_call_operand.vmem [shape: s32[2], index: 2, kind: input, shape index: {}]
  %s3 = inlined_call_operand.vmem [shape: f32[2,256], index: 3, kind: input, shape index: {}]
  %s4 = inlined_call_operand.vmem [shape: f32[2,784,8], index: 4, kind: input, shape index: {}]
  %s5 = inlined_call_operand.vmem [shape: bf16[2,256,32], index: 5, kind: input, shape index: {}]
  %s6 = inlined_call_operand.vmem [shape: f32[2,784,32], index: 6, kind: output, shape index: {}]
  %s7 = sld [smem:[#allocation0]]
  $region57: #{tpu_custom_call.1} parent=0
    _
  %s9 = ssub.s32 1, %s7
  %s10 = scalar_select 0, %s9, %s7
  %s11 = sshll.u32 %s0, 4
  %s12 = int_to_ptr.vmem [resolvable:$true] %s11
  %14 = dma.vmem_to_smem %s12, 16, [#allocation3], [#allocation2]
  %s15 = sshll.u32 %s1, 4
  %s16 = int_to_ptr.vmem [resolvable:$true] %s15
  %18 = dma.vmem_to_smem %s16, 16, [#allocation4], [#allocation2]
  %s19 = sshll.u32 %s2, 4
  %s20 = int_to_ptr.vmem [resolvable:$true] %s19
  %22 = dma.vmem_to_smem %s20, 16, [#allocation5], [#allocation2]
  %23 = dma.done [#allocation2], 48
  %24 = sfence
  loop: start=0, step=1, limit=6
  $region2: #{tpu_custom_call.1} parent=0 // loop_pre_header
    _
  $region3: #{tpu_custom_call.1} parent=0 // loop_header
    %s26 = sphi 0, %s30
    %p27 = scmp.ge.s32.totalorder %s26, 6
    %s33 = sphi 0, %s45
    %s34 = sphi 0, %s41
    %s35 = sphi 0, %s33
    %s36 = sphi 0, %s34
    %s37 = sphi 0, %s35
    %s38 = sphi 0, %s36
    %s56 = sphi 0, %s58
    %s59 = sphi 0, %s56
    %s60 = sphi 0, %s59
    %s76 = sphi 0, %s60
    %s82 = sphi 0, %s84
    %s85 = sphi 0, %s82
    %s86 = sphi 0, %s85
    %s102 = sphi 0, %s86
    %s120 = sphi 0, %s122
    %s123 = sphi 0, %s120
    %s124 = sphi 0, %s123
    %s140 = sphi 0, %s124
    %s146 = sphi 0, %s148
    %s149 = sphi 0, %s146
    %s150 = sphi 0, %s149
    %s166 = sphi 0, %s150
  $region4: #{tpu_custom_call.1} parent=0 // loop_header_branch
    %29 = sbr.rel (%p27) target = $region8
  $region5: #{tpu_custom_call.1} parent=0 // loop_body
    %s31 = ssub.s32 %s26, 1
    %s32 = ssub.s32 %s26, 2
    %s39 = sadd.s32 1, %s34
    %p40 = scmp.ge.s32.totalorder %s39, 2
    %s41 = scalar_select %p40, 0, %s39
    %s42 = sadd.s32 1, %s33
    %s43 = scalar_select %p40, %s42, %s33
    %p44 = scmp.ge.s32.totalorder %s43, 2
    %s45 = scalar_select %p44, 0, %s43
    %s46 = sld [smem:[#allocation4 + %s33]]
    %s47 = sadd.s32 %s46, %s34
    %p48 = scmp.lt.s32.totalorder %s47, 1
    %s49 = scalar_select %p48, %s47, 1
    %s50 = sld [smem:[#allocation4 + %s45]]
    %s51 = sadd.s32 %s50, %s41
    %p52 = scmp.lt.s32.totalorder %s51, 1
    %s53 = scalar_select %p52, %s51, 1
    %s54 = ssub.s32 %s49, %s53
    %p55 = scmp.eq.s32.totalorder %s54, 0
    %s57 = sadd.s32 %s56, 1
    %s58 = scalar_select %p55, %s56, %s57
    %p61 = pneg %p55
    %p62 = scmp.eq.s32.totalorder %s26, 3
    %p63 = por %p61, %p62
    %p64 = scmp.ne.s32.totalorder %s56, %s59
    %p65 = scmp.eq.s32.totalorder %s26, 0
    %p66 = por %p64, %p65
    %p67 = scmp.ne.s32.totalorder %s56, %s59
    %p68 = scmp.eq.s32.totalorder %s31, 3
    %p69 = por %p67, %p68
    %p70 = scmp.ne.s32.totalorder %s59, %s60
    %p71 = scmp.eq.s32.totalorder %s31, 0
    %p72 = por %p70, %p71
    %p73 = scmp.ne.s32.totalorder %s59, %s60
    %p74 = scmp.eq.s32.totalorder %s32, 3
    %p75 = por %p73, %p74
    %p77 = scmp.ne.s32.totalorder %s60, %s76
    %p78 = scmp.eq.s32.totalorder %s32, 0
    %p79 = por %p77, %p78
    %s80 = ssub.s32 %s33, %s45
    %p81 = scmp.eq.s32.totalorder %s80, 0
    %s83 = sadd.s32 %s82, 1
    %s84 = scalar_select %p81, %s82, %s83
    %p87 = pneg %p81
    %p88 = scmp.eq.s32.totalorder %s26, 3
    %p89 = por %p87, %p88
    %p90 = scmp.ne.s32.totalorder %s82, %s85
    %p91 = scmp.eq.s32.totalorder %s26, 0
    %p92 = por %p90, %p91
    %p93 = scmp.ne.s32.totalorder %s82, %s85
    %p94 = scmp.eq.s32.totalorder %s31, 3
    %p95 = por %p93, %p94
    %p96 = scmp.ne.s32.totalorder %s85, %s86
    %p97 = scmp.eq.s32.totalorder %s31, 0
    %p98 = por %p96, %p97
    %p99 = scmp.ne.s32.totalorder %s85, %s86
    %p100 = scmp.eq.s32.totalorder %s32, 3
    %p101 = por %p99, %p100
    %p103 = scmp.ne.s32.totalorder %s86, %s102
    %p104 = scmp.eq.s32.totalorder %s32, 0
    %p105 = por %p103, %p104
    %s106 = sld [smem:[#allocation3 + %s33]]
    %s107 = sld [smem:[#allocation4 + %s33]]
    %s108 = sadd.s32 %s107, %s34
    %p109 = scmp.lt.s32.totalorder %s108, 1
    %s110 = scalar_select %p109, %s108, 1
    %s111 = sld [smem:[#allocation3 + %s45]]
    %s112 = sld [smem:[#allocation4 + %s45]]
    %s113 = sadd.s32 %s112, %s41
    %p114 = scmp.lt.s32.totalorder %s113, 1
    %s115 = scalar_select %p114, %s113, 1
    %s116 = ssub.s32 %s106, %s111
    %s117 = ssub.s32 %s110, %s115
    %s118 = sor.u32 %s116, %s117
    %p119 = scmp.eq.s32.totalorder %s118, 0
    %s121 = sadd.s32 %s120, 1
    %s122 = scalar_select %p119, %s120, %s121
    %p125 = pneg %p119
    %p126 = scmp.eq.s32.totalorder %s26, 3
    %p127 = por %p125, %p126
    %p128 = scmp.ne.s32.totalorder %s120, %s123
    %p129 = scmp.eq.s32.totalorder %s26, 0
    %p130 = por %p128, %p129
    %p131 = scmp.ne.s32.totalorder %s120, %s123
    %p132 = scmp.eq.s32.totalorder %s31, 3
    %p133 = por %p131, %p132
    %p134 = scmp.ne.s32.totalorder %s123, %s124
    %p135 = scmp.eq.s32.totalorder %s31, 0
    %p136 = por %p134, %p135
    %p137 = scmp.ne.s32.totalorder %s123, %s124
    %p138 = scmp.eq.s32.totalorder %s32, 3
    %p139 = por %p137, %p138
    %p141 = scmp.ne.s32.totalorder %s124, %s140
    %p142 = scmp.eq.s32.totalorder %s32, 0
    %p143 = por %p141, %p142
    %s144 = ssub.s32 %s33, %s45
    %p145 = scmp.eq.s32.totalorder %s144, 0
    %s147 = sadd.s32 %s146, 1
    %s148 = scalar_select %p145, %s146, %s147
    %p151 = pneg %p145
    %p152 = scmp.eq.s32.totalorder %s26, 3
    %p153 = por %p151, %p152
    %p154 = scmp.ne.s32.totalorder %s146, %s149
    %p155 = scmp.eq.s32.totalorder %s26, 0
    %p156 = por %p154, %p155
    %p157 = scmp.ne.s32.totalorder %s146, %s149
    %p158 = scmp.eq.s32.totalorder %s31, 3
    %p159 = por %p157, %p158
    %p160 = scmp.ne.s32.totalorder %s149, %s150
    %p161 = scmp.eq.s32.totalorder %s31, 0
    %p162 = por %p160, %p161
    %p163 = scmp.ne.s32.totalorder %s149, %s150
    %p164 = scmp.eq.s32.totalorder %s32, 3
    %p165 = por %p163, %p164
    %p167 = scmp.ne.s32.totalorder %s150, %s166
    %p168 = scmp.eq.s32.totalorder %s32, 0
    %p169 = por %p167, %p168
    %p170 = scmp.le.s32.totalorder 1, %s26
    %p171 = scmp.lt.s32.totalorder %s26, 5
    %p172 = pnand %p170, %p171
    %p173 = pneg %p172
    // Predicated region
    $region9: #{tpu_custom_call.1} parent=5 // pred_check
      _
    $region10: #{tpu_custom_call.1} parent=5 // pred_check_branch
      %175 = sbr.rel (%p172) target = $region12
    $region11: #{tpu_custom_call.1} parent=5 // pred_region
      %s176 = ssub.s32 %s26, 1
    $region12: #{tpu_custom_call.1} parent=5 // pred_fallthru
      _
    %p177 = scmp.lt.s32.totalorder %s26, 4
    // Predicated region
    $region13: #{tpu_custom_call.1} parent=5 // pred_check
      %p178 = pneg %p177
    $region14: #{tpu_custom_call.1} parent=5 // pred_check_branch
      %180 = sbr.rel (%p178) target = $region16
    $region15: #{tpu_custom_call.1} parent=5 // pred_region
      // Predicated region
      $region17: #{tpu_custom_call.1} parent=15 // pred_check
        %p181 = pneg %p66
      $region18: #{tpu_custom_call.1} parent=15 // pred_check_branch
        %183 = sbr.rel (%p181) target = $region20
      $region19: #{tpu_custom_call.1} parent=15 // pred_region
        %s184 = sld [smem:[#allocation4 + %s33]]
        %s185 = sadd.s32 %s184, %s34
        %p186 = scmp.lt.s32.totalorder %s185, 1
        %s187 = scalar_select %p186, %s185, 1
        %p188 = scmp.lt.s32.totalorder %s187, 1
        %s189 = scalar_select %p188, %s187, 1
        %s190 = smul.addr %s189, 2
        %s191 = scalar_lea.vmem %s3, %s190
        %s192 = sld [smem:[#allocation4 + %s33]]
        %s193 = sadd.s32 %s192, %s34
        %p194 = scmp.lt.s32.totalorder %s193, 1
        %s195 = scalar_select %p194, %s193, 1
      $region20: #{tpu_custom_call.1} parent=15 // pred_fallthru
        _
      // Predicated region
      $region21: #{tpu_custom_call.1} parent=15 // pred_check
        %p196 = pneg %p92
      $region22: #{tpu_custom_call.1} parent=15 // pred_check_branch
        %198 = sbr.rel (%p196) target = $region24
      $region23: #{tpu_custom_call.1} parent=15 // pred_region
        %p199 = scmp.lt.s32.totalorder %s33, 1
        %s200 = scalar_select %p199, %s33, 1
        %s201 = smul.addr %s200, 98
        %s202 = smul.addr %s201, 8
        %s203 = scalar_lea.vmem %s4, %s202
      $region24: #{tpu_custom_call.1} parent=15 // pred_fallthru
        _
      // Predicated region
      $region25: #{tpu_custom_call.1} parent=15 // pred_check
        %p204 = pneg %p130
      $region26: #{tpu_custom_call.1} parent=15 // pred_check_branch
        %206 = sbr.rel (%p204) target = $region28
      $region27: #{tpu_custom_call.1} parent=15 // pred_region
        %s207 = sld [smem:[#allocation3 + %s33]]
        %s208 = sld [smem:[#allocation4 + %s33]]
        %s209 = sadd.s32 %s208, %s34
        %p210 = scmp.lt.s32.totalorder %s209, 1
        %s211 = scalar_select %p210, %s209, 1
        %s212 = smul.u32 16, %s211
        %p213 = scmp.lt.s32.totalorder %s207, 1
        %s214 = scalar_select %p213, %s207, 1
        %p215 = scmp.lt.s32.totalorder %s212, 31
        %s216 = scalar_select %p215, %s212, 31
        %s217 = smul.addr %s214, 32
        %s218 = sadd.s32 %s216, %s217
        %s219 = smul.addr %s218, 4
        %s220 = scalar_lea.vmem %s5, %s219
        %s221 = sld [smem:[#allocation3 + %s33]]
        %s222 = sld [smem:[#allocation4 + %s33]]
        %s223 = sadd.s32 %s222, %s34
        %p224 = scmp.lt.s32.totalorder %s223, 1
        %s225 = scalar_select %p224, %s223, 1
        %s226 = smul.u32 16, %s225
      $region28: #{tpu_custom_call.1} parent=15 // pred_fallthru
        _
    $region16: #{tpu_custom_call.1} parent=5 // pred_fallthru
      _
    %p227 = scmp.le.s32.totalorder 1, %s26
    %p228 = scmp.lt.s32.totalorder %s26, 5
    %p229 = pnand %p227, %p228
    %p230 = pneg %p229
    // Predicated region
    $region29: #{tpu_custom_call.1} parent=5 // pred_check
      _
    $region30: #{tpu_custom_call.1} parent=5 // pred_check_branch
      %232 = sbr.rel (%p229) target = $region32
    $region31: #{tpu_custom_call.1} parent=5 // pred_region
      %s233 = ssub.s32 %s26, 1
      %s234 = sld [smem:[#allocation4 + %s35]]
      %s235 = sadd.s32 %s234, %s36
      %p236 = scmp.lt.s32.totalorder %s235, 1
      %s237 = scalar_select %p236, %s235, 1
      %p238 = scmp.lt.s32.totalorder %s237, 1
      %s239 = scalar_select %p238, %s237, 1
      %s240 = smul.addr %s239, 2
      %s241 = scalar_lea.vmem %s3, %s240
      %p242 = pneg %p72
      %p243 = pneg %p69
      %p244 = scmp.lt.s32.totalorder %s35, 1
      %s245 = scalar_select %p244, %s35, 1
      %s246 = smul.addr %s245, 98
      %s247 = smul.addr %s246, 8
      %s248 = scalar_lea.vmem %s4, %s247
      %p249 = pneg %p98
      %p250 = pneg %p95
      %s251 = sld [smem:[#allocation3 + %s35]]
      %s252 = sld [smem:[#allocation4 + %s35]]
      %s253 = sadd.s32 %s252, %s36
      %p254 = scmp.lt.s32.totalorder %s253, 1
      %s255 = scalar_select %p254, %s253, 1
      %s256 = smul.u32 16, %s255
      %p257 = scmp.lt.s32.totalorder %s251, 1
      %s258 = scalar_select %p257, %s251, 1
      %p259 = scmp.lt.s32.totalorder %s256, 31
      %s260 = scalar_select %p259, %s256, 31
      %s261 = smul.addr %s258, 32
      %s262 = sadd.s32 %s260, %s261
      %s263 = smul.addr %s262, 4
      %s264 = scalar_lea.vmem %s5, %s263
      %p265 = pneg %p136
      %p266 = pneg %p133
      %p267 = pneg %p162
      %p268 = pneg %p159
      %p269 = scmp.lt.s32.totalorder %s35, 1
      %s270 = scalar_select %p269, %s35, 1
      %s271 = smul.addr %s270, 98
      %s272 = smul.addr %s271, 8
      %s273 = scalar_lea.vmem %s6, %s272
      %s274 = sld [smem:[#allocation4 + %s35]]
      %s275 = sadd.s32 %s274, %s36
      %p276 = scmp.lt.s32.totalorder %s275, 1
      %s277 = scalar_select %p276, %s275, 1
      %p278 = scmp.lt.s32.totalorder %s277, 1
      %s279 = scalar_select %p278, %s277, 1
      %s280 = smul.addr %s279, 2
      %s281 = scalar_lea.vmem %s3, %s280
      %s282 = sld [smem:[#allocation4 + %s35]]
      %s283 = sadd.s32 %s282, %s36
      %p284 = scmp.lt.s32.totalorder %s283, 1
      %s285 = scalar_select %p284, %s283, 1
      %p286 = scmp.lt.s32.totalorder %s35, 1
      %s287 = scalar_select %p286, %s35, 1
      %s288 = smul.addr %s287, 98
      %s289 = smul.addr %s288, 8
      %s290 = scalar_lea.vmem %s4, %s289
      %s291 = sld [smem:[#allocation3 + %s35]]
      %s292 = sld [smem:[#allocation4 + %s35]]
      %s293 = sadd.s32 %s292, %s36
      %p294 = scmp.lt.s32.totalorder %s293, 1
      %s295 = scalar_select %p294, %s293, 1
      %s296 = smul.u32 16, %s295
      %p297 = scmp.lt.s32.totalorder %s291, 1
      %s298 = scalar_select %p297, %s291, 1
      %p299 = scmp.lt.s32.totalorder %s296, 31
      %s300 = scalar_select %p299, %s296, 31
      %s301 = smul.addr %s298, 32
      %s302 = sadd.s32 %s300, %s301
      %s303 = smul.addr %s302, 4
      %s304 = scalar_lea.vmem %s5, %s303
      %s305 = sld [smem:[#allocation3 + %s35]]
      %s306 = sld [smem:[#allocation4 + %s35]]
      %s307 = sadd.s32 %s306, %s36
      %p308 = scmp.lt.s32.totalorder %s307, 1
      %s309 = scalar_select %p308, %s307, 1
      %s310 = smul.u32 16, %s309
      %p311 = scmp.lt.s32.totalorder %s35, 1
      %s312 = scalar_select %p311, %s35, 1
      %s313 = smul.addr %s312, 98
      %s314 = smul.addr %s313, 8
      %s315 = scalar_lea.vmem %s6, %s314
      %s317 = sld [smem:[#allocation5 + %s35]]
      %p318 = scmp.lt.s32.totalorder %s36, %s317
      // Predicated region
      $region33: #{tpu_custom_call.1} parent=31 // pred_check
        %p319 = pneg %p318
      $region34: #{tpu_custom_call.1} parent=31 // pred_check_branch
        %321 = sbr.rel (%p319) target = $region36
      $region35: #{tpu_custom_call.1} parent=31 // pred_region
        %v322 = vld [vmem:[%s281] sm:$0x1]
        %v323 = vld [vmem:[%s281 + $0x1] sm:$0x1]
        %v324 = vld [vmem:[%s290] sm:$0xff]
        %v325 = vld [vmem:[%s290 + $0x8] sm:$0xff]
        %v326 = vld [vmem:[%s290 + $0x10] sm:$0xff]
        %v327 = vld [vmem:[%s290 + $0x18] sm:$0xff]
        %v328 = vld [vmem:[%s290 + $0x20] sm:$0xff]
        %v329 = vld [vmem:[%s290 + $0x28] sm:$0xff]
        %v330 = vld [vmem:[%s290 + $0x30] sm:$0xff]
        %v331 = vld [vmem:[%s290 + $0x38] sm:$0xff]
        %v332 = vld [vmem:[%s290 + $0x40] sm:$0xff]
        %v333 = vld [vmem:[%s290 + $0x48] sm:$0xff]
        %v334 = vld [vmem:[%s290 + $0x50] sm:$0xff]
        %v335 = vld [vmem:[%s290 + $0x58] sm:$0xff]
        %v336 = vld [vmem:[%s290 + $0x60] sm:$0xff]
        %v337 = vld [vmem:[%s290 + $0x68] sm:$0xff]
        %v338 = vld [vmem:[%s290 + $0x70] sm:$0xff]
        %v339 = vld [vmem:[%s290 + $0x78] sm:$0xff]
        %v340 = vld [vmem:[%s290 + $0x80] sm:$0xff]
        %v341 = vld [vmem:[%s290 + $0x88] sm:$0xff]
        %v342 = vld [vmem:[%s290 + $0x90] sm:$0xff]
        %v343 = vld [vmem:[%s290 + $0x98] sm:$0xff]
        %v344 = vld [vmem:[%s290 + $0xa0] sm:$0xff]
        %v345 = vld [vmem:[%s290 + $0xa8] sm:$0xff]
        %v346 = vld [vmem:[%s290 + $0xb0] sm:$0xff]
        %v347 = vld [vmem:[%s290 + $0xb8] sm:$0xff]
        %v348 = vld [vmem:[%s290 + $0xc0] sm:$0xff]
        %v349 = vld [vmem:[%s290 + $0xc8] sm:$0xff]
        %v350 = vld [vmem:[%s290 + $0xd0] sm:$0xff]
        %v351 = vld [vmem:[%s290 + $0xd8] sm:$0xff]
        %v352 = vld [vmem:[%s290 + $0xe0] sm:$0xff]
        %v353 = vld [vmem:[%s290 + $0xe8] sm:$0xff]
        %v354 = vld [vmem:[%s290 + $0xf0] sm:$0xff]
        %v355 = vld [vmem:[%s290 + $0xf8] sm:$0xff]
        %v356 = vld [vmem:[%s290 + $0x100] sm:$0xff]
        %v357 = vld [vmem:[%s290 + $0x108] sm:$0xff]
        %v358 = vld [vmem:[%s290 + $0x110] sm:$0xff]
        %v359 = vld [vmem:[%s290 + $0x118] sm:$0xff]
        %v360 = vld [vmem:[%s290 + $0x120] sm:$0xff]
        %v361 = vld [vmem:[%s290 + $0x128] sm:$0xff]
        %v362 = vld [vmem:[%s290 + $0x130] sm:$0xff]
        %v363 = vld [vmem:[%s290 + $0x138] sm:$0xff]
        %v364 = vld [vmem:[%s290 + $0x140] sm:$0xff]
        %v365 = vld [vmem:[%s290 + $0x148] sm:$0xff]
        %v366 = vld [vmem:[%s290 + $0x150] sm:$0xff]
        %v367 = vld [vmem:[%s290 + $0x158] sm:$0xff]
        %v368 = vld [vmem:[%s290 + $0x160] sm:$0xff]
        %v369 = vld [vmem:[%s290 + $0x168] sm:$0xff]
        %v370 = vld [vmem:[%s290 + $0x170] sm:$0xff]
        %v371 = vld [vmem:[%s290 + $0x178] sm:$0xff]
        %v372 = vld [vmem:[%s290 + $0x180] sm:$0xff]
        %v373 = vld [vmem:[%s290 + $0x188] sm:$0xff]
        %v374 = vld [vmem:[%s290 + $0x190] sm:$0xff]
        %v375 = vld [vmem:[%s290 + $0x198] sm:$0xff]
        %v376 = vld [vmem:[%s290 + $0x1a0] sm:$0xff]
        %v377 = vld [vmem:[%s290 + $0x1a8] sm:$0xff]
        %v378 = vld [vmem:[%s290 + $0x1b0] sm:$0xff]
        %v379 = vld [vmem:[%s290 + $0x1b8] sm:$0xff]
        %v380 = vld [vmem:[%s290 + $0x1c0] sm:$0xff]
        %v381 = vld [vmem:[%s290 + $0x1c8] sm:$0xff]
        %v382 = vld [vmem:[%s290 + $0x1d0] sm:$0xff]
        %v383 = vld [vmem:[%s290 + $0x1d8] sm:$0xff]
        %v384 = vld [vmem:[%s290 + $0x1e0] sm:$0xff]
        %v385 = vld [vmem:[%s290 + $0x1e8] sm:$0xff]
        %v386 = vld [vmem:[%s290 + $0x1f0] sm:$0xff]
        %v387 = vld [vmem:[%s290 + $0x1f8] sm:$0xff]
        %v388 = vld [vmem:[%s290 + $0x200] sm:$0xff]
        %v389 = vld [vmem:[%s290 + $0x208] sm:$0xff]
        %v390 = vld [vmem:[%s290 + $0x210] sm:$0xff]
        %v391 = vld [vmem:[%s290 + $0x218] sm:$0xff]
        %v392 = vld [vmem:[%s290 + $0x220] sm:$0xff]
        %v393 = vld [vmem:[%s290 + $0x228] sm:$0xff]
        %v394 = vld [vmem:[%s290 + $0x230] sm:$0xff]
        %v395 = vld [vmem:[%s290 + $0x238] sm:$0xff]
        %v396 = vld [vmem:[%s290 + $0x240] sm:$0xff]
        %v397 = vld [vmem:[%s290 + $0x248] sm:$0xff]
        %v398 = vld [vmem:[%s290 + $0x250] sm:$0xff]
        %v399 = vld [vmem:[%s290 + $0x258] sm:$0xff]
        %v400 = vld [vmem:[%s290 + $0x260] sm:$0xff]
        %v401 = vld [vmem:[%s290 + $0x268] sm:$0xff]
        %v402 = vld [vmem:[%s290 + $0x270] sm:$0xff]
        %v403 = vld [vmem:[%s290 + $0x278] sm:$0xff]
        %v404 = vld [vmem:[%s290 + $0x280] sm:$0xff]
        %v405 = vld [vmem:[%s290 + $0x288] sm:$0xff]
        %v406 = vld [vmem:[%s290 + $0x290] sm:$0xff]
        %v407 = vld [vmem:[%s290 + $0x298] sm:$0xff]
        %v408 = vld [vmem:[%s290 + $0x2a0] sm:$0xff]
        %v409 = vld [vmem:[%s290 + $0x2a8] sm:$0xff]
        %v410 = vld [vmem:[%s290 + $0x2b0] sm:$0xff]
        %v411 = vld [vmem:[%s290 + $0x2b8] sm:$0xff]
        %v412 = vld [vmem:[%s290 + $0x2c0] sm:$0xff]
        %v413 = vld [vmem:[%s290 + $0x2c8] sm:$0xff]
        %v414 = vld [vmem:[%s290 + $0x2d0] sm:$0xff]
        %v415 = vld [vmem:[%s290 + $0x2d8] sm:$0xff]
        %v416 = vld [vmem:[%s290 + $0x2e0] sm:$0xff]
        %v417 = vld [vmem:[%s290 + $0x2e8] sm:$0xff]
        %v418 = vld [vmem:[%s290 + $0x2f0] sm:$0xff]
        %v419 = vld [vmem:[%s290 + $0x2f8] sm:$0xff]
        %v420 = vld [vmem:[%s290 + $0x300] sm:$0xff]
        %v421 = vld [vmem:[%s290 + $0x308] sm:$0xff]
        %423 = vset.pattern.permute.xlu0 0
        %424 = vperm.xlu0 %423, %v324
        %v425 = vpop.permute.xlu0 %424
        %428 = vset.pattern.permute.xlu0 0
        %429 = vperm.xlu0 %428, %v325
        %v430 = vpop.permute.xlu0 %429
        %433 = vset.pattern.permute.xlu0 0
        %434 = vperm.xlu0 %433, %v326
        %v435 = vpop.permute.xlu0 %434
        %438 = vset.pattern.permute.xlu0 0
        %439 = vperm.xlu0 %438, %v327
        %v440 = vpop.permute.xlu0 %439
        %443 = vset.pattern.permute.xlu0 0
        %444 = vperm.xlu0 %443, %v328
        %v445 = vpop.permute.xlu0 %444
        %448 = vset.pattern.permute.xlu0 0
        %449 = vperm.xlu0 %448, %v329
        %v450 = vpop.permute.xlu0 %449
        %453 = vset.pattern.permute.xlu0 0
        %454 = vperm.xlu0 %453, %v330
        %v455 = vpop.permute.xlu0 %454
        %458 = vset.pattern.permute.xlu0 0
        %459 = vperm.xlu0 %458, %v331
        %v460 = vpop.permute.xlu0 %459
        %463 = vset.pattern.permute.xlu0 0
        %464 = vperm.xlu0 %463, %v332
        %v465 = vpop.permute.xlu0 %464
        %468 = vset.pattern.permute.xlu0 0
        %469 = vperm.xlu0 %468, %v333
        %v470 = vpop.permute.xlu0 %469
        %473 = vset.pattern.permute.xlu0 0
        %474 = vperm.xlu0 %473, %v334
        %v475 = vpop.permute.xlu0 %474
        %478 = vset.pattern.permute.xlu0 0
        %479 = vperm.xlu0 %478, %v335
        %v480 = vpop.permute.xlu0 %479
        %483 = vset.pattern.permute.xlu0 0
        %484 = vperm.xlu0 %483, %v336
        %v485 = vpop.permute.xlu0 %484
        %488 = vset.pattern.permute.xlu0 0
        %489 = vperm.xlu0 %488, %v337
        %v490 = vpop.permute.xlu0 %489
        %493 = vset.pattern.permute.xlu0 0
        %494 = vperm.xlu0 %493, %v338
        %v495 = vpop.permute.xlu0 %494
        %498 = vset.pattern.permute.xlu0 0
        %499 = vperm.xlu0 %498, %v339
        %v500 = vpop.permute.xlu0 %499
        %503 = vset.pattern.permute.xlu0 0
        %504 = vperm.xlu0 %503, %v340
        %v505 = vpop.permute.xlu0 %504
        %508 = vset.pattern.permute.xlu0 0
        %509 = vperm.xlu0 %508, %v341
        %v510 = vpop.permute.xlu0 %509
        %513 = vset.pattern.permute.xlu0 0
        %514 = vperm.xlu0 %513, %v342
        %v515 = vpop.permute.xlu0 %514
        %518 = vset.pattern.permute.xlu0 0
        %519 = vperm.xlu0 %518, %v343
        %v520 = vpop.permute.xlu0 %519
        %523 = vset.pattern.permute.xlu0 0
        %524 = vperm.xlu0 %523, %v344
        %v525 = vpop.permute.xlu0 %524
        %528 = vset.pattern.permute.xlu0 0
        %529 = vperm.xlu0 %528, %v345
        %v530 = vpop.permute.xlu0 %529
        %533 = vset.pattern.permute.xlu0 0
        %534 = vperm.xlu0 %533, %v346
        %v535 = vpop.permute.xlu0 %534
        %538 = vset.pattern.permute.xlu0 0
        %539 = vperm.xlu0 %538, %v347
        %v540 = vpop.permute.xlu0 %539
        %543 = vset.pattern.permute.xlu0 0
        %544 = vperm.xlu0 %543, %v348
        %v545 = vpop.permute.xlu0 %544
        %548 = vset.pattern.permute.xlu0 0
        %549 = vperm.xlu0 %548, %v349
        %v550 = vpop.permute.xlu0 %549
        %553 = vset.pattern.permute.xlu0 0
        %554 = vperm.xlu0 %553, %v350
        %v555 = vpop.permute.xlu0 %554
        %558 = vset.pattern.permute.xlu0 0
        %559 = vperm.xlu0 %558, %v351
        %v560 = vpop.permute.xlu0 %559
        %563 = vset.pattern.permute.xlu0 0
        %564 = vperm.xlu0 %563, %v352
        %v565 = vpop.permute.xlu0 %564
        %568 = vset.pattern.permute.xlu0 0
        %569 = vperm.xlu0 %568, %v353
        %v570 = vpop.permute.xlu0 %569
        %573 = vset.pattern.permute.xlu0 0
        %574 = vperm.xlu0 %573, %v354
        %v575 = vpop.permute.xlu0 %574
        %578 = vset.pattern.permute.xlu0 0
        %579 = vperm.xlu0 %578, %v355
        %v580 = vpop.permute.xlu0 %579
        %583 = vset.pattern.permute.xlu0 0
        %584 = vperm.xlu0 %583, %v356
        %v585 = vpop.permute.xlu0 %584
        %588 = vset.pattern.permute.xlu0 0
        %589 = vperm.xlu0 %588, %v357
        %v590 = vpop.permute.xlu0 %589
        %593 = vset.pattern.permute.xlu0 0
        %594 = vperm.xlu0 %593, %v358
        %v595 = vpop.permute.xlu0 %594
        %598 = vset.pattern.permute.xlu0 0
        %599 = vperm.xlu0 %598, %v359
        %v600 = vpop.permute.xlu0 %599
        %603 = vset.pattern.permute.xlu0 0
        %604 = vperm.xlu0 %603, %v360
        %v605 = vpop.permute.xlu0 %604
        %608 = vset.pattern.permute.xlu0 0
        %609 = vperm.xlu0 %608, %v361
        %v610 = vpop.permute.xlu0 %609
        %613 = vset.pattern.permute.xlu0 0
        %614 = vperm.xlu0 %613, %v362
        %v615 = vpop.permute.xlu0 %614
        %618 = vset.pattern.permute.xlu0 0
        %619 = vperm.xlu0 %618, %v363
        %v620 = vpop.permute.xlu0 %619
        %623 = vset.pattern.permute.xlu0 0
        %624 = vperm.xlu0 %623, %v364
        %v625 = vpop.permute.xlu0 %624
        %628 = vset.pattern.permute.xlu0 0
        %629 = vperm.xlu0 %628, %v365
        %v630 = vpop.permute.xlu0 %629
        %633 = vset.pattern.permute.xlu0 0
        %634 = vperm.xlu0 %633, %v366
        %v635 = vpop.permute.xlu0 %634
        %638 = vset.pattern.permute.xlu0 0
        %639 = vperm.xlu0 %638, %v367
        %v640 = vpop.permute.xlu0 %639
        %643 = vset.pattern.permute.xlu0 0
        %644 = vperm.xlu0 %643, %v368
        %v645 = vpop.permute.xlu0 %644
        %648 = vset.pattern.permute.xlu0 0
        %649 = vperm.xlu0 %648, %v369
        %v650 = vpop.permute.xlu0 %649
        %653 = vset.pattern.permute.xlu0 0
        %654 = vperm.xlu0 %653, %v370
        %v655 = vpop.permute.xlu0 %654
        %658 = vset.pattern.permute.xlu0 0
        %659 = vperm.xlu0 %658, %v371
        %v660 = vpop.permute.xlu0 %659
        %663 = vset.pattern.permute.xlu0 0
        %664 = vperm.xlu0 %663, %v372
        %v665 = vpop.permute.xlu0 %664
        %668 = vset.pattern.permute.xlu0 0
        %669 = vperm.xlu0 %668, %v373
        %v670 = vpop.permute.xlu0 %669
        %673 = vset.pattern.permute.xlu0 0
        %674 = vperm.xlu0 %673, %v374
        %v675 = vpop.permute.xlu0 %674
        %678 = vset.pattern.permute.xlu0 0
        %679 = vperm.xlu0 %678, %v375
        %v680 = vpop.permute.xlu0 %679
        %683 = vset.pattern.permute.xlu0 0
        %684 = vperm.xlu0 %683, %v376
        %v685 = vpop.permute.xlu0 %684
        %688 = vset.pattern.permute.xlu0 0
        %689 = vperm.xlu0 %688, %v377
        %v690 = vpop.permute.xlu0 %689
        %693 = vset.pattern.permute.xlu0 0
        %694 = vperm.xlu0 %693, %v378
        %v695 = vpop.permute.xlu0 %694
        %698 = vset.pattern.permute.xlu0 0
        %699 = vperm.xlu0 %698, %v379
        %v700 = vpop.permute.xlu0 %699
        %703 = vset.pattern.permute.xlu0 0
        %704 = vperm.xlu0 %703, %v380
        %v705 = vpop.permute.xlu0 %704
        %708 = vset.pattern.permute.xlu0 0
        %709 = vperm.xlu0 %708, %v381
        %v710 = vpop.permute.xlu0 %709
        %713 = vset.pattern.permute.xlu0 0
        %714 = vperm.xlu0 %713, %v382
        %v715 = vpop.permute.xlu0 %714
        %718 = vset.pattern.permute.xlu0 0
        %719 = vperm.xlu0 %718, %v383
        %v720 = vpop.permute.xlu0 %719
        %723 = vset.pattern.permute.xlu0 0
        %724 = vperm.xlu0 %723, %v384
        %v725 = vpop.permute.xlu0 %724
        %728 = vset.pattern.permute.xlu0 0
        %729 = vperm.xlu0 %728, %v385
        %v730 = vpop.permute.xlu0 %729
        %733 = vset.pattern.permute.xlu0 0
        %734 = vperm.xlu0 %733, %v386
        %v735 = vpop.permute.xlu0 %734
        %738 = vset.pattern.permute.xlu0 0
        %739 = vperm.xlu0 %738, %v387
        %v740 = vpop.permute.xlu0 %739
        %743 = vset.pattern.permute.xlu0 0
        %744 = vperm.xlu0 %743, %v388
        %v745 = vpop.permute.xlu0 %744
        %748 = vset.pattern.permute.xlu0 0
        %749 = vperm.xlu0 %748, %v389
        %v750 = vpop.permute.xlu0 %749
        %753 = vset.pattern.permute.xlu0 0
        %754 = vperm.xlu0 %753, %v390
        %v755 = vpop.permute.xlu0 %754
        %758 = vset.pattern.permute.xlu0 0
        %759 = vperm.xlu0 %758, %v391
        %v760 = vpop.permute.xlu0 %759
        %763 = vset.pattern.permute.xlu0 0
        %764 = vperm.xlu0 %763, %v392
        %v765 = vpop.permute.xlu0 %764
        %768 = vset.pattern.permute.xlu0 0
        %769 = vperm.xlu0 %768, %v393
        %v770 = vpop.permute.xlu0 %769
        %773 = vset.pattern.permute.xlu0 0
        %774 = vperm.xlu0 %773, %v394
        %v775 = vpop.permute.xlu0 %774
        %778 = vset.pattern.permute.xlu0 0
        %779 = vperm.xlu0 %778, %v395
        %v780 = vpop.permute.xlu0 %779
        %783 = vset.pattern.permute.xlu0 0
        %784 = vperm.xlu0 %783, %v396
        %v785 = vpop.permute.xlu0 %784
        %788 = vset.pattern.permute.xlu0 0
        %789 = vperm.xlu0 %788, %v397
        %v790 = vpop.permute.xlu0 %789
        %793 = vset.pattern.permute.xlu0 0
        %794 = vperm.xlu0 %793, %v398
        %v795 = vpop.permute.xlu0 %794
        %798 = vset.pattern.permute.xlu0 0
        %799 = vperm.xlu0 %798, %v399
        %v800 = vpop.permute.xlu0 %799
        %803 = vset.pattern.permute.xlu0 0
        %804 = vperm.xlu0 %803, %v400
        %v805 = vpop.permute.xlu0 %804
        %808 = vset.pattern.permute.xlu0 0
        %809 = vperm.xlu0 %808, %v401
        %v810 = vpop.permute.xlu0 %809
        %813 = vset.pattern.permute.xlu0 0
        %814 = vperm.xlu0 %813, %v402
        %v815 = vpop.permute.xlu0 %814
        %818 = vset.pattern.permute.xlu0 0
        %819 = vperm.xlu0 %818, %v403
        %v820 = vpop.permute.xlu0 %819
        %823 = vset.pattern.permute.xlu0 0
        %824 = vperm.xlu0 %823, %v404
        %v825 = vpop.permute.xlu0 %824
        %828 = vset.pattern.permute.xlu0 0
        %829 = vperm.xlu0 %828, %v405
        %v830 = vpop.permute.xlu0 %829
        %833 = vset.pattern.permute.xlu0 0
        %834 = vperm.xlu0 %833, %v406
        %v835 = vpop.permute.xlu0 %834
        %838 = vset.pattern.permute.xlu0 0
        %839 = vperm.xlu0 %838, %v407
        %v840 = vpop.permute.xlu0 %839
        %843 = vset.pattern.permute.xlu0 0
        %844 = vperm.xlu0 %843, %v408
        %v845 = vpop.permute.xlu0 %844
        %848 = vset.pattern.permute.xlu0 0
        %849 = vperm.xlu0 %848, %v409
        %v850 = vpop.permute.xlu0 %849
        %853 = vset.pattern.permute.xlu0 0
        %854 = vperm.xlu0 %853, %v410
        %v855 = vpop.permute.xlu0 %854
        %858 = vset.pattern.permute.xlu0 0
        %859 = vperm.xlu0 %858, %v411
        %v860 = vpop.permute.xlu0 %859
        %863 = vset.pattern.permute.xlu0 0
        %864 = vperm.xlu0 %863, %v412
        %v865 = vpop.permute.xlu0 %864
        %868 = vset.pattern.permute.xlu0 0
        %869 = vperm.xlu0 %868, %v413
        %v870 = vpop.permute.xlu0 %869
        %873 = vset.pattern.permute.xlu0 0
        %874 = vperm.xlu0 %873, %v414
        %v875 = vpop.permute.xlu0 %874
        %878 = vset.pattern.permute.xlu0 0
        %879 = vperm.xlu0 %878, %v415
        %v880 = vpop.permute.xlu0 %879
        %883 = vset.pattern.permute.xlu0 0
        %884 = vperm.xlu0 %883, %v416
        %v885 = vpop.permute.xlu0 %884
        %888 = vset.pattern.permute.xlu0 0
        %889 = vperm.xlu0 %888, %v417
        %v890 = vpop.permute.xlu0 %889
        %893 = vset.pattern.permute.xlu0 0
        %894 = vperm.xlu0 %893, %v418
        %v895 = vpop.permute.xlu0 %894
        %898 = vset.pattern.permute.xlu0 0
        %899 = vperm.xlu0 %898, %v419
        %v900 = vpop.permute.xlu0 %899
        %903 = vset.pattern.permute.xlu0 0
        %904 = vperm.xlu0 %903, %v420
        %v905 = vpop.permute.xlu0 %904
        %908 = vset.pattern.permute.xlu0 0
        %909 = vperm.xlu0 %908, %v421
        %v910 = vpop.permute.xlu0 %909
        %v912 = vlaneseq
        %v913 = vshrl.u32 %v912, 7
        %v914 = vsub.s32 0, %v913
        %v915 = vrot.slane %v322, %v914
        %v916 = vsub.f32 %v425, %v915
        %v917 = vsub.f32 %v430, %v915
        %v918 = vsub.f32 %v435, %v915
        %v919 = vsub.f32 %v440, %v915
        %v920 = vsub.f32 %v445, %v915
        %v921 = vsub.f32 %v450, %v915
        %v922 = vsub.f32 %v455, %v915
        %v923 = vsub.f32 %v460, %v915
        %v924 = vsub.f32 %v465, %v915
        %v925 = vsub.f32 %v470, %v915
        %v926 = vsub.f32 %v475, %v915
        %v927 = vsub.f32 %v480, %v915
        %v928 = vsub.f32 %v485, %v915
        %v929 = vsub.f32 %v490, %v915
        %v930 = vsub.f32 %v495, %v915
        %v931 = vsub.f32 %v500, %v915
        %v932 = vsub.f32 %v505, %v915
        %v933 = vsub.f32 %v510, %v915
        %v934 = vsub.f32 %v515, %v915
        %v935 = vsub.f32 %v520, %v915
        %v936 = vsub.f32 %v525, %v915
        %v937 = vsub.f32 %v530, %v915
        %v938 = vsub.f32 %v535, %v915
        %v939 = vsub.f32 %v540, %v915
        %v940 = vsub.f32 %v545, %v915
        %v941 = vsub.f32 %v550, %v915
        %v942 = vsub.f32 %v555, %v915
        %v943 = vsub.f32 %v560, %v915
        %v944 = vsub.f32 %v565, %v915
        %v945 = vsub.f32 %v570, %v915
        %v946 = vsub.f32 %v575, %v915
        %v947 = vsub.f32 %v580, %v915
        %v948 = vsub.f32 %v585, %v915
        %v949 = vsub.f32 %v590, %v915
        %v950 = vsub.f32 %v595, %v915
        %v951 = vsub.f32 %v600, %v915
        %v952 = vsub.f32 %v605, %v915
        %v953 = vsub.f32 %v610, %v915
        %v954 = vsub.f32 %v615, %v915
        %v955 = vsub.f32 %v620, %v915
        %v956 = vsub.f32 %v625, %v915
        %v957 = vsub.f32 %v630, %v915
        %v958 = vsub.f32 %v635, %v915
        %v959 = vsub.f32 %v640, %v915
        %v960 = vsub.f32 %v645, %v915
        %v961 = vsub.f32 %v650, %v915
        %v962 = vsub.f32 %v655, %v915
        %v963 = vsub.f32 %v660, %v915
        %v964 = vsub.f32 %v665, %v915
        %v965 = vsub.f32 %v670, %v915
        %v966 = vsub.f32 %v675, %v915
        %v967 = vsub.f32 %v680, %v915
        %v968 = vsub.f32 %v685, %v915
        %v969 = vsub.f32 %v690, %v915
        %v970 = vsub.f32 %v695, %v915
        %v971 = vsub.f32 %v700, %v915
        %v972 = vsub.f32 %v705, %v915
        %v973 = vsub.f32 %v710, %v915
        %v974 = vsub.f32 %v715, %v915
        %v975 = vsub.f32 %v720, %v915
        %v976 = vsub.f32 %v725, %v915
        %v977 = vsub.f32 %v730, %v915
        %v978 = vsub.f32 %v735, %v915
        %v979 = vsub.f32 %v740, %v915
        %v980 = vsub.f32 %v745, %v915
        %v981 = vsub.f32 %v750, %v915
        %v982 = vsub.f32 %v755, %v915
        %v983 = vsub.f32 %v760, %v915
        %v984 = vsub.f32 %v765, %v915
        %v985 = vsub.f32 %v770, %v915
        %v986 = vsub.f32 %v775, %v915
        %v987 = vsub.f32 %v780, %v915
        %v988 = vsub.f32 %v785, %v915
        %v989 = vsub.f32 %v790, %v915
        %v990 = vsub.f32 %v795, %v915
        %v991 = vsub.f32 %v800, %v915
        %v992 = vsub.f32 %v805, %v915
        %v993 = vsub.f32 %v810, %v915
        %v994 = vsub.f32 %v815, %v915
        %v995 = vsub.f32 %v820, %v915
        %v996 = vsub.f32 %v825, %v915
        %v997 = vsub.f32 %v830, %v915
        %v998 = vsub.f32 %v835, %v915
        %v999 = vsub.f32 %v840, %v915
        %v1000 = vsub.f32 %v845, %v915
        %v1001 = vsub.f32 %v850, %v915
        %v1002 = vsub.f32 %v855, %v915
        %v1003 = vsub.f32 %v860, %v915
        %v1004 = vsub.f32 %v865, %v915
        %v1005 = vsub.f32 %v870, %v915
        %v1006 = vsub.f32 %v875, %v915
        %v1007 = vsub.f32 %v880, %v915
        %v1008 = vsub.f32 %v885, %v915
        %v1009 = vsub.f32 %v890, %v915
        %v1010 = vsub.f32 %v895, %v915
        %v1011 = vsub.f32 %v900, %v915
        %v1012 = vsub.f32 %v905, %v915
        %v1013 = vsub.f32 %v910, %v915
        %v1014 = vand.u32 2147483647, %v916
        %v1015 = vand.u32 2147483647, %v917
        %v1016 = vand.u32 2147483647, %v918
        %v1017 = vand.u32 2147483647, %v919
        %v1018 = vand.u32 2147483647, %v920
        %v1019 = vand.u32 2147483647, %v921
        %v1020 = vand.u32 2147483647, %v922
        %v1021 = vand.u32 2147483647, %v923
        %v1022 = vand.u32 2147483647, %v924
        %v1023 = vand.u32 2147483647, %v925
        %v1024 = vand.u32 2147483647, %v926
        %v1025 = vand.u32 2147483647, %v927
        %v1026 = vand.u32 2147483647, %v928
        %v1027 = vand.u32 2147483647, %v929
        %v1028 = vand.u32 2147483647, %v930
        %v1029 = vand.u32 2147483647, %v931
        %v1030 = vand.u32 2147483647, %v932
        %v1031 = vand.u32 2147483647, %v933
        %v1032 = vand.u32 2147483647, %v934
        %v1033 = vand.u32 2147483647, %v935
        %v1034 = vand.u32 2147483647, %v936
        %v1035 = vand.u32 2147483647, %v937
        %v1036 = vand.u32 2147483647, %v938
        %v1037 = vand.u32 2147483647, %v939
        %v1038 = vand.u32 2147483647, %v940
        %v1039 = vand.u32 2147483647, %v941
        %v1040 = vand.u32 2147483647, %v942
        %v1041 = vand.u32 2147483647, %v943
        %v1042 = vand.u32 2147483647, %v944
        %v1043 = vand.u32 2147483647, %v945
        %v1044 = vand.u32 2147483647, %v946
        %v1045 = vand.u32 2147483647, %v947
        %v1046 = vand.u32 2147483647, %v948
        %v1047 = vand.u32 2147483647, %v949
        %v1048 = vand.u32 2147483647, %v950
        %v1049 = vand.u32 2147483647, %v951
        %v1050 = vand.u32 2147483647, %v952
        %v1051 = vand.u32 2147483647, %v953
        %v1052 = vand.u32 2147483647, %v954
        %v1053 = vand.u32 2147483647, %v955
        %v1054 = vand.u32 2147483647, %v956
        %v1055 = vand.u32 2147483647, %v957
        %v1056 = vand.u32 2147483647, %v958
        %v1057 = vand.u32 2147483647, %v959
        %v1058 = vand.u32 2147483647, %v960
        %v1059 = vand.u32 2147483647, %v961
        %v1060 = vand.u32 2147483647, %v962
        %v1061 = vand.u32 2147483647, %v963
        %v1062 = vand.u32 2147483647, %v964
        %v1063 = vand.u32 2147483647, %v965
        %v1064 = vand.u32 2147483647, %v966
        %v1065 = vand.u32 2147483647, %v967
        %v1066 = vand.u32 2147483647, %v968
        %v1067 = vand.u32 2147483647, %v969
        %v1068 = vand.u32 2147483647, %v970
        %v1069 = vand.u32 2147483647, %v971
        %v1070 = vand.u32 2147483647, %v972
        %v1071 = vand.u32 2147483647, %v973
        %v1072 = vand.u32 2147483647, %v974
        %v1073 = vand.u32 2147483647, %v975
        %v1074 = vand.u32 2147483647, %v976
        %v1075 = vand.u32 2147483647, %v977
        %v1076 = vand.u32 2147483647, %v978
        %v1077 = vand.u32 2147483647, %v979
        %v1078 = vand.u32 2147483647, %v980
        %v1079 = vand.u32 2147483647, %v981
        %v1080 = vand.u32 2147483647, %v982
        %v1081 = vand.u32 2147483647, %v983
        %v1082 = vand.u32 2147483647, %v984
        %v1083 = vand.u32 2147483647, %v985
        %v1084 = vand.u32 2147483647, %v986
        %v1085 = vand.u32 2147483647, %v987
        %v1086 = vand.u32 2147483647, %v988
        %v1087 = vand.u32 2147483647, %v989
        %v1088 = vand.u32 2147483647, %v990
        %v1089 = vand.u32 2147483647, %v991
        %v1090 = vand.u32 2147483647, %v992
        %v1091 = vand.u32 2147483647, %v993
        %v1092 = vand.u32 2147483647, %v994
        %v1093 = vand.u32 2147483647, %v995
        %v1094 = vand.u32 2147483647, %v996
        %v1095 = vand.u32 2147483647, %v997
        %v1096 = vand.u32 2147483647, %v998
        %v1097 = vand.u32 2147483647, %v999
        %v1098 = vand.u32 2147483647, %v1000
        %v1099 = vand.u32 2147483647, %v1001
        %v1100 = vand.u32 2147483647, %v1002
        %v1101 = vand.u32 2147483647, %v1003
        %v1102 = vand.u32 2147483647, %v1004
        %v1103 = vand.u32 2147483647, %v1005
        %v1104 = vand.u32 2147483647, %v1006
        %v1105 = vand.u32 2147483647, %v1007
        %v1106 = vand.u32 2147483647, %v1008
        %v1107 = vand.u32 2147483647, %v1009
        %v1108 = vand.u32 2147483647, %v1010
        %v1109 = vand.u32 2147483647, %v1011
        %v1110 = vand.u32 2147483647, %v1012
        %v1111 = vand.u32 2147483647, %v1013
        %v1112 = vsub.f32 1.0, %v1014
        %v1113 = vsub.f32 1.0, %v1015
        %v1114 = vsub.f32 1.0, %v1016
        %v1115 = vsub.f32 1.0, %v1017
        %v1116 = vsub.f32 1.0, %v1018
        %v1117 = vsub.f32 1.0, %v1019
        %v1118 = vsub.f32 1.0, %v1020
        %v1119 = vsub.f32 1.0, %v1021
        %v1120 = vsub.f32 1.0, %v1022
        %v1121 = vsub.f32 1.0, %v1023
        %v1122 = vsub.f32 1.0, %v1024
        %v1123 = vsub.f32 1.0, %v1025
        %v1124 = vsub.f32 1.0, %v1026
        %v1125 = vsub.f32 1.0, %v1027
        %v1126 = vsub.f32 1.0, %v1028
        %v1127 = vsub.f32 1.0, %v1029
        %v1128 = vsub.f32 1.0, %v1030
        %v1129 = vsub.f32 1.0, %v1031
        %v1130 = vsub.f32 1.0, %v1032
        %v1131 = vsub.f32 1.0, %v1033
        %v1132 = vsub.f32 1.0, %v1034
        %v1133 = vsub.f32 1.0, %v1035
        %v1134 = vsub.f32 1.0, %v1036
        %v1135 = vsub.f32 1.0, %v1037
        %v1136 = vsub.f32 1.0, %v1038
        %v1137 = vsub.f32 1.0, %v1039
        %v1138 = vsub.f32 1.0, %v1040
        %v1139 = vsub.f32 1.0, %v1041
        %v1140 = vsub.f32 1.0, %v1042
        %v1141 = vsub.f32 1.0, %v1043
        %v1142 = vsub.f32 1.0, %v1044
        %v1143 = vsub.f32 1.0, %v1045
        %v1144 = vsub.f32 1.0, %v1046
        %v1145 = vsub.f32 1.0, %v1047
        %v1146 = vsub.f32 1.0, %v1048
        %v1147 = vsub.f32 1.0, %v1049
        %v1148 = vsub.f32 1.0, %v1050
        %v1149 = vsub.f32 1.0, %v1051
        %v1150 = vsub.f32 1.0, %v1052
        %v1151 = vsub.f32 1.0, %v1053
        %v1152 = vsub.f32 1.0, %v1054
        %v1153 = vsub.f32 1.0, %v1055
        %v1154 = vsub.f32 1.0, %v1056
        %v1155 = vsub.f32 1.0, %v1057
        %v1156 = vsub.f32 1.0, %v1058
        %v1157 = vsub.f32 1.0, %v1059
        %v1158 = vsub.f32 1.0, %v1060
        %v1159 = vsub.f32 1.0, %v1061
        %v1160 = vsub.f32 1.0, %v1062
        %v1161 = vsub.f32 1.0, %v1063
        %v1162 = vsub.f32 1.0, %v1064
        %v1163 = vsub.f32 1.0, %v1065
        %v1164 = vsub.f32 1.0, %v1066
        %v1165 = vsub.f32 1.0, %v1067
        %v1166 = vsub.f32 1.0, %v1068
        %v1167 = vsub.f32 1.0, %v1069
        %v1168 = vsub.f32 1.0, %v1070
        %v1169 = vsub.f32 1.0, %v1071
        %v1170 = vsub.f32 1.0, %v1072
        %v1171 = vsub.f32 1.0, %v1073
        %v1172 = vsub.f32 1.0, %v1074
        %v1173 = vsub.f32 1.0, %v1075
        %v1174 = vsub.f32 1.0, %v1076
        %v1175 = vsub.f32 1.0, %v1077
        %v1176 = vsub.f32 1.0, %v1078
        %v1177 = vsub.f32 1.0, %v1079
        %v1178 = vsub.f32 1.0, %v1080
        %v1179 = vsub.f32 1.0, %v1081
        %v1180 = vsub.f32 1.0, %v1082
        %v1181 = vsub.f32 1.0, %v1083
        %v1182 = vsub.f32 1.0, %v1084
        %v1183 = vsub.f32 1.0, %v1085
        %v1184 = vsub.f32 1.0, %v1086
        %v1185 = vsub.f32 1.0, %v1087
        %v1186 = vsub.f32 1.0, %v1088
        %v1187 = vsub.f32 1.0, %v1089
        %v1188 = vsub.f32 1.0, %v1090
        %v1189 = vsub.f32 1.0, %v1091
        %v1190 = vsub.f32 1.0, %v1092
        %v1191 = vsub.f32 1.0, %v1093
        %v1192 = vsub.f32 1.0, %v1094
        %v1193 = vsub.f32 1.0, %v1095
        %v1194 = vsub.f32 1.0, %v1096
        %v1195 = vsub.f32 1.0, %v1097
        %v1196 = vsub.f32 1.0, %v1098
        %v1197 = vsub.f32 1.0, %v1099
        %v1198 = vsub.f32 1.0, %v1100
        %v1199 = vsub.f32 1.0, %v1101
        %v1200 = vsub.f32 1.0, %v1102
        %v1201 = vsub.f32 1.0, %v1103
        %v1202 = vsub.f32 1.0, %v1104
        %v1203 = vsub.f32 1.0, %v1105
        %v1204 = vsub.f32 1.0, %v1106
        %v1205 = vsub.f32 1.0, %v1107
        %v1206 = vsub.f32 1.0, %v1108
        %v1207 = vsub.f32 1.0, %v1109
        %v1208 = vsub.f32 1.0, %v1110
        %v1209 = vsub.f32 1.0, %v1111
        %v1210 = vmax.f32 %v1112, 0.0
        %v1211 = vmax.f32 %v1113, 0.0
        %v1212 = vmax.f32 %v1114, 0.0
        %v1213 = vmax.f32 %v1115, 0.0
        %v1214 = vmax.f32 %v1116, 0.0
        %v1215 = vmax.f32 %v1117, 0.0
        %v1216 = vmax.f32 %v1118, 0.0
        %v1217 = vmax.f32 %v1119, 0.0
        %v1218 = vmax.f32 %v1120, 0.0
        %v1219 = vmax.f32 %v1121, 0.0
        %v1220 = vmax.f32 %v1122, 0.0
        %v1221 = vmax.f32 %v1123, 0.0
        %v1222 = vmax.f32 %v1124, 0.0
        %v1223 = vmax.f32 %v1125, 0.0
        %v1224 = vmax.f32 %v1126, 0.0
        %v1225 = vmax.f32 %v1127, 0.0
        %v1226 = vmax.f32 %v1128, 0.0
        %v1227 = vmax.f32 %v1129, 0.0
        %v1228 = vmax.f32 %v1130, 0.0
        %v1229 = vmax.f32 %v1131, 0.0
        %v1230 = vmax.f32 %v1132, 0.0
        %v1231 = vmax.f32 %v1133, 0.0
        %v1232 = vmax.f32 %v1134, 0.0
        %v1233 = vmax.f32 %v1135, 0.0
        %v1234 = vmax.f32 %v1136, 0.0
        %v1235 = vmax.f32 %v1137, 0.0
        %v1236 = vmax.f32 %v1138, 0.0
        %v1237 = vmax.f32 %v1139, 0.0
        %v1238 = vmax.f32 %v1140, 0.0
        %v1239 = vmax.f32 %v1141, 0.0
        %v1240 = vmax.f32 %v1142, 0.0
        %v1241 = vmax.f32 %v1143, 0.0
        %v1242 = vmax.f32 %v1144, 0.0
        %v1243 = vmax.f32 %v1145, 0.0
        %v1244 = vmax.f32 %v1146, 0.0
        %v1245 = vmax.f32 %v1147, 0.0
        %v1246 = vmax.f32 %v1148, 0.0
        %v1247 = vmax.f32 %v1149, 0.0
        %v1248 = vmax.f32 %v1150, 0.0
        %v1249 = vmax.f32 %v1151, 0.0
        %v1250 = vmax.f32 %v1152, 0.0
        %v1251 = vmax.f32 %v1153, 0.0
        %v1252 = vmax.f32 %v1154, 0.0
        %v1253 = vmax.f32 %v1155, 0.0
        %v1254 = vmax.f32 %v1156, 0.0
        %v1255 = vmax.f32 %v1157, 0.0
        %v1256 = vmax.f32 %v1158, 0.0
        %v1257 = vmax.f32 %v1159, 0.0
        %v1258 = vmax.f32 %v1160, 0.0
        %v1259 = vmax.f32 %v1161, 0.0
        %v1260 = vmax.f32 %v1162, 0.0
        %v1261 = vmax.f32 %v1163, 0.0
        %v1262 = vmax.f32 %v1164, 0.0
        %v1263 = vmax.f32 %v1165, 0.0
        %v1264 = vmax.f32 %v1166, 0.0
        %v1265 = vmax.f32 %v1167, 0.0
        %v1266 = vmax.f32 %v1168, 0.0
        %v1267 = vmax.f32 %v1169, 0.0
        %v1268 = vmax.f32 %v1170, 0.0
        %v1269 = vmax.f32 %v1171, 0.0
        %v1270 = vmax.f32 %v1172, 0.0
        %v1271 = vmax.f32 %v1173, 0.0
        %v1272 = vmax.f32 %v1174, 0.0
        %v1273 = vmax.f32 %v1175, 0.0
        %v1274 = vmax.f32 %v1176, 0.0
        %v1275 = vmax.f32 %v1177, 0.0
        %v1276 = vmax.f32 %v1178, 0.0
        %v1277 = vmax.f32 %v1179, 0.0
        %v1278 = vmax.f32 %v1180, 0.0
        %v1279 = vmax.f32 %v1181, 0.0
        %v1280 = vmax.f32 %v1182, 0.0
        %v1281 = vmax.f32 %v1183, 0.0
        %v1282 = vmax.f32 %v1184, 0.0
        %v1283 = vmax.f32 %v1185, 0.0
        %v1284 = vmax.f32 %v1186, 0.0
        %v1285 = vmax.f32 %v1187, 0.0
        %v1286 = vmax.f32 %v1188, 0.0
        %v1287 = vmax.f32 %v1189, 0.0
        %v1288 = vmax.f32 %v1190, 0.0
        %v1289 = vmax.f32 %v1191, 0.0
        %v1290 = vmax.f32 %v1192, 0.0
        %v1291 = vmax.f32 %v1193, 0.0
        %v1292 = vmax.f32 %v1194, 0.0
        %v1293 = vmax.f32 %v1195, 0.0
        %v1294 = vmax.f32 %v1196, 0.0
        %v1295 = vmax.f32 %v1197, 0.0
        %v1296 = vmax.f32 %v1198, 0.0
        %v1297 = vmax.f32 %v1199, 0.0
        %v1298 = vmax.f32 %v1200, 0.0
        %v1299 = vmax.f32 %v1201, 0.0
        %v1300 = vmax.f32 %v1202, 0.0
        %v1301 = vmax.f32 %v1203, 0.0
        %v1302 = vmax.f32 %v1204, 0.0
        %v1303 = vmax.f32 %v1205, 0.0
        %v1304 = vmax.f32 %v1206, 0.0
        %v1305 = vmax.f32 %v1207, 0.0
        %v1306 = vmax.f32 %v1208, 0.0
        %v1307 = vmax.f32 %v1209, 0.0
        %1308 = vset.pattern.permute.xlu0 4
        %1309 = vperm.xlu0 %1308, %v324
        %v1310 = vpop.permute.xlu0 %1309
        %1312 = vset.pattern.permute.xlu0 4
        %1313 = vperm.xlu0 %1312, %v325
        %v1314 = vpop.permute.xlu0 %1313
        %1316 = vset.pattern.permute.xlu0 4
        %1317 = vperm.xlu0 %1316, %v326
        %v1318 = vpop.permute.xlu0 %1317
        %1320 = vset.pattern.permute.xlu0 4
        %1321 = vperm.xlu0 %1320, %v327
        %v1322 = vpop.permute.xlu0 %1321
        %1324 = vset.pattern.permute.xlu0 4
        %1325 = vperm.xlu0 %1324, %v328
        %v1326 = vpop.permute.xlu0 %1325
        %1328 = vset.pattern.permute.xlu0 4
        %1329 = vperm.xlu0 %1328, %v329
        %v1330 = vpop.permute.xlu0 %1329
        %1332 = vset.pattern.permute.xlu0 4
        %1333 = vperm.xlu0 %1332, %v330
        %v1334 = vpop.permute.xlu0 %1333
        %1336 = vset.pattern.permute.xlu0 4
        %1337 = vperm.xlu0 %1336, %v331
        %v1338 = vpop.permute.xlu0 %1337
        %1340 = vset.pattern.permute.xlu0 4
        %1341 = vperm.xlu0 %1340, %v332
        %v1342 = vpop.permute.xlu0 %1341
        %1344 = vset.pattern.permute.xlu0 4
        %1345 = vperm.xlu0 %1344, %v333
        %v1346 = vpop.permute.xlu0 %1345
        %1348 = vset.pattern.permute.xlu0 4
        %1349 = vperm.xlu0 %1348, %v334
        %v1350 = vpop.permute.xlu0 %1349
        %1352 = vset.pattern.permute.xlu0 4
        %1353 = vperm.xlu0 %1352, %v335
        %v1354 = vpop.permute.xlu0 %1353
        %1356 = vset.pattern.permute.xlu0 4
        %1357 = vperm.xlu0 %1356, %v336
        %v1358 = vpop.permute.xlu0 %1357
        %1360 = vset.pattern.permute.xlu0 4
        %1361 = vperm.xlu0 %1360, %v337
        %v1362 = vpop.permute.xlu0 %1361
        %1364 = vset.pattern.permute.xlu0 4
        %1365 = vperm.xlu0 %1364, %v338
        %v1366 = vpop.permute.xlu0 %1365
        %1368 = vset.pattern.permute.xlu0 4
        %1369 = vperm.xlu0 %1368, %v339
        %v1370 = vpop.permute.xlu0 %1369
        %1372 = vset.pattern.permute.xlu0 4
        %1373 = vperm.xlu0 %1372, %v340
        %v1374 = vpop.permute.xlu0 %1373
        %1376 = vset.pattern.permute.xlu0 4
        %1377 = vperm.xlu0 %1376, %v341
        %v1378 = vpop.permute.xlu0 %1377
        %1380 = vset.pattern.permute.xlu0 4
        %1381 = vperm.xlu0 %1380, %v342
        %v1382 = vpop.permute.xlu0 %1381
        %1384 = vset.pattern.permute.xlu0 4
        %1385 = vperm.xlu0 %1384, %v343
        %v1386 = vpop.permute.xlu0 %1385
        %1388 = vset.pattern.permute.xlu0 4
        %1389 = vperm.xlu0 %1388, %v344
        %v1390 = vpop.permute.xlu0 %1389
        %1392 = vset.pattern.permute.xlu0 4
        %1393 = vperm.xlu0 %1392, %v345
        %v1394 = vpop.permute.xlu0 %1393
        %1396 = vset.pattern.permute.xlu0 4
        %1397 = vperm.xlu0 %1396, %v346
        %v1398 = vpop.permute.xlu0 %1397
        %1400 = vset.pattern.permute.xlu0 4
        %1401 = vperm.xlu0 %1400, %v347
        %v1402 = vpop.permute.xlu0 %1401
        %1404 = vset.pattern.permute.xlu0 4
        %1405 = vperm.xlu0 %1404, %v348
        %v1406 = vpop.permute.xlu0 %1405
        %1408 = vset.pattern.permute.xlu0 4
        %1409 = vperm.xlu0 %1408, %v349
        %v1410 = vpop.permute.xlu0 %1409
        %1412 = vset.pattern.permute.xlu0 4
        %1413 = vperm.xlu0 %1412, %v350
        %v1414 = vpop.permute.xlu0 %1413
        %1416 = vset.pattern.permute.xlu0 4
        %1417 = vperm.xlu0 %1416, %v351
        %v1418 = vpop.permute.xlu0 %1417
        %1420 = vset.pattern.permute.xlu0 4
        %1421 = vperm.xlu0 %1420, %v352
        %v1422 = vpop.permute.xlu0 %1421
        %1424 = vset.pattern.permute.xlu0 4
        %1425 = vperm.xlu0 %1424, %v353
        %v1426 = vpop.permute.xlu0 %1425
        %1428 = vset.pattern.permute.xlu0 4
        %1429 = vperm.xlu0 %1428, %v354
        %v1430 = vpop.permute.xlu0 %1429
        %1432 = vset.pattern.permute.xlu0 4
        %1433 = vperm.xlu0 %1432, %v355
        %v1434 = vpop.permute.xlu0 %1433
        %1436 = vset.pattern.permute.xlu0 4
        %1437 = vperm.xlu0 %1436, %v356
        %v1438 = vpop.permute.xlu0 %1437
        %1440 = vset.pattern.permute.xlu0 4
        %1441 = vperm.xlu0 %1440, %v357
        %v1442 = vpop.permute.xlu0 %1441
        %1444 = vset.pattern.permute.xlu0 4
        %1445 = vperm.xlu0 %1444, %v358
        %v1446 = vpop.permute.xlu0 %1445
        %1448 = vset.pattern.permute.xlu0 4
        %1449 = vperm.xlu0 %1448, %v359
        %v1450 = vpop.permute.xlu0 %1449
        %1452 = vset.pattern.permute.xlu0 4
        %1453 = vperm.xlu0 %1452, %v360
        %v1454 = vpop.permute.xlu0 %1453
        %1456 = vset.pattern.permute.xlu0 4
        %1457 = vperm.xlu0 %1456, %v361
        %v1458 = vpop.permute.xlu0 %1457
        %1460 = vset.pattern.permute.xlu0 4
        %1461 = vperm.xlu0 %1460, %v362
        %v1462 = vpop.permute.xlu0 %1461
        %1464 = vset.pattern.permute.xlu0 4
        %1465 = vperm.xlu0 %1464, %v363
        %v1466 = vpop.permute.xlu0 %1465
        %1468 = vset.pattern.permute.xlu0 4
        %1469 = vperm.xlu0 %1468, %v364
        %v1470 = vpop.permute.xlu0 %1469
        %1472 = vset.pattern.permute.xlu0 4
        %1473 = vperm.xlu0 %1472, %v365
        %v1474 = vpop.permute.xlu0 %1473
        %1476 = vset.pattern.permute.xlu0 4
        %1477 = vperm.xlu0 %1476, %v366
        %v1478 = vpop.permute.xlu0 %1477
        %1480 = vset.pattern.permute.xlu0 4
        %1481 = vperm.xlu0 %1480, %v367
        %v1482 = vpop.permute.xlu0 %1481
        %1484 = vset.pattern.permute.xlu0 4
        %1485 = vperm.xlu0 %1484, %v368
        %v1486 = vpop.permute.xlu0 %1485
        %1488 = vset.pattern.permute.xlu0 4
        %1489 = vperm.xlu0 %1488, %v369
        %v1490 = vpop.permute.xlu0 %1489
        %1492 = vset.pattern.permute.xlu0 4
        %1493 = vperm.xlu0 %1492, %v370
        %v1494 = vpop.permute.xlu0 %1493
        %1496 = vset.pattern.permute.xlu0 4
        %1497 = vperm.xlu0 %1496, %v371
        %v1498 = vpop.permute.xlu0 %1497
        %1500 = vset.pattern.permute.xlu0 4
        %1501 = vperm.xlu0 %1500, %v372
        %v1502 = vpop.permute.xlu0 %1501
        %1504 = vset.pattern.permute.xlu0 4
        %1505 = vperm.xlu0 %1504, %v373
        %v1506 = vpop.permute.xlu0 %1505
        %1508 = vset.pattern.permute.xlu0 4
        %1509 = vperm.xlu0 %1508, %v374
        %v1510 = vpop.permute.xlu0 %1509
        %1512 = vset.pattern.permute.xlu0 4
        %1513 = vperm.xlu0 %1512, %v375
        %v1514 = vpop.permute.xlu0 %1513
        %1516 = vset.pattern.permute.xlu0 4
        %1517 = vperm.xlu0 %1516, %v376
        %v1518 = vpop.permute.xlu0 %1517
        %1520 = vset.pattern.permute.xlu0 4
        %1521 = vperm.xlu0 %1520, %v377
        %v1522 = vpop.permute.xlu0 %1521
        %1524 = vset.pattern.permute.xlu0 4
        %1525 = vperm.xlu0 %1524, %v378
        %v1526 = vpop.permute.xlu0 %1525
        %1528 = vset.pattern.permute.xlu0 4
        %1529 = vperm.xlu0 %1528, %v379
        %v1530 = vpop.permute.xlu0 %1529
        %1532 = vset.pattern.permute.xlu0 4
        %1533 = vperm.xlu0 %1532, %v380
        %v1534 = vpop.permute.xlu0 %1533
        %1536 = vset.pattern.permute.xlu0 4
        %1537 = vperm.xlu0 %1536, %v381
        %v1538 = vpop.permute.xlu0 %1537
        %1540 = vset.pattern.permute.xlu0 4
        %1541 = vperm.xlu0 %1540, %v382
        %v1542 = vpop.permute.xlu0 %1541
        %1544 = vset.pattern.permute.xlu0 4
        %1545 = vperm.xlu0 %1544, %v383
        %v1546 = vpop.permute.xlu0 %1545
        %1548 = vset.pattern.permute.xlu0 4
        %1549 = vperm.xlu0 %1548, %v384
        %v1550 = vpop.permute.xlu0 %1549
        %1552 = vset.pattern.permute.xlu0 4
        %1553 = vperm.xlu0 %1552, %v385
        %v1554 = vpop.permute.xlu0 %1553
        %1556 = vset.pattern.permute.xlu0 4
        %1557 = vperm.xlu0 %1556, %v386
        %v1558 = vpop.permute.xlu0 %1557
        %1560 = vset.pattern.permute.xlu0 4
        %1561 = vperm.xlu0 %1560, %v387
        %v1562 = vpop.permute.xlu0 %1561
        %1564 = vset.pattern.permute.xlu0 4
        %1565 = vperm.xlu0 %1564, %v388
        %v1566 = vpop.permute.xlu0 %1565
        %1568 = vset.pattern.permute.xlu0 4
        %1569 = vperm.xlu0 %1568, %v389
        %v1570 = vpop.permute.xlu0 %1569
        %1572 = vset.pattern.permute.xlu0 4
        %1573 = vperm.xlu0 %1572, %v390
        %v1574 = vpop.permute.xlu0 %1573
        %1576 = vset.pattern.permute.xlu0 4
        %1577 = vperm.xlu0 %1576, %v391
        %v1578 = vpop.permute.xlu0 %1577
        %1580 = vset.pattern.permute.xlu0 4
        %1581 = vperm.xlu0 %1580, %v392
        %v1582 = vpop.permute.xlu0 %1581
        %1584 = vset.pattern.permute.xlu0 4
        %1585 = vperm.xlu0 %1584, %v393
        %v1586 = vpop.permute.xlu0 %1585
        %1588 = vset.pattern.permute.xlu0 4
        %1589 = vperm.xlu0 %1588, %v394
        %v1590 = vpop.permute.xlu0 %1589
        %1592 = vset.pattern.permute.xlu0 4
        %1593 = vperm.xlu0 %1592, %v395
        %v1594 = vpop.permute.xlu0 %1593
        %1596 = vset.pattern.permute.xlu0 4
        %1597 = vperm.xlu0 %1596, %v396
        %v1598 = vpop.permute.xlu0 %1597
        %1600 = vset.pattern.permute.xlu0 4
        %1601 = vperm.xlu0 %1600, %v397
        %v1602 = vpop.permute.xlu0 %1601
        %1604 = vset.pattern.permute.xlu0 4
        %1605 = vperm.xlu0 %1604, %v398
        %v1606 = vpop.permute.xlu0 %1605
        %1608 = vset.pattern.permute.xlu0 4
        %1609 = vperm.xlu0 %1608, %v399
        %v1610 = vpop.permute.xlu0 %1609
        %1612 = vset.pattern.permute.xlu0 4
        %1613 = vperm.xlu0 %1612, %v400
        %v1614 = vpop.permute.xlu0 %1613
        %1616 = vset.pattern.permute.xlu0 4
        %1617 = vperm.xlu0 %1616, %v401
        %v1618 = vpop.permute.xlu0 %1617
        %1620 = vset.pattern.permute.xlu0 4
        %1621 = vperm.xlu0 %1620, %v402
        %v1622 = vpop.permute.xlu0 %1621
        %1624 = vset.pattern.permute.xlu0 4
        %1625 = vperm.xlu0 %1624, %v403
        %v1626 = vpop.permute.xlu0 %1625
        %1628 = vset.pattern.permute.xlu0 4
        %1629 = vperm.xlu0 %1628, %v404
        %v1630 = vpop.permute.xlu0 %1629
        %1632 = vset.pattern.permute.xlu0 4
        %1633 = vperm.xlu0 %1632, %v405
        %v1634 = vpop.permute.xlu0 %1633
        %1636 = vset.pattern.permute.xlu0 4
        %1637 = vperm.xlu0 %1636, %v406
        %v1638 = vpop.permute.xlu0 %1637
        %1640 = vset.pattern.permute.xlu0 4
        %1641 = vperm.xlu0 %1640, %v407
        %v1642 = vpop.permute.xlu0 %1641
        %1644 = vset.pattern.permute.xlu0 4
        %1645 = vperm.xlu0 %1644, %v408
        %v1646 = vpop.permute.xlu0 %1645
        %1648 = vset.pattern.permute.xlu0 4
        %1649 = vperm.xlu0 %1648, %v409
        %v1650 = vpop.permute.xlu0 %1649
        %1652 = vset.pattern.permute.xlu0 4
        %1653 = vperm.xlu0 %1652, %v410
        %v1654 = vpop.permute.xlu0 %1653
        %1656 = vset.pattern.permute.xlu0 4
        %1657 = vperm.xlu0 %1656, %v411
        %v1658 = vpop.permute.xlu0 %1657
        %1660 = vset.pattern.permute.xlu0 4
        %1661 = vperm.xlu0 %1660, %v412
        %v1662 = vpop.permute.xlu0 %1661
        %1664 = vset.pattern.permute.xlu0 4
        %1665 = vperm.xlu0 %1664, %v413
        %v1666 = vpop.permute.xlu0 %1665
        %1668 = vset.pattern.permute.xlu0 4
        %1669 = vperm.xlu0 %1668, %v414
        %v1670 = vpop.permute.xlu0 %1669
        %1672 = vset.pattern.permute.xlu0 4
        %1673 = vperm.xlu0 %1672, %v415
        %v1674 = vpop.permute.xlu0 %1673
        %1676 = vset.pattern.permute.xlu0 4
        %1677 = vperm.xlu0 %1676, %v416
        %v1678 = vpop.permute.xlu0 %1677
        %1680 = vset.pattern.permute.xlu0 4
        %1681 = vperm.xlu0 %1680, %v417
        %v1682 = vpop.permute.xlu0 %1681
        %1684 = vset.pattern.permute.xlu0 4
        %1685 = vperm.xlu0 %1684, %v418
        %v1686 = vpop.permute.xlu0 %1685
        %1688 = vset.pattern.permute.xlu0 4
        %1689 = vperm.xlu0 %1688, %v419
        %v1690 = vpop.permute.xlu0 %1689
        %1692 = vset.pattern.permute.xlu0 4
        %1693 = vperm.xlu0 %1692, %v420
        %v1694 = vpop.permute.xlu0 %1693
        %1696 = vset.pattern.permute.xlu0 4
        %1697 = vperm.xlu0 %1696, %v421
        %v1698 = vpop.permute.xlu0 %1697
        %v1700 = vlaneseq
        %v1701 = vshrl.u32 %v1700, 7
        %v1702 = vsub.s32 0, %v1701
        %v1703 = vrot.slane %v323, %v1702
        %v1704 = vsub.f32 %v1310, %v1703
        %v1705 = vsub.f32 %v1314, %v1703
        %v1706 = vsub.f32 %v1318, %v1703
        %v1707 = vsub.f32 %v1322, %v1703
        %v1708 = vsub.f32 %v1326, %v1703
        %v1709 = vsub.f32 %v1330, %v1703
        %v1710 = vsub.f32 %v1334, %v1703
        %v1711 = vsub.f32 %v1338, %v1703
        %v1712 = vsub.f32 %v1342, %v1703
        %v1713 = vsub.f32 %v1346, %v1703
        %v1714 = vsub.f32 %v1350, %v1703
        %v1715 = vsub.f32 %v1354, %v1703
        %v1716 = vsub.f32 %v1358, %v1703
        %v1717 = vsub.f32 %v1362, %v1703
        %v1718 = vsub.f32 %v1366, %v1703
        %v1719 = vsub.f32 %v1370, %v1703
        %v1720 = vsub.f32 %v1374, %v1703
        %v1721 = vsub.f32 %v1378, %v1703
        %v1722 = vsub.f32 %v1382, %v1703
        %v1723 = vsub.f32 %v1386, %v1703
        %v1724 = vsub.f32 %v1390, %v1703
        %v1725 = vsub.f32 %v1394, %v1703
        %v1726 = vsub.f32 %v1398, %v1703
        %v1727 = vsub.f32 %v1402, %v1703
        %v1728 = vsub.f32 %v1406, %v1703
        %v1729 = vsub.f32 %v1410, %v1703
        %v1730 = vsub.f32 %v1414, %v1703
        %v1731 = vsub.f32 %v1418, %v1703
        %v1732 = vsub.f32 %v1422, %v1703
        %v1733 = vsub.f32 %v1426, %v1703
        %v1734 = vsub.f32 %v1430, %v1703
        %v1735 = vsub.f32 %v1434, %v1703
        %v1736 = vsub.f32 %v1438, %v1703
        %v1737 = vsub.f32 %v1442, %v1703
        %v1738 = vsub.f32 %v1446, %v1703
        %v1739 = vsub.f32 %v1450, %v1703
        %v1740 = vsub.f32 %v1454, %v1703
        %v1741 = vsub.f32 %v1458, %v1703
        %v1742 = vsub.f32 %v1462, %v1703
        %v1743 = vsub.f32 %v1466, %v1703
        %v1744 = vsub.f32 %v1470, %v1703
        %v1745 = vsub.f32 %v1474, %v1703
        %v1746 = vsub.f32 %v1478, %v1703
        %v1747 = vsub.f32 %v1482, %v1703
        %v1748 = vsub.f32 %v1486, %v1703
        %v1749 = vsub.f32 %v1490, %v1703
        %v1750 = vsub.f32 %v1494, %v1703
        %v1751 = vsub.f32 %v1498, %v1703
        %v1752 = vsub.f32 %v1502, %v1703
        %v1753 = vsub.f32 %v1506, %v1703
        %v1754 = vsub.f32 %v1510, %v1703
        %v1755 = vsub.f32 %v1514, %v1703
        %v1756 = vsub.f32 %v1518, %v1703
        %v1757 = vsub.f32 %v1522, %v1703
        %v1758 = vsub.f32 %v1526, %v1703
        %v1759 = vsub.f32 %v1530, %v1703
        %v1760 = vsub.f32 %v1534, %v1703
        %v1761 = vsub.f32 %v1538, %v1703
        %v1762 = vsub.f32 %v1542, %v1703
        %v1763 = vsub.f32 %v1546, %v1703
        %v1764 = vsub.f32 %v1550, %v1703
        %v1765 = vsub.f32 %v1554, %v1703
        %v1766 = vsub.f32 %v1558, %v1703
        %v1767 = vsub.f32 %v1562, %v1703
        %v1768 = vsub.f32 %v1566, %v1703
        %v1769 = vsub.f32 %v1570, %v1703
        %v1770 = vsub.f32 %v1574, %v1703
        %v1771 = vsub.f32 %v1578, %v1703
        %v1772 = vsub.f32 %v1582, %v1703
        %v1773 = vsub.f32 %v1586, %v1703
        %v1774 = vsub.f32 %v1590, %v1703
        %v1775 = vsub.f32 %v1594, %v1703
        %v1776 = vsub.f32 %v1598, %v1703
        %v1777 = vsub.f32 %v1602, %v1703
        %v1778 = vsub.f32 %v1606, %v1703
        %v1779 = vsub.f32 %v1610, %v1703
        %v1780 = vsub.f32 %v1614, %v1703
        %v1781 = vsub.f32 %v1618, %v1703
        %v1782 = vsub.f32 %v1622, %v1703
        %v1783 = vsub.f32 %v1626, %v1703
        %v1784 = vsub.f32 %v1630, %v1703
        %v1785 = vsub.f32 %v1634, %v1703
        %v1786 = vsub.f32 %v1638, %v1703
        %v1787 = vsub.f32 %v1642, %v1703
        %v1788 = vsub.f32 %v1646, %v1703
        %v1789 = vsub.f32 %v1650, %v1703
        %v1790 = vsub.f32 %v1654, %v1703
        %v1791 = vsub.f32 %v1658, %v1703
        %v1792 = vsub.f32 %v1662, %v1703
        %v1793 = vsub.f32 %v1666, %v1703
        %v1794 = vsub.f32 %v1670, %v1703
        %v1795 = vsub.f32 %v1674, %v1703
        %v1796 = vsub.f32 %v1678, %v1703
        %v1797 = vsub.f32 %v1682, %v1703
        %v1798 = vsub.f32 %v1686, %v1703
        %v1799 = vsub.f32 %v1690, %v1703
        %v1800 = vsub.f32 %v1694, %v1703
        %v1801 = vsub.f32 %v1698, %v1703
        %v1802 = vand.u32 2147483647, %v1704
        %v1803 = vand.u32 2147483647, %v1705
        %v1804 = vand.u32 2147483647, %v1706
        %v1805 = vand.u32 2147483647, %v1707
        %v1806 = vand.u32 2147483647, %v1708
        %v1807 = vand.u32 2147483647, %v1709
        %v1808 = vand.u32 2147483647, %v1710
        %v1809 = vand.u32 2147483647, %v1711
        %v1810 = vand.u32 2147483647, %v1712
        %v1811 = vand.u32 2147483647, %v1713
        %v1812 = vand.u32 2147483647, %v1714
        %v1813 = vand.u32 2147483647, %v1715
        %v1814 = vand.u32 2147483647, %v1716
        %v1815 = vand.u32 2147483647, %v1717
        %v1816 = vand.u32 2147483647, %v1718
        %v1817 = vand.u32 2147483647, %v1719
        %v1818 = vand.u32 2147483647, %v1720
        %v1819 = vand.u32 2147483647, %v1721
        %v1820 = vand.u32 2147483647, %v1722
        %v1821 = vand.u32 2147483647, %v1723
        %v1822 = vand.u32 2147483647, %v1724
        %v1823 = vand.u32 2147483647, %v1725
        %v1824 = vand.u32 2147483647, %v1726
        %v1825 = vand.u32 2147483647, %v1727
        %v1826 = vand.u32 2147483647, %v1728
        %v1827 = vand.u32 2147483647, %v1729
        %v1828 = vand.u32 2147483647, %v1730
        %v1829 = vand.u32 2147483647, %v1731
        %v1830 = vand.u32 2147483647, %v1732
        %v1831 = vand.u32 2147483647, %v1733
        %v1832 = vand.u32 2147483647, %v1734
        %v1833 = vand.u32 2147483647, %v1735
        %v1834 = vand.u32 2147483647, %v1736
        %v1835 = vand.u32 2147483647, %v1737
        %v1836 = vand.u32 2147483647, %v1738
        %v1837 = vand.u32 2147483647, %v1739
        %v1838 = vand.u32 2147483647, %v1740
        %v1839 = vand.u32 2147483647, %v1741
        %v1840 = vand.u32 2147483647, %v1742
        %v1841 = vand.u32 2147483647, %v1743
        %v1842 = vand.u32 2147483647, %v1744
        %v1843 = vand.u32 2147483647, %v1745
        %v1844 = vand.u32 2147483647, %v1746
        %v1845 = vand.u32 2147483647, %v1747
        %v1846 = vand.u32 2147483647, %v1748
        %v1847 = vand.u32 2147483647, %v1749
        %v1848 = vand.u32 2147483647, %v1750
        %v1849 = vand.u32 2147483647, %v1751
        %v1850 = vand.u32 2147483647, %v1752
        %v1851 = vand.u32 2147483647, %v1753
        %v1852 = vand.u32 2147483647, %v1754
        %v1853 = vand.u32 2147483647, %v1755
        %v1854 = vand.u32 2147483647, %v1756
        %v1855 = vand.u32 2147483647, %v1757
        %v1856 = vand.u32 2147483647, %v1758
        %v1857 = vand.u32 2147483647, %v1759
        %v1858 = vand.u32 2147483647, %v1760
        %v1859 = vand.u32 2147483647, %v1761
        %v1860 = vand.u32 2147483647, %v1762
        %v1861 = vand.u32 2147483647, %v1763
        %v1862 = vand.u32 2147483647, %v1764
        %v1863 = vand.u32 2147483647, %v1765
        %v1864 = vand.u32 2147483647, %v1766
        %v1865 = vand.u32 2147483647, %v1767
        %v1866 = vand.u32 2147483647, %v1768
        %v1867 = vand.u32 2147483647, %v1769
        %v1868 = vand.u32 2147483647, %v1770
        %v1869 = vand.u32 2147483647, %v1771
        %v1870 = vand.u32 2147483647, %v1772
        %v1871 = vand.u32 2147483647, %v1773
        %v1872 = vand.u32 2147483647, %v1774
        %v1873 = vand.u32 2147483647, %v1775
        %v1874 = vand.u32 2147483647, %v1776
        %v1875 = vand.u32 2147483647, %v1777
        %v1876 = vand.u32 2147483647, %v1778
        %v1877 = vand.u32 2147483647, %v1779
        %v1878 = vand.u32 2147483647, %v1780
        %v1879 = vand.u32 2147483647, %v1781
        %v1880 = vand.u32 2147483647, %v1782
        %v1881 = vand.u32 2147483647, %v1783
        %v1882 = vand.u32 2147483647, %v1784
        %v1883 = vand.u32 2147483647, %v1785
        %v1884 = vand.u32 2147483647, %v1786
        %v1885 = vand.u32 2147483647, %v1787
        %v1886 = vand.u32 2147483647, %v1788
        %v1887 = vand.u32 2147483647, %v1789
        %v1888 = vand.u32 2147483647, %v1790
        %v1889 = vand.u32 2147483647, %v1791
        %v1890 = vand.u32 2147483647, %v1792
        %v1891 = vand.u32 2147483647, %v1793
        %v1892 = vand.u32 2147483647, %v1794
        %v1893 = vand.u32 2147483647, %v1795
        %v1894 = vand.u32 2147483647, %v1796
        %v1895 = vand.u32 2147483647, %v1797
        %v1896 = vand.u32 2147483647, %v1798
        %v1897 = vand.u32 2147483647, %v1799
        %v1898 = vand.u32 2147483647, %v1800
        %v1899 = vand.u32 2147483647, %v1801
        %v1900 = vsub.f32 1.0, %v1802
        %v1901 = vsub.f32 1.0, %v1803
        %v1902 = vsub.f32 1.0, %v1804
        %v1903 = vsub.f32 1.0, %v1805
        %v1904 = vsub.f32 1.0, %v1806
        %v1905 = vsub.f32 1.0, %v1807
        %v1906 = vsub.f32 1.0, %v1808
        %v1907 = vsub.f32 1.0, %v1809
        %v1908 = vsub.f32 1.0, %v1810
        %v1909 = vsub.f32 1.0, %v1811
        %v1910 = vsub.f32 1.0, %v1812
        %v1911 = vsub.f32 1.0, %v1813
        %v1912 = vsub.f32 1.0, %v1814
        %v1913 = vsub.f32 1.0, %v1815
        %v1914 = vsub.f32 1.0, %v1816
        %v1915 = vsub.f32 1.0, %v1817
        %v1916 = vsub.f32 1.0, %v1818
        %v1917 = vsub.f32 1.0, %v1819
        %v1918 = vsub.f32 1.0, %v1820
        %v1919 = vsub.f32 1.0, %v1821
        %v1920 = vsub.f32 1.0, %v1822
        %v1921 = vsub.f32 1.0, %v1823
        %v1922 = vsub.f32 1.0, %v1824
        %v1923 = vsub.f32 1.0, %v1825
        %v1924 = vsub.f32 1.0, %v1826
        %v1925 = vsub.f32 1.0, %v1827
        %v1926 = vsub.f32 1.0, %v1828
        %v1927 = vsub.f32 1.0, %v1829
        %v1928 = vsub.f32 1.0, %v1830
        %v1929 = vsub.f32 1.0, %v1831
        %v1930 = vsub.f32 1.0, %v1832
        %v1931 = vsub.f32 1.0, %v1833
        %v1932 = vsub.f32 1.0, %v1834
        %v1933 = vsub.f32 1.0, %v1835
        %v1934 = vsub.f32 1.0, %v1836
        %v1935 = vsub.f32 1.0, %v1837
        %v1936 = vsub.f32 1.0, %v1838
        %v1937 = vsub.f32 1.0, %v1839
        %v1938 = vsub.f32 1.0, %v1840
        %v1939 = vsub.f32 1.0, %v1841
        %v1940 = vsub.f32 1.0, %v1842
        %v1941 = vsub.f32 1.0, %v1843
        %v1942 = vsub.f32 1.0, %v1844
        %v1943 = vsub.f32 1.0, %v1845
        %v1944 = vsub.f32 1.0, %v1846
        %v1945 = vsub.f32 1.0, %v1847
        %v1946 = vsub.f32 1.0, %v1848
        %v1947 = vsub.f32 1.0, %v1849
        %v1948 = vsub.f32 1.0, %v1850
        %v1949 = vsub.f32 1.0, %v1851
        %v1950 = vsub.f32 1.0, %v1852
        %v1951 = vsub.f32 1.0, %v1853
        %v1952 = vsub.f32 1.0, %v1854
        %v1953 = vsub.f32 1.0, %v1855
        %v1954 = vsub.f32 1.0, %v1856
        %v1955 = vsub.f32 1.0, %v1857
        %v1956 = vsub.f32 1.0, %v1858
        %v1957 = vsub.f32 1.0, %v1859
        %v1958 = vsub.f32 1.0, %v1860
        %v1959 = vsub.f32 1.0, %v1861
        %v1960 = vsub.f32 1.0, %v1862
        %v1961 = vsub.f32 1.0, %v1863
        %v1962 = vsub.f32 1.0, %v1864
        %v1963 = vsub.f32 1.0, %v1865
        %v1964 = vsub.f32 1.0, %v1866
        %v1965 = vsub.f32 1.0, %v1867
        %v1966 = vsub.f32 1.0, %v1868
        %v1967 = vsub.f32 1.0, %v1869
        %v1968 = vsub.f32 1.0, %v1870
        %v1969 = vsub.f32 1.0, %v1871
        %v1970 = vsub.f32 1.0, %v1872
        %v1971 = vsub.f32 1.0, %v1873
        %v1972 = vsub.f32 1.0, %v1874
        %v1973 = vsub.f32 1.0, %v1875
        %v1974 = vsub.f32 1.0, %v1876
        %v1975 = vsub.f32 1.0, %v1877
        %v1976 = vsub.f32 1.0, %v1878
        %v1977 = vsub.f32 1.0, %v1879
        %v1978 = vsub.f32 1.0, %v1880
        %v1979 = vsub.f32 1.0, %v1881
        %v1980 = vsub.f32 1.0, %v1882
        %v1981 = vsub.f32 1.0, %v1883
        %v1982 = vsub.f32 1.0, %v1884
        %v1983 = vsub.f32 1.0, %v1885
        %v1984 = vsub.f32 1.0, %v1886
        %v1985 = vsub.f32 1.0, %v1887
        %v1986 = vsub.f32 1.0, %v1888
        %v1987 = vsub.f32 1.0, %v1889
        %v1988 = vsub.f32 1.0, %v1890
        %v1989 = vsub.f32 1.0, %v1891
        %v1990 = vsub.f32 1.0, %v1892
        %v1991 = vsub.f32 1.0, %v1893
        %v1992 = vsub.f32 1.0, %v1894
        %v1993 = vsub.f32 1.0, %v1895
        %v1994 = vsub.f32 1.0, %v1896
        %v1995 = vsub.f32 1.0, %v1897
        %v1996 = vsub.f32 1.0, %v1898
        %v1997 = vsub.f32 1.0, %v1899
        %v1998 = vmax.f32 %v1900, 0.0
        %v1999 = vmax.f32 %v1901, 0.0
        %v2000 = vmax.f32 %v1902, 0.0
        %v2001 = vmax.f32 %v1903, 0.0
        %v2002 = vmax.f32 %v1904, 0.0
        %v2003 = vmax.f32 %v1905, 0.0
        %v2004 = vmax.f32 %v1906, 0.0
        %v2005 = vmax.f32 %v1907, 0.0
        %v2006 = vmax.f32 %v1908, 0.0
        %v2007 = vmax.f32 %v1909, 0.0
        %v2008 = vmax.f32 %v1910, 0.0
        %v2009 = vmax.f32 %v1911, 0.0
        %v2010 = vmax.f32 %v1912, 0.0
        %v2011 = vmax.f32 %v1913, 0.0
        %v2012 = vmax.f32 %v1914, 0.0
        %v2013 = vmax.f32 %v1915, 0.0
        %v2014 = vmax.f32 %v1916, 0.0
        %v2015 = vmax.f32 %v1917, 0.0
        %v2016 = vmax.f32 %v1918, 0.0
        %v2017 = vmax.f32 %v1919, 0.0
        %v2018 = vmax.f32 %v1920, 0.0
        %v2019 = vmax.f32 %v1921, 0.0
        %v2020 = vmax.f32 %v1922, 0.0
        %v2021 = vmax.f32 %v1923, 0.0
        %v2022 = vmax.f32 %v1924, 0.0
        %v2023 = vmax.f32 %v1925, 0.0
        %v2024 = vmax.f32 %v1926, 0.0
        %v2025 = vmax.f32 %v1927, 0.0
        %v2026 = vmax.f32 %v1928, 0.0
        %v2027 = vmax.f32 %v1929, 0.0
        %v2028 = vmax.f32 %v1930, 0.0
        %v2029 = vmax.f32 %v1931, 0.0
        %v2030 = vmax.f32 %v1932, 0.0
        %v2031 = vmax.f32 %v1933, 0.0
        %v2032 = vmax.f32 %v1934, 0.0
        %v2033 = vmax.f32 %v1935, 0.0
        %v2034 = vmax.f32 %v1936, 0.0
        %v2035 = vmax.f32 %v1937, 0.0
        %v2036 = vmax.f32 %v1938, 0.0
        %v2037 = vmax.f32 %v1939, 0.0
        %v2038 = vmax.f32 %v1940, 0.0
        %v2039 = vmax.f32 %v1941, 0.0
        %v2040 = vmax.f32 %v1942, 0.0
        %v2041 = vmax.f32 %v1943, 0.0
        %v2042 = vmax.f32 %v1944, 0.0
        %v2043 = vmax.f32 %v1945, 0.0
        %v2044 = vmax.f32 %v1946, 0.0
        %v2045 = vmax.f32 %v1947, 0.0
        %v2046 = vmax.f32 %v1948, 0.0
        %v2047 = vmax.f32 %v1949, 0.0
        %v2048 = vmax.f32 %v1950, 0.0
        %v2049 = vmax.f32 %v1951, 0.0
        %v2050 = vmax.f32 %v1952, 0.0
        %v2051 = vmax.f32 %v1953, 0.0
        %v2052 = vmax.f32 %v1954, 0.0
        %v2053 = vmax.f32 %v1955, 0.0
        %v2054 = vmax.f32 %v1956, 0.0
        %v2055 = vmax.f32 %v1957, 0.0
        %v2056 = vmax.f32 %v1958, 0.0
        %v2057 = vmax.f32 %v1959, 0.0
        %v2058 = vmax.f32 %v1960, 0.0
        %v2059 = vmax.f32 %v1961, 0.0
        %v2060 = vmax.f32 %v1962, 0.0
        %v2061 = vmax.f32 %v1963, 0.0
        %v2062 = vmax.f32 %v1964, 0.0
        %v2063 = vmax.f32 %v1965, 0.0
        %v2064 = vmax.f32 %v1966, 0.0
        %v2065 = vmax.f32 %v1967, 0.0
        %v2066 = vmax.f32 %v1968, 0.0
        %v2067 = vmax.f32 %v1969, 0.0
        %v2068 = vmax.f32 %v1970, 0.0
        %v2069 = vmax.f32 %v1971, 0.0
        %v2070 = vmax.f32 %v1972, 0.0
        %v2071 = vmax.f32 %v1973, 0.0
        %v2072 = vmax.f32 %v1974, 0.0
        %v2073 = vmax.f32 %v1975, 0.0
        %v2074 = vmax.f32 %v1976, 0.0
        %v2075 = vmax.f32 %v1977, 0.0
        %v2076 = vmax.f32 %v1978, 0.0
        %v2077 = vmax.f32 %v1979, 0.0
        %v2078 = vmax.f32 %v1980, 0.0
        %v2079 = vmax.f32 %v1981, 0.0
        %v2080 = vmax.f32 %v1982, 0.0
        %v2081 = vmax.f32 %v1983, 0.0
        %v2082 = vmax.f32 %v1984, 0.0
        %v2083 = vmax.f32 %v1985, 0.0
        %v2084 = vmax.f32 %v1986, 0.0
        %v2085 = vmax.f32 %v1987, 0.0
        %v2086 = vmax.f32 %v1988, 0.0
        %v2087 = vmax.f32 %v1989, 0.0
        %v2088 = vmax.f32 %v1990, 0.0
        %v2089 = vmax.f32 %v1991, 0.0
        %v2090 = vmax.f32 %v1992, 0.0
        %v2091 = vmax.f32 %v1993, 0.0
        %v2092 = vmax.f32 %v1994, 0.0
        %v2093 = vmax.f32 %v1995, 0.0
        %v2094 = vmax.f32 %v1996, 0.0
        %v2095 = vmax.f32 %v1997, 0.0
        %v2096 = vmul.f32 %v1210, %v1998
        %v2097 = vmul.f32 %v1211, %v1999
        %v2098 = vmul.f32 %v1212, %v2000
        %v2099 = vmul.f32 %v1213, %v2001
        %v2100 = vmul.f32 %v1214, %v2002
        %v2101 = vmul.f32 %v1215, %v2003
        %v2102 = vmul.f32 %v1216, %v2004
        %v2103 = vmul.f32 %v1217, %v2005
        %v2104 = vmul.f32 %v1218, %v2006
        %v2105 = vmul.f32 %v1219, %v2007
        %v2106 = vmul.f32 %v1220, %v2008
        %v2107 = vmul.f32 %v1221, %v2009
        %v2108 = vmul.f32 %v1222, %v2010
        %v2109 = vmul.f32 %v1223, %v2011
        %v2110 = vmul.f32 %v1224, %v2012
        %v2111 = vmul.f32 %v1225, %v2013
        %v2112 = vmul.f32 %v1226, %v2014
        %v2113 = vmul.f32 %v1227, %v2015
        %v2114 = vmul.f32 %v1228, %v2016
        %v2115 = vmul.f32 %v1229, %v2017
        %v2116 = vmul.f32 %v1230, %v2018
        %v2117 = vmul.f32 %v1231, %v2019
        %v2118 = vmul.f32 %v1232, %v2020
        %v2119 = vmul.f32 %v1233, %v2021
        %v2120 = vmul.f32 %v1234, %v2022
        %v2121 = vmul.f32 %v1235, %v2023
        %v2122 = vmul.f32 %v1236, %v2024
        %v2123 = vmul.f32 %v1237, %v2025
        %v2124 = vmul.f32 %v1238, %v2026
        %v2125 = vmul.f32 %v1239, %v2027
        %v2126 = vmul.f32 %v1240, %v2028
        %v2127 = vmul.f32 %v1241, %v2029
        %v2128 = vmul.f32 %v1242, %v2030
        %v2129 = vmul.f32 %v1243, %v2031
        %v2130 = vmul.f32 %v1244, %v2032
        %v2131 = vmul.f32 %v1245, %v2033
        %v2132 = vmul.f32 %v1246, %v2034
        %v2133 = vmul.f32 %v1247, %v2035
        %v2134 = vmul.f32 %v1248, %v2036
        %v2135 = vmul.f32 %v1249, %v2037
        %v2136 = vmul.f32 %v1250, %v2038
        %v2137 = vmul.f32 %v1251, %v2039
        %v2138 = vmul.f32 %v1252, %v2040
        %v2139 = vmul.f32 %v1253, %v2041
        %v2140 = vmul.f32 %v1254, %v2042
        %v2141 = vmul.f32 %v1255, %v2043
        %v2142 = vmul.f32 %v1256, %v2044
        %v2143 = vmul.f32 %v1257, %v2045
        %v2144 = vmul.f32 %v1258, %v2046
        %v2145 = vmul.f32 %v1259, %v2047
        %v2146 = vmul.f32 %v1260, %v2048
        %v2147 = vmul.f32 %v1261, %v2049
        %v2148 = vmul.f32 %v1262, %v2050
        %v2149 = vmul.f32 %v1263, %v2051
        %v2150 = vmul.f32 %v1264, %v2052
        %v2151 = vmul.f32 %v1265, %v2053
        %v2152 = vmul.f32 %v1266, %v2054
        %v2153 = vmul.f32 %v1267, %v2055
        %v2154 = vmul.f32 %v1268, %v2056
        %v2155 = vmul.f32 %v1269, %v2057
        %v2156 = vmul.f32 %v1270, %v2058
        %v2157 = vmul.f32 %v1271, %v2059
        %v2158 = vmul.f32 %v1272, %v2060
        %v2159 = vmul.f32 %v1273, %v2061
        %v2160 = vmul.f32 %v1274, %v2062
        %v2161 = vmul.f32 %v1275, %v2063
        %v2162 = vmul.f32 %v1276, %v2064
        %v2163 = vmul.f32 %v1277, %v2065
        %v2164 = vmul.f32 %v1278, %v2066
        %v2165 = vmul.f32 %v1279, %v2067
        %v2166 = vmul.f32 %v1280, %v2068
        %v2167 = vmul.f32 %v1281, %v2069
        %v2168 = vmul.f32 %v1282, %v2070
        %v2169 = vmul.f32 %v1283, %v2071
        %v2170 = vmul.f32 %v1284, %v2072
        %v2171 = vmul.f32 %v1285, %v2073
        %v2172 = vmul.f32 %v1286, %v2074
        %v2173 = vmul.f32 %v1287, %v2075
        %v2174 = vmul.f32 %v1288, %v2076
        %v2175 = vmul.f32 %v1289, %v2077
        %v2176 = vmul.f32 %v1290, %v2078
        %v2177 = vmul.f32 %v1291, %v2079
        %v2178 = vmul.f32 %v1292, %v2080
        %v2179 = vmul.f32 %v1293, %v2081
        %v2180 = vmul.f32 %v1294, %v2082
        %v2181 = vmul.f32 %v1295, %v2083
        %v2182 = vmul.f32 %v1296, %v2084
        %v2183 = vmul.f32 %v1297, %v2085
        %v2184 = vmul.f32 %v1298, %v2086
        %v2185 = vmul.f32 %v1299, %v2087
        %v2186 = vmul.f32 %v1300, %v2088
        %v2187 = vmul.f32 %v1301, %v2089
        %v2188 = vmul.f32 %v1302, %v2090
        %v2189 = vmul.f32 %v1303, %v2091
        %v2190 = vmul.f32 %v1304, %v2092
        %v2191 = vmul.f32 %v1305, %v2093
        %v2192 = vmul.f32 %v1306, %v2094
        %v2193 = vmul.f32 %v1307, %v2095
        %2194 = vset.pattern.permute.xlu0 1
        %2195 = vperm.xlu0 %2194, %v324
        %v2196 = vpop.permute.xlu0 %2195
        %2198 = vset.pattern.permute.xlu0 1
        %2199 = vperm.xlu0 %2198, %v325
        %v2200 = vpop.permute.xlu0 %2199
        %2202 = vset.pattern.permute.xlu0 1
        %2203 = vperm.xlu0 %2202, %v326
        %v2204 = vpop.permute.xlu0 %2203
        %2206 = vset.pattern.permute.xlu0 1
        %2207 = vperm.xlu0 %2206, %v327
        %v2208 = vpop.permute.xlu0 %2207
        %2210 = vset.pattern.permute.xlu0 1
        %2211 = vperm.xlu0 %2210, %v328
        %v2212 = vpop.permute.xlu0 %2211
        %2214 = vset.pattern.permute.xlu0 1
        %2215 = vperm.xlu0 %2214, %v329
        %v2216 = vpop.permute.xlu0 %2215
        %2218 = vset.pattern.permute.xlu0 1
        %2219 = vperm.xlu0 %2218, %v330
        %v2220 = vpop.permute.xlu0 %2219
        %2222 = vset.pattern.permute.xlu0 1
        %2223 = vperm.xlu0 %2222, %v331
        %v2224 = vpop.permute.xlu0 %2223
        %2226 = vset.pattern.permute.xlu0 1
        %2227 = vperm.xlu0 %2226, %v332
        %v2228 = vpop.permute.xlu0 %2227
        %2230 = vset.pattern.permute.xlu0 1
        %2231 = vperm.xlu0 %2230, %v333
        %v2232 = vpop.permute.xlu0 %2231
        %2234 = vset.pattern.permute.xlu0 1
        %2235 = vperm.xlu0 %2234, %v334
        %v2236 = vpop.permute.xlu0 %2235
        %2238 = vset.pattern.permute.xlu0 1
        %2239 = vperm.xlu0 %2238, %v335
        %v2240 = vpop.permute.xlu0 %2239
        %2242 = vset.pattern.permute.xlu0 1
        %2243 = vperm.xlu0 %2242, %v336
        %v2244 = vpop.permute.xlu0 %2243
        %2246 = vset.pattern.permute.xlu0 1
        %2247 = vperm.xlu0 %2246, %v337
        %v2248 = vpop.permute.xlu0 %2247
        %2250 = vset.pattern.permute.xlu0 1
        %2251 = vperm.xlu0 %2250, %v338
        %v2252 = vpop.permute.xlu0 %2251
        %2254 = vset.pattern.permute.xlu0 1
        %2255 = vperm.xlu0 %2254, %v339
        %v2256 = vpop.permute.xlu0 %2255
        %2258 = vset.pattern.permute.xlu0 1
        %2259 = vperm.xlu0 %2258, %v340
        %v2260 = vpop.permute.xlu0 %2259
        %2262 = vset.pattern.permute.xlu0 1
        %2263 = vperm.xlu0 %2262, %v341
        %v2264 = vpop.permute.xlu0 %2263
        %2266 = vset.pattern.permute.xlu0 1
        %2267 = vperm.xlu0 %2266, %v342
        %v2268 = vpop.permute.xlu0 %2267
        %2270 = vset.pattern.permute.xlu0 1
        %2271 = vperm.xlu0 %2270, %v343
        %v2272 = vpop.permute.xlu0 %2271
        %2274 = vset.pattern.permute.xlu0 1
        %2275 = vperm.xlu0 %2274, %v344
        %v2276 = vpop.permute.xlu0 %2275
        %2278 = vset.pattern.permute.xlu0 1
        %2279 = vperm.xlu0 %2278, %v345
        %v2280 = vpop.permute.xlu0 %2279
        %2282 = vset.pattern.permute.xlu0 1
        %2283 = vperm.xlu0 %2282, %v346
        %v2284 = vpop.permute.xlu0 %2283
        %2286 = vset.pattern.permute.xlu0 1
        %2287 = vperm.xlu0 %2286, %v347
        %v2288 = vpop.permute.xlu0 %2287
        %2290 = vset.pattern.permute.xlu0 1
        %2291 = vperm.xlu0 %2290, %v348
        %v2292 = vpop.permute.xlu0 %2291
        %2294 = vset.pattern.permute.xlu0 1
        %2295 = vperm.xlu0 %2294, %v349
        %v2296 = vpop.permute.xlu0 %2295
        %2298 = vset.pattern.permute.xlu0 1
        %2299 = vperm.xlu0 %2298, %v350
        %v2300 = vpop.permute.xlu0 %2299
        %2302 = vset.pattern.permute.xlu0 1
        %2303 = vperm.xlu0 %2302, %v351
        %v2304 = vpop.permute.xlu0 %2303
        %2306 = vset.pattern.permute.xlu0 1
        %2307 = vperm.xlu0 %2306, %v352
        %v2308 = vpop.permute.xlu0 %2307
        %2310 = vset.pattern.permute.xlu0 1
        %2311 = vperm.xlu0 %2310, %v353
        %v2312 = vpop.permute.xlu0 %2311
        %2314 = vset.pattern.permute.xlu0 1
        %2315 = vperm.xlu0 %2314, %v354
        %v2316 = vpop.permute.xlu0 %2315
        %2318 = vset.pattern.permute.xlu0 1
        %2319 = vperm.xlu0 %2318, %v355
        %v2320 = vpop.permute.xlu0 %2319
        %2322 = vset.pattern.permute.xlu0 1
        %2323 = vperm.xlu0 %2322, %v356
        %v2324 = vpop.permute.xlu0 %2323
        %2326 = vset.pattern.permute.xlu0 1
        %2327 = vperm.xlu0 %2326, %v357
        %v2328 = vpop.permute.xlu0 %2327
        %2330 = vset.pattern.permute.xlu0 1
        %2331 = vperm.xlu0 %2330, %v358
        %v2332 = vpop.permute.xlu0 %2331
        %2334 = vset.pattern.permute.xlu0 1
        %2335 = vperm.xlu0 %2334, %v359
        %v2336 = vpop.permute.xlu0 %2335
        %2338 = vset.pattern.permute.xlu0 1
        %2339 = vperm.xlu0 %2338, %v360
        %v2340 = vpop.permute.xlu0 %2339
        %2342 = vset.pattern.permute.xlu0 1
        %2343 = vperm.xlu0 %2342, %v361
        %v2344 = vpop.permute.xlu0 %2343
        %2346 = vset.pattern.permute.xlu0 1
        %2347 = vperm.xlu0 %2346, %v362
        %v2348 = vpop.permute.xlu0 %2347
        %2350 = vset.pattern.permute.xlu0 1
        %2351 = vperm.xlu0 %2350, %v363
        %v2352 = vpop.permute.xlu0 %2351
        %2354 = vset.pattern.permute.xlu0 1
        %2355 = vperm.xlu0 %2354, %v364
        %v2356 = vpop.permute.xlu0 %2355
        %2358 = vset.pattern.permute.xlu0 1
        %2359 = vperm.xlu0 %2358, %v365
        %v2360 = vpop.permute.xlu0 %2359
        %2362 = vset.pattern.permute.xlu0 1
        %2363 = vperm.xlu0 %2362, %v366
        %v2364 = vpop.permute.xlu0 %2363
        %2366 = vset.pattern.permute.xlu0 1
        %2367 = vperm.xlu0 %2366, %v367
        %v2368 = vpop.permute.xlu0 %2367
        %2370 = vset.pattern.permute.xlu0 1
        %2371 = vperm.xlu0 %2370, %v368
        %v2372 = vpop.permute.xlu0 %2371
        %2374 = vset.pattern.permute.xlu0 1
        %2375 = vperm.xlu0 %2374, %v369
        %v2376 = vpop.permute.xlu0 %2375
        %2378 = vset.pattern.permute.xlu0 1
        %2379 = vperm.xlu0 %2378, %v370
        %v2380 = vpop.permute.xlu0 %2379
        %2382 = vset.pattern.permute.xlu0 1
        %2383 = vperm.xlu0 %2382, %v371
        %v2384 = vpop.permute.xlu0 %2383
        %2386 = vset.pattern.permute.xlu0 1
        %2387 = vperm.xlu0 %2386, %v372
        %v2388 = vpop.permute.xlu0 %2387
        %2390 = vset.pattern.permute.xlu0 1
        %2391 = vperm.xlu0 %2390, %v373
        %v2392 = vpop.permute.xlu0 %2391
        %2394 = vset.pattern.permute.xlu0 1
        %2395 = vperm.xlu0 %2394, %v374
        %v2396 = vpop.permute.xlu0 %2395
        %2398 = vset.pattern.permute.xlu0 1
        %2399 = vperm.xlu0 %2398, %v375
        %v2400 = vpop.permute.xlu0 %2399
        %2402 = vset.pattern.permute.xlu0 1
        %2403 = vperm.xlu0 %2402, %v376
        %v2404 = vpop.permute.xlu0 %2403
        %2406 = vset.pattern.permute.xlu0 1
        %2407 = vperm.xlu0 %2406, %v377
        %v2408 = vpop.permute.xlu0 %2407
        %2410 = vset.pattern.permute.xlu0 1
        %2411 = vperm.xlu0 %2410, %v378
        %v2412 = vpop.permute.xlu0 %2411
        %2414 = vset.pattern.permute.xlu0 1
        %2415 = vperm.xlu0 %2414, %v379
        %v2416 = vpop.permute.xlu0 %2415
        %2418 = vset.pattern.permute.xlu0 1
        %2419 = vperm.xlu0 %2418, %v380
        %v2420 = vpop.permute.xlu0 %2419
        %2422 = vset.pattern.permute.xlu0 1
        %2423 = vperm.xlu0 %2422, %v381
        %v2424 = vpop.permute.xlu0 %2423
        %2426 = vset.pattern.permute.xlu0 1
        %2427 = vperm.xlu0 %2426, %v382
        %v2428 = vpop.permute.xlu0 %2427
        %2430 = vset.pattern.permute.xlu0 1
        %2431 = vperm.xlu0 %2430, %v383
        %v2432 = vpop.permute.xlu0 %2431
        %2434 = vset.pattern.permute.xlu0 1
        %2435 = vperm.xlu0 %2434, %v384
        %v2436 = vpop.permute.xlu0 %2435
        %2438 = vset.pattern.permute.xlu0 1
        %2439 = vperm.xlu0 %2438, %v385
        %v2440 = vpop.permute.xlu0 %2439
        %2442 = vset.pattern.permute.xlu0 1
        %2443 = vperm.xlu0 %2442, %v386
        %v2444 = vpop.permute.xlu0 %2443
        %2446 = vset.pattern.permute.xlu0 1
        %2447 = vperm.xlu0 %2446, %v387
        %v2448 = vpop.permute.xlu0 %2447
        %2450 = vset.pattern.permute.xlu0 1
        %2451 = vperm.xlu0 %2450, %v388
        %v2452 = vpop.permute.xlu0 %2451
        %2454 = vset.pattern.permute.xlu0 1
        %2455 = vperm.xlu0 %2454, %v389
        %v2456 = vpop.permute.xlu0 %2455
        %2458 = vset.pattern.permute.xlu0 1
        %2459 = vperm.xlu0 %2458, %v390
        %v2460 = vpop.permute.xlu0 %2459
        %2462 = vset.pattern.permute.xlu0 1
        %2463 = vperm.xlu0 %2462, %v391
        %v2464 = vpop.permute.xlu0 %2463
        %2466 = vset.pattern.permute.xlu0 1
        %2467 = vperm.xlu0 %2466, %v392
        %v2468 = vpop.permute.xlu0 %2467
        %2470 = vset.pattern.permute.xlu0 1
        %2471 = vperm.xlu0 %2470, %v393
        %v2472 = vpop.permute.xlu0 %2471
        %2474 = vset.pattern.permute.xlu0 1
        %2475 = vperm.xlu0 %2474, %v394
        %v2476 = vpop.permute.xlu0 %2475
        %2478 = vset.pattern.permute.xlu0 1
        %2479 = vperm.xlu0 %2478, %v395
        %v2480 = vpop.permute.xlu0 %2479
        %2482 = vset.pattern.permute.xlu0 1
        %2483 = vperm.xlu0 %2482, %v396
        %v2484 = vpop.permute.xlu0 %2483
        %2486 = vset.pattern.permute.xlu0 1
        %2487 = vperm.xlu0 %2486, %v397
        %v2488 = vpop.permute.xlu0 %2487
        %2490 = vset.pattern.permute.xlu0 1
        %2491 = vperm.xlu0 %2490, %v398
        %v2492 = vpop.permute.xlu0 %2491
        %2494 = vset.pattern.permute.xlu0 1
        %2495 = vperm.xlu0 %2494, %v399
        %v2496 = vpop.permute.xlu0 %2495
        %2498 = vset.pattern.permute.xlu0 1
        %2499 = vperm.xlu0 %2498, %v400
        %v2500 = vpop.permute.xlu0 %2499
        %2502 = vset.pattern.permute.xlu0 1
        %2503 = vperm.xlu0 %2502, %v401
        %v2504 = vpop.permute.xlu0 %2503
        %2506 = vset.pattern.permute.xlu0 1
        %2507 = vperm.xlu0 %2506, %v402
        %v2508 = vpop.permute.xlu0 %2507
        %2510 = vset.pattern.permute.xlu0 1
        %2511 = vperm.xlu0 %2510, %v403
        %v2512 = vpop.permute.xlu0 %2511
        %2514 = vset.pattern.permute.xlu0 1
        %2515 = vperm.xlu0 %2514, %v404
        %v2516 = vpop.permute.xlu0 %2515
        %2518 = vset.pattern.permute.xlu0 1
        %2519 = vperm.xlu0 %2518, %v405
        %v2520 = vpop.permute.xlu0 %2519
        %2522 = vset.pattern.permute.xlu0 1
        %2523 = vperm.xlu0 %2522, %v406
        %v2524 = vpop.permute.xlu0 %2523
        %2526 = vset.pattern.permute.xlu0 1
        %2527 = vperm.xlu0 %2526, %v407
        %v2528 = vpop.permute.xlu0 %2527
        %2530 = vset.pattern.permute.xlu0 1
        %2531 = vperm.xlu0 %2530, %v408
        %v2532 = vpop.permute.xlu0 %2531
        %2534 = vset.pattern.permute.xlu0 1
        %2535 = vperm.xlu0 %2534, %v409
        %v2536 = vpop.permute.xlu0 %2535
        %2538 = vset.pattern.permute.xlu0 1
        %2539 = vperm.xlu0 %2538, %v410
        %v2540 = vpop.permute.xlu0 %2539
        %2542 = vset.pattern.permute.xlu0 1
        %2543 = vperm.xlu0 %2542, %v411
        %v2544 = vpop.permute.xlu0 %2543
        %2546 = vset.pattern.permute.xlu0 1
        %2547 = vperm.xlu0 %2546, %v412
        %v2548 = vpop.permute.xlu0 %2547
        %2550 = vset.pattern.permute.xlu0 1
        %2551 = vperm.xlu0 %2550, %v413
        %v2552 = vpop.permute.xlu0 %2551
        %2554 = vset.pattern.permute.xlu0 1
        %2555 = vperm.xlu0 %2554, %v414
        %v2556 = vpop.permute.xlu0 %2555
        %2558 = vset.pattern.permute.xlu0 1
        %2559 = vperm.xlu0 %2558, %v415
        %v2560 = vpop.permute.xlu0 %2559
        %2562 = vset.pattern.permute.xlu0 1
        %2563 = vperm.xlu0 %2562, %v416
        %v2564 = vpop.permute.xlu0 %2563
        %2566 = vset.pattern.permute.xlu0 1
        %2567 = vperm.xlu0 %2566, %v417
        %v2568 = vpop.permute.xlu0 %2567
        %2570 = vset.pattern.permute.xlu0 1
        %2571 = vperm.xlu0 %2570, %v418
        %v2572 = vpop.permute.xlu0 %2571
        %2574 = vset.pattern.permute.xlu0 1
        %2575 = vperm.xlu0 %2574, %v419
        %v2576 = vpop.permute.xlu0 %2575
        %2578 = vset.pattern.permute.xlu0 1
        %2579 = vperm.xlu0 %2578, %v420
        %v2580 = vpop.permute.xlu0 %2579
        %2582 = vset.pattern.permute.xlu0 1
        %2583 = vperm.xlu0 %2582, %v421
        %v2584 = vpop.permute.xlu0 %2583
        %v2586 = vsub.f32 %v2196, %v915
        %v2587 = vsub.f32 %v2200, %v915
        %v2588 = vsub.f32 %v2204, %v915
        %v2589 = vsub.f32 %v2208, %v915
        %v2590 = vsub.f32 %v2212, %v915
        %v2591 = vsub.f32 %v2216, %v915
        %v2592 = vsub.f32 %v2220, %v915
        %v2593 = vsub.f32 %v2224, %v915
        %v2594 = vsub.f32 %v2228, %v915
        %v2595 = vsub.f32 %v2232, %v915
        %v2596 = vsub.f32 %v2236, %v915
        %v2597 = vsub.f32 %v2240, %v915
        %v2598 = vsub.f32 %v2244, %v915
        %v2599 = vsub.f32 %v2248, %v915
        %v2600 = vsub.f32 %v2252, %v915
        %v2601 = vsub.f32 %v2256, %v915
        %v2602 = vsub.f32 %v2260, %v915
        %v2603 = vsub.f32 %v2264, %v915
        %v2604 = vsub.f32 %v2268, %v915
        %v2605 = vsub.f32 %v2272, %v915
        %v2606 = vsub.f32 %v2276, %v915
        %v2607 = vsub.f32 %v2280, %v915
        %v2608 = vsub.f32 %v2284, %v915
        %v2609 = vsub.f32 %v2288, %v915
        %v2610 = vsub.f32 %v2292, %v915
        %v2611 = vsub.f32 %v2296, %v915
        %v2612 = vsub.f32 %v2300, %v915
        %v2613 = vsub.f32 %v2304, %v915
        %v2614 = vsub.f32 %v2308, %v915
        %v2615 = vsub.f32 %v2312, %v915
        %v2616 = vsub.f32 %v2316, %v915
        %v2617 = vsub.f32 %v2320, %v915
        %v2618 = vsub.f32 %v2324, %v915
        %v2619 = vsub.f32 %v2328, %v915
        %v2620 = vsub.f32 %v2332, %v915
        %v2621 = vsub.f32 %v2336, %v915
        %v2622 = vsub.f32 %v2340, %v915
        %v2623 = vsub.f32 %v2344, %v915
        %v2624 = vsub.f32 %v2348, %v915
        %v2625 = vsub.f32 %v2352, %v915
        %v2626 = vsub.f32 %v2356, %v915
        %v2627 = vsub.f32 %v2360, %v915
        %v2628 = vsub.f32 %v2364, %v915
        %v2629 = vsub.f32 %v2368, %v915
        %v2630 = vsub.f32 %v2372, %v915
        %v2631 = vsub.f32 %v2376, %v915
        %v2632 = vsub.f32 %v2380, %v915
        %v2633 = vsub.f32 %v2384, %v915
        %v2634 = vsub.f32 %v2388, %v915
        %v2635 = vsub.f32 %v2392, %v915
        %v2636 = vsub.f32 %v2396, %v915
        %v2637 = vsub.f32 %v2400, %v915
        %v2638 = vsub.f32 %v2404, %v915
        %v2639 = vsub.f32 %v2408, %v915
        %v2640 = vsub.f32 %v2412, %v915
        %v2641 = vsub.f32 %v2416, %v915
        %v2642 = vsub.f32 %v2420, %v915
        %v2643 = vsub.f32 %v2424, %v915
        %v2644 = vsub.f32 %v2428, %v915
        %v2645 = vsub.f32 %v2432, %v915
        %v2646 = vsub.f32 %v2436, %v915
        %v2647 = vsub.f32 %v2440, %v915
        %v2648 = vsub.f32 %v2444, %v915
        %v2649 = vsub.f32 %v2448, %v915
        %v2650 = vsub.f32 %v2452, %v915
        %v2651 = vsub.f32 %v2456, %v915
        %v2652 = vsub.f32 %v2460, %v915
        %v2653 = vsub.f32 %v2464, %v915
        %v2654 = vsub.f32 %v2468, %v915
        %v2655 = vsub.f32 %v2472, %v915
        %v2656 = vsub.f32 %v2476, %v915
        %v2657 = vsub.f32 %v2480, %v915
        %v2658 = vsub.f32 %v2484, %v915
        %v2659 = vsub.f32 %v2488, %v915
        %v2660 = vsub.f32 %v2492, %v915
        %v2661 = vsub.f32 %v2496, %v915
        %v2662 = vsub.f32 %v2500, %v915
        %v2663 = vsub.f32 %v2504, %v915
        %v2664 = vsub.f32 %v2508, %v915
        %v2665 = vsub.f32 %v2512, %v915
        %v2666 = vsub.f32 %v2516, %v915
        %v2667 = vsub.f32 %v2520, %v915
        %v2668 = vsub.f32 %v2524, %v915
        %v2669 = vsub.f32 %v2528, %v915
        %v2670 = vsub.f32 %v2532, %v915
        %v2671 = vsub.f32 %v2536, %v915
        %v2672 = vsub.f32 %v2540, %v915
        %v2673 = vsub.f32 %v2544, %v915
        %v2674 = vsub.f32 %v2548, %v915
        %v2675 = vsub.f32 %v2552, %v915
        %v2676 = vsub.f32 %v2556, %v915
        %v2677 = vsub.f32 %v2560, %v915
        %v2678 = vsub.f32 %v2564, %v915
        %v2679 = vsub.f32 %v2568, %v915
        %v2680 = vsub.f32 %v2572, %v915
        %v2681 = vsub.f32 %v2576, %v915
        %v2682 = vsub.f32 %v2580, %v915
        %v2683 = vsub.f32 %v2584, %v915
        %v2684 = vand.u32 2147483647, %v2586
        %v2685 = vand.u32 2147483647, %v2587
        %v2686 = vand.u32 2147483647, %v2588
        %v2687 = vand.u32 2147483647, %v2589
        %v2688 = vand.u32 2147483647, %v2590
        %v2689 = vand.u32 2147483647, %v2591
        %v2690 = vand.u32 2147483647, %v2592
        %v2691 = vand.u32 2147483647, %v2593
        %v2692 = vand.u32 2147483647, %v2594
        %v2693 = vand.u32 2147483647, %v2595
        %v2694 = vand.u32 2147483647, %v2596
        %v2695 = vand.u32 2147483647, %v2597
        %v2696 = vand.u32 2147483647, %v2598
        %v2697 = vand.u32 2147483647, %v2599
        %v2698 = vand.u32 2147483647, %v2600
        %v2699 = vand.u32 2147483647, %v2601
        %v2700 = vand.u32 2147483647, %v2602
        %v2701 = vand.u32 2147483647, %v2603
        %v2702 = vand.u32 2147483647, %v2604
        %v2703 = vand.u32 2147483647, %v2605
        %v2704 = vand.u32 2147483647, %v2606
        %v2705 = vand.u32 2147483647, %v2607
        %v2706 = vand.u32 2147483647, %v2608
        %v2707 = vand.u32 2147483647, %v2609
        %v2708 = vand.u32 2147483647, %v2610
        %v2709 = vand.u32 2147483647, %v2611
        %v2710 = vand.u32 2147483647, %v2612
        %v2711 = vand.u32 2147483647, %v2613
        %v2712 = vand.u32 2147483647, %v2614
        %v2713 = vand.u32 2147483647, %v2615
        %v2714 = vand.u32 2147483647, %v2616
        %v2715 = vand.u32 2147483647, %v2617
        %v2716 = vand.u32 2147483647, %v2618
        %v2717 = vand.u32 2147483647, %v2619
        %v2718 = vand.u32 2147483647, %v2620
        %v2719 = vand.u32 2147483647, %v2621
        %v2720 = vand.u32 2147483647, %v2622
        %v2721 = vand.u32 2147483647, %v2623
        %v2722 = vand.u32 2147483647, %v2624
        %v2723 = vand.u32 2147483647, %v2625
        %v2724 = vand.u32 2147483647, %v2626
        %v2725 = vand.u32 2147483647, %v2627
        %v2726 = vand.u32 2147483647, %v2628
        %v2727 = vand.u32 2147483647, %v2629
        %v2728 = vand.u32 2147483647, %v2630
        %v2729 = vand.u32 2147483647, %v2631
        %v2730 = vand.u32 2147483647, %v2632
        %v2731 = vand.u32 2147483647, %v2633
        %v2732 = vand.u32 2147483647, %v2634
        %v2733 = vand.u32 2147483647, %v2635
        %v2734 = vand.u32 2147483647, %v2636
        %v2735 = vand.u32 2147483647, %v2637
        %v2736 = vand.u32 2147483647, %v2638
        %v2737 = vand.u32 2147483647, %v2639
        %v2738 = vand.u32 2147483647, %v2640
        %v2739 = vand.u32 2147483647, %v2641
        %v2740 = vand.u32 2147483647, %v2642
        %v2741 = vand.u32 2147483647, %v2643
        %v2742 = vand.u32 2147483647, %v2644
        %v2743 = vand.u32 2147483647, %v2645
        %v2744 = vand.u32 2147483647, %v2646
        %v2745 = vand.u32 2147483647, %v2647
        %v2746 = vand.u32 2147483647, %v2648
        %v2747 = vand.u32 2147483647, %v2649
        %v2748 = vand.u32 2147483647, %v2650
        %v2749 = vand.u32 2147483647, %v2651
        %v2750 = vand.u32 2147483647, %v2652
        %v2751 = vand.u32 2147483647, %v2653
        %v2752 = vand.u32 2147483647, %v2654
        %v2753 = vand.u32 2147483647, %v2655
        %v2754 = vand.u32 2147483647, %v2656
        %v2755 = vand.u32 2147483647, %v2657
        %v2756 = vand.u32 2147483647, %v2658
        %v2757 = vand.u32 2147483647, %v2659
        %v2758 = vand.u32 2147483647, %v2660
        %v2759 = vand.u32 2147483647, %v2661
        %v2760 = vand.u32 2147483647, %v2662
        %v2761 = vand.u32 2147483647, %v2663
        %v2762 = vand.u32 2147483647, %v2664
        %v2763 = vand.u32 2147483647, %v2665
        %v2764 = vand.u32 2147483647, %v2666
        %v2765 = vand.u32 2147483647, %v2667
        %v2766 = vand.u32 2147483647, %v2668
        %v2767 = vand.u32 2147483647, %v2669
        %v2768 = vand.u32 2147483647, %v2670
        %v2769 = vand.u32 2147483647, %v2671
        %v2770 = vand.u32 2147483647, %v2672
        %v2771 = vand.u32 2147483647, %v2673
        %v2772 = vand.u32 2147483647, %v2674
        %v2773 = vand.u32 2147483647, %v2675
        %v2774 = vand.u32 2147483647, %v2676
        %v2775 = vand.u32 2147483647, %v2677
        %v2776 = vand.u32 2147483647, %v2678
        %v2777 = vand.u32 2147483647, %v2679
        %v2778 = vand.u32 2147483647, %v2680
        %v2779 = vand.u32 2147483647, %v2681
        %v2780 = vand.u32 2147483647, %v2682
        %v2781 = vand.u32 2147483647, %v2683
        %v2782 = vsub.f32 1.0, %v2684
        %v2783 = vsub.f32 1.0, %v2685
        %v2784 = vsub.f32 1.0, %v2686
        %v2785 = vsub.f32 1.0, %v2687
        %v2786 = vsub.f32 1.0, %v2688
        %v2787 = vsub.f32 1.0, %v2689
        %v2788 = vsub.f32 1.0, %v2690
        %v2789 = vsub.f32 1.0, %v2691
        %v2790 = vsub.f32 1.0, %v2692
        %v2791 = vsub.f32 1.0, %v2693
        %v2792 = vsub.f32 1.0, %v2694
        %v2793 = vsub.f32 1.0, %v2695
        %v2794 = vsub.f32 1.0, %v2696
        %v2795 = vsub.f32 1.0, %v2697
        %v2796 = vsub.f32 1.0, %v2698
        %v2797 = vsub.f32 1.0, %v2699
        %v2798 = vsub.f32 1.0, %v2700
        %v2799 = vsub.f32 1.0, %v2701
        %v2800 = vsub.f32 1.0, %v2702
        %v2801 = vsub.f32 1.0, %v2703
        %v2802 = vsub.f32 1.0, %v2704
        %v2803 = vsub.f32 1.0, %v2705
        %v2804 = vsub.f32 1.0, %v2706
        %v2805 = vsub.f32 1.0, %v2707
        %v2806 = vsub.f32 1.0, %v2708
        %v2807 = vsub.f32 1.0, %v2709
        %v2808 = vsub.f32 1.0, %v2710
        %v2809 = vsub.f32 1.0, %v2711
        %v2810 = vsub.f32 1.0, %v2712
        %v2811 = vsub.f32 1.0, %v2713
        %v2812 = vsub.f32 1.0, %v2714
        %v2813 = vsub.f32 1.0, %v2715
        %v2814 = vsub.f32 1.0, %v2716
        %v2815 = vsub.f32 1.0, %v2717
        %v2816 = vsub.f32 1.0, %v2718
        %v2817 = vsub.f32 1.0, %v2719
        %v2818 = vsub.f32 1.0, %v2720
        %v2819 = vsub.f32 1.0, %v2721
        %v2820 = vsub.f32 1.0, %v2722
        %v2821 = vsub.f32 1.0, %v2723
        %v2822 = vsub.f32 1.0, %v2724
        %v2823 = vsub.f32 1.0, %v2725
        %v2824 = vsub.f32 1.0, %v2726
        %v2825 = vsub.f32 1.0, %v2727
        %v2826 = vsub.f32 1.0, %v2728
        %v2827 = vsub.f32 1.0, %v2729
        %v2828 = vsub.f32 1.0, %v2730
        %v2829 = vsub.f32 1.0, %v2731
        %v2830 = vsub.f32 1.0, %v2732
        %v2831 = vsub.f32 1.0, %v2733
        %v2832 = vsub.f32 1.0, %v2734
        %v2833 = vsub.f32 1.0, %v2735
        %v2834 = vsub.f32 1.0, %v2736
        %v2835 = vsub.f32 1.0, %v2737
        %v2836 = vsub.f32 1.0, %v2738
        %v2837 = vsub.f32 1.0, %v2739
        %v2838 = vsub.f32 1.0, %v2740
        %v2839 = vsub.f32 1.0, %v2741
        %v2840 = vsub.f32 1.0, %v2742
        %v2841 = vsub.f32 1.0, %v2743
        %v2842 = vsub.f32 1.0, %v2744
        %v2843 = vsub.f32 1.0, %v2745
        %v2844 = vsub.f32 1.0, %v2746
        %v2845 = vsub.f32 1.0, %v2747
        %v2846 = vsub.f32 1.0, %v2748
        %v2847 = vsub.f32 1.0, %v2749
        %v2848 = vsub.f32 1.0, %v2750
        %v2849 = vsub.f32 1.0, %v2751
        %v2850 = vsub.f32 1.0, %v2752
        %v2851 = vsub.f32 1.0, %v2753
        %v2852 = vsub.f32 1.0, %v2754
        %v2853 = vsub.f32 1.0, %v2755
        %v2854 = vsub.f32 1.0, %v2756
        %v2855 = vsub.f32 1.0, %v2757
        %v2856 = vsub.f32 1.0, %v2758
        %v2857 = vsub.f32 1.0, %v2759
        %v2858 = vsub.f32 1.0, %v2760
        %v2859 = vsub.f32 1.0, %v2761
        %v2860 = vsub.f32 1.0, %v2762
        %v2861 = vsub.f32 1.0, %v2763
        %v2862 = vsub.f32 1.0, %v2764
        %v2863 = vsub.f32 1.0, %v2765
        %v2864 = vsub.f32 1.0, %v2766
        %v2865 = vsub.f32 1.0, %v2767
        %v2866 = vsub.f32 1.0, %v2768
        %v2867 = vsub.f32 1.0, %v2769
        %v2868 = vsub.f32 1.0, %v2770
        %v2869 = vsub.f32 1.0, %v2771
        %v2870 = vsub.f32 1.0, %v2772
        %v2871 = vsub.f32 1.0, %v2773
        %v2872 = vsub.f32 1.0, %v2774
        %v2873 = vsub.f32 1.0, %v2775
        %v2874 = vsub.f32 1.0, %v2776
        %v2875 = vsub.f32 1.0, %v2777
        %v2876 = vsub.f32 1.0, %v2778
        %v2877 = vsub.f32 1.0, %v2779
        %v2878 = vsub.f32 1.0, %v2780
        %v2879 = vsub.f32 1.0, %v2781
        %v2880 = vmax.f32 %v2782, 0.0
        %v2881 = vmax.f32 %v2783, 0.0
        %v2882 = vmax.f32 %v2784, 0.0
        %v2883 = vmax.f32 %v2785, 0.0
        %v2884 = vmax.f32 %v2786, 0.0
        %v2885 = vmax.f32 %v2787, 0.0
        %v2886 = vmax.f32 %v2788, 0.0
        %v2887 = vmax.f32 %v2789, 0.0
        %v2888 = vmax.f32 %v2790, 0.0
        %v2889 = vmax.f32 %v2791, 0.0
        %v2890 = vmax.f32 %v2792, 0.0
        %v2891 = vmax.f32 %v2793, 0.0
        %v2892 = vmax.f32 %v2794, 0.0
        %v2893 = vmax.f32 %v2795, 0.0
        %v2894 = vmax.f32 %v2796, 0.0
        %v2895 = vmax.f32 %v2797, 0.0
        %v2896 = vmax.f32 %v2798, 0.0
        %v2897 = vmax.f32 %v2799, 0.0
        %v2898 = vmax.f32 %v2800, 0.0
        %v2899 = vmax.f32 %v2801, 0.0
        %v2900 = vmax.f32 %v2802, 0.0
        %v2901 = vmax.f32 %v2803, 0.0
        %v2902 = vmax.f32 %v2804, 0.0
        %v2903 = vmax.f32 %v2805, 0.0
        %v2904 = vmax.f32 %v2806, 0.0
        %v2905 = vmax.f32 %v2807, 0.0
        %v2906 = vmax.f32 %v2808, 0.0
        %v2907 = vmax.f32 %v2809, 0.0
        %v2908 = vmax.f32 %v2810, 0.0
        %v2909 = vmax.f32 %v2811, 0.0
        %v2910 = vmax.f32 %v2812, 0.0
        %v2911 = vmax.f32 %v2813, 0.0
        %v2912 = vmax.f32 %v2814, 0.0
        %v2913 = vmax.f32 %v2815, 0.0
        %v2914 = vmax.f32 %v2816, 0.0
        %v2915 = vmax.f32 %v2817, 0.0
        %v2916 = vmax.f32 %v2818, 0.0
        %v2917 = vmax.f32 %v2819, 0.0
        %v2918 = vmax.f32 %v2820, 0.0
        %v2919 = vmax.f32 %v2821, 0.0
        %v2920 = vmax.f32 %v2822, 0.0
        %v2921 = vmax.f32 %v2823, 0.0
        %v2922 = vmax.f32 %v2824, 0.0
        %v2923 = vmax.f32 %v2825, 0.0
        %v2924 = vmax.f32 %v2826, 0.0
        %v2925 = vmax.f32 %v2827, 0.0
        %v2926 = vmax.f32 %v2828, 0.0
        %v2927 = vmax.f32 %v2829, 0.0
        %v2928 = vmax.f32 %v2830, 0.0
        %v2929 = vmax.f32 %v2831, 0.0
        %v2930 = vmax.f32 %v2832, 0.0
        %v2931 = vmax.f32 %v2833, 0.0
        %v2932 = vmax.f32 %v2834, 0.0
        %v2933 = vmax.f32 %v2835, 0.0
        %v2934 = vmax.f32 %v2836, 0.0
        %v2935 = vmax.f32 %v2837, 0.0
        %v2936 = vmax.f32 %v2838, 0.0
        %v2937 = vmax.f32 %v2839, 0.0
        %v2938 = vmax.f32 %v2840, 0.0
        %v2939 = vmax.f32 %v2841, 0.0
        %v2940 = vmax.f32 %v2842, 0.0
        %v2941 = vmax.f32 %v2843, 0.0
        %v2942 = vmax.f32 %v2844, 0.0
        %v2943 = vmax.f32 %v2845, 0.0
        %v2944 = vmax.f32 %v2846, 0.0
        %v2945 = vmax.f32 %v2847, 0.0
        %v2946 = vmax.f32 %v2848, 0.0
        %v2947 = vmax.f32 %v2849, 0.0
        %v2948 = vmax.f32 %v2850, 0.0
        %v2949 = vmax.f32 %v2851, 0.0
        %v2950 = vmax.f32 %v2852, 0.0
        %v2951 = vmax.f32 %v2853, 0.0
        %v2952 = vmax.f32 %v2854, 0.0
        %v2953 = vmax.f32 %v2855, 0.0
        %v2954 = vmax.f32 %v2856, 0.0
        %v2955 = vmax.f32 %v2857, 0.0
        %v2956 = vmax.f32 %v2858, 0.0
        %v2957 = vmax.f32 %v2859, 0.0
        %v2958 = vmax.f32 %v2860, 0.0
        %v2959 = vmax.f32 %v2861, 0.0
        %v2960 = vmax.f32 %v2862, 0.0
        %v2961 = vmax.f32 %v2863, 0.0
        %v2962 = vmax.f32 %v2864, 0.0
        %v2963 = vmax.f32 %v2865, 0.0
        %v2964 = vmax.f32 %v2866, 0.0
        %v2965 = vmax.f32 %v2867, 0.0
        %v2966 = vmax.f32 %v2868, 0.0
        %v2967 = vmax.f32 %v2869, 0.0
        %v2968 = vmax.f32 %v2870, 0.0
        %v2969 = vmax.f32 %v2871, 0.0
        %v2970 = vmax.f32 %v2872, 0.0
        %v2971 = vmax.f32 %v2873, 0.0
        %v2972 = vmax.f32 %v2874, 0.0
        %v2973 = vmax.f32 %v2875, 0.0
        %v2974 = vmax.f32 %v2876, 0.0
        %v2975 = vmax.f32 %v2877, 0.0
        %v2976 = vmax.f32 %v2878, 0.0
        %v2977 = vmax.f32 %v2879, 0.0
        %2978 = vset.pattern.permute.xlu0 5
        %2979 = vperm.xlu0 %2978, %v324
        %v2980 = vpop.permute.xlu0 %2979
        %2982 = vset.pattern.permute.xlu0 5
        %2983 = vperm.xlu0 %2982, %v325
        %v2984 = vpop.permute.xlu0 %2983
        %2986 = vset.pattern.permute.xlu0 5
        %2987 = vperm.xlu0 %2986, %v326
        %v2988 = vpop.permute.xlu0 %2987
        %2990 = vset.pattern.permute.xlu0 5
        %2991 = vperm.xlu0 %2990, %v327
        %v2992 = vpop.permute.xlu0 %2991
        %2994 = vset.pattern.permute.xlu0 5
        %2995 = vperm.xlu0 %2994, %v328
        %v2996 = vpop.permute.xlu0 %2995
        %2998 = vset.pattern.permute.xlu0 5
        %2999 = vperm.xlu0 %2998, %v329
        %v3000 = vpop.permute.xlu0 %2999
        %3002 = vset.pattern.permute.xlu0 5
        %3003 = vperm.xlu0 %3002, %v330
        %v3004 = vpop.permute.xlu0 %3003
        %3006 = vset.pattern.permute.xlu0 5
        %3007 = vperm.xlu0 %3006, %v331
        %v3008 = vpop.permute.xlu0 %3007
        %3010 = vset.pattern.permute.xlu0 5
        %3011 = vperm.xlu0 %3010, %v332
        %v3012 = vpop.permute.xlu0 %3011
        %3014 = vset.pattern.permute.xlu0 5
        %3015 = vperm.xlu0 %3014, %v333
        %v3016 = vpop.permute.xlu0 %3015
        %3018 = vset.pattern.permute.xlu0 5
        %3019 = vperm.xlu0 %3018, %v334
        %v3020 = vpop.permute.xlu0 %3019
        %3022 = vset.pattern.permute.xlu0 5
        %3023 = vperm.xlu0 %3022, %v335
        %v3024 = vpop.permute.xlu0 %3023
        %3026 = vset.pattern.permute.xlu0 5
        %3027 = vperm.xlu0 %3026, %v336
        %v3028 = vpop.permute.xlu0 %3027
        %3030 = vset.pattern.permute.xlu0 5
        %3031 = vperm.xlu0 %3030, %v337
        %v3032 = vpop.permute.xlu0 %3031
        %3034 = vset.pattern.permute.xlu0 5
        %3035 = vperm.xlu0 %3034, %v338
        %v3036 = vpop.permute.xlu0 %3035
        %3038 = vset.pattern.permute.xlu0 5
        %3039 = vperm.xlu0 %3038, %v339
        %v3040 = vpop.permute.xlu0 %3039
        %3042 = vset.pattern.permute.xlu0 5
        %3043 = vperm.xlu0 %3042, %v340
        %v3044 = vpop.permute.xlu0 %3043
        %3046 = vset.pattern.permute.xlu0 5
        %3047 = vperm.xlu0 %3046, %v341
        %v3048 = vpop.permute.xlu0 %3047
        %3050 = vset.pattern.permute.xlu0 5
        %3051 = vperm.xlu0 %3050, %v342
        %v3052 = vpop.permute.xlu0 %3051
        %3054 = vset.pattern.permute.xlu0 5
        %3055 = vperm.xlu0 %3054, %v343
        %v3056 = vpop.permute.xlu0 %3055
        %3058 = vset.pattern.permute.xlu0 5
        %3059 = vperm.xlu0 %3058, %v344
        %v3060 = vpop.permute.xlu0 %3059
        %3062 = vset.pattern.permute.xlu0 5
        %3063 = vperm.xlu0 %3062, %v345
        %v3064 = vpop.permute.xlu0 %3063
        %3066 = vset.pattern.permute.xlu0 5
        %3067 = vperm.xlu0 %3066, %v346
        %v3068 = vpop.permute.xlu0 %3067
        %3070 = vset.pattern.permute.xlu0 5
        %3071 = vperm.xlu0 %3070, %v347
        %v3072 = vpop.permute.xlu0 %3071
        %3074 = vset.pattern.permute.xlu0 5
        %3075 = vperm.xlu0 %3074, %v348
        %v3076 = vpop.permute.xlu0 %3075
        %3078 = vset.pattern.permute.xlu0 5
        %3079 = vperm.xlu0 %3078, %v349
        %v3080 = vpop.permute.xlu0 %3079
        %3082 = vset.pattern.permute.xlu0 5
        %3083 = vperm.xlu0 %3082, %v350
        %v3084 = vpop.permute.xlu0 %3083
        %3086 = vset.pattern.permute.xlu0 5
        %3087 = vperm.xlu0 %3086, %v351
        %v3088 = vpop.permute.xlu0 %3087
        %3090 = vset.pattern.permute.xlu0 5
        %3091 = vperm.xlu0 %3090, %v352
        %v3092 = vpop.permute.xlu0 %3091
        %3094 = vset.pattern.permute.xlu0 5
        %3095 = vperm.xlu0 %3094, %v353
        %v3096 = vpop.permute.xlu0 %3095
        %3098 = vset.pattern.permute.xlu0 5
        %3099 = vperm.xlu0 %3098, %v354
        %v3100 = vpop.permute.xlu0 %3099
        %3102 = vset.pattern.permute.xlu0 5
        %3103 = vperm.xlu0 %3102, %v355
        %v3104 = vpop.permute.xlu0 %3103
        %3106 = vset.pattern.permute.xlu0 5
        %3107 = vperm.xlu0 %3106, %v356
        %v3108 = vpop.permute.xlu0 %3107
        %3110 = vset.pattern.permute.xlu0 5
        %3111 = vperm.xlu0 %3110, %v357
        %v3112 = vpop.permute.xlu0 %3111
        %3114 = vset.pattern.permute.xlu0 5
        %3115 = vperm.xlu0 %3114, %v358
        %v3116 = vpop.permute.xlu0 %3115
        %3118 = vset.pattern.permute.xlu0 5
        %3119 = vperm.xlu0 %3118, %v359
        %v3120 = vpop.permute.xlu0 %3119
        %3122 = vset.pattern.permute.xlu0 5
        %3123 = vperm.xlu0 %3122, %v360
        %v3124 = vpop.permute.xlu0 %3123
        %3126 = vset.pattern.permute.xlu0 5
        %3127 = vperm.xlu0 %3126, %v361
        %v3128 = vpop.permute.xlu0 %3127
        %3130 = vset.pattern.permute.xlu0 5
        %3131 = vperm.xlu0 %3130, %v362
        %v3132 = vpop.permute.xlu0 %3131
        %3134 = vset.pattern.permute.xlu0 5
        %3135 = vperm.xlu0 %3134, %v363
        %v3136 = vpop.permute.xlu0 %3135
        %3138 = vset.pattern.permute.xlu0 5
        %3139 = vperm.xlu0 %3138, %v364
        %v3140 = vpop.permute.xlu0 %3139
        %3142 = vset.pattern.permute.xlu0 5
        %3143 = vperm.xlu0 %3142, %v365
        %v3144 = vpop.permute.xlu0 %3143
        %3146 = vset.pattern.permute.xlu0 5
        %3147 = vperm.xlu0 %3146, %v366
        %v3148 = vpop.permute.xlu0 %3147
        %3150 = vset.pattern.permute.xlu0 5
        %3151 = vperm.xlu0 %3150, %v367
        %v3152 = vpop.permute.xlu0 %3151
        %3154 = vset.pattern.permute.xlu0 5
        %3155 = vperm.xlu0 %3154, %v368
        %v3156 = vpop.permute.xlu0 %3155
        %3158 = vset.pattern.permute.xlu0 5
        %3159 = vperm.xlu0 %3158, %v369
        %v3160 = vpop.permute.xlu0 %3159
        %3162 = vset.pattern.permute.xlu0 5
        %3163 = vperm.xlu0 %3162, %v370
        %v3164 = vpop.permute.xlu0 %3163
        %3166 = vset.pattern.permute.xlu0 5
        %3167 = vperm.xlu0 %3166, %v371
        %v3168 = vpop.permute.xlu0 %3167
        %3170 = vset.pattern.permute.xlu0 5
        %3171 = vperm.xlu0 %3170, %v372
        %v3172 = vpop.permute.xlu0 %3171
        %3174 = vset.pattern.permute.xlu0 5
        %3175 = vperm.xlu0 %3174, %v373
        %v3176 = vpop.permute.xlu0 %3175
        %3178 = vset.pattern.permute.xlu0 5
        %3179 = vperm.xlu0 %3178, %v374
        %v3180 = vpop.permute.xlu0 %3179
        %3182 = vset.pattern.permute.xlu0 5
        %3183 = vperm.xlu0 %3182, %v375
        %v3184 = vpop.permute.xlu0 %3183
        %3186 = vset.pattern.permute.xlu0 5
        %3187 = vperm.xlu0 %3186, %v376
        %v3188 = vpop.permute.xlu0 %3187
        %3190 = vset.pattern.permute.xlu0 5
        %3191 = vperm.xlu0 %3190, %v377
        %v3192 = vpop.permute.xlu0 %3191
        %3194 = vset.pattern.permute.xlu0 5
        %3195 = vperm.xlu0 %3194, %v378
        %v3196 = vpop.permute.xlu0 %3195
        %3198 = vset.pattern.permute.xlu0 5
        %3199 = vperm.xlu0 %3198, %v379
        %v3200 = vpop.permute.xlu0 %3199
        %3202 = vset.pattern.permute.xlu0 5
        %3203 = vperm.xlu0 %3202, %v380
        %v3204 = vpop.permute.xlu0 %3203
        %3206 = vset.pattern.permute.xlu0 5
        %3207 = vperm.xlu0 %3206, %v381
        %v3208 = vpop.permute.xlu0 %3207
        %3210 = vset.pattern.permute.xlu0 5
        %3211 = vperm.xlu0 %3210, %v382
        %v3212 = vpop.permute.xlu0 %3211
        %3214 = vset.pattern.permute.xlu0 5
        %3215 = vperm.xlu0 %3214, %v383
        %v3216 = vpop.permute.xlu0 %3215
        %3218 = vset.pattern.permute.xlu0 5
        %3219 = vperm.xlu0 %3218, %v384
        %v3220 = vpop.permute.xlu0 %3219
        %3222 = vset.pattern.permute.xlu0 5
        %3223 = vperm.xlu0 %3222, %v385
        %v3224 = vpop.permute.xlu0 %3223
        %3226 = vset.pattern.permute.xlu0 5
        %3227 = vperm.xlu0 %3226, %v386
        %v3228 = vpop.permute.xlu0 %3227
        %3230 = vset.pattern.permute.xlu0 5
        %3231 = vperm.xlu0 %3230, %v387
        %v3232 = vpop.permute.xlu0 %3231
        %3234 = vset.pattern.permute.xlu0 5
        %3235 = vperm.xlu0 %3234, %v388
        %v3236 = vpop.permute.xlu0 %3235
        %3238 = vset.pattern.permute.xlu0 5
        %3239 = vperm.xlu0 %3238, %v389
        %v3240 = vpop.permute.xlu0 %3239
        %3242 = vset.pattern.permute.xlu0 5
        %3243 = vperm.xlu0 %3242, %v390
        %v3244 = vpop.permute.xlu0 %3243
        %3246 = vset.pattern.permute.xlu0 5
        %3247 = vperm.xlu0 %3246, %v391
        %v3248 = vpop.permute.xlu0 %3247
        %3250 = vset.pattern.permute.xlu0 5
        %3251 = vperm.xlu0 %3250, %v392
        %v3252 = vpop.permute.xlu0 %3251
        %3254 = vset.pattern.permute.xlu0 5
        %3255 = vperm.xlu0 %3254, %v393
        %v3256 = vpop.permute.xlu0 %3255
        %3258 = vset.pattern.permute.xlu0 5
        %3259 = vperm.xlu0 %3258, %v394
        %v3260 = vpop.permute.xlu0 %3259
        %3262 = vset.pattern.permute.xlu0 5
        %3263 = vperm.xlu0 %3262, %v395
        %v3264 = vpop.permute.xlu0 %3263
        %3266 = vset.pattern.permute.xlu0 5
        %3267 = vperm.xlu0 %3266, %v396
        %v3268 = vpop.permute.xlu0 %3267
        %3270 = vset.pattern.permute.xlu0 5
        %3271 = vperm.xlu0 %3270, %v397
        %v3272 = vpop.permute.xlu0 %3271
        %3274 = vset.pattern.permute.xlu0 5
        %3275 = vperm.xlu0 %3274, %v398
        %v3276 = vpop.permute.xlu0 %3275
        %3278 = vset.pattern.permute.xlu0 5
        %3279 = vperm.xlu0 %3278, %v399
        %v3280 = vpop.permute.xlu0 %3279
        %3282 = vset.pattern.permute.xlu0 5
        %3283 = vperm.xlu0 %3282, %v400
        %v3284 = vpop.permute.xlu0 %3283
        %3286 = vset.pattern.permute.xlu0 5
        %3287 = vperm.xlu0 %3286, %v401
        %v3288 = vpop.permute.xlu0 %3287
        %3290 = vset.pattern.permute.xlu0 5
        %3291 = vperm.xlu0 %3290, %v402
        %v3292 = vpop.permute.xlu0 %3291
        %3294 = vset.pattern.permute.xlu0 5
        %3295 = vperm.xlu0 %3294, %v403
        %v3296 = vpop.permute.xlu0 %3295
        %3298 = vset.pattern.permute.xlu0 5
        %3299 = vperm.xlu0 %3298, %v404
        %v3300 = vpop.permute.xlu0 %3299
        %3302 = vset.pattern.permute.xlu0 5
        %3303 = vperm.xlu0 %3302, %v405
        %v3304 = vpop.permute.xlu0 %3303
        %3306 = vset.pattern.permute.xlu0 5
        %3307 = vperm.xlu0 %3306, %v406
        %v3308 = vpop.permute.xlu0 %3307
        %3310 = vset.pattern.permute.xlu0 5
        %3311 = vperm.xlu0 %3310, %v407
        %v3312 = vpop.permute.xlu0 %3311
        %3314 = vset.pattern.permute.xlu0 5
        %3315 = vperm.xlu0 %3314, %v408
        %v3316 = vpop.permute.xlu0 %3315
        %3318 = vset.pattern.permute.xlu0 5
        %3319 = vperm.xlu0 %3318, %v409
        %v3320 = vpop.permute.xlu0 %3319
        %3322 = vset.pattern.permute.xlu0 5
        %3323 = vperm.xlu0 %3322, %v410
        %v3324 = vpop.permute.xlu0 %3323
        %3326 = vset.pattern.permute.xlu0 5
        %3327 = vperm.xlu0 %3326, %v411
        %v3328 = vpop.permute.xlu0 %3327
        %3330 = vset.pattern.permute.xlu0 5
        %3331 = vperm.xlu0 %3330, %v412
        %v3332 = vpop.permute.xlu0 %3331
        %3334 = vset.pattern.permute.xlu0 5
        %3335 = vperm.xlu0 %3334, %v413
        %v3336 = vpop.permute.xlu0 %3335
        %3338 = vset.pattern.permute.xlu0 5
        %3339 = vperm.xlu0 %3338, %v414
        %v3340 = vpop.permute.xlu0 %3339
        %3342 = vset.pattern.permute.xlu0 5
        %3343 = vperm.xlu0 %3342, %v415
        %v3344 = vpop.permute.xlu0 %3343
        %3346 = vset.pattern.permute.xlu0 5
        %3347 = vperm.xlu0 %3346, %v416
        %v3348 = vpop.permute.xlu0 %3347
        %3350 = vset.pattern.permute.xlu0 5
        %3351 = vperm.xlu0 %3350, %v417
        %v3352 = vpop.permute.xlu0 %3351
        %3354 = vset.pattern.permute.xlu0 5
        %3355 = vperm.xlu0 %3354, %v418
        %v3356 = vpop.permute.xlu0 %3355
        %3358 = vset.pattern.permute.xlu0 5
        %3359 = vperm.xlu0 %3358, %v419
        %v3360 = vpop.permute.xlu0 %3359
        %3362 = vset.pattern.permute.xlu0 5
        %3363 = vperm.xlu0 %3362, %v420
        %v3364 = vpop.permute.xlu0 %3363
        %3366 = vset.pattern.permute.xlu0 5
        %3367 = vperm.xlu0 %3366, %v421
        %v3368 = vpop.permute.xlu0 %3367
        %v3370 = vsub.f32 %v2980, %v1703
        %v3371 = vsub.f32 %v2984, %v1703
        %v3372 = vsub.f32 %v2988, %v1703
        %v3373 = vsub.f32 %v2992, %v1703
        %v3374 = vsub.f32 %v2996, %v1703
        %v3375 = vsub.f32 %v3000, %v1703
        %v3376 = vsub.f32 %v3004, %v1703
        %v3377 = vsub.f32 %v3008, %v1703
        %v3378 = vsub.f32 %v3012, %v1703
        %v3379 = vsub.f32 %v3016, %v1703
        %v3380 = vsub.f32 %v3020, %v1703
        %v3381 = vsub.f32 %v3024, %v1703
        %v3382 = vsub.f32 %v3028, %v1703
        %v3383 = vsub.f32 %v3032, %v1703
        %v3384 = vsub.f32 %v3036, %v1703
        %v3385 = vsub.f32 %v3040, %v1703
        %v3386 = vsub.f32 %v3044, %v1703
        %v3387 = vsub.f32 %v3048, %v1703
        %v3388 = vsub.f32 %v3052, %v1703
        %v3389 = vsub.f32 %v3056, %v1703
        %v3390 = vsub.f32 %v3060, %v1703
        %v3391 = vsub.f32 %v3064, %v1703
        %v3392 = vsub.f32 %v3068, %v1703
        %v3393 = vsub.f32 %v3072, %v1703
        %v3394 = vsub.f32 %v3076, %v1703
        %v3395 = vsub.f32 %v3080, %v1703
        %v3396 = vsub.f32 %v3084, %v1703
        %v3397 = vsub.f32 %v3088, %v1703
        %v3398 = vsub.f32 %v3092, %v1703
        %v3399 = vsub.f32 %v3096, %v1703
        %v3400 = vsub.f32 %v3100, %v1703
        %v3401 = vsub.f32 %v3104, %v1703
        %v3402 = vsub.f32 %v3108, %v1703
        %v3403 = vsub.f32 %v3112, %v1703
        %v3404 = vsub.f32 %v3116, %v1703
        %v3405 = vsub.f32 %v3120, %v1703
        %v3406 = vsub.f32 %v3124, %v1703
        %v3407 = vsub.f32 %v3128, %v1703
        %v3408 = vsub.f32 %v3132, %v1703
        %v3409 = vsub.f32 %v3136, %v1703
        %v3410 = vsub.f32 %v3140, %v1703
        %v3411 = vsub.f32 %v3144, %v1703
        %v3412 = vsub.f32 %v3148, %v1703
        %v3413 = vsub.f32 %v3152, %v1703
        %v3414 = vsub.f32 %v3156, %v1703
        %v3415 = vsub.f32 %v3160, %v1703
        %v3416 = vsub.f32 %v3164, %v1703
        %v3417 = vsub.f32 %v3168, %v1703
        %v3418 = vsub.f32 %v3172, %v1703
        %v3419 = vsub.f32 %v3176, %v1703
        %v3420 = vsub.f32 %v3180, %v1703
        %v3421 = vsub.f32 %v3184, %v1703
        %v3422 = vsub.f32 %v3188, %v1703
        %v3423 = vsub.f32 %v3192, %v1703
        %v3424 = vsub.f32 %v3196, %v1703
        %v3425 = vsub.f32 %v3200, %v1703
        %v3426 = vsub.f32 %v3204, %v1703
        %v3427 = vsub.f32 %v3208, %v1703
        %v3428 = vsub.f32 %v3212, %v1703
        %v3429 = vsub.f32 %v3216, %v1703
        %v3430 = vsub.f32 %v3220, %v1703
        %v3431 = vsub.f32 %v3224, %v1703
        %v3432 = vsub.f32 %v3228, %v1703
        %v3433 = vsub.f32 %v3232, %v1703
        %v3434 = vsub.f32 %v3236, %v1703
        %v3435 = vsub.f32 %v3240, %v1703
        %v3436 = vsub.f32 %v3244, %v1703
        %v3437 = vsub.f32 %v3248, %v1703
        %v3438 = vsub.f32 %v3252, %v1703
        %v3439 = vsub.f32 %v3256, %v1703
        %v3440 = vsub.f32 %v3260, %v1703
        %v3441 = vsub.f32 %v3264, %v1703
        %v3442 = vsub.f32 %v3268, %v1703
        %v3443 = vsub.f32 %v3272, %v1703
        %v3444 = vsub.f32 %v3276, %v1703
        %v3445 = vsub.f32 %v3280, %v1703
        %v3446 = vsub.f32 %v3284, %v1703
        %v3447 = vsub.f32 %v3288, %v1703
        %v3448 = vsub.f32 %v3292, %v1703
        %v3449 = vsub.f32 %v3296, %v1703
        %v3450 = vsub.f32 %v3300, %v1703
        %v3451 = vsub.f32 %v3304, %v1703
        %v3452 = vsub.f32 %v3308, %v1703
        %v3453 = vsub.f32 %v3312, %v1703
        %v3454 = vsub.f32 %v3316, %v1703
        %v3455 = vsub.f32 %v3320, %v1703
        %v3456 = vsub.f32 %v3324, %v1703
        %v3457 = vsub.f32 %v3328, %v1703
        %v3458 = vsub.f32 %v3332, %v1703
        %v3459 = vsub.f32 %v3336, %v1703
        %v3460 = vsub.f32 %v3340, %v1703
        %v3461 = vsub.f32 %v3344, %v1703
        %v3462 = vsub.f32 %v3348, %v1703
        %v3463 = vsub.f32 %v3352, %v1703
        %v3464 = vsub.f32 %v3356, %v1703
        %v3465 = vsub.f32 %v3360, %v1703
        %v3466 = vsub.f32 %v3364, %v1703
        %v3467 = vsub.f32 %v3368, %v1703
        %v3468 = vand.u32 2147483647, %v3370
        %v3469 = vand.u32 2147483647, %v3371
        %v3470 = vand.u32 2147483647, %v3372
        %v3471 = vand.u32 2147483647, %v3373
        %v3472 = vand.u32 2147483647, %v3374
        %v3473 = vand.u32 2147483647, %v3375
        %v3474 = vand.u32 2147483647, %v3376
        %v3475 = vand.u32 2147483647, %v3377
        %v3476 = vand.u32 2147483647, %v3378
        %v3477 = vand.u32 2147483647, %v3379
        %v3478 = vand.u32 2147483647, %v3380
        %v3479 = vand.u32 2147483647, %v3381
        %v3480 = vand.u32 2147483647, %v3382
        %v3481 = vand.u32 2147483647, %v3383
        %v3482 = vand.u32 2147483647, %v3384
        %v3483 = vand.u32 2147483647, %v3385
        %v3484 = vand.u32 2147483647, %v3386
        %v3485 = vand.u32 2147483647, %v3387
        %v3486 = vand.u32 2147483647, %v3388
        %v3487 = vand.u32 2147483647, %v3389
        %v3488 = vand.u32 2147483647, %v3390
        %v3489 = vand.u32 2147483647, %v3391
        %v3490 = vand.u32 2147483647, %v3392
        %v3491 = vand.u32 2147483647, %v3393
        %v3492 = vand.u32 2147483647, %v3394
        %v3493 = vand.u32 2147483647, %v3395
        %v3494 = vand.u32 2147483647, %v3396
        %v3495 = vand.u32 2147483647, %v3397
        %v3496 = vand.u32 2147483647, %v3398
        %v3497 = vand.u32 2147483647, %v3399
        %v3498 = vand.u32 2147483647, %v3400
        %v3499 = vand.u32 2147483647, %v3401
        %v3500 = vand.u32 2147483647, %v3402
        %v3501 = vand.u32 2147483647, %v3403
        %v3502 = vand.u32 2147483647, %v3404
        %v3503 = vand.u32 2147483647, %v3405
        %v3504 = vand.u32 2147483647, %v3406
        %v3505 = vand.u32 2147483647, %v3407
        %v3506 = vand.u32 2147483647, %v3408
        %v3507 = vand.u32 2147483647, %v3409
        %v3508 = vand.u32 2147483647, %v3410
        %v3509 = vand.u32 2147483647, %v3411
        %v3510 = vand.u32 2147483647, %v3412
        %v3511 = vand.u32 2147483647, %v3413
        %v3512 = vand.u32 2147483647, %v3414
        %v3513 = vand.u32 2147483647, %v3415
        %v3514 = vand.u32 2147483647, %v3416
        %v3515 = vand.u32 2147483647, %v3417
        %v3516 = vand.u32 2147483647, %v3418
        %v3517 = vand.u32 2147483647, %v3419
        %v3518 = vand.u32 2147483647, %v3420
        %v3519 = vand.u32 2147483647, %v3421
        %v3520 = vand.u32 2147483647, %v3422
        %v3521 = vand.u32 2147483647, %v3423
        %v3522 = vand.u32 2147483647, %v3424
        %v3523 = vand.u32 2147483647, %v3425
        %v3524 = vand.u32 2147483647, %v3426
        %v3525 = vand.u32 2147483647, %v3427
        %v3526 = vand.u32 2147483647, %v3428
        %v3527 = vand.u32 2147483647, %v3429
        %v3528 = vand.u32 2147483647, %v3430
        %v3529 = vand.u32 2147483647, %v3431
        %v3530 = vand.u32 2147483647, %v3432
        %v3531 = vand.u32 2147483647, %v3433
        %v3532 = vand.u32 2147483647, %v3434
        %v3533 = vand.u32 2147483647, %v3435
        %v3534 = vand.u32 2147483647, %v3436
        %v3535 = vand.u32 2147483647, %v3437
        %v3536 = vand.u32 2147483647, %v3438
        %v3537 = vand.u32 2147483647, %v3439
        %v3538 = vand.u32 2147483647, %v3440
        %v3539 = vand.u32 2147483647, %v3441
        %v3540 = vand.u32 2147483647, %v3442
        %v3541 = vand.u32 2147483647, %v3443
        %v3542 = vand.u32 2147483647, %v3444
        %v3543 = vand.u32 2147483647, %v3445
        %v3544 = vand.u32 2147483647, %v3446
        %v3545 = vand.u32 2147483647, %v3447
        %v3546 = vand.u32 2147483647, %v3448
        %v3547 = vand.u32 2147483647, %v3449
        %v3548 = vand.u32 2147483647, %v3450
        %v3549 = vand.u32 2147483647, %v3451
        %v3550 = vand.u32 2147483647, %v3452
        %v3551 = vand.u32 2147483647, %v3453
        %v3552 = vand.u32 2147483647, %v3454
        %v3553 = vand.u32 2147483647, %v3455
        %v3554 = vand.u32 2147483647, %v3456
        %v3555 = vand.u32 2147483647, %v3457
        %v3556 = vand.u32 2147483647, %v3458
        %v3557 = vand.u32 2147483647, %v3459
        %v3558 = vand.u32 2147483647, %v3460
        %v3559 = vand.u32 2147483647, %v3461
        %v3560 = vand.u32 2147483647, %v3462
        %v3561 = vand.u32 2147483647, %v3463
        %v3562 = vand.u32 2147483647, %v3464
        %v3563 = vand.u32 2147483647, %v3465
        %v3564 = vand.u32 2147483647, %v3466
        %v3565 = vand.u32 2147483647, %v3467
        %v3566 = vsub.f32 1.0, %v3468
        %v3567 = vsub.f32 1.0, %v3469
        %v3568 = vsub.f32 1.0, %v3470
        %v3569 = vsub.f32 1.0, %v3471
        %v3570 = vsub.f32 1.0, %v3472
        %v3571 = vsub.f32 1.0, %v3473
        %v3572 = vsub.f32 1.0, %v3474
        %v3573 = vsub.f32 1.0, %v3475
        %v3574 = vsub.f32 1.0, %v3476
        %v3575 = vsub.f32 1.0, %v3477
        %v3576 = vsub.f32 1.0, %v3478
        %v3577 = vsub.f32 1.0, %v3479
        %v3578 = vsub.f32 1.0, %v3480
        %v3579 = vsub.f32 1.0, %v3481
        %v3580 = vsub.f32 1.0, %v3482
        %v3581 = vsub.f32 1.0, %v3483
        %v3582 = vsub.f32 1.0, %v3484
        %v3583 = vsub.f32 1.0, %v3485
        %v3584 = vsub.f32 1.0, %v3486
        %v3585 = vsub.f32 1.0, %v3487
        %v3586 = vsub.f32 1.0, %v3488
        %v3587 = vsub.f32 1.0, %v3489
        %v3588 = vsub.f32 1.0, %v3490
        %v3589 = vsub.f32 1.0, %v3491
        %v3590 = vsub.f32 1.0, %v3492
        %v3591 = vsub.f32 1.0, %v3493
        %v3592 = vsub.f32 1.0, %v3494
        %v3593 = vsub.f32 1.0, %v3495
        %v3594 = vsub.f32 1.0, %v3496
        %v3595 = vsub.f32 1.0, %v3497
        %v3596 = vsub.f32 1.0, %v3498
        %v3597 = vsub.f32 1.0, %v3499
        %v3598 = vsub.f32 1.0, %v3500
        %v3599 = vsub.f32 1.0, %v3501
        %v3600 = vsub.f32 1.0, %v3502
        %v3601 = vsub.f32 1.0, %v3503
        %v3602 = vsub.f32 1.0, %v3504
        %v3603 = vsub.f32 1.0, %v3505
        %v3604 = vsub.f32 1.0, %v3506
        %v3605 = vsub.f32 1.0, %v3507
        %v3606 = vsub.f32 1.0, %v3508
        %v3607 = vsub.f32 1.0, %v3509
        %v3608 = vsub.f32 1.0, %v3510
        %v3609 = vsub.f32 1.0, %v3511
        %v3610 = vsub.f32 1.0, %v3512
        %v3611 = vsub.f32 1.0, %v3513
        %v3612 = vsub.f32 1.0, %v3514
        %v3613 = vsub.f32 1.0, %v3515
        %v3614 = vsub.f32 1.0, %v3516
        %v3615 = vsub.f32 1.0, %v3517
        %v3616 = vsub.f32 1.0, %v3518
        %v3617 = vsub.f32 1.0, %v3519
        %v3618 = vsub.f32 1.0, %v3520
        %v3619 = vsub.f32 1.0, %v3521
        %v3620 = vsub.f32 1.0, %v3522
        %v3621 = vsub.f32 1.0, %v3523
        %v3622 = vsub.f32 1.0, %v3524
        %v3623 = vsub.f32 1.0, %v3525
        %v3624 = vsub.f32 1.0, %v3526
        %v3625 = vsub.f32 1.0, %v3527
        %v3626 = vsub.f32 1.0, %v3528
        %v3627 = vsub.f32 1.0, %v3529
        %v3628 = vsub.f32 1.0, %v3530
        %v3629 = vsub.f32 1.0, %v3531
        %v3630 = vsub.f32 1.0, %v3532
        %v3631 = vsub.f32 1.0, %v3533
        %v3632 = vsub.f32 1.0, %v3534
        %v3633 = vsub.f32 1.0, %v3535
        %v3634 = vsub.f32 1.0, %v3536
        %v3635 = vsub.f32 1.0, %v3537
        %v3636 = vsub.f32 1.0, %v3538
        %v3637 = vsub.f32 1.0, %v3539
        %v3638 = vsub.f32 1.0, %v3540
        %v3639 = vsub.f32 1.0, %v3541
        %v3640 = vsub.f32 1.0, %v3542
        %v3641 = vsub.f32 1.0, %v3543
        %v3642 = vsub.f32 1.0, %v3544
        %v3643 = vsub.f32 1.0, %v3545
        %v3644 = vsub.f32 1.0, %v3546
        %v3645 = vsub.f32 1.0, %v3547
        %v3646 = vsub.f32 1.0, %v3548
        %v3647 = vsub.f32 1.0, %v3549
        %v3648 = vsub.f32 1.0, %v3550
        %v3649 = vsub.f32 1.0, %v3551
        %v3650 = vsub.f32 1.0, %v3552
        %v3651 = vsub.f32 1.0, %v3553
        %v3652 = vsub.f32 1.0, %v3554
        %v3653 = vsub.f32 1.0, %v3555
        %v3654 = vsub.f32 1.0, %v3556
        %v3655 = vsub.f32 1.0, %v3557
        %v3656 = vsub.f32 1.0, %v3558
        %v3657 = vsub.f32 1.0, %v3559
        %v3658 = vsub.f32 1.0, %v3560
        %v3659 = vsub.f32 1.0, %v3561
        %v3660 = vsub.f32 1.0, %v3562
        %v3661 = vsub.f32 1.0, %v3563
        %v3662 = vsub.f32 1.0, %v3564
        %v3663 = vsub.f32 1.0, %v3565
        %v3664 = vmax.f32 %v3566, 0.0
        %v3665 = vmax.f32 %v3567, 0.0
        %v3666 = vmax.f32 %v3568, 0.0
        %v3667 = vmax.f32 %v3569, 0.0
        %v3668 = vmax.f32 %v3570, 0.0
        %v3669 = vmax.f32 %v3571, 0.0
        %v3670 = vmax.f32 %v3572, 0.0
        %v3671 = vmax.f32 %v3573, 0.0
        %v3672 = vmax.f32 %v3574, 0.0
        %v3673 = vmax.f32 %v3575, 0.0
        %v3674 = vmax.f32 %v3576, 0.0
        %v3675 = vmax.f32 %v3577, 0.0
        %v3676 = vmax.f32 %v3578, 0.0
        %v3677 = vmax.f32 %v3579, 0.0
        %v3678 = vmax.f32 %v3580, 0.0
        %v3679 = vmax.f32 %v3581, 0.0
        %v3680 = vmax.f32 %v3582, 0.0
        %v3681 = vmax.f32 %v3583, 0.0
        %v3682 = vmax.f32 %v3584, 0.0
        %v3683 = vmax.f32 %v3585, 0.0
        %v3684 = vmax.f32 %v3586, 0.0
        %v3685 = vmax.f32 %v3587, 0.0
        %v3686 = vmax.f32 %v3588, 0.0
        %v3687 = vmax.f32 %v3589, 0.0
        %v3688 = vmax.f32 %v3590, 0.0
        %v3689 = vmax.f32 %v3591, 0.0
        %v3690 = vmax.f32 %v3592, 0.0
        %v3691 = vmax.f32 %v3593, 0.0
        %v3692 = vmax.f32 %v3594, 0.0
        %v3693 = vmax.f32 %v3595, 0.0
        %v3694 = vmax.f32 %v3596, 0.0
        %v3695 = vmax.f32 %v3597, 0.0
        %v3696 = vmax.f32 %v3598, 0.0
        %v3697 = vmax.f32 %v3599, 0.0
        %v3698 = vmax.f32 %v3600, 0.0
        %v3699 = vmax.f32 %v3601, 0.0
        %v3700 = vmax.f32 %v3602, 0.0
        %v3701 = vmax.f32 %v3603, 0.0
        %v3702 = vmax.f32 %v3604, 0.0
        %v3703 = vmax.f32 %v3605, 0.0
        %v3704 = vmax.f32 %v3606, 0.0
        %v3705 = vmax.f32 %v3607, 0.0
        %v3706 = vmax.f32 %v3608, 0.0
        %v3707 = vmax.f32 %v3609, 0.0
        %v3708 = vmax.f32 %v3610, 0.0
        %v3709 = vmax.f32 %v3611, 0.0
        %v3710 = vmax.f32 %v3612, 0.0
        %v3711 = vmax.f32 %v3613, 0.0
        %v3712 = vmax.f32 %v3614, 0.0
        %v3713 = vmax.f32 %v3615, 0.0
        %v3714 = vmax.f32 %v3616, 0.0
        %v3715 = vmax.f32 %v3617, 0.0
        %v3716 = vmax.f32 %v3618, 0.0
        %v3717 = vmax.f32 %v3619, 0.0
        %v3718 = vmax.f32 %v3620, 0.0
        %v3719 = vmax.f32 %v3621, 0.0
        %v3720 = vmax.f32 %v3622, 0.0
        %v3721 = vmax.f32 %v3623, 0.0
        %v3722 = vmax.f32 %v3624, 0.0
        %v3723 = vmax.f32 %v3625, 0.0
        %v3724 = vmax.f32 %v3626, 0.0
        %v3725 = vmax.f32 %v3627, 0.0
        %v3726 = vmax.f32 %v3628, 0.0
        %v3727 = vmax.f32 %v3629, 0.0
        %v3728 = vmax.f32 %v3630, 0.0
        %v3729 = vmax.f32 %v3631, 0.0
        %v3730 = vmax.f32 %v3632, 0.0
        %v3731 = vmax.f32 %v3633, 0.0
        %v3732 = vmax.f32 %v3634, 0.0
        %v3733 = vmax.f32 %v3635, 0.0
        %v3734 = vmax.f32 %v3636, 0.0
        %v3735 = vmax.f32 %v3637, 0.0
        %v3736 = vmax.f32 %v3638, 0.0
        %v3737 = vmax.f32 %v3639, 0.0
        %v3738 = vmax.f32 %v3640, 0.0
        %v3739 = vmax.f32 %v3641, 0.0
        %v3740 = vmax.f32 %v3642, 0.0
        %v3741 = vmax.f32 %v3643, 0.0
        %v3742 = vmax.f32 %v3644, 0.0
        %v3743 = vmax.f32 %v3645, 0.0
        %v3744 = vmax.f32 %v3646, 0.0
        %v3745 = vmax.f32 %v3647, 0.0
        %v3746 = vmax.f32 %v3648, 0.0
        %v3747 = vmax.f32 %v3649, 0.0
        %v3748 = vmax.f32 %v3650, 0.0
        %v3749 = vmax.f32 %v3651, 0.0
        %v3750 = vmax.f32 %v3652, 0.0
        %v3751 = vmax.f32 %v3653, 0.0
        %v3752 = vmax.f32 %v3654, 0.0
        %v3753 = vmax.f32 %v3655, 0.0
        %v3754 = vmax.f32 %v3656, 0.0
        %v3755 = vmax.f32 %v3657, 0.0
        %v3756 = vmax.f32 %v3658, 0.0
        %v3757 = vmax.f32 %v3659, 0.0
        %v3758 = vmax.f32 %v3660, 0.0
        %v3759 = vmax.f32 %v3661, 0.0
        %v3760 = vmax.f32 %v3662, 0.0
        %v3761 = vmax.f32 %v3663, 0.0
        %v3762 = vmul.f32 %v2880, %v3664
        %v3763 = vmul.f32 %v2881, %v3665
        %v3764 = vmul.f32 %v2882, %v3666
        %v3765 = vmul.f32 %v2883, %v3667
        %v3766 = vmul.f32 %v2884, %v3668
        %v3767 = vmul.f32 %v2885, %v3669
        %v3768 = vmul.f32 %v2886, %v3670
        %v3769 = vmul.f32 %v2887, %v3671
        %v3770 = vmul.f32 %v2888, %v3672
        %v3771 = vmul.f32 %v2889, %v3673
        %v3772 = vmul.f32 %v2890, %v3674
        %v3773 = vmul.f32 %v2891, %v3675
        %v3774 = vmul.f32 %v2892, %v3676
        %v3775 = vmul.f32 %v2893, %v3677
        %v3776 = vmul.f32 %v2894, %v3678
        %v3777 = vmul.f32 %v2895, %v3679
        %v3778 = vmul.f32 %v2896, %v3680
        %v3779 = vmul.f32 %v2897, %v3681
        %v3780 = vmul.f32 %v2898, %v3682
        %v3781 = vmul.f32 %v2899, %v3683
        %v3782 = vmul.f32 %v2900, %v3684
        %v3783 = vmul.f32 %v2901, %v3685
        %v3784 = vmul.f32 %v2902, %v3686
        %v3785 = vmul.f32 %v2903, %v3687
        %v3786 = vmul.f32 %v2904, %v3688
        %v3787 = vmul.f32 %v2905, %v3689
        %v3788 = vmul.f32 %v2906, %v3690
        %v3789 = vmul.f32 %v2907, %v3691
        %v3790 = vmul.f32 %v2908, %v3692
        %v3791 = vmul.f32 %v2909, %v3693
        %v3792 = vmul.f32 %v2910, %v3694
        %v3793 = vmul.f32 %v2911, %v3695
        %v3794 = vmul.f32 %v2912, %v3696
        %v3795 = vmul.f32 %v2913, %v3697
        %v3796 = vmul.f32 %v2914, %v3698
        %v3797 = vmul.f32 %v2915, %v3699
        %v3798 = vmul.f32 %v2916, %v3700
        %v3799 = vmul.f32 %v2917, %v3701
        %v3800 = vmul.f32 %v2918, %v3702
        %v3801 = vmul.f32 %v2919, %v3703
        %v3802 = vmul.f32 %v2920, %v3704
        %v3803 = vmul.f32 %v2921, %v3705
        %v3804 = vmul.f32 %v2922, %v3706
        %v3805 = vmul.f32 %v2923, %v3707
        %v3806 = vmul.f32 %v2924, %v3708
        %v3807 = vmul.f32 %v2925, %v3709
        %v3808 = vmul.f32 %v2926, %v3710
        %v3809 = vmul.f32 %v2927, %v3711
        %v3810 = vmul.f32 %v2928, %v3712
        %v3811 = vmul.f32 %v2929, %v3713
        %v3812 = vmul.f32 %v2930, %v3714
        %v3813 = vmul.f32 %v2931, %v3715
        %v3814 = vmul.f32 %v2932, %v3716
        %v3815 = vmul.f32 %v2933, %v3717
        %v3816 = vmul.f32 %v2934, %v3718
        %v3817 = vmul.f32 %v2935, %v3719
        %v3818 = vmul.f32 %v2936, %v3720
        %v3819 = vmul.f32 %v2937, %v3721
        %v3820 = vmul.f32 %v2938, %v3722
        %v3821 = vmul.f32 %v2939, %v3723
        %v3822 = vmul.f32 %v2940, %v3724
        %v3823 = vmul.f32 %v2941, %v3725
        %v3824 = vmul.f32 %v2942, %v3726
        %v3825 = vmul.f32 %v2943, %v3727
        %v3826 = vmul.f32 %v2944, %v3728
        %v3827 = vmul.f32 %v2945, %v3729
        %v3828 = vmul.f32 %v2946, %v3730
        %v3829 = vmul.f32 %v2947, %v3731
        %v3830 = vmul.f32 %v2948, %v3732
        %v3831 = vmul.f32 %v2949, %v3733
        %v3832 = vmul.f32 %v2950, %v3734
        %v3833 = vmul.f32 %v2951, %v3735
        %v3834 = vmul.f32 %v2952, %v3736
        %v3835 = vmul.f32 %v2953, %v3737
        %v3836 = vmul.f32 %v2954, %v3738
        %v3837 = vmul.f32 %v2955, %v3739
        %v3838 = vmul.f32 %v2956, %v3740
        %v3839 = vmul.f32 %v2957, %v3741
        %v3840 = vmul.f32 %v2958, %v3742
        %v3841 = vmul.f32 %v2959, %v3743
        %v3842 = vmul.f32 %v2960, %v3744
        %v3843 = vmul.f32 %v2961, %v3745
        %v3844 = vmul.f32 %v2962, %v3746
        %v3845 = vmul.f32 %v2963, %v3747
        %v3846 = vmul.f32 %v2964, %v3748
        %v3847 = vmul.f32 %v2965, %v3749
        %v3848 = vmul.f32 %v2966, %v3750
        %v3849 = vmul.f32 %v2967, %v3751
        %v3850 = vmul.f32 %v2968, %v3752
        %v3851 = vmul.f32 %v2969, %v3753
        %v3852 = vmul.f32 %v2970, %v3754
        %v3853 = vmul.f32 %v2971, %v3755
        %v3854 = vmul.f32 %v2972, %v3756
        %v3855 = vmul.f32 %v2973, %v3757
        %v3856 = vmul.f32 %v2974, %v3758
        %v3857 = vmul.f32 %v2975, %v3759
        %v3858 = vmul.f32 %v2976, %v3760
        %v3859 = vmul.f32 %v2977, %v3761
        %v3860 = vadd.f32 %v2096, %v3762
        %v3861 = vadd.f32 %v2097, %v3763
        %v3862 = vadd.f32 %v2098, %v3764
        %v3863 = vadd.f32 %v2099, %v3765
        %v3864 = vadd.f32 %v2100, %v3766
        %v3865 = vadd.f32 %v2101, %v3767
        %v3866 = vadd.f32 %v2102, %v3768
        %v3867 = vadd.f32 %v2103, %v3769
        %v3868 = vadd.f32 %v2104, %v3770
        %v3869 = vadd.f32 %v2105, %v3771
        %v3870 = vadd.f32 %v2106, %v3772
        %v3871 = vadd.f32 %v2107, %v3773
        %v3872 = vadd.f32 %v2108, %v3774
        %v3873 = vadd.f32 %v2109, %v3775
        %v3874 = vadd.f32 %v2110, %v3776
        %v3875 = vadd.f32 %v2111, %v3777
        %v3876 = vadd.f32 %v2112, %v3778
        %v3877 = vadd.f32 %v2113, %v3779
        %v3878 = vadd.f32 %v2114, %v3780
        %v3879 = vadd.f32 %v2115, %v3781
        %v3880 = vadd.f32 %v2116, %v3782
        %v3881 = vadd.f32 %v2117, %v3783
        %v3882 = vadd.f32 %v2118, %v3784
        %v3883 = vadd.f32 %v2119, %v3785
        %v3884 = vadd.f32 %v2120, %v3786
        %v3885 = vadd.f32 %v2121, %v3787
        %v3886 = vadd.f32 %v2122, %v3788
        %v3887 = vadd.f32 %v2123, %v3789
        %v3888 = vadd.f32 %v2124, %v3790
        %v3889 = vadd.f32 %v2125, %v3791
        %v3890 = vadd.f32 %v2126, %v3792
        %v3891 = vadd.f32 %v2127, %v3793
        %v3892 = vadd.f32 %v2128, %v3794
        %v3893 = vadd.f32 %v2129, %v3795
        %v3894 = vadd.f32 %v2130, %v3796
        %v3895 = vadd.f32 %v2131, %v3797
        %v3896 = vadd.f32 %v2132, %v3798
        %v3897 = vadd.f32 %v2133, %v3799
        %v3898 = vadd.f32 %v2134, %v3800
        %v3899 = vadd.f32 %v2135, %v3801
        %v3900 = vadd.f32 %v2136, %v3802
        %v3901 = vadd.f32 %v2137, %v3803
        %v3902 = vadd.f32 %v2138, %v3804
        %v3903 = vadd.f32 %v2139, %v3805
        %v3904 = vadd.f32 %v2140, %v3806
        %v3905 = vadd.f32 %v2141, %v3807
        %v3906 = vadd.f32 %v2142, %v3808
        %v3907 = vadd.f32 %v2143, %v3809
        %v3908 = vadd.f32 %v2144, %v3810
        %v3909 = vadd.f32 %v2145, %v3811
        %v3910 = vadd.f32 %v2146, %v3812
        %v3911 = vadd.f32 %v2147, %v3813
        %v3912 = vadd.f32 %v2148, %v3814
        %v3913 = vadd.f32 %v2149, %v3815
        %v3914 = vadd.f32 %v2150, %v3816
        %v3915 = vadd.f32 %v2151, %v3817
        %v3916 = vadd.f32 %v2152, %v3818
        %v3917 = vadd.f32 %v2153, %v3819
        %v3918 = vadd.f32 %v2154, %v3820
        %v3919 = vadd.f32 %v2155, %v3821
        %v3920 = vadd.f32 %v2156, %v3822
        %v3921 = vadd.f32 %v2157, %v3823
        %v3922 = vadd.f32 %v2158, %v3824
        %v3923 = vadd.f32 %v2159, %v3825
        %v3924 = vadd.f32 %v2160, %v3826
        %v3925 = vadd.f32 %v2161, %v3827
        %v3926 = vadd.f32 %v2162, %v3828
        %v3927 = vadd.f32 %v2163, %v3829
        %v3928 = vadd.f32 %v2164, %v3830
        %v3929 = vadd.f32 %v2165, %v3831
        %v3930 = vadd.f32 %v2166, %v3832
        %v3931 = vadd.f32 %v2167, %v3833
        %v3932 = vadd.f32 %v2168, %v3834
        %v3933 = vadd.f32 %v2169, %v3835
        %v3934 = vadd.f32 %v2170, %v3836
        %v3935 = vadd.f32 %v2171, %v3837
        %v3936 = vadd.f32 %v2172, %v3838
        %v3937 = vadd.f32 %v2173, %v3839
        %v3938 = vadd.f32 %v2174, %v3840
        %v3939 = vadd.f32 %v2175, %v3841
        %v3940 = vadd.f32 %v2176, %v3842
        %v3941 = vadd.f32 %v2177, %v3843
        %v3942 = vadd.f32 %v2178, %v3844
        %v3943 = vadd.f32 %v2179, %v3845
        %v3944 = vadd.f32 %v2180, %v3846
        %v3945 = vadd.f32 %v2181, %v3847
        %v3946 = vadd.f32 %v2182, %v3848
        %v3947 = vadd.f32 %v2183, %v3849
        %v3948 = vadd.f32 %v2184, %v3850
        %v3949 = vadd.f32 %v2185, %v3851
        %v3950 = vadd.f32 %v2186, %v3852
        %v3951 = vadd.f32 %v2187, %v3853
        %v3952 = vadd.f32 %v2188, %v3854
        %v3953 = vadd.f32 %v2189, %v3855
        %v3954 = vadd.f32 %v2190, %v3856
        %v3955 = vadd.f32 %v2191, %v3857
        %v3956 = vadd.f32 %v2192, %v3858
        %v3957 = vadd.f32 %v2193, %v3859
        %3958 = vset.pattern.permute.xlu0 2
        %3959 = vperm.xlu0 %3958, %v324
        %v3960 = vpop.permute.xlu0 %3959
        %3962 = vset.pattern.permute.xlu0 2
        %3963 = vperm.xlu0 %3962, %v325
        %v3964 = vpop.permute.xlu0 %3963
        %3966 = vset.pattern.permute.xlu0 2
        %3967 = vperm.xlu0 %3966, %v326
        %v3968 = vpop.permute.xlu0 %3967
        %3970 = vset.pattern.permute.xlu0 2
        %3971 = vperm.xlu0 %3970, %v327
        %v3972 = vpop.permute.xlu0 %3971
        %3974 = vset.pattern.permute.xlu0 2
        %3975 = vperm.xlu0 %3974, %v328
        %v3976 = vpop.permute.xlu0 %3975
        %3978 = vset.pattern.permute.xlu0 2
        %3979 = vperm.xlu0 %3978, %v329
        %v3980 = vpop.permute.xlu0 %3979
        %3982 = vset.pattern.permute.xlu0 2
        %3983 = vperm.xlu0 %3982, %v330
        %v3984 = vpop.permute.xlu0 %3983
        %3986 = vset.pattern.permute.xlu0 2
        %3987 = vperm.xlu0 %3986, %v331
        %v3988 = vpop.permute.xlu0 %3987
        %3990 = vset.pattern.permute.xlu0 2
        %3991 = vperm.xlu0 %3990, %v332
        %v3992 = vpop.permute.xlu0 %3991
        %3994 = vset.pattern.permute.xlu0 2
        %3995 = vperm.xlu0 %3994, %v333
        %v3996 = vpop.permute.xlu0 %3995
        %3998 = vset.pattern.permute.xlu0 2
        %3999 = vperm.xlu0 %3998, %v334
        %v4000 = vpop.permute.xlu0 %3999
        %4002 = vset.pattern.permute.xlu0 2
        %4003 = vperm.xlu0 %4002, %v335
        %v4004 = vpop.permute.xlu0 %4003
        %4006 = vset.pattern.permute.xlu0 2
        %4007 = vperm.xlu0 %4006, %v336
        %v4008 = vpop.permute.xlu0 %4007
        %4010 = vset.pattern.permute.xlu0 2
        %4011 = vperm.xlu0 %4010, %v337
        %v4012 = vpop.permute.xlu0 %4011
        %4014 = vset.pattern.permute.xlu0 2
        %4015 = vperm.xlu0 %4014, %v338
        %v4016 = vpop.permute.xlu0 %4015
        %4018 = vset.pattern.permute.xlu0 2
        %4019 = vperm.xlu0 %4018, %v339
        %v4020 = vpop.permute.xlu0 %4019
        %4022 = vset.pattern.permute.xlu0 2
        %4023 = vperm.xlu0 %4022, %v340
        %v4024 = vpop.permute.xlu0 %4023
        %4026 = vset.pattern.permute.xlu0 2
        %4027 = vperm.xlu0 %4026, %v341
        %v4028 = vpop.permute.xlu0 %4027
        %4030 = vset.pattern.permute.xlu0 2
        %4031 = vperm.xlu0 %4030, %v342
        %v4032 = vpop.permute.xlu0 %4031
        %4034 = vset.pattern.permute.xlu0 2
        %4035 = vperm.xlu0 %4034, %v343
        %v4036 = vpop.permute.xlu0 %4035
        %4038 = vset.pattern.permute.xlu0 2
        %4039 = vperm.xlu0 %4038, %v344
        %v4040 = vpop.permute.xlu0 %4039
        %4042 = vset.pattern.permute.xlu0 2
        %4043 = vperm.xlu0 %4042, %v345
        %v4044 = vpop.permute.xlu0 %4043
        %4046 = vset.pattern.permute.xlu0 2
        %4047 = vperm.xlu0 %4046, %v346
        %v4048 = vpop.permute.xlu0 %4047
        %4050 = vset.pattern.permute.xlu0 2
        %4051 = vperm.xlu0 %4050, %v347
        %v4052 = vpop.permute.xlu0 %4051
        %4054 = vset.pattern.permute.xlu0 2
        %4055 = vperm.xlu0 %4054, %v348
        %v4056 = vpop.permute.xlu0 %4055
        %4058 = vset.pattern.permute.xlu0 2
        %4059 = vperm.xlu0 %4058, %v349
        %v4060 = vpop.permute.xlu0 %4059
        %4062 = vset.pattern.permute.xlu0 2
        %4063 = vperm.xlu0 %4062, %v350
        %v4064 = vpop.permute.xlu0 %4063
        %4066 = vset.pattern.permute.xlu0 2
        %4067 = vperm.xlu0 %4066, %v351
        %v4068 = vpop.permute.xlu0 %4067
        %4070 = vset.pattern.permute.xlu0 2
        %4071 = vperm.xlu0 %4070, %v352
        %v4072 = vpop.permute.xlu0 %4071
        %4074 = vset.pattern.permute.xlu0 2
        %4075 = vperm.xlu0 %4074, %v353
        %v4076 = vpop.permute.xlu0 %4075
        %4078 = vset.pattern.permute.xlu0 2
        %4079 = vperm.xlu0 %4078, %v354
        %v4080 = vpop.permute.xlu0 %4079
        %4082 = vset.pattern.permute.xlu0 2
        %4083 = vperm.xlu0 %4082, %v355
        %v4084 = vpop.permute.xlu0 %4083
        %4086 = vset.pattern.permute.xlu0 2
        %4087 = vperm.xlu0 %4086, %v356
        %v4088 = vpop.permute.xlu0 %4087
        %4090 = vset.pattern.permute.xlu0 2
        %4091 = vperm.xlu0 %4090, %v357
        %v4092 = vpop.permute.xlu0 %4091
        %4094 = vset.pattern.permute.xlu0 2
        %4095 = vperm.xlu0 %4094, %v358
        %v4096 = vpop.permute.xlu0 %4095
        %4098 = vset.pattern.permute.xlu0 2
        %4099 = vperm.xlu0 %4098, %v359
        %v4100 = vpop.permute.xlu0 %4099
        %4102 = vset.pattern.permute.xlu0 2
        %4103 = vperm.xlu0 %4102, %v360
        %v4104 = vpop.permute.xlu0 %4103
        %4106 = vset.pattern.permute.xlu0 2
        %4107 = vperm.xlu0 %4106, %v361
        %v4108 = vpop.permute.xlu0 %4107
        %4110 = vset.pattern.permute.xlu0 2
        %4111 = vperm.xlu0 %4110, %v362
        %v4112 = vpop.permute.xlu0 %4111
        %4114 = vset.pattern.permute.xlu0 2
        %4115 = vperm.xlu0 %4114, %v363
        %v4116 = vpop.permute.xlu0 %4115
        %4118 = vset.pattern.permute.xlu0 2
        %4119 = vperm.xlu0 %4118, %v364
        %v4120 = vpop.permute.xlu0 %4119
        %4122 = vset.pattern.permute.xlu0 2
        %4123 = vperm.xlu0 %4122, %v365
        %v4124 = vpop.permute.xlu0 %4123
        %4126 = vset.pattern.permute.xlu0 2
        %4127 = vperm.xlu0 %4126, %v366
        %v4128 = vpop.permute.xlu0 %4127
        %4130 = vset.pattern.permute.xlu0 2
        %4131 = vperm.xlu0 %4130, %v367
        %v4132 = vpop.permute.xlu0 %4131
        %4134 = vset.pattern.permute.xlu0 2
        %4135 = vperm.xlu0 %4134, %v368
        %v4136 = vpop.permute.xlu0 %4135
        %4138 = vset.pattern.permute.xlu0 2
        %4139 = vperm.xlu0 %4138, %v369
        %v4140 = vpop.permute.xlu0 %4139
        %4142 = vset.pattern.permute.xlu0 2
        %4143 = vperm.xlu0 %4142, %v370
        %v4144 = vpop.permute.xlu0 %4143
        %4146 = vset.pattern.permute.xlu0 2
        %4147 = vperm.xlu0 %4146, %v371
        %v4148 = vpop.permute.xlu0 %4147
        %4150 = vset.pattern.permute.xlu0 2
        %4151 = vperm.xlu0 %4150, %v372
        %v4152 = vpop.permute.xlu0 %4151
        %4154 = vset.pattern.permute.xlu0 2
        %4155 = vperm.xlu0 %4154, %v373
        %v4156 = vpop.permute.xlu0 %4155
        %4158 = vset.pattern.permute.xlu0 2
        %4159 = vperm.xlu0 %4158, %v374
        %v4160 = vpop.permute.xlu0 %4159
        %4162 = vset.pattern.permute.xlu0 2
        %4163 = vperm.xlu0 %4162, %v375
        %v4164 = vpop.permute.xlu0 %4163
        %4166 = vset.pattern.permute.xlu0 2
        %4167 = vperm.xlu0 %4166, %v376
        %v4168 = vpop.permute.xlu0 %4167
        %4170 = vset.pattern.permute.xlu0 2
        %4171 = vperm.xlu0 %4170, %v377
        %v4172 = vpop.permute.xlu0 %4171
        %4174 = vset.pattern.permute.xlu0 2
        %4175 = vperm.xlu0 %4174, %v378
        %v4176 = vpop.permute.xlu0 %4175
        %4178 = vset.pattern.permute.xlu0 2
        %4179 = vperm.xlu0 %4178, %v379
        %v4180 = vpop.permute.xlu0 %4179
        %4182 = vset.pattern.permute.xlu0 2
        %4183 = vperm.xlu0 %4182, %v380
        %v4184 = vpop.permute.xlu0 %4183
        %4186 = vset.pattern.permute.xlu0 2
        %4187 = vperm.xlu0 %4186, %v381
        %v4188 = vpop.permute.xlu0 %4187
        %4190 = vset.pattern.permute.xlu0 2
        %4191 = vperm.xlu0 %4190, %v382
        %v4192 = vpop.permute.xlu0 %4191
        %4194 = vset.pattern.permute.xlu0 2
        %4195 = vperm.xlu0 %4194, %v383
        %v4196 = vpop.permute.xlu0 %4195
        %4198 = vset.pattern.permute.xlu0 2
        %4199 = vperm.xlu0 %4198, %v384
        %v4200 = vpop.permute.xlu0 %4199
        %4202 = vset.pattern.permute.xlu0 2
        %4203 = vperm.xlu0 %4202, %v385
        %v4204 = vpop.permute.xlu0 %4203
        %4206 = vset.pattern.permute.xlu0 2
        %4207 = vperm.xlu0 %4206, %v386
        %v4208 = vpop.permute.xlu0 %4207
        %4210 = vset.pattern.permute.xlu0 2
        %4211 = vperm.xlu0 %4210, %v387
        %v4212 = vpop.permute.xlu0 %4211
        %4214 = vset.pattern.permute.xlu0 2
        %4215 = vperm.xlu0 %4214, %v388
        %v4216 = vpop.permute.xlu0 %4215
        %4218 = vset.pattern.permute.xlu0 2
        %4219 = vperm.xlu0 %4218, %v389
        %v4220 = vpop.permute.xlu0 %4219
        %4222 = vset.pattern.permute.xlu0 2
        %4223 = vperm.xlu0 %4222, %v390
        %v4224 = vpop.permute.xlu0 %4223
        %4226 = vset.pattern.permute.xlu0 2
        %4227 = vperm.xlu0 %4226, %v391
        %v4228 = vpop.permute.xlu0 %4227
        %4230 = vset.pattern.permute.xlu0 2
        %4231 = vperm.xlu0 %4230, %v392
        %v4232 = vpop.permute.xlu0 %4231
        %4234 = vset.pattern.permute.xlu0 2
        %4235 = vperm.xlu0 %4234, %v393
        %v4236 = vpop.permute.xlu0 %4235
        %4238 = vset.pattern.permute.xlu0 2
        %4239 = vperm.xlu0 %4238, %v394
        %v4240 = vpop.permute.xlu0 %4239
        %4242 = vset.pattern.permute.xlu0 2
        %4243 = vperm.xlu0 %4242, %v395
        %v4244 = vpop.permute.xlu0 %4243
        %4246 = vset.pattern.permute.xlu0 2
        %4247 = vperm.xlu0 %4246, %v396
        %v4248 = vpop.permute.xlu0 %4247
        %4250 = vset.pattern.permute.xlu0 2
        %4251 = vperm.xlu0 %4250, %v397
        %v4252 = vpop.permute.xlu0 %4251
        %4254 = vset.pattern.permute.xlu0 2
        %4255 = vperm.xlu0 %4254, %v398
        %v4256 = vpop.permute.xlu0 %4255
        %4258 = vset.pattern.permute.xlu0 2
        %4259 = vperm.xlu0 %4258, %v399
        %v4260 = vpop.permute.xlu0 %4259
        %4262 = vset.pattern.permute.xlu0 2
        %4263 = vperm.xlu0 %4262, %v400
        %v4264 = vpop.permute.xlu0 %4263
        %4266 = vset.pattern.permute.xlu0 2
        %4267 = vperm.xlu0 %4266, %v401
        %v4268 = vpop.permute.xlu0 %4267
        %4270 = vset.pattern.permute.xlu0 2
        %4271 = vperm.xlu0 %4270, %v402
        %v4272 = vpop.permute.xlu0 %4271
        %4274 = vset.pattern.permute.xlu0 2
        %4275 = vperm.xlu0 %4274, %v403
        %v4276 = vpop.permute.xlu0 %4275
        %4278 = vset.pattern.permute.xlu0 2
        %4279 = vperm.xlu0 %4278, %v404
        %v4280 = vpop.permute.xlu0 %4279
        %4282 = vset.pattern.permute.xlu0 2
        %4283 = vperm.xlu0 %4282, %v405
        %v4284 = vpop.permute.xlu0 %4283
        %4286 = vset.pattern.permute.xlu0 2
        %4287 = vperm.xlu0 %4286, %v406
        %v4288 = vpop.permute.xlu0 %4287
        %4290 = vset.pattern.permute.xlu0 2
        %4291 = vperm.xlu0 %4290, %v407
        %v4292 = vpop.permute.xlu0 %4291
        %4294 = vset.pattern.permute.xlu0 2
        %4295 = vperm.xlu0 %4294, %v408
        %v4296 = vpop.permute.xlu0 %4295
        %4298 = vset.pattern.permute.xlu0 2
        %4299 = vperm.xlu0 %4298, %v409
        %v4300 = vpop.permute.xlu0 %4299
        %4302 = vset.pattern.permute.xlu0 2
        %4303 = vperm.xlu0 %4302, %v410
        %v4304 = vpop.permute.xlu0 %4303
        %4306 = vset.pattern.permute.xlu0 2
        %4307 = vperm.xlu0 %4306, %v411
        %v4308 = vpop.permute.xlu0 %4307
        %4310 = vset.pattern.permute.xlu0 2
        %4311 = vperm.xlu0 %4310, %v412
        %v4312 = vpop.permute.xlu0 %4311
        %4314 = vset.pattern.permute.xlu0 2
        %4315 = vperm.xlu0 %4314, %v413
        %v4316 = vpop.permute.xlu0 %4315
        %4318 = vset.pattern.permute.xlu0 2
        %4319 = vperm.xlu0 %4318, %v414
        %v4320 = vpop.permute.xlu0 %4319
        %4322 = vset.pattern.permute.xlu0 2
        %4323 = vperm.xlu0 %4322, %v415
        %v4324 = vpop.permute.xlu0 %4323
        %4326 = vset.pattern.permute.xlu0 2
        %4327 = vperm.xlu0 %4326, %v416
        %v4328 = vpop.permute.xlu0 %4327
        %4330 = vset.pattern.permute.xlu0 2
        %4331 = vperm.xlu0 %4330, %v417
        %v4332 = vpop.permute.xlu0 %4331
        %4334 = vset.pattern.permute.xlu0 2
        %4335 = vperm.xlu0 %4334, %v418
        %v4336 = vpop.permute.xlu0 %4335
        %4338 = vset.pattern.permute.xlu0 2
        %4339 = vperm.xlu0 %4338, %v419
        %v4340 = vpop.permute.xlu0 %4339
        %4342 = vset.pattern.permute.xlu0 2
        %4343 = vperm.xlu0 %4342, %v420
        %v4344 = vpop.permute.xlu0 %4343
        %4346 = vset.pattern.permute.xlu0 2
        %4347 = vperm.xlu0 %4346, %v421
        %v4348 = vpop.permute.xlu0 %4347
        %v4350 = vsub.f32 %v3960, %v915
        %v4351 = vsub.f32 %v3964, %v915
        %v4352 = vsub.f32 %v3968, %v915
        %v4353 = vsub.f32 %v3972, %v915
        %v4354 = vsub.f32 %v3976, %v915
        %v4355 = vsub.f32 %v3980, %v915
        %v4356 = vsub.f32 %v3984, %v915
        %v4357 = vsub.f32 %v3988, %v915
        %v4358 = vsub.f32 %v3992, %v915
        %v4359 = vsub.f32 %v3996, %v915
        %v4360 = vsub.f32 %v4000, %v915
        %v4361 = vsub.f32 %v4004, %v915
        %v4362 = vsub.f32 %v4008, %v915
        %v4363 = vsub.f32 %v4012, %v915
        %v4364 = vsub.f32 %v4016, %v915
        %v4365 = vsub.f32 %v4020, %v915
        %v4366 = vsub.f32 %v4024, %v915
        %v4367 = vsub.f32 %v4028, %v915
        %v4368 = vsub.f32 %v4032, %v915
        %v4369 = vsub.f32 %v4036, %v915
        %v4370 = vsub.f32 %v4040, %v915
        %v4371 = vsub.f32 %v4044, %v915
        %v4372 = vsub.f32 %v4048, %v915
        %v4373 = vsub.f32 %v4052, %v915
        %v4374 = vsub.f32 %v4056, %v915
        %v4375 = vsub.f32 %v4060, %v915
        %v4376 = vsub.f32 %v4064, %v915
        %v4377 = vsub.f32 %v4068, %v915
        %v4378 = vsub.f32 %v4072, %v915
        %v4379 = vsub.f32 %v4076, %v915
        %v4380 = vsub.f32 %v4080, %v915
        %v4381 = vsub.f32 %v4084, %v915
        %v4382 = vsub.f32 %v4088, %v915
        %v4383 = vsub.f32 %v4092, %v915
        %v4384 = vsub.f32 %v4096, %v915
        %v4385 = vsub.f32 %v4100, %v915
        %v4386 = vsub.f32 %v4104, %v915
        %v4387 = vsub.f32 %v4108, %v915
        %v4388 = vsub.f32 %v4112, %v915
        %v4389 = vsub.f32 %v4116, %v915
        %v4390 = vsub.f32 %v4120, %v915
        %v4391 = vsub.f32 %v4124, %v915
        %v4392 = vsub.f32 %v4128, %v915
        %v4393 = vsub.f32 %v4132, %v915
        %v4394 = vsub.f32 %v4136, %v915
        %v4395 = vsub.f32 %v4140, %v915
        %v4396 = vsub.f32 %v4144, %v915
        %v4397 = vsub.f32 %v4148, %v915
        %v4398 = vsub.f32 %v4152, %v915
        %v4399 = vsub.f32 %v4156, %v915
        %v4400 = vsub.f32 %v4160, %v915
        %v4401 = vsub.f32 %v4164, %v915
        %v4402 = vsub.f32 %v4168, %v915
        %v4403 = vsub.f32 %v4172, %v915
        %v4404 = vsub.f32 %v4176, %v915
        %v4405 = vsub.f32 %v4180, %v915
        %v4406 = vsub.f32 %v4184, %v915
        %v4407 = vsub.f32 %v4188, %v915
        %v4408 = vsub.f32 %v4192, %v915
        %v4409 = vsub.f32 %v4196, %v915
        %v4410 = vsub.f32 %v4200, %v915
        %v4411 = vsub.f32 %v4204, %v915
        %v4412 = vsub.f32 %v4208, %v915
        %v4413 = vsub.f32 %v4212, %v915
        %v4414 = vsub.f32 %v4216, %v915
        %v4415 = vsub.f32 %v4220, %v915
        %v4416 = vsub.f32 %v4224, %v915
        %v4417 = vsub.f32 %v4228, %v915
        %v4418 = vsub.f32 %v4232, %v915
        %v4419 = vsub.f32 %v4236, %v915
        %v4420 = vsub.f32 %v4240, %v915
        %v4421 = vsub.f32 %v4244, %v915
        %v4422 = vsub.f32 %v4248, %v915
        %v4423 = vsub.f32 %v4252, %v915
        %v4424 = vsub.f32 %v4256, %v915
        %v4425 = vsub.f32 %v4260, %v915
        %v4426 = vsub.f32 %v4264, %v915
        %v4427 = vsub.f32 %v4268, %v915
        %v4428 = vsub.f32 %v4272, %v915
        %v4429 = vsub.f32 %v4276, %v915
        %v4430 = vsub.f32 %v4280, %v915
        %v4431 = vsub.f32 %v4284, %v915
        %v4432 = vsub.f32 %v4288, %v915
        %v4433 = vsub.f32 %v4292, %v915
        %v4434 = vsub.f32 %v4296, %v915
        %v4435 = vsub.f32 %v4300, %v915
        %v4436 = vsub.f32 %v4304, %v915
        %v4437 = vsub.f32 %v4308, %v915
        %v4438 = vsub.f32 %v4312, %v915
        %v4439 = vsub.f32 %v4316, %v915
        %v4440 = vsub.f32 %v4320, %v915
        %v4441 = vsub.f32 %v4324, %v915
        %v4442 = vsub.f32 %v4328, %v915
        %v4443 = vsub.f32 %v4332, %v915
        %v4444 = vsub.f32 %v4336, %v915
        %v4445 = vsub.f32 %v4340, %v915
        %v4446 = vsub.f32 %v4344, %v915
        %v4447 = vsub.f32 %v4348, %v915
        %v4448 = vand.u32 2147483647, %v4350
        %v4449 = vand.u32 2147483647, %v4351
        %v4450 = vand.u32 2147483647, %v4352
        %v4451 = vand.u32 2147483647, %v4353
        %v4452 = vand.u32 2147483647, %v4354
        %v4453 = vand.u32 2147483647, %v4355
        %v4454 = vand.u32 2147483647, %v4356
        %v4455 = vand.u32 2147483647, %v4357
        %v4456 = vand.u32 2147483647, %v4358
        %v4457 = vand.u32 2147483647, %v4359
        %v4458 = vand.u32 2147483647, %v4360
        %v4459 = vand.u32 2147483647, %v4361
        %v4460 = vand.u32 2147483647, %v4362
        %v4461 = vand.u32 2147483647, %v4363
        %v4462 = vand.u32 2147483647, %v4364
        %v4463 = vand.u32 2147483647, %v4365
        %v4464 = vand.u32 2147483647, %v4366
        %v4465 = vand.u32 2147483647, %v4367
        %v4466 = vand.u32 2147483647, %v4368
        %v4467 = vand.u32 2147483647, %v4369
        %v4468 = vand.u32 2147483647, %v4370
        %v4469 = vand.u32 2147483647, %v4371
        %v4470 = vand.u32 2147483647, %v4372
        %v4471 = vand.u32 2147483647, %v4373
        %v4472 = vand.u32 2147483647, %v4374
        %v4473 = vand.u32 2147483647, %v4375
        %v4474 = vand.u32 2147483647, %v4376
        %v4475 = vand.u32 2147483647, %v4377
        %v4476 = vand.u32 2147483647, %v4378
        %v4477 = vand.u32 2147483647, %v4379
        %v4478 = vand.u32 2147483647, %v4380
        %v4479 = vand.u32 2147483647, %v4381
        %v4480 = vand.u32 2147483647, %v4382
        %v4481 = vand.u32 2147483647, %v4383
        %v4482 = vand.u32 2147483647, %v4384
        %v4483 = vand.u32 2147483647, %v4385
        %v4484 = vand.u32 2147483647, %v4386
        %v4485 = vand.u32 2147483647, %v4387
        %v4486 = vand.u32 2147483647, %v4388
        %v4487 = vand.u32 2147483647, %v4389
        %v4488 = vand.u32 2147483647, %v4390
        %v4489 = vand.u32 2147483647, %v4391
        %v4490 = vand.u32 2147483647, %v4392
        %v4491 = vand.u32 2147483647, %v4393
        %v4492 = vand.u32 2147483647, %v4394
        %v4493 = vand.u32 2147483647, %v4395
        %v4494 = vand.u32 2147483647, %v4396
        %v4495 = vand.u32 2147483647, %v4397
        %v4496 = vand.u32 2147483647, %v4398
        %v4497 = vand.u32 2147483647, %v4399
        %v4498 = vand.u32 2147483647, %v4400
        %v4499 = vand.u32 2147483647, %v4401
        %v4500 = vand.u32 2147483647, %v4402
        %v4501 = vand.u32 2147483647, %v4403
        %v4502 = vand.u32 2147483647, %v4404
        %v4503 = vand.u32 2147483647, %v4405
        %v4504 = vand.u32 2147483647, %v4406
        %v4505 = vand.u32 2147483647, %v4407
        %v4506 = vand.u32 2147483647, %v4408
        %v4507 = vand.u32 2147483647, %v4409
        %v4508 = vand.u32 2147483647, %v4410
        %v4509 = vand.u32 2147483647, %v4411
        %v4510 = vand.u32 2147483647, %v4412
        %v4511 = vand.u32 2147483647, %v4413
        %v4512 = vand.u32 2147483647, %v4414
        %v4513 = vand.u32 2147483647, %v4415
        %v4514 = vand.u32 2147483647, %v4416
        %v4515 = vand.u32 2147483647, %v4417
        %v4516 = vand.u32 2147483647, %v4418
        %v4517 = vand.u32 2147483647, %v4419
        %v4518 = vand.u32 2147483647, %v4420
        %v4519 = vand.u32 2147483647, %v4421
        %v4520 = vand.u32 2147483647, %v4422
        %v4521 = vand.u32 2147483647, %v4423
        %v4522 = vand.u32 2147483647, %v4424
        %v4523 = vand.u32 2147483647, %v4425
        %v4524 = vand.u32 2147483647, %v4426
        %v4525 = vand.u32 2147483647, %v4427
        %v4526 = vand.u32 2147483647, %v4428
        %v4527 = vand.u32 2147483647, %v4429
        %v4528 = vand.u32 2147483647, %v4430
        %v4529 = vand.u32 2147483647, %v4431
        %v4530 = vand.u32 2147483647, %v4432
        %v4531 = vand.u32 2147483647, %v4433
        %v4532 = vand.u32 2147483647, %v4434
        %v4533 = vand.u32 2147483647, %v4435
        %v4534 = vand.u32 2147483647, %v4436
        %v4535 = vand.u32 2147483647, %v4437
        %v4536 = vand.u32 2147483647, %v4438
        %v4537 = vand.u32 2147483647, %v4439
        %v4538 = vand.u32 2147483647, %v4440
        %v4539 = vand.u32 2147483647, %v4441
        %v4540 = vand.u32 2147483647, %v4442
        %v4541 = vand.u32 2147483647, %v4443
        %v4542 = vand.u32 2147483647, %v4444
        %v4543 = vand.u32 2147483647, %v4445
        %v4544 = vand.u32 2147483647, %v4446
        %v4545 = vand.u32 2147483647, %v4447
        %v4546 = vsub.f32 1.0, %v4448
        %v4547 = vsub.f32 1.0, %v4449
        %v4548 = vsub.f32 1.0, %v4450
        %v4549 = vsub.f32 1.0, %v4451
        %v4550 = vsub.f32 1.0, %v4452
        %v4551 = vsub.f32 1.0, %v4453
        %v4552 = vsub.f32 1.0, %v4454
        %v4553 = vsub.f32 1.0, %v4455
        %v4554 = vsub.f32 1.0, %v4456
        %v4555 = vsub.f32 1.0, %v4457
        %v4556 = vsub.f32 1.0, %v4458
        %v4557 = vsub.f32 1.0, %v4459
        %v4558 = vsub.f32 1.0, %v4460
        %v4559 = vsub.f32 1.0, %v4461
        %v4560 = vsub.f32 1.0, %v4462
        %v4561 = vsub.f32 1.0, %v4463
        %v4562 = vsub.f32 1.0, %v4464
        %v4563 = vsub.f32 1.0, %v4465
        %v4564 = vsub.f32 1.0, %v4466
        %v4565 = vsub.f32 1.0, %v4467
        %v4566 = vsub.f32 1.0, %v4468
        %v4567 = vsub.f32 1.0, %v4469
        %v4568 = vsub.f32 1.0, %v4470
        %v4569 = vsub.f32 1.0, %v4471
        %v4570 = vsub.f32 1.0, %v4472
        %v4571 = vsub.f32 1.0, %v4473
        %v4572 = vsub.f32 1.0, %v4474
        %v4573 = vsub.f32 1.0, %v4475
        %v4574 = vsub.f32 1.0, %v4476
        %v4575 = vsub.f32 1.0, %v4477
        %v4576 = vsub.f32 1.0, %v4478
        %v4577 = vsub.f32 1.0, %v4479
        %v4578 = vsub.f32 1.0, %v4480
        %v4579 = vsub.f32 1.0, %v4481
        %v4580 = vsub.f32 1.0, %v4482
        %v4581 = vsub.f32 1.0, %v4483
        %v4582 = vsub.f32 1.0, %v4484
        %v4583 = vsub.f32 1.0, %v4485
        %v4584 = vsub.f32 1.0, %v4486
        %v4585 = vsub.f32 1.0, %v4487
        %v4586 = vsub.f32 1.0, %v4488
        %v4587 = vsub.f32 1.0, %v4489
        %v4588 = vsub.f32 1.0, %v4490
        %v4589 = vsub.f32 1.0, %v4491
        %v4590 = vsub.f32 1.0, %v4492
        %v4591 = vsub.f32 1.0, %v4493
        %v4592 = vsub.f32 1.0, %v4494
        %v4593 = vsub.f32 1.0, %v4495
        %v4594 = vsub.f32 1.0, %v4496
        %v4595 = vsub.f32 1.0, %v4497
        %v4596 = vsub.f32 1.0, %v4498
        %v4597 = vsub.f32 1.0, %v4499
        %v4598 = vsub.f32 1.0, %v4500
        %v4599 = vsub.f32 1.0, %v4501
        %v4600 = vsub.f32 1.0, %v4502
        %v4601 = vsub.f32 1.0, %v4503
        %v4602 = vsub.f32 1.0, %v4504
        %v4603 = vsub.f32 1.0, %v4505
        %v4604 = vsub.f32 1.0, %v4506
        %v4605 = vsub.f32 1.0, %v4507
        %v4606 = vsub.f32 1.0, %v4508
        %v4607 = vsub.f32 1.0, %v4509
        %v4608 = vsub.f32 1.0, %v4510
        %v4609 = vsub.f32 1.0, %v4511
        %v4610 = vsub.f32 1.0, %v4512
        %v4611 = vsub.f32 1.0, %v4513
        %v4612 = vsub.f32 1.0, %v4514
        %v4613 = vsub.f32 1.0, %v4515
        %v4614 = vsub.f32 1.0, %v4516
        %v4615 = vsub.f32 1.0, %v4517
        %v4616 = vsub.f32 1.0, %v4518
        %v4617 = vsub.f32 1.0, %v4519
        %v4618 = vsub.f32 1.0, %v4520
        %v4619 = vsub.f32 1.0, %v4521
        %v4620 = vsub.f32 1.0, %v4522
        %v4621 = vsub.f32 1.0, %v4523
        %v4622 = vsub.f32 1.0, %v4524
        %v4623 = vsub.f32 1.0, %v4525
        %v4624 = vsub.f32 1.0, %v4526
        %v4625 = vsub.f32 1.0, %v4527
        %v4626 = vsub.f32 1.0, %v4528
        %v4627 = vsub.f32 1.0, %v4529
        %v4628 = vsub.f32 1.0, %v4530
        %v4629 = vsub.f32 1.0, %v4531
        %v4630 = vsub.f32 1.0, %v4532
        %v4631 = vsub.f32 1.0, %v4533
        %v4632 = vsub.f32 1.0, %v4534
        %v4633 = vsub.f32 1.0, %v4535
        %v4634 = vsub.f32 1.0, %v4536
        %v4635 = vsub.f32 1.0, %v4537
        %v4636 = vsub.f32 1.0, %v4538
        %v4637 = vsub.f32 1.0, %v4539
        %v4638 = vsub.f32 1.0, %v4540
        %v4639 = vsub.f32 1.0, %v4541
        %v4640 = vsub.f32 1.0, %v4542
        %v4641 = vsub.f32 1.0, %v4543
        %v4642 = vsub.f32 1.0, %v4544
        %v4643 = vsub.f32 1.0, %v4545
        %v4644 = vmax.f32 %v4546, 0.0
        %v4645 = vmax.f32 %v4547, 0.0
        %v4646 = vmax.f32 %v4548, 0.0
        %v4647 = vmax.f32 %v4549, 0.0
        %v4648 = vmax.f32 %v4550, 0.0
        %v4649 = vmax.f32 %v4551, 0.0
        %v4650 = vmax.f32 %v4552, 0.0
        %v4651 = vmax.f32 %v4553, 0.0
        %v4652 = vmax.f32 %v4554, 0.0
        %v4653 = vmax.f32 %v4555, 0.0
        %v4654 = vmax.f32 %v4556, 0.0
        %v4655 = vmax.f32 %v4557, 0.0
        %v4656 = vmax.f32 %v4558, 0.0
        %v4657 = vmax.f32 %v4559, 0.0
        %v4658 = vmax.f32 %v4560, 0.0
        %v4659 = vmax.f32 %v4561, 0.0
        %v4660 = vmax.f32 %v4562, 0.0
        %v4661 = vmax.f32 %v4563, 0.0
        %v4662 = vmax.f32 %v4564, 0.0
        %v4663 = vmax.f32 %v4565, 0.0
        %v4664 = vmax.f32 %v4566, 0.0
        %v4665 = vmax.f32 %v4567, 0.0
        %v4666 = vmax.f32 %v4568, 0.0
        %v4667 = vmax.f32 %v4569, 0.0
        %v4668 = vmax.f32 %v4570, 0.0
        %v4669 = vmax.f32 %v4571, 0.0
        %v4670 = vmax.f32 %v4572, 0.0
        %v4671 = vmax.f32 %v4573, 0.0
        %v4672 = vmax.f32 %v4574, 0.0
        %v4673 = vmax.f32 %v4575, 0.0
        %v4674 = vmax.f32 %v4576, 0.0
        %v4675 = vmax.f32 %v4577, 0.0
        %v4676 = vmax.f32 %v4578, 0.0
        %v4677 = vmax.f32 %v4579, 0.0
        %v4678 = vmax.f32 %v4580, 0.0
        %v4679 = vmax.f32 %v4581, 0.0
        %v4680 = vmax.f32 %v4582, 0.0
        %v4681 = vmax.f32 %v4583, 0.0
        %v4682 = vmax.f32 %v4584, 0.0
        %v4683 = vmax.f32 %v4585, 0.0
        %v4684 = vmax.f32 %v4586, 0.0
        %v4685 = vmax.f32 %v4587, 0.0
        %v4686 = vmax.f32 %v4588, 0.0
        %v4687 = vmax.f32 %v4589, 0.0
        %v4688 = vmax.f32 %v4590, 0.0
        %v4689 = vmax.f32 %v4591, 0.0
        %v4690 = vmax.f32 %v4592, 0.0
        %v4691 = vmax.f32 %v4593, 0.0
        %v4692 = vmax.f32 %v4594, 0.0
        %v4693 = vmax.f32 %v4595, 0.0
        %v4694 = vmax.f32 %v4596, 0.0
        %v4695 = vmax.f32 %v4597, 0.0
        %v4696 = vmax.f32 %v4598, 0.0
        %v4697 = vmax.f32 %v4599, 0.0
        %v4698 = vmax.f32 %v4600, 0.0
        %v4699 = vmax.f32 %v4601, 0.0
        %v4700 = vmax.f32 %v4602, 0.0
        %v4701 = vmax.f32 %v4603, 0.0
        %v4702 = vmax.f32 %v4604, 0.0
        %v4703 = vmax.f32 %v4605, 0.0
        %v4704 = vmax.f32 %v4606, 0.0
        %v4705 = vmax.f32 %v4607, 0.0
        %v4706 = vmax.f32 %v4608, 0.0
        %v4707 = vmax.f32 %v4609, 0.0
        %v4708 = vmax.f32 %v4610, 0.0
        %v4709 = vmax.f32 %v4611, 0.0
        %v4710 = vmax.f32 %v4612, 0.0
        %v4711 = vmax.f32 %v4613, 0.0
        %v4712 = vmax.f32 %v4614, 0.0
        %v4713 = vmax.f32 %v4615, 0.0
        %v4714 = vmax.f32 %v4616, 0.0
        %v4715 = vmax.f32 %v4617, 0.0
        %v4716 = vmax.f32 %v4618, 0.0
        %v4717 = vmax.f32 %v4619, 0.0
        %v4718 = vmax.f32 %v4620, 0.0
        %v4719 = vmax.f32 %v4621, 0.0
        %v4720 = vmax.f32 %v4622, 0.0
        %v4721 = vmax.f32 %v4623, 0.0
        %v4722 = vmax.f32 %v4624, 0.0
        %v4723 = vmax.f32 %v4625, 0.0
        %v4724 = vmax.f32 %v4626, 0.0
        %v4725 = vmax.f32 %v4627, 0.0
        %v4726 = vmax.f32 %v4628, 0.0
        %v4727 = vmax.f32 %v4629, 0.0
        %v4728 = vmax.f32 %v4630, 0.0
        %v4729 = vmax.f32 %v4631, 0.0
        %v4730 = vmax.f32 %v4632, 0.0
        %v4731 = vmax.f32 %v4633, 0.0
        %v4732 = vmax.f32 %v4634, 0.0
        %v4733 = vmax.f32 %v4635, 0.0
        %v4734 = vmax.f32 %v4636, 0.0
        %v4735 = vmax.f32 %v4637, 0.0
        %v4736 = vmax.f32 %v4638, 0.0
        %v4737 = vmax.f32 %v4639, 0.0
        %v4738 = vmax.f32 %v4640, 0.0
        %v4739 = vmax.f32 %v4641, 0.0
        %v4740 = vmax.f32 %v4642, 0.0
        %v4741 = vmax.f32 %v4643, 0.0
        %4742 = vset.pattern.permute.xlu0 6
        %4743 = vperm.xlu0 %4742, %v324
        %v4744 = vpop.permute.xlu0 %4743
        %4746 = vset.pattern.permute.xlu0 6
        %4747 = vperm.xlu0 %4746, %v325
        %v4748 = vpop.permute.xlu0 %4747
        %4750 = vset.pattern.permute.xlu0 6
        %4751 = vperm.xlu0 %4750, %v326
        %v4752 = vpop.permute.xlu0 %4751
        %4754 = vset.pattern.permute.xlu0 6
        %4755 = vperm.xlu0 %4754, %v327
        %v4756 = vpop.permute.xlu0 %4755
        %4758 = vset.pattern.permute.xlu0 6
        %4759 = vperm.xlu0 %4758, %v328
        %v4760 = vpop.permute.xlu0 %4759
        %4762 = vset.pattern.permute.xlu0 6
        %4763 = vperm.xlu0 %4762, %v329
        %v4764 = vpop.permute.xlu0 %4763
        %4766 = vset.pattern.permute.xlu0 6
        %4767 = vperm.xlu0 %4766, %v330
        %v4768 = vpop.permute.xlu0 %4767
        %4770 = vset.pattern.permute.xlu0 6
        %4771 = vperm.xlu0 %4770, %v331
        %v4772 = vpop.permute.xlu0 %4771
        %4774 = vset.pattern.permute.xlu0 6
        %4775 = vperm.xlu0 %4774, %v332
        %v4776 = vpop.permute.xlu0 %4775
        %4778 = vset.pattern.permute.xlu0 6
        %4779 = vperm.xlu0 %4778, %v333
        %v4780 = vpop.permute.xlu0 %4779
        %4782 = vset.pattern.permute.xlu0 6
        %4783 = vperm.xlu0 %4782, %v334
        %v4784 = vpop.permute.xlu0 %4783
        %4786 = vset.pattern.permute.xlu0 6
        %4787 = vperm.xlu0 %4786, %v335
        %v4788 = vpop.permute.xlu0 %4787
        %4790 = vset.pattern.permute.xlu0 6
        %4791 = vperm.xlu0 %4790, %v336
        %v4792 = vpop.permute.xlu0 %4791
        %4794 = vset.pattern.permute.xlu0 6
        %4795 = vperm.xlu0 %4794, %v337
        %v4796 = vpop.permute.xlu0 %4795
        %4798 = vset.pattern.permute.xlu0 6
        %4799 = vperm.xlu0 %4798, %v338
        %v4800 = vpop.permute.xlu0 %4799
        %4802 = vset.pattern.permute.xlu0 6
        %4803 = vperm.xlu0 %4802, %v339
        %v4804 = vpop.permute.xlu0 %4803
        %4806 = vset.pattern.permute.xlu0 6
        %4807 = vperm.xlu0 %4806, %v340
        %v4808 = vpop.permute.xlu0 %4807
        %4810 = vset.pattern.permute.xlu0 6
        %4811 = vperm.xlu0 %4810, %v341
        %v4812 = vpop.permute.xlu0 %4811
        %4814 = vset.pattern.permute.xlu0 6
        %4815 = vperm.xlu0 %4814, %v342
        %v4816 = vpop.permute.xlu0 %4815
        %4818 = vset.pattern.permute.xlu0 6
        %4819 = vperm.xlu0 %4818, %v343
        %v4820 = vpop.permute.xlu0 %4819
        %4822 = vset.pattern.permute.xlu0 6
        %4823 = vperm.xlu0 %4822, %v344
        %v4824 = vpop.permute.xlu0 %4823
        %4826 = vset.pattern.permute.xlu0 6
        %4827 = vperm.xlu0 %4826, %v345
        %v4828 = vpop.permute.xlu0 %4827
        %4830 = vset.pattern.permute.xlu0 6
        %4831 = vperm.xlu0 %4830, %v346
        %v4832 = vpop.permute.xlu0 %4831
        %4834 = vset.pattern.permute.xlu0 6
        %4835 = vperm.xlu0 %4834, %v347
        %v4836 = vpop.permute.xlu0 %4835
        %4838 = vset.pattern.permute.xlu0 6
        %4839 = vperm.xlu0 %4838, %v348
        %v4840 = vpop.permute.xlu0 %4839
        %4842 = vset.pattern.permute.xlu0 6
        %4843 = vperm.xlu0 %4842, %v349
        %v4844 = vpop.permute.xlu0 %4843
        %4846 = vset.pattern.permute.xlu0 6
        %4847 = vperm.xlu0 %4846, %v350
        %v4848 = vpop.permute.xlu0 %4847
        %4850 = vset.pattern.permute.xlu0 6
        %4851 = vperm.xlu0 %4850, %v351
        %v4852 = vpop.permute.xlu0 %4851
        %4854 = vset.pattern.permute.xlu0 6
        %4855 = vperm.xlu0 %4854, %v352
        %v4856 = vpop.permute.xlu0 %4855
        %4858 = vset.pattern.permute.xlu0 6
        %4859 = vperm.xlu0 %4858, %v353
        %v4860 = vpop.permute.xlu0 %4859
        %4862 = vset.pattern.permute.xlu0 6
        %4863 = vperm.xlu0 %4862, %v354
        %v4864 = vpop.permute.xlu0 %4863
        %4866 = vset.pattern.permute.xlu0 6
        %4867 = vperm.xlu0 %4866, %v355
        %v4868 = vpop.permute.xlu0 %4867
        %4870 = vset.pattern.permute.xlu0 6
        %4871 = vperm.xlu0 %4870, %v356
        %v4872 = vpop.permute.xlu0 %4871
        %4874 = vset.pattern.permute.xlu0 6
        %4875 = vperm.xlu0 %4874, %v357
        %v4876 = vpop.permute.xlu0 %4875
        %4878 = vset.pattern.permute.xlu0 6
        %4879 = vperm.xlu0 %4878, %v358
        %v4880 = vpop.permute.xlu0 %4879
        %4882 = vset.pattern.permute.xlu0 6
        %4883 = vperm.xlu0 %4882, %v359
        %v4884 = vpop.permute.xlu0 %4883
        %4886 = vset.pattern.permute.xlu0 6
        %4887 = vperm.xlu0 %4886, %v360
        %v4888 = vpop.permute.xlu0 %4887
        %4890 = vset.pattern.permute.xlu0 6
        %4891 = vperm.xlu0 %4890, %v361
        %v4892 = vpop.permute.xlu0 %4891
        %4894 = vset.pattern.permute.xlu0 6
        %4895 = vperm.xlu0 %4894, %v362
        %v4896 = vpop.permute.xlu0 %4895
        %4898 = vset.pattern.permute.xlu0 6
        %4899 = vperm.xlu0 %4898, %v363
        %v4900 = vpop.permute.xlu0 %4899
        %4902 = vset.pattern.permute.xlu0 6
        %4903 = vperm.xlu0 %4902, %v364
        %v4904 = vpop.permute.xlu0 %4903
        %4906 = vset.pattern.permute.xlu0 6
        %4907 = vperm.xlu0 %4906, %v365
        %v4908 = vpop.permute.xlu0 %4907
        %4910 = vset.pattern.permute.xlu0 6
        %4911 = vperm.xlu0 %4910, %v366
        %v4912 = vpop.permute.xlu0 %4911
        %4914 = vset.pattern.permute.xlu0 6
        %4915 = vperm.xlu0 %4914, %v367
        %v4916 = vpop.permute.xlu0 %4915
        %4918 = vset.pattern.permute.xlu0 6
        %4919 = vperm.xlu0 %4918, %v368
        %v4920 = vpop.permute.xlu0 %4919
        %4922 = vset.pattern.permute.xlu0 6
        %4923 = vperm.xlu0 %4922, %v369
        %v4924 = vpop.permute.xlu0 %4923
        %4926 = vset.pattern.permute.xlu0 6
        %4927 = vperm.xlu0 %4926, %v370
        %v4928 = vpop.permute.xlu0 %4927
        %4930 = vset.pattern.permute.xlu0 6
        %4931 = vperm.xlu0 %4930, %v371
        %v4932 = vpop.permute.xlu0 %4931
        %4934 = vset.pattern.permute.xlu0 6
        %4935 = vperm.xlu0 %4934, %v372
        %v4936 = vpop.permute.xlu0 %4935
        %4938 = vset.pattern.permute.xlu0 6
        %4939 = vperm.xlu0 %4938, %v373
        %v4940 = vpop.permute.xlu0 %4939
        %4942 = vset.pattern.permute.xlu0 6
        %4943 = vperm.xlu0 %4942, %v374
        %v4944 = vpop.permute.xlu0 %4943
        %4946 = vset.pattern.permute.xlu0 6
        %4947 = vperm.xlu0 %4946, %v375
        %v4948 = vpop.permute.xlu0 %4947
        %4950 = vset.pattern.permute.xlu0 6
        %4951 = vperm.xlu0 %4950, %v376
        %v4952 = vpop.permute.xlu0 %4951
        %4954 = vset.pattern.permute.xlu0 6
        %4955 = vperm.xlu0 %4954, %v377
        %v4956 = vpop.permute.xlu0 %4955
        %4958 = vset.pattern.permute.xlu0 6
        %4959 = vperm.xlu0 %4958, %v378
        %v4960 = vpop.permute.xlu0 %4959
        %4962 = vset.pattern.permute.xlu0 6
        %4963 = vperm.xlu0 %4962, %v379
        %v4964 = vpop.permute.xlu0 %4963
        %4966 = vset.pattern.permute.xlu0 6
        %4967 = vperm.xlu0 %4966, %v380
        %v4968 = vpop.permute.xlu0 %4967
        %4970 = vset.pattern.permute.xlu0 6
        %4971 = vperm.xlu0 %4970, %v381
        %v4972 = vpop.permute.xlu0 %4971
        %4974 = vset.pattern.permute.xlu0 6
        %4975 = vperm.xlu0 %4974, %v382
        %v4976 = vpop.permute.xlu0 %4975
        %4978 = vset.pattern.permute.xlu0 6
        %4979 = vperm.xlu0 %4978, %v383
        %v4980 = vpop.permute.xlu0 %4979
        %4982 = vset.pattern.permute.xlu0 6
        %4983 = vperm.xlu0 %4982, %v384
        %v4984 = vpop.permute.xlu0 %4983
        %4986 = vset.pattern.permute.xlu0 6
        %4987 = vperm.xlu0 %4986, %v385
        %v4988 = vpop.permute.xlu0 %4987
        %4990 = vset.pattern.permute.xlu0 6
        %4991 = vperm.xlu0 %4990, %v386
        %v4992 = vpop.permute.xlu0 %4991
        %4994 = vset.pattern.permute.xlu0 6
        %4995 = vperm.xlu0 %4994, %v387
        %v4996 = vpop.permute.xlu0 %4995
        %4998 = vset.pattern.permute.xlu0 6
        %4999 = vperm.xlu0 %4998, %v388
        %v5000 = vpop.permute.xlu0 %4999
        %5002 = vset.pattern.permute.xlu0 6
        %5003 = vperm.xlu0 %5002, %v389
        %v5004 = vpop.permute.xlu0 %5003
        %5006 = vset.pattern.permute.xlu0 6
        %5007 = vperm.xlu0 %5006, %v390
        %v5008 = vpop.permute.xlu0 %5007
        %5010 = vset.pattern.permute.xlu0 6
        %5011 = vperm.xlu0 %5010, %v391
        %v5012 = vpop.permute.xlu0 %5011
        %5014 = vset.pattern.permute.xlu0 6
        %5015 = vperm.xlu0 %5014, %v392
        %v5016 = vpop.permute.xlu0 %5015
        %5018 = vset.pattern.permute.xlu0 6
        %5019 = vperm.xlu0 %5018, %v393
        %v5020 = vpop.permute.xlu0 %5019
        %5022 = vset.pattern.permute.xlu0 6
        %5023 = vperm.xlu0 %5022, %v394
        %v5024 = vpop.permute.xlu0 %5023
        %5026 = vset.pattern.permute.xlu0 6
        %5027 = vperm.xlu0 %5026, %v395
        %v5028 = vpop.permute.xlu0 %5027
        %5030 = vset.pattern.permute.xlu0 6
        %5031 = vperm.xlu0 %5030, %v396
        %v5032 = vpop.permute.xlu0 %5031
        %5034 = vset.pattern.permute.xlu0 6
        %5035 = vperm.xlu0 %5034, %v397
        %v5036 = vpop.permute.xlu0 %5035
        %5038 = vset.pattern.permute.xlu0 6
        %5039 = vperm.xlu0 %5038, %v398
        %v5040 = vpop.permute.xlu0 %5039
        %5042 = vset.pattern.permute.xlu0 6
        %5043 = vperm.xlu0 %5042, %v399
        %v5044 = vpop.permute.xlu0 %5043
        %5046 = vset.pattern.permute.xlu0 6
        %5047 = vperm.xlu0 %5046, %v400
        %v5048 = vpop.permute.xlu0 %5047
        %5050 = vset.pattern.permute.xlu0 6
        %5051 = vperm.xlu0 %5050, %v401
        %v5052 = vpop.permute.xlu0 %5051
        %5054 = vset.pattern.permute.xlu0 6
        %5055 = vperm.xlu0 %5054, %v402
        %v5056 = vpop.permute.xlu0 %5055
        %5058 = vset.pattern.permute.xlu0 6
        %5059 = vperm.xlu0 %5058, %v403
        %v5060 = vpop.permute.xlu0 %5059
        %5062 = vset.pattern.permute.xlu0 6
        %5063 = vperm.xlu0 %5062, %v404
        %v5064 = vpop.permute.xlu0 %5063
        %5066 = vset.pattern.permute.xlu0 6
        %5067 = vperm.xlu0 %5066, %v405
        %v5068 = vpop.permute.xlu0 %5067
        %5070 = vset.pattern.permute.xlu0 6
        %5071 = vperm.xlu0 %5070, %v406
        %v5072 = vpop.permute.xlu0 %5071
        %5074 = vset.pattern.permute.xlu0 6
        %5075 = vperm.xlu0 %5074, %v407
        %v5076 = vpop.permute.xlu0 %5075
        %5078 = vset.pattern.permute.xlu0 6
        %5079 = vperm.xlu0 %5078, %v408
        %v5080 = vpop.permute.xlu0 %5079
        %5082 = vset.pattern.permute.xlu0 6
        %5083 = vperm.xlu0 %5082, %v409
        %v5084 = vpop.permute.xlu0 %5083
        %5086 = vset.pattern.permute.xlu0 6
        %5087 = vperm.xlu0 %5086, %v410
        %v5088 = vpop.permute.xlu0 %5087
        %5090 = vset.pattern.permute.xlu0 6
        %5091 = vperm.xlu0 %5090, %v411
        %v5092 = vpop.permute.xlu0 %5091
        %5094 = vset.pattern.permute.xlu0 6
        %5095 = vperm.xlu0 %5094, %v412
        %v5096 = vpop.permute.xlu0 %5095
        %5098 = vset.pattern.permute.xlu0 6
        %5099 = vperm.xlu0 %5098, %v413
        %v5100 = vpop.permute.xlu0 %5099
        %5102 = vset.pattern.permute.xlu0 6
        %5103 = vperm.xlu0 %5102, %v414
        %v5104 = vpop.permute.xlu0 %5103
        %5106 = vset.pattern.permute.xlu0 6
        %5107 = vperm.xlu0 %5106, %v415
        %v5108 = vpop.permute.xlu0 %5107
        %5110 = vset.pattern.permute.xlu0 6
        %5111 = vperm.xlu0 %5110, %v416
        %v5112 = vpop.permute.xlu0 %5111
        %5114 = vset.pattern.permute.xlu0 6
        %5115 = vperm.xlu0 %5114, %v417
        %v5116 = vpop.permute.xlu0 %5115
        %5118 = vset.pattern.permute.xlu0 6
        %5119 = vperm.xlu0 %5118, %v418
        %v5120 = vpop.permute.xlu0 %5119
        %5122 = vset.pattern.permute.xlu0 6
        %5123 = vperm.xlu0 %5122, %v419
        %v5124 = vpop.permute.xlu0 %5123
        %5126 = vset.pattern.permute.xlu0 6
        %5127 = vperm.xlu0 %5126, %v420
        %v5128 = vpop.permute.xlu0 %5127
        %5130 = vset.pattern.permute.xlu0 6
        %5131 = vperm.xlu0 %5130, %v421
        %v5132 = vpop.permute.xlu0 %5131
        %v5134 = vsub.f32 %v4744, %v1703
        %v5135 = vsub.f32 %v4748, %v1703
        %v5136 = vsub.f32 %v4752, %v1703
        %v5137 = vsub.f32 %v4756, %v1703
        %v5138 = vsub.f32 %v4760, %v1703
        %v5139 = vsub.f32 %v4764, %v1703
        %v5140 = vsub.f32 %v4768, %v1703
        %v5141 = vsub.f32 %v4772, %v1703
        %v5142 = vsub.f32 %v4776, %v1703
        %v5143 = vsub.f32 %v4780, %v1703
        %v5144 = vsub.f32 %v4784, %v1703
        %v5145 = vsub.f32 %v4788, %v1703
        %v5146 = vsub.f32 %v4792, %v1703
        %v5147 = vsub.f32 %v4796, %v1703
        %v5148 = vsub.f32 %v4800, %v1703
        %v5149 = vsub.f32 %v4804, %v1703
        %v5150 = vsub.f32 %v4808, %v1703
        %v5151 = vsub.f32 %v4812, %v1703
        %v5152 = vsub.f32 %v4816, %v1703
        %v5153 = vsub.f32 %v4820, %v1703
        %v5154 = vsub.f32 %v4824, %v1703
        %v5155 = vsub.f32 %v4828, %v1703
        %v5156 = vsub.f32 %v4832, %v1703
        %v5157 = vsub.f32 %v4836, %v1703
        %v5158 = vsub.f32 %v4840, %v1703
        %v5159 = vsub.f32 %v4844, %v1703
        %v5160 = vsub.f32 %v4848, %v1703
        %v5161 = vsub.f32 %v4852, %v1703
        %v5162 = vsub.f32 %v4856, %v1703
        %v5163 = vsub.f32 %v4860, %v1703
        %v5164 = vsub.f32 %v4864, %v1703
        %v5165 = vsub.f32 %v4868, %v1703
        %v5166 = vsub.f32 %v4872, %v1703
        %v5167 = vsub.f32 %v4876, %v1703
        %v5168 = vsub.f32 %v4880, %v1703
        %v5169 = vsub.f32 %v4884, %v1703
        %v5170 = vsub.f32 %v4888, %v1703
        %v5171 = vsub.f32 %v4892, %v1703
        %v5172 = vsub.f32 %v4896, %v1703
        %v5173 = vsub.f32 %v4900, %v1703
        %v5174 = vsub.f32 %v4904, %v1703
        %v5175 = vsub.f32 %v4908, %v1703
        %v5176 = vsub.f32 %v4912, %v1703
        %v5177 = vsub.f32 %v4916, %v1703
        %v5178 = vsub.f32 %v4920, %v1703
        %v5179 = vsub.f32 %v4924, %v1703
        %v5180 = vsub.f32 %v4928, %v1703
        %v5181 = vsub.f32 %v4932, %v1703
        %v5182 = vsub.f32 %v4936, %v1703
        %v5183 = vsub.f32 %v4940, %v1703
        %v5184 = vsub.f32 %v4944, %v1703
        %v5185 = vsub.f32 %v4948, %v1703
        %v5186 = vsub.f32 %v4952, %v1703
        %v5187 = vsub.f32 %v4956, %v1703
        %v5188 = vsub.f32 %v4960, %v1703
        %v5189 = vsub.f32 %v4964, %v1703
        %v5190 = vsub.f32 %v4968, %v1703
        %v5191 = vsub.f32 %v4972, %v1703
        %v5192 = vsub.f32 %v4976, %v1703
        %v5193 = vsub.f32 %v4980, %v1703
        %v5194 = vsub.f32 %v4984, %v1703
        %v5195 = vsub.f32 %v4988, %v1703
        %v5196 = vsub.f32 %v4992, %v1703
        %v5197 = vsub.f32 %v4996, %v1703
        %v5198 = vsub.f32 %v5000, %v1703
        %v5199 = vsub.f32 %v5004, %v1703
        %v5200 = vsub.f32 %v5008, %v1703
        %v5201 = vsub.f32 %v5012, %v1703
        %v5202 = vsub.f32 %v5016, %v1703
        %v5203 = vsub.f32 %v5020, %v1703
        %v5204 = vsub.f32 %v5024, %v1703
        %v5205 = vsub.f32 %v5028, %v1703
        %v5206 = vsub.f32 %v5032, %v1703
        %v5207 = vsub.f32 %v5036, %v1703
        %v5208 = vsub.f32 %v5040, %v1703
        %v5209 = vsub.f32 %v5044, %v1703
        %v5210 = vsub.f32 %v5048, %v1703
        %v5211 = vsub.f32 %v5052, %v1703
        %v5212 = vsub.f32 %v5056, %v1703
        %v5213 = vsub.f32 %v5060, %v1703
        %v5214 = vsub.f32 %v5064, %v1703
        %v5215 = vsub.f32 %v5068, %v1703
        %v5216 = vsub.f32 %v5072, %v1703
        %v5217 = vsub.f32 %v5076, %v1703
        %v5218 = vsub.f32 %v5080, %v1703
        %v5219 = vsub.f32 %v5084, %v1703
        %v5220 = vsub.f32 %v5088, %v1703
        %v5221 = vsub.f32 %v5092, %v1703
        %v5222 = vsub.f32 %v5096, %v1703
        %v5223 = vsub.f32 %v5100, %v1703
        %v5224 = vsub.f32 %v5104, %v1703
        %v5225 = vsub.f32 %v5108, %v1703
        %v5226 = vsub.f32 %v5112, %v1703
        %v5227 = vsub.f32 %v5116, %v1703
        %v5228 = vsub.f32 %v5120, %v1703
        %v5229 = vsub.f32 %v5124, %v1703
        %v5230 = vsub.f32 %v5128, %v1703
        %v5231 = vsub.f32 %v5132, %v1703
        %v5232 = vand.u32 2147483647, %v5134
        %v5233 = vand.u32 2147483647, %v5135
        %v5234 = vand.u32 2147483647, %v5136
        %v5235 = vand.u32 2147483647, %v5137
        %v5236 = vand.u32 2147483647, %v5138
        %v5237 = vand.u32 2147483647, %v5139
        %v5238 = vand.u32 2147483647, %v5140
        %v5239 = vand.u32 2147483647, %v5141
        %v5240 = vand.u32 2147483647, %v5142
        %v5241 = vand.u32 2147483647, %v5143
        %v5242 = vand.u32 2147483647, %v5144
        %v5243 = vand.u32 2147483647, %v5145
        %v5244 = vand.u32 2147483647, %v5146
        %v5245 = vand.u32 2147483647, %v5147
        %v5246 = vand.u32 2147483647, %v5148
        %v5247 = vand.u32 2147483647, %v5149
        %v5248 = vand.u32 2147483647, %v5150
        %v5249 = vand.u32 2147483647, %v5151
        %v5250 = vand.u32 2147483647, %v5152
        %v5251 = vand.u32 2147483647, %v5153
        %v5252 = vand.u32 2147483647, %v5154
        %v5253 = vand.u32 2147483647, %v5155
        %v5254 = vand.u32 2147483647, %v5156
        %v5255 = vand.u32 2147483647, %v5157
        %v5256 = vand.u32 2147483647, %v5158
        %v5257 = vand.u32 2147483647, %v5159
        %v5258 = vand.u32 2147483647, %v5160
        %v5259 = vand.u32 2147483647, %v5161
        %v5260 = vand.u32 2147483647, %v5162
        %v5261 = vand.u32 2147483647, %v5163
        %v5262 = vand.u32 2147483647, %v5164
        %v5263 = vand.u32 2147483647, %v5165
        %v5264 = vand.u32 2147483647, %v5166
        %v5265 = vand.u32 2147483647, %v5167
        %v5266 = vand.u32 2147483647, %v5168
        %v5267 = vand.u32 2147483647, %v5169
        %v5268 = vand.u32 2147483647, %v5170
        %v5269 = vand.u32 2147483647, %v5171
        %v5270 = vand.u32 2147483647, %v5172
        %v5271 = vand.u32 2147483647, %v5173
        %v5272 = vand.u32 2147483647, %v5174
        %v5273 = vand.u32 2147483647, %v5175
        %v5274 = vand.u32 2147483647, %v5176
        %v5275 = vand.u32 2147483647, %v5177
        %v5276 = vand.u32 2147483647, %v5178
        %v5277 = vand.u32 2147483647, %v5179
        %v5278 = vand.u32 2147483647, %v5180
        %v5279 = vand.u32 2147483647, %v5181
        %v5280 = vand.u32 2147483647, %v5182
        %v5281 = vand.u32 2147483647, %v5183
        %v5282 = vand.u32 2147483647, %v5184
        %v5283 = vand.u32 2147483647, %v5185
        %v5284 = vand.u32 2147483647, %v5186
        %v5285 = vand.u32 2147483647, %v5187
        %v5286 = vand.u32 2147483647, %v5188
        %v5287 = vand.u32 2147483647, %v5189
        %v5288 = vand.u32 2147483647, %v5190
        %v5289 = vand.u32 2147483647, %v5191
        %v5290 = vand.u32 2147483647, %v5192
        %v5291 = vand.u32 2147483647, %v5193
        %v5292 = vand.u32 2147483647, %v5194
        %v5293 = vand.u32 2147483647, %v5195
        %v5294 = vand.u32 2147483647, %v5196
        %v5295 = vand.u32 2147483647, %v5197
        %v5296 = vand.u32 2147483647, %v5198
        %v5297 = vand.u32 2147483647, %v5199
        %v5298 = vand.u32 2147483647, %v5200
        %v5299 = vand.u32 2147483647, %v5201
        %v5300 = vand.u32 2147483647, %v5202
        %v5301 = vand.u32 2147483647, %v5203
        %v5302 = vand.u32 2147483647, %v5204
        %v5303 = vand.u32 2147483647, %v5205
        %v5304 = vand.u32 2147483647, %v5206
        %v5305 = vand.u32 2147483647, %v5207
        %v5306 = vand.u32 2147483647, %v5208
        %v5307 = vand.u32 2147483647, %v5209
        %v5308 = vand.u32 2147483647, %v5210
        %v5309 = vand.u32 2147483647, %v5211
        %v5310 = vand.u32 2147483647, %v5212
        %v5311 = vand.u32 2147483647, %v5213
        %v5312 = vand.u32 2147483647, %v5214
        %v5313 = vand.u32 2147483647, %v5215
        %v5314 = vand.u32 2147483647, %v5216
        %v5315 = vand.u32 2147483647, %v5217
        %v5316 = vand.u32 2147483647, %v5218
        %v5317 = vand.u32 2147483647, %v5219
        %v5318 = vand.u32 2147483647, %v5220
        %v5319 = vand.u32 2147483647, %v5221
        %v5320 = vand.u32 2147483647, %v5222
        %v5321 = vand.u32 2147483647, %v5223
        %v5322 = vand.u32 2147483647, %v5224
        %v5323 = vand.u32 2147483647, %v5225
        %v5324 = vand.u32 2147483647, %v5226
        %v5325 = vand.u32 2147483647, %v5227
        %v5326 = vand.u32 2147483647, %v5228
        %v5327 = vand.u32 2147483647, %v5229
        %v5328 = vand.u32 2147483647, %v5230
        %v5329 = vand.u32 2147483647, %v5231
        %v5330 = vsub.f32 1.0, %v5232
        %v5331 = vsub.f32 1.0, %v5233
        %v5332 = vsub.f32 1.0, %v5234
        %v5333 = vsub.f32 1.0, %v5235
        %v5334 = vsub.f32 1.0, %v5236
        %v5335 = vsub.f32 1.0, %v5237
        %v5336 = vsub.f32 1.0, %v5238
        %v5337 = vsub.f32 1.0, %v5239
        %v5338 = vsub.f32 1.0, %v5240
        %v5339 = vsub.f32 1.0, %v5241
        %v5340 = vsub.f32 1.0, %v5242
        %v5341 = vsub.f32 1.0, %v5243
        %v5342 = vsub.f32 1.0, %v5244
        %v5343 = vsub.f32 1.0, %v5245
        %v5344 = vsub.f32 1.0, %v5246
        %v5345 = vsub.f32 1.0, %v5247
        %v5346 = vsub.f32 1.0, %v5248
        %v5347 = vsub.f32 1.0, %v5249
        %v5348 = vsub.f32 1.0, %v5250
        %v5349 = vsub.f32 1.0, %v5251
        %v5350 = vsub.f32 1.0, %v5252
        %v5351 = vsub.f32 1.0, %v5253
        %v5352 = vsub.f32 1.0, %v5254
        %v5353 = vsub.f32 1.0, %v5255
        %v5354 = vsub.f32 1.0, %v5256
        %v5355 = vsub.f32 1.0, %v5257
        %v5356 = vsub.f32 1.0, %v5258
        %v5357 = vsub.f32 1.0, %v5259
        %v5358 = vsub.f32 1.0, %v5260
        %v5359 = vsub.f32 1.0, %v5261
        %v5360 = vsub.f32 1.0, %v5262
        %v5361 = vsub.f32 1.0, %v5263
        %v5362 = vsub.f32 1.0, %v5264
        %v5363 = vsub.f32 1.0, %v5265
        %v5364 = vsub.f32 1.0, %v5266
        %v5365 = vsub.f32 1.0, %v5267
        %v5366 = vsub.f32 1.0, %v5268
        %v5367 = vsub.f32 1.0, %v5269
        %v5368 = vsub.f32 1.0, %v5270
        %v5369 = vsub.f32 1.0, %v5271
        %v5370 = vsub.f32 1.0, %v5272
        %v5371 = vsub.f32 1.0, %v5273
        %v5372 = vsub.f32 1.0, %v5274
        %v5373 = vsub.f32 1.0, %v5275
        %v5374 = vsub.f32 1.0, %v5276
        %v5375 = vsub.f32 1.0, %v5277
        %v5376 = vsub.f32 1.0, %v5278
        %v5377 = vsub.f32 1.0, %v5279
        %v5378 = vsub.f32 1.0, %v5280
        %v5379 = vsub.f32 1.0, %v5281
        %v5380 = vsub.f32 1.0, %v5282
        %v5381 = vsub.f32 1.0, %v5283
        %v5382 = vsub.f32 1.0, %v5284
        %v5383 = vsub.f32 1.0, %v5285
        %v5384 = vsub.f32 1.0, %v5286
        %v5385 = vsub.f32 1.0, %v5287
        %v5386 = vsub.f32 1.0, %v5288
        %v5387 = vsub.f32 1.0, %v5289
        %v5388 = vsub.f32 1.0, %v5290
        %v5389 = vsub.f32 1.0, %v5291
        %v5390 = vsub.f32 1.0, %v5292
        %v5391 = vsub.f32 1.0, %v5293
        %v5392 = vsub.f32 1.0, %v5294
        %v5393 = vsub.f32 1.0, %v5295
        %v5394 = vsub.f32 1.0, %v5296
        %v5395 = vsub.f32 1.0, %v5297
        %v5396 = vsub.f32 1.0, %v5298
        %v5397 = vsub.f32 1.0, %v5299
        %v5398 = vsub.f32 1.0, %v5300
        %v5399 = vsub.f32 1.0, %v5301
        %v5400 = vsub.f32 1.0, %v5302
        %v5401 = vsub.f32 1.0, %v5303
        %v5402 = vsub.f32 1.0, %v5304
        %v5403 = vsub.f32 1.0, %v5305
        %v5404 = vsub.f32 1.0, %v5306
        %v5405 = vsub.f32 1.0, %v5307
        %v5406 = vsub.f32 1.0, %v5308
        %v5407 = vsub.f32 1.0, %v5309
        %v5408 = vsub.f32 1.0, %v5310
        %v5409 = vsub.f32 1.0, %v5311
        %v5410 = vsub.f32 1.0, %v5312
        %v5411 = vsub.f32 1.0, %v5313
        %v5412 = vsub.f32 1.0, %v5314
        %v5413 = vsub.f32 1.0, %v5315
        %v5414 = vsub.f32 1.0, %v5316
        %v5415 = vsub.f32 1.0, %v5317
        %v5416 = vsub.f32 1.0, %v5318
        %v5417 = vsub.f32 1.0, %v5319
        %v5418 = vsub.f32 1.0, %v5320
        %v5419 = vsub.f32 1.0, %v5321
        %v5420 = vsub.f32 1.0, %v5322
        %v5421 = vsub.f32 1.0, %v5323
        %v5422 = vsub.f32 1.0, %v5324
        %v5423 = vsub.f32 1.0, %v5325
        %v5424 = vsub.f32 1.0, %v5326
        %v5425 = vsub.f32 1.0, %v5327
        %v5426 = vsub.f32 1.0, %v5328
        %v5427 = vsub.f32 1.0, %v5329
        %v5428 = vmax.f32 %v5330, 0.0
        %v5429 = vmax.f32 %v5331, 0.0
        %v5430 = vmax.f32 %v5332, 0.0
        %v5431 = vmax.f32 %v5333, 0.0
        %v5432 = vmax.f32 %v5334, 0.0
        %v5433 = vmax.f32 %v5335, 0.0
        %v5434 = vmax.f32 %v5336, 0.0
        %v5435 = vmax.f32 %v5337, 0.0
        %v5436 = vmax.f32 %v5338, 0.0
        %v5437 = vmax.f32 %v5339, 0.0
        %v5438 = vmax.f32 %v5340, 0.0
        %v5439 = vmax.f32 %v5341, 0.0
        %v5440 = vmax.f32 %v5342, 0.0
        %v5441 = vmax.f32 %v5343, 0.0
        %v5442 = vmax.f32 %v5344, 0.0
        %v5443 = vmax.f32 %v5345, 0.0
        %v5444 = vmax.f32 %v5346, 0.0
        %v5445 = vmax.f32 %v5347, 0.0
        %v5446 = vmax.f32 %v5348, 0.0
        %v5447 = vmax.f32 %v5349, 0.0
        %v5448 = vmax.f32 %v5350, 0.0
        %v5449 = vmax.f32 %v5351, 0.0
        %v5450 = vmax.f32 %v5352, 0.0
        %v5451 = vmax.f32 %v5353, 0.0
        %v5452 = vmax.f32 %v5354, 0.0
        %v5453 = vmax.f32 %v5355, 0.0
        %v5454 = vmax.f32 %v5356, 0.0
        %v5455 = vmax.f32 %v5357, 0.0
        %v5456 = vmax.f32 %v5358, 0.0
        %v5457 = vmax.f32 %v5359, 0.0
        %v5458 = vmax.f32 %v5360, 0.0
        %v5459 = vmax.f32 %v5361, 0.0
        %v5460 = vmax.f32 %v5362, 0.0
        %v5461 = vmax.f32 %v5363, 0.0
        %v5462 = vmax.f32 %v5364, 0.0
        %v5463 = vmax.f32 %v5365, 0.0
        %v5464 = vmax.f32 %v5366, 0.0
        %v5465 = vmax.f32 %v5367, 0.0
        %v5466 = vmax.f32 %v5368, 0.0
        %v5467 = vmax.f32 %v5369, 0.0
        %v5468 = vmax.f32 %v5370, 0.0
        %v5469 = vmax.f32 %v5371, 0.0
        %v5470 = vmax.f32 %v5372, 0.0
        %v5471 = vmax.f32 %v5373, 0.0
        %v5472 = vmax.f32 %v5374, 0.0
        %v5473 = vmax.f32 %v5375, 0.0
        %v5474 = vmax.f32 %v5376, 0.0
        %v5475 = vmax.f32 %v5377, 0.0
        %v5476 = vmax.f32 %v5378, 0.0
        %v5477 = vmax.f32 %v5379, 0.0
        %v5478 = vmax.f32 %v5380, 0.0
        %v5479 = vmax.f32 %v5381, 0.0
        %v5480 = vmax.f32 %v5382, 0.0
        %v5481 = vmax.f32 %v5383, 0.0
        %v5482 = vmax.f32 %v5384, 0.0
        %v5483 = vmax.f32 %v5385, 0.0
        %v5484 = vmax.f32 %v5386, 0.0
        %v5485 = vmax.f32 %v5387, 0.0
        %v5486 = vmax.f32 %v5388, 0.0
        %v5487 = vmax.f32 %v5389, 0.0
        %v5488 = vmax.f32 %v5390, 0.0
        %v5489 = vmax.f32 %v5391, 0.0
        %v5490 = vmax.f32 %v5392, 0.0
        %v5491 = vmax.f32 %v5393, 0.0
        %v5492 = vmax.f32 %v5394, 0.0
        %v5493 = vmax.f32 %v5395, 0.0
        %v5494 = vmax.f32 %v5396, 0.0
        %v5495 = vmax.f32 %v5397, 0.0
        %v5496 = vmax.f32 %v5398, 0.0
        %v5497 = vmax.f32 %v5399, 0.0
        %v5498 = vmax.f32 %v5400, 0.0
        %v5499 = vmax.f32 %v5401, 0.0
        %v5500 = vmax.f32 %v5402, 0.0
        %v5501 = vmax.f32 %v5403, 0.0
        %v5502 = vmax.f32 %v5404, 0.0
        %v5503 = vmax.f32 %v5405, 0.0
        %v5504 = vmax.f32 %v5406, 0.0
        %v5505 = vmax.f32 %v5407, 0.0
        %v5506 = vmax.f32 %v5408, 0.0
        %v5507 = vmax.f32 %v5409, 0.0
        %v5508 = vmax.f32 %v5410, 0.0
        %v5509 = vmax.f32 %v5411, 0.0
        %v5510 = vmax.f32 %v5412, 0.0
        %v5511 = vmax.f32 %v5413, 0.0
        %v5512 = vmax.f32 %v5414, 0.0
        %v5513 = vmax.f32 %v5415, 0.0
        %v5514 = vmax.f32 %v5416, 0.0
        %v5515 = vmax.f32 %v5417, 0.0
        %v5516 = vmax.f32 %v5418, 0.0
        %v5517 = vmax.f32 %v5419, 0.0
        %v5518 = vmax.f32 %v5420, 0.0
        %v5519 = vmax.f32 %v5421, 0.0
        %v5520 = vmax.f32 %v5422, 0.0
        %v5521 = vmax.f32 %v5423, 0.0
        %v5522 = vmax.f32 %v5424, 0.0
        %v5523 = vmax.f32 %v5425, 0.0
        %v5524 = vmax.f32 %v5426, 0.0
        %v5525 = vmax.f32 %v5427, 0.0
        %v5526 = vmul.f32 %v4644, %v5428
        %v5527 = vmul.f32 %v4645, %v5429
        %v5528 = vmul.f32 %v4646, %v5430
        %v5529 = vmul.f32 %v4647, %v5431
        %v5530 = vmul.f32 %v4648, %v5432
        %v5531 = vmul.f32 %v4649, %v5433
        %v5532 = vmul.f32 %v4650, %v5434
        %v5533 = vmul.f32 %v4651, %v5435
        %v5534 = vmul.f32 %v4652, %v5436
        %v5535 = vmul.f32 %v4653, %v5437
        %v5536 = vmul.f32 %v4654, %v5438
        %v5537 = vmul.f32 %v4655, %v5439
        %v5538 = vmul.f32 %v4656, %v5440
        %v5539 = vmul.f32 %v4657, %v5441
        %v5540 = vmul.f32 %v4658, %v5442
        %v5541 = vmul.f32 %v4659, %v5443
        %v5542 = vmul.f32 %v4660, %v5444
        %v5543 = vmul.f32 %v4661, %v5445
        %v5544 = vmul.f32 %v4662, %v5446
        %v5545 = vmul.f32 %v4663, %v5447
        %v5546 = vmul.f32 %v4664, %v5448
        %v5547 = vmul.f32 %v4665, %v5449
        %v5548 = vmul.f32 %v4666, %v5450
        %v5549 = vmul.f32 %v4667, %v5451
        %v5550 = vmul.f32 %v4668, %v5452
        %v5551 = vmul.f32 %v4669, %v5453
        %v5552 = vmul.f32 %v4670, %v5454
        %v5553 = vmul.f32 %v4671, %v5455
        %v5554 = vmul.f32 %v4672, %v5456
        %v5555 = vmul.f32 %v4673, %v5457
        %v5556 = vmul.f32 %v4674, %v5458
        %v5557 = vmul.f32 %v4675, %v5459
        %v5558 = vmul.f32 %v4676, %v5460
        %v5559 = vmul.f32 %v4677, %v5461
        %v5560 = vmul.f32 %v4678, %v5462
        %v5561 = vmul.f32 %v4679, %v5463
        %v5562 = vmul.f32 %v4680, %v5464
        %v5563 = vmul.f32 %v4681, %v5465
        %v5564 = vmul.f32 %v4682, %v5466
        %v5565 = vmul.f32 %v4683, %v5467
        %v5566 = vmul.f32 %v4684, %v5468
        %v5567 = vmul.f32 %v4685, %v5469
        %v5568 = vmul.f32 %v4686, %v5470
        %v5569 = vmul.f32 %v4687, %v5471
        %v5570 = vmul.f32 %v4688, %v5472
        %v5571 = vmul.f32 %v4689, %v5473
        %v5572 = vmul.f32 %v4690, %v5474
        %v5573 = vmul.f32 %v4691, %v5475
        %v5574 = vmul.f32 %v4692, %v5476
        %v5575 = vmul.f32 %v4693, %v5477
        %v5576 = vmul.f32 %v4694, %v5478
        %v5577 = vmul.f32 %v4695, %v5479
        %v5578 = vmul.f32 %v4696, %v5480
        %v5579 = vmul.f32 %v4697, %v5481
        %v5580 = vmul.f32 %v4698, %v5482
        %v5581 = vmul.f32 %v4699, %v5483
        %v5582 = vmul.f32 %v4700, %v5484
        %v5583 = vmul.f32 %v4701, %v5485
        %v5584 = vmul.f32 %v4702, %v5486
        %v5585 = vmul.f32 %v4703, %v5487
        %v5586 = vmul.f32 %v4704, %v5488
        %v5587 = vmul.f32 %v4705, %v5489
        %v5588 = vmul.f32 %v4706, %v5490
        %v5589 = vmul.f32 %v4707, %v5491
        %v5590 = vmul.f32 %v4708, %v5492
        %v5591 = vmul.f32 %v4709, %v5493
        %v5592 = vmul.f32 %v4710, %v5494
        %v5593 = vmul.f32 %v4711, %v5495
        %v5594 = vmul.f32 %v4712, %v5496
        %v5595 = vmul.f32 %v4713, %v5497
        %v5596 = vmul.f32 %v4714, %v5498
        %v5597 = vmul.f32 %v4715, %v5499
        %v5598 = vmul.f32 %v4716, %v5500
        %v5599 = vmul.f32 %v4717, %v5501
        %v5600 = vmul.f32 %v4718, %v5502
        %v5601 = vmul.f32 %v4719, %v5503
        %v5602 = vmul.f32 %v4720, %v5504
        %v5603 = vmul.f32 %v4721, %v5505
        %v5604 = vmul.f32 %v4722, %v5506
        %v5605 = vmul.f32 %v4723, %v5507
        %v5606 = vmul.f32 %v4724, %v5508
        %v5607 = vmul.f32 %v4725, %v5509
        %v5608 = vmul.f32 %v4726, %v5510
        %v5609 = vmul.f32 %v4727, %v5511
        %v5610 = vmul.f32 %v4728, %v5512
        %v5611 = vmul.f32 %v4729, %v5513
        %v5612 = vmul.f32 %v4730, %v5514
        %v5613 = vmul.f32 %v4731, %v5515
        %v5614 = vmul.f32 %v4732, %v5516
        %v5615 = vmul.f32 %v4733, %v5517
        %v5616 = vmul.f32 %v4734, %v5518
        %v5617 = vmul.f32 %v4735, %v5519
        %v5618 = vmul.f32 %v4736, %v5520
        %v5619 = vmul.f32 %v4737, %v5521
        %v5620 = vmul.f32 %v4738, %v5522
        %v5621 = vmul.f32 %v4739, %v5523
        %v5622 = vmul.f32 %v4740, %v5524
        %v5623 = vmul.f32 %v4741, %v5525
        %v5624 = vadd.f32 %v3860, %v5526
        %v5625 = vadd.f32 %v3861, %v5527
        %v5626 = vadd.f32 %v3862, %v5528
        %v5627 = vadd.f32 %v3863, %v5529
        %v5628 = vadd.f32 %v3864, %v5530
        %v5629 = vadd.f32 %v3865, %v5531
        %v5630 = vadd.f32 %v3866, %v5532
        %v5631 = vadd.f32 %v3867, %v5533
        %v5632 = vadd.f32 %v3868, %v5534
        %v5633 = vadd.f32 %v3869, %v5535
        %v5634 = vadd.f32 %v3870, %v5536
        %v5635 = vadd.f32 %v3871, %v5537
        %v5636 = vadd.f32 %v3872, %v5538
        %v5637 = vadd.f32 %v3873, %v5539
        %v5638 = vadd.f32 %v3874, %v5540
        %v5639 = vadd.f32 %v3875, %v5541
        %v5640 = vadd.f32 %v3876, %v5542
        %v5641 = vadd.f32 %v3877, %v5543
        %v5642 = vadd.f32 %v3878, %v5544
        %v5643 = vadd.f32 %v3879, %v5545
        %v5644 = vadd.f32 %v3880, %v5546
        %v5645 = vadd.f32 %v3881, %v5547
        %v5646 = vadd.f32 %v3882, %v5548
        %v5647 = vadd.f32 %v3883, %v5549
        %v5648 = vadd.f32 %v3884, %v5550
        %v5649 = vadd.f32 %v3885, %v5551
        %v5650 = vadd.f32 %v3886, %v5552
        %v5651 = vadd.f32 %v3887, %v5553
        %v5652 = vadd.f32 %v3888, %v5554
        %v5653 = vadd.f32 %v3889, %v5555
        %v5654 = vadd.f32 %v3890, %v5556
        %v5655 = vadd.f32 %v3891, %v5557
        %v5656 = vadd.f32 %v3892, %v5558
        %v5657 = vadd.f32 %v3893, %v5559
        %v5658 = vadd.f32 %v3894, %v5560
        %v5659 = vadd.f32 %v3895, %v5561
        %v5660 = vadd.f32 %v3896, %v5562
        %v5661 = vadd.f32 %v3897, %v5563
        %v5662 = vadd.f32 %v3898, %v5564
        %v5663 = vadd.f32 %v3899, %v5565
        %v5664 = vadd.f32 %v3900, %v5566
        %v5665 = vadd.f32 %v3901, %v5567
        %v5666 = vadd.f32 %v3902, %v5568
        %v5667 = vadd.f32 %v3903, %v5569
        %v5668 = vadd.f32 %v3904, %v5570
        %v5669 = vadd.f32 %v3905, %v5571
        %v5670 = vadd.f32 %v3906, %v5572
        %v5671 = vadd.f32 %v3907, %v5573
        %v5672 = vadd.f32 %v3908, %v5574
        %v5673 = vadd.f32 %v3909, %v5575
        %v5674 = vadd.f32 %v3910, %v5576
        %v5675 = vadd.f32 %v3911, %v5577
        %v5676 = vadd.f32 %v3912, %v5578
        %v5677 = vadd.f32 %v3913, %v5579
        %v5678 = vadd.f32 %v3914, %v5580
        %v5679 = vadd.f32 %v3915, %v5581
        %v5680 = vadd.f32 %v3916, %v5582
        %v5681 = vadd.f32 %v3917, %v5583
        %v5682 = vadd.f32 %v3918, %v5584
        %v5683 = vadd.f32 %v3919, %v5585
        %v5684 = vadd.f32 %v3920, %v5586
        %v5685 = vadd.f32 %v3921, %v5587
        %v5686 = vadd.f32 %v3922, %v5588
        %v5687 = vadd.f32 %v3923, %v5589
        %v5688 = vadd.f32 %v3924, %v5590
        %v5689 = vadd.f32 %v3925, %v5591
        %v5690 = vadd.f32 %v3926, %v5592
        %v5691 = vadd.f32 %v3927, %v5593
        %v5692 = vadd.f32 %v3928, %v5594
        %v5693 = vadd.f32 %v3929, %v5595
        %v5694 = vadd.f32 %v3930, %v5596
        %v5695 = vadd.f32 %v3931, %v5597
        %v5696 = vadd.f32 %v3932, %v5598
        %v5697 = vadd.f32 %v3933, %v5599
        %v5698 = vadd.f32 %v3934, %v5600
        %v5699 = vadd.f32 %v3935, %v5601
        %v5700 = vadd.f32 %v3936, %v5602
        %v5701 = vadd.f32 %v3937, %v5603
        %v5702 = vadd.f32 %v3938, %v5604
        %v5703 = vadd.f32 %v3939, %v5605
        %v5704 = vadd.f32 %v3940, %v5606
        %v5705 = vadd.f32 %v3941, %v5607
        %v5706 = vadd.f32 %v3942, %v5608
        %v5707 = vadd.f32 %v3943, %v5609
        %v5708 = vadd.f32 %v3944, %v5610
        %v5709 = vadd.f32 %v3945, %v5611
        %v5710 = vadd.f32 %v3946, %v5612
        %v5711 = vadd.f32 %v3947, %v5613
        %v5712 = vadd.f32 %v3948, %v5614
        %v5713 = vadd.f32 %v3949, %v5615
        %v5714 = vadd.f32 %v3950, %v5616
        %v5715 = vadd.f32 %v3951, %v5617
        %v5716 = vadd.f32 %v3952, %v5618
        %v5717 = vadd.f32 %v3953, %v5619
        %v5718 = vadd.f32 %v3954, %v5620
        %v5719 = vadd.f32 %v3955, %v5621
        %v5720 = vadd.f32 %v3956, %v5622
        %v5721 = vadd.f32 %v3957, %v5623
        %5722 = vset.pattern.permute.xlu0 3
        %5723 = vperm.xlu0 %5722, %v324
        %v5724 = vpop.permute.xlu0 %5723
        %5726 = vset.pattern.permute.xlu0 3
        %5727 = vperm.xlu0 %5726, %v325
        %v5728 = vpop.permute.xlu0 %5727
        %5730 = vset.pattern.permute.xlu0 3
        %5731 = vperm.xlu0 %5730, %v326
        %v5732 = vpop.permute.xlu0 %5731
        %5734 = vset.pattern.permute.xlu0 3
        %5735 = vperm.xlu0 %5734, %v327
        %v5736 = vpop.permute.xlu0 %5735
        %5738 = vset.pattern.permute.xlu0 3
        %5739 = vperm.xlu0 %5738, %v328
        %v5740 = vpop.permute.xlu0 %5739
        %5742 = vset.pattern.permute.xlu0 3
        %5743 = vperm.xlu0 %5742, %v329
        %v5744 = vpop.permute.xlu0 %5743
        %5746 = vset.pattern.permute.xlu0 3
        %5747 = vperm.xlu0 %5746, %v330
        %v5748 = vpop.permute.xlu0 %5747
        %5750 = vset.pattern.permute.xlu0 3
        %5751 = vperm.xlu0 %5750, %v331
        %v5752 = vpop.permute.xlu0 %5751
        %5754 = vset.pattern.permute.xlu0 3
        %5755 = vperm.xlu0 %5754, %v332
        %v5756 = vpop.permute.xlu0 %5755
        %5758 = vset.pattern.permute.xlu0 3
        %5759 = vperm.xlu0 %5758, %v333
        %v5760 = vpop.permute.xlu0 %5759
        %5762 = vset.pattern.permute.xlu0 3
        %5763 = vperm.xlu0 %5762, %v334
        %v5764 = vpop.permute.xlu0 %5763
        %5766 = vset.pattern.permute.xlu0 3
        %5767 = vperm.xlu0 %5766, %v335
        %v5768 = vpop.permute.xlu0 %5767
        %5770 = vset.pattern.permute.xlu0 3
        %5771 = vperm.xlu0 %5770, %v336
        %v5772 = vpop.permute.xlu0 %5771
        %5774 = vset.pattern.permute.xlu0 3
        %5775 = vperm.xlu0 %5774, %v337
        %v5776 = vpop.permute.xlu0 %5775
        %5778 = vset.pattern.permute.xlu0 3
        %5779 = vperm.xlu0 %5778, %v338
        %v5780 = vpop.permute.xlu0 %5779
        %5782 = vset.pattern.permute.xlu0 3
        %5783 = vperm.xlu0 %5782, %v339
        %v5784 = vpop.permute.xlu0 %5783
        %5786 = vset.pattern.permute.xlu0 3
        %5787 = vperm.xlu0 %5786, %v340
        %v5788 = vpop.permute.xlu0 %5787
        %5790 = vset.pattern.permute.xlu0 3
        %5791 = vperm.xlu0 %5790, %v341
        %v5792 = vpop.permute.xlu0 %5791
        %5794 = vset.pattern.permute.xlu0 3
        %5795 = vperm.xlu0 %5794, %v342
        %v5796 = vpop.permute.xlu0 %5795
        %5798 = vset.pattern.permute.xlu0 3
        %5799 = vperm.xlu0 %5798, %v343
        %v5800 = vpop.permute.xlu0 %5799
        %5802 = vset.pattern.permute.xlu0 3
        %5803 = vperm.xlu0 %5802, %v344
        %v5804 = vpop.permute.xlu0 %5803
        %5806 = vset.pattern.permute.xlu0 3
        %5807 = vperm.xlu0 %5806, %v345
        %v5808 = vpop.permute.xlu0 %5807
        %5810 = vset.pattern.permute.xlu0 3
        %5811 = vperm.xlu0 %5810, %v346
        %v5812 = vpop.permute.xlu0 %5811
        %5814 = vset.pattern.permute.xlu0 3
        %5815 = vperm.xlu0 %5814, %v347
        %v5816 = vpop.permute.xlu0 %5815
        %5818 = vset.pattern.permute.xlu0 3
        %5819 = vperm.xlu0 %5818, %v348
        %v5820 = vpop.permute.xlu0 %5819
        %5822 = vset.pattern.permute.xlu0 3
        %5823 = vperm.xlu0 %5822, %v349
        %v5824 = vpop.permute.xlu0 %5823
        %5826 = vset.pattern.permute.xlu0 3
        %5827 = vperm.xlu0 %5826, %v350
        %v5828 = vpop.permute.xlu0 %5827
        %5830 = vset.pattern.permute.xlu0 3
        %5831 = vperm.xlu0 %5830, %v351
        %v5832 = vpop.permute.xlu0 %5831
        %5834 = vset.pattern.permute.xlu0 3
        %5835 = vperm.xlu0 %5834, %v352
        %v5836 = vpop.permute.xlu0 %5835
        %5838 = vset.pattern.permute.xlu0 3
        %5839 = vperm.xlu0 %5838, %v353
        %v5840 = vpop.permute.xlu0 %5839
        %5842 = vset.pattern.permute.xlu0 3
        %5843 = vperm.xlu0 %5842, %v354
        %v5844 = vpop.permute.xlu0 %5843
        %5846 = vset.pattern.permute.xlu0 3
        %5847 = vperm.xlu0 %5846, %v355
        %v5848 = vpop.permute.xlu0 %5847
        %5850 = vset.pattern.permute.xlu0 3
        %5851 = vperm.xlu0 %5850, %v356
        %v5852 = vpop.permute.xlu0 %5851
        %5854 = vset.pattern.permute.xlu0 3
        %5855 = vperm.xlu0 %5854, %v357
        %v5856 = vpop.permute.xlu0 %5855
        %5858 = vset.pattern.permute.xlu0 3
        %5859 = vperm.xlu0 %5858, %v358
        %v5860 = vpop.permute.xlu0 %5859
        %5862 = vset.pattern.permute.xlu0 3
        %5863 = vperm.xlu0 %5862, %v359
        %v5864 = vpop.permute.xlu0 %5863
        %5866 = vset.pattern.permute.xlu0 3
        %5867 = vperm.xlu0 %5866, %v360
        %v5868 = vpop.permute.xlu0 %5867
        %5870 = vset.pattern.permute.xlu0 3
        %5871 = vperm.xlu0 %5870, %v361
        %v5872 = vpop.permute.xlu0 %5871
        %5874 = vset.pattern.permute.xlu0 3
        %5875 = vperm.xlu0 %5874, %v362
        %v5876 = vpop.permute.xlu0 %5875
        %5878 = vset.pattern.permute.xlu0 3
        %5879 = vperm.xlu0 %5878, %v363
        %v5880 = vpop.permute.xlu0 %5879
        %5882 = vset.pattern.permute.xlu0 3
        %5883 = vperm.xlu0 %5882, %v364
        %v5884 = vpop.permute.xlu0 %5883
        %5886 = vset.pattern.permute.xlu0 3
        %5887 = vperm.xlu0 %5886, %v365
        %v5888 = vpop.permute.xlu0 %5887
        %5890 = vset.pattern.permute.xlu0 3
        %5891 = vperm.xlu0 %5890, %v366
        %v5892 = vpop.permute.xlu0 %5891
        %5894 = vset.pattern.permute.xlu0 3
        %5895 = vperm.xlu0 %5894, %v367
        %v5896 = vpop.permute.xlu0 %5895
        %5898 = vset.pattern.permute.xlu0 3
        %5899 = vperm.xlu0 %5898, %v368
        %v5900 = vpop.permute.xlu0 %5899
        %5902 = vset.pattern.permute.xlu0 3
        %5903 = vperm.xlu0 %5902, %v369
        %v5904 = vpop.permute.xlu0 %5903
        %5906 = vset.pattern.permute.xlu0 3
        %5907 = vperm.xlu0 %5906, %v370
        %v5908 = vpop.permute.xlu0 %5907
        %5910 = vset.pattern.permute.xlu0 3
        %5911 = vperm.xlu0 %5910, %v371
        %v5912 = vpop.permute.xlu0 %5911
        %5914 = vset.pattern.permute.xlu0 3
        %5915 = vperm.xlu0 %5914, %v372
        %v5916 = vpop.permute.xlu0 %5915
        %5918 = vset.pattern.permute.xlu0 3
        %5919 = vperm.xlu0 %5918, %v373
        %v5920 = vpop.permute.xlu0 %5919
        %5922 = vset.pattern.permute.xlu0 3
        %5923 = vperm.xlu0 %5922, %v374
        %v5924 = vpop.permute.xlu0 %5923
        %5926 = vset.pattern.permute.xlu0 3
        %5927 = vperm.xlu0 %5926, %v375
        %v5928 = vpop.permute.xlu0 %5927
        %5930 = vset.pattern.permute.xlu0 3
        %5931 = vperm.xlu0 %5930, %v376
        %v5932 = vpop.permute.xlu0 %5931
        %5934 = vset.pattern.permute.xlu0 3
        %5935 = vperm.xlu0 %5934, %v377
        %v5936 = vpop.permute.xlu0 %5935
        %5938 = vset.pattern.permute.xlu0 3
        %5939 = vperm.xlu0 %5938, %v378
        %v5940 = vpop.permute.xlu0 %5939
        %5942 = vset.pattern.permute.xlu0 3
        %5943 = vperm.xlu0 %5942, %v379
        %v5944 = vpop.permute.xlu0 %5943
        %5946 = vset.pattern.permute.xlu0 3
        %5947 = vperm.xlu0 %5946, %v380
        %v5948 = vpop.permute.xlu0 %5947
        %5950 = vset.pattern.permute.xlu0 3
        %5951 = vperm.xlu0 %5950, %v381
        %v5952 = vpop.permute.xlu0 %5951
        %5954 = vset.pattern.permute.xlu0 3
        %5955 = vperm.xlu0 %5954, %v382
        %v5956 = vpop.permute.xlu0 %5955
        %5958 = vset.pattern.permute.xlu0 3
        %5959 = vperm.xlu0 %5958, %v383
        %v5960 = vpop.permute.xlu0 %5959
        %5962 = vset.pattern.permute.xlu0 3
        %5963 = vperm.xlu0 %5962, %v384
        %v5964 = vpop.permute.xlu0 %5963
        %5966 = vset.pattern.permute.xlu0 3
        %5967 = vperm.xlu0 %5966, %v385
        %v5968 = vpop.permute.xlu0 %5967
        %5970 = vset.pattern.permute.xlu0 3
        %5971 = vperm.xlu0 %5970, %v386
        %v5972 = vpop.permute.xlu0 %5971
        %5974 = vset.pattern.permute.xlu0 3
        %5975 = vperm.xlu0 %5974, %v387
        %v5976 = vpop.permute.xlu0 %5975
        %5978 = vset.pattern.permute.xlu0 3
        %5979 = vperm.xlu0 %5978, %v388
        %v5980 = vpop.permute.xlu0 %5979
        %5982 = vset.pattern.permute.xlu0 3
        %5983 = vperm.xlu0 %5982, %v389
        %v5984 = vpop.permute.xlu0 %5983
        %5986 = vset.pattern.permute.xlu0 3
        %5987 = vperm.xlu0 %5986, %v390
        %v5988 = vpop.permute.xlu0 %5987
        %5990 = vset.pattern.permute.xlu0 3
        %5991 = vperm.xlu0 %5990, %v391
        %v5992 = vpop.permute.xlu0 %5991
        %5994 = vset.pattern.permute.xlu0 3
        %5995 = vperm.xlu0 %5994, %v392
        %v5996 = vpop.permute.xlu0 %5995
        %5998 = vset.pattern.permute.xlu0 3
        %5999 = vperm.xlu0 %5998, %v393
        %v6000 = vpop.permute.xlu0 %5999
        %6002 = vset.pattern.permute.xlu0 3
        %6003 = vperm.xlu0 %6002, %v394
        %v6004 = vpop.permute.xlu0 %6003
        %6006 = vset.pattern.permute.xlu0 3
        %6007 = vperm.xlu0 %6006, %v395
        %v6008 = vpop.permute.xlu0 %6007
        %6010 = vset.pattern.permute.xlu0 3
        %6011 = vperm.xlu0 %6010, %v396
        %v6012 = vpop.permute.xlu0 %6011
        %6014 = vset.pattern.permute.xlu0 3
        %6015 = vperm.xlu0 %6014, %v397
        %v6016 = vpop.permute.xlu0 %6015
        %6018 = vset.pattern.permute.xlu0 3
        %6019 = vperm.xlu0 %6018, %v398
        %v6020 = vpop.permute.xlu0 %6019
        %6022 = vset.pattern.permute.xlu0 3
        %6023 = vperm.xlu0 %6022, %v399
        %v6024 = vpop.permute.xlu0 %6023
        %6026 = vset.pattern.permute.xlu0 3
        %6027 = vperm.xlu0 %6026, %v400
        %v6028 = vpop.permute.xlu0 %6027
        %6030 = vset.pattern.permute.xlu0 3
        %6031 = vperm.xlu0 %6030, %v401
        %v6032 = vpop.permute.xlu0 %6031
        %6034 = vset.pattern.permute.xlu0 3
        %6035 = vperm.xlu0 %6034, %v402
        %v6036 = vpop.permute.xlu0 %6035
        %6038 = vset.pattern.permute.xlu0 3
        %6039 = vperm.xlu0 %6038, %v403
        %v6040 = vpop.permute.xlu0 %6039
        %6042 = vset.pattern.permute.xlu0 3
        %6043 = vperm.xlu0 %6042, %v404
        %v6044 = vpop.permute.xlu0 %6043
        %6046 = vset.pattern.permute.xlu0 3
        %6047 = vperm.xlu0 %6046, %v405
        %v6048 = vpop.permute.xlu0 %6047
        %6050 = vset.pattern.permute.xlu0 3
        %6051 = vperm.xlu0 %6050, %v406
        %v6052 = vpop.permute.xlu0 %6051
        %6054 = vset.pattern.permute.xlu0 3
        %6055 = vperm.xlu0 %6054, %v407
        %v6056 = vpop.permute.xlu0 %6055
        %6058 = vset.pattern.permute.xlu0 3
        %6059 = vperm.xlu0 %6058, %v408
        %v6060 = vpop.permute.xlu0 %6059
        %6062 = vset.pattern.permute.xlu0 3
        %6063 = vperm.xlu0 %6062, %v409
        %v6064 = vpop.permute.xlu0 %6063
        %6066 = vset.pattern.permute.xlu0 3
        %6067 = vperm.xlu0 %6066, %v410
        %v6068 = vpop.permute.xlu0 %6067
        %6070 = vset.pattern.permute.xlu0 3
        %6071 = vperm.xlu0 %6070, %v411
        %v6072 = vpop.permute.xlu0 %6071
        %6074 = vset.pattern.permute.xlu0 3
        %6075 = vperm.xlu0 %6074, %v412
        %v6076 = vpop.permute.xlu0 %6075
        %6078 = vset.pattern.permute.xlu0 3
        %6079 = vperm.xlu0 %6078, %v413
        %v6080 = vpop.permute.xlu0 %6079
        %6082 = vset.pattern.permute.xlu0 3
        %6083 = vperm.xlu0 %6082, %v414
        %v6084 = vpop.permute.xlu0 %6083
        %6086 = vset.pattern.permute.xlu0 3
        %6087 = vperm.xlu0 %6086, %v415
        %v6088 = vpop.permute.xlu0 %6087
        %6090 = vset.pattern.permute.xlu0 3
        %6091 = vperm.xlu0 %6090, %v416
        %v6092 = vpop.permute.xlu0 %6091
        %6094 = vset.pattern.permute.xlu0 3
        %6095 = vperm.xlu0 %6094, %v417
        %v6096 = vpop.permute.xlu0 %6095
        %6098 = vset.pattern.permute.xlu0 3
        %6099 = vperm.xlu0 %6098, %v418
        %v6100 = vpop.permute.xlu0 %6099
        %6102 = vset.pattern.permute.xlu0 3
        %6103 = vperm.xlu0 %6102, %v419
        %v6104 = vpop.permute.xlu0 %6103
        %6106 = vset.pattern.permute.xlu0 3
        %6107 = vperm.xlu0 %6106, %v420
        %v6108 = vpop.permute.xlu0 %6107
        %6110 = vset.pattern.permute.xlu0 3
        %6111 = vperm.xlu0 %6110, %v421
        %v6112 = vpop.permute.xlu0 %6111
        %v6114 = vsub.f32 %v5724, %v915
        %v6115 = vsub.f32 %v5728, %v915
        %v6116 = vsub.f32 %v5732, %v915
        %v6117 = vsub.f32 %v5736, %v915
        %v6118 = vsub.f32 %v5740, %v915
        %v6119 = vsub.f32 %v5744, %v915
        %v6120 = vsub.f32 %v5748, %v915
        %v6121 = vsub.f32 %v5752, %v915
        %v6122 = vsub.f32 %v5756, %v915
        %v6123 = vsub.f32 %v5760, %v915
        %v6124 = vsub.f32 %v5764, %v915
        %v6125 = vsub.f32 %v5768, %v915
        %v6126 = vsub.f32 %v5772, %v915
        %v6127 = vsub.f32 %v5776, %v915
        %v6128 = vsub.f32 %v5780, %v915
        %v6129 = vsub.f32 %v5784, %v915
        %v6130 = vsub.f32 %v5788, %v915
        %v6131 = vsub.f32 %v5792, %v915
        %v6132 = vsub.f32 %v5796, %v915
        %v6133 = vsub.f32 %v5800, %v915
        %v6134 = vsub.f32 %v5804, %v915
        %v6135 = vsub.f32 %v5808, %v915
        %v6136 = vsub.f32 %v5812, %v915
        %v6137 = vsub.f32 %v5816, %v915
        %v6138 = vsub.f32 %v5820, %v915
        %v6139 = vsub.f32 %v5824, %v915
        %v6140 = vsub.f32 %v5828, %v915
        %v6141 = vsub.f32 %v5832, %v915
        %v6142 = vsub.f32 %v5836, %v915
        %v6143 = vsub.f32 %v5840, %v915
        %v6144 = vsub.f32 %v5844, %v915
        %v6145 = vsub.f32 %v5848, %v915
        %v6146 = vsub.f32 %v5852, %v915
        %v6147 = vsub.f32 %v5856, %v915
        %v6148 = vsub.f32 %v5860, %v915
        %v6149 = vsub.f32 %v5864, %v915
        %v6150 = vsub.f32 %v5868, %v915
        %v6151 = vsub.f32 %v5872, %v915
        %v6152 = vsub.f32 %v5876, %v915
        %v6153 = vsub.f32 %v5880, %v915
        %v6154 = vsub.f32 %v5884, %v915
        %v6155 = vsub.f32 %v5888, %v915
        %v6156 = vsub.f32 %v5892, %v915
        %v6157 = vsub.f32 %v5896, %v915
        %v6158 = vsub.f32 %v5900, %v915
        %v6159 = vsub.f32 %v5904, %v915
        %v6160 = vsub.f32 %v5908, %v915
        %v6161 = vsub.f32 %v5912, %v915
        %v6162 = vsub.f32 %v5916, %v915
        %v6163 = vsub.f32 %v5920, %v915
        %v6164 = vsub.f32 %v5924, %v915
        %v6165 = vsub.f32 %v5928, %v915
        %v6166 = vsub.f32 %v5932, %v915
        %v6167 = vsub.f32 %v5936, %v915
        %v6168 = vsub.f32 %v5940, %v915
        %v6169 = vsub.f32 %v5944, %v915
        %v6170 = vsub.f32 %v5948, %v915
        %v6171 = vsub.f32 %v5952, %v915
        %v6172 = vsub.f32 %v5956, %v915
        %v6173 = vsub.f32 %v5960, %v915
        %v6174 = vsub.f32 %v5964, %v915
        %v6175 = vsub.f32 %v5968, %v915
        %v6176 = vsub.f32 %v5972, %v915
        %v6177 = vsub.f32 %v5976, %v915
        %v6178 = vsub.f32 %v5980, %v915
        %v6179 = vsub.f32 %v5984, %v915
        %v6180 = vsub.f32 %v5988, %v915
        %v6181 = vsub.f32 %v5992, %v915
        %v6182 = vsub.f32 %v5996, %v915
        %v6183 = vsub.f32 %v6000, %v915
        %v6184 = vsub.f32 %v6004, %v915
        %v6185 = vsub.f32 %v6008, %v915
        %v6186 = vsub.f32 %v6012, %v915
        %v6187 = vsub.f32 %v6016, %v915
        %v6188 = vsub.f32 %v6020, %v915
        %v6189 = vsub.f32 %v6024, %v915
        %v6190 = vsub.f32 %v6028, %v915
        %v6191 = vsub.f32 %v6032, %v915
        %v6192 = vsub.f32 %v6036, %v915
        %v6193 = vsub.f32 %v6040, %v915
        %v6194 = vsub.f32 %v6044, %v915
        %v6195 = vsub.f32 %v6048, %v915
        %v6196 = vsub.f32 %v6052, %v915
        %v6197 = vsub.f32 %v6056, %v915
        %v6198 = vsub.f32 %v6060, %v915
        %v6199 = vsub.f32 %v6064, %v915
        %v6200 = vsub.f32 %v6068, %v915
        %v6201 = vsub.f32 %v6072, %v915
        %v6202 = vsub.f32 %v6076, %v915
        %v6203 = vsub.f32 %v6080, %v915
        %v6204 = vsub.f32 %v6084, %v915
        %v6205 = vsub.f32 %v6088, %v915
        %v6206 = vsub.f32 %v6092, %v915
        %v6207 = vsub.f32 %v6096, %v915
        %v6208 = vsub.f32 %v6100, %v915
        %v6209 = vsub.f32 %v6104, %v915
        %v6210 = vsub.f32 %v6108, %v915
        %v6211 = vsub.f32 %v6112, %v915
        %v6212 = vand.u32 2147483647, %v6114
        %v6213 = vand.u32 2147483647, %v6115
        %v6214 = vand.u32 2147483647, %v6116
        %v6215 = vand.u32 2147483647, %v6117
        %v6216 = vand.u32 2147483647, %v6118
        %v6217 = vand.u32 2147483647, %v6119
        %v6218 = vand.u32 2147483647, %v6120
        %v6219 = vand.u32 2147483647, %v6121
        %v6220 = vand.u32 2147483647, %v6122
        %v6221 = vand.u32 2147483647, %v6123
        %v6222 = vand.u32 2147483647, %v6124
        %v6223 = vand.u32 2147483647, %v6125
        %v6224 = vand.u32 2147483647, %v6126
        %v6225 = vand.u32 2147483647, %v6127
        %v6226 = vand.u32 2147483647, %v6128
        %v6227 = vand.u32 2147483647, %v6129
        %v6228 = vand.u32 2147483647, %v6130
        %v6229 = vand.u32 2147483647, %v6131
        %v6230 = vand.u32 2147483647, %v6132
        %v6231 = vand.u32 2147483647, %v6133
        %v6232 = vand.u32 2147483647, %v6134
        %v6233 = vand.u32 2147483647, %v6135
        %v6234 = vand.u32 2147483647, %v6136
        %v6235 = vand.u32 2147483647, %v6137
        %v6236 = vand.u32 2147483647, %v6138
        %v6237 = vand.u32 2147483647, %v6139
        %v6238 = vand.u32 2147483647, %v6140
        %v6239 = vand.u32 2147483647, %v6141
        %v6240 = vand.u32 2147483647, %v6142
        %v6241 = vand.u32 2147483647, %v6143
        %v6242 = vand.u32 2147483647, %v6144
        %v6243 = vand.u32 2147483647, %v6145
        %v6244 = vand.u32 2147483647, %v6146
        %v6245 = vand.u32 2147483647, %v6147
        %v6246 = vand.u32 2147483647, %v6148
        %v6247 = vand.u32 2147483647, %v6149
        %v6248 = vand.u32 2147483647, %v6150
        %v6249 = vand.u32 2147483647, %v6151
        %v6250 = vand.u32 2147483647, %v6152
        %v6251 = vand.u32 2147483647, %v6153
        %v6252 = vand.u32 2147483647, %v6154
        %v6253 = vand.u32 2147483647, %v6155
        %v6254 = vand.u32 2147483647, %v6156
        %v6255 = vand.u32 2147483647, %v6157
        %v6256 = vand.u32 2147483647, %v6158
        %v6257 = vand.u32 2147483647, %v6159
        %v6258 = vand.u32 2147483647, %v6160
        %v6259 = vand.u32 2147483647, %v6161
        %v6260 = vand.u32 2147483647, %v6162
        %v6261 = vand.u32 2147483647, %v6163
        %v6262 = vand.u32 2147483647, %v6164
        %v6263 = vand.u32 2147483647, %v6165
        %v6264 = vand.u32 2147483647, %v6166
        %v6265 = vand.u32 2147483647, %v6167
        %v6266 = vand.u32 2147483647, %v6168
        %v6267 = vand.u32 2147483647, %v6169
        %v6268 = vand.u32 2147483647, %v6170
        %v6269 = vand.u32 2147483647, %v6171
        %v6270 = vand.u32 2147483647, %v6172
        %v6271 = vand.u32 2147483647, %v6173
        %v6272 = vand.u32 2147483647, %v6174
        %v6273 = vand.u32 2147483647, %v6175
        %v6274 = vand.u32 2147483647, %v6176
        %v6275 = vand.u32 2147483647, %v6177
        %v6276 = vand.u32 2147483647, %v6178
        %v6277 = vand.u32 2147483647, %v6179
        %v6278 = vand.u32 2147483647, %v6180
        %v6279 = vand.u32 2147483647, %v6181
        %v6280 = vand.u32 2147483647, %v6182
        %v6281 = vand.u32 2147483647, %v6183
        %v6282 = vand.u32 2147483647, %v6184
        %v6283 = vand.u32 2147483647, %v6185
        %v6284 = vand.u32 2147483647, %v6186
        %v6285 = vand.u32 2147483647, %v6187
        %v6286 = vand.u32 2147483647, %v6188
        %v6287 = vand.u32 2147483647, %v6189
        %v6288 = vand.u32 2147483647, %v6190
        %v6289 = vand.u32 2147483647, %v6191
        %v6290 = vand.u32 2147483647, %v6192
        %v6291 = vand.u32 2147483647, %v6193
        %v6292 = vand.u32 2147483647, %v6194
        %v6293 = vand.u32 2147483647, %v6195
        %v6294 = vand.u32 2147483647, %v6196
        %v6295 = vand.u32 2147483647, %v6197
        %v6296 = vand.u32 2147483647, %v6198
        %v6297 = vand.u32 2147483647, %v6199
        %v6298 = vand.u32 2147483647, %v6200
        %v6299 = vand.u32 2147483647, %v6201
        %v6300 = vand.u32 2147483647, %v6202
        %v6301 = vand.u32 2147483647, %v6203
        %v6302 = vand.u32 2147483647, %v6204
        %v6303 = vand.u32 2147483647, %v6205
        %v6304 = vand.u32 2147483647, %v6206
        %v6305 = vand.u32 2147483647, %v6207
        %v6306 = vand.u32 2147483647, %v6208
        %v6307 = vand.u32 2147483647, %v6209
        %v6308 = vand.u32 2147483647, %v6210
        %v6309 = vand.u32 2147483647, %v6211
        %v6310 = vsub.f32 1.0, %v6212
        %v6311 = vsub.f32 1.0, %v6213
        %v6312 = vsub.f32 1.0, %v6214
        %v6313 = vsub.f32 1.0, %v6215
        %v6314 = vsub.f32 1.0, %v6216
        %v6315 = vsub.f32 1.0, %v6217
        %v6316 = vsub.f32 1.0, %v6218
        %v6317 = vsub.f32 1.0, %v6219
        %v6318 = vsub.f32 1.0, %v6220
        %v6319 = vsub.f32 1.0, %v6221
        %v6320 = vsub.f32 1.0, %v6222
        %v6321 = vsub.f32 1.0, %v6223
        %v6322 = vsub.f32 1.0, %v6224
        %v6323 = vsub.f32 1.0, %v6225
        %v6324 = vsub.f32 1.0, %v6226
        %v6325 = vsub.f32 1.0, %v6227
        %v6326 = vsub.f32 1.0, %v6228
        %v6327 = vsub.f32 1.0, %v6229
        %v6328 = vsub.f32 1.0, %v6230
        %v6329 = vsub.f32 1.0, %v6231
        %v6330 = vsub.f32 1.0, %v6232
        %v6331 = vsub.f32 1.0, %v6233
        %v6332 = vsub.f32 1.0, %v6234
        %v6333 = vsub.f32 1.0, %v6235
        %v6334 = vsub.f32 1.0, %v6236
        %v6335 = vsub.f32 1.0, %v6237
        %v6336 = vsub.f32 1.0, %v6238
        %v6337 = vsub.f32 1.0, %v6239
        %v6338 = vsub.f32 1.0, %v6240
        %v6339 = vsub.f32 1.0, %v6241
        %v6340 = vsub.f32 1.0, %v6242
        %v6341 = vsub.f32 1.0, %v6243
        %v6342 = vsub.f32 1.0, %v6244
        %v6343 = vsub.f32 1.0, %v6245
        %v6344 = vsub.f32 1.0, %v6246
        %v6345 = vsub.f32 1.0, %v6247
        %v6346 = vsub.f32 1.0, %v6248
        %v6347 = vsub.f32 1.0, %v6249
        %v6348 = vsub.f32 1.0, %v6250
        %v6349 = vsub.f32 1.0, %v6251
        %v6350 = vsub.f32 1.0, %v6252
        %v6351 = vsub.f32 1.0, %v6253
        %v6352 = vsub.f32 1.0, %v6254
        %v6353 = vsub.f32 1.0, %v6255
        %v6354 = vsub.f32 1.0, %v6256
        %v6355 = vsub.f32 1.0, %v6257
        %v6356 = vsub.f32 1.0, %v6258
        %v6357 = vsub.f32 1.0, %v6259
        %v6358 = vsub.f32 1.0, %v6260
        %v6359 = vsub.f32 1.0, %v6261
        %v6360 = vsub.f32 1.0, %v6262
        %v6361 = vsub.f32 1.0, %v6263
        %v6362 = vsub.f32 1.0, %v6264
        %v6363 = vsub.f32 1.0, %v6265
        %v6364 = vsub.f32 1.0, %v6266
        %v6365 = vsub.f32 1.0, %v6267
        %v6366 = vsub.f32 1.0, %v6268
        %v6367 = vsub.f32 1.0, %v6269
        %v6368 = vsub.f32 1.0, %v6270
        %v6369 = vsub.f32 1.0, %v6271
        %v6370 = vsub.f32 1.0, %v6272
        %v6371 = vsub.f32 1.0, %v6273
        %v6372 = vsub.f32 1.0, %v6274
        %v6373 = vsub.f32 1.0, %v6275
        %v6374 = vsub.f32 1.0, %v6276
        %v6375 = vsub.f32 1.0, %v6277
        %v6376 = vsub.f32 1.0, %v6278
        %v6377 = vsub.f32 1.0, %v6279
        %v6378 = vsub.f32 1.0, %v6280
        %v6379 = vsub.f32 1.0, %v6281
        %v6380 = vsub.f32 1.0, %v6282
        %v6381 = vsub.f32 1.0, %v6283
        %v6382 = vsub.f32 1.0, %v6284
        %v6383 = vsub.f32 1.0, %v6285
        %v6384 = vsub.f32 1.0, %v6286
        %v6385 = vsub.f32 1.0, %v6287
        %v6386 = vsub.f32 1.0, %v6288
        %v6387 = vsub.f32 1.0, %v6289
        %v6388 = vsub.f32 1.0, %v6290
        %v6389 = vsub.f32 1.0, %v6291
        %v6390 = vsub.f32 1.0, %v6292
        %v6391 = vsub.f32 1.0, %v6293
        %v6392 = vsub.f32 1.0, %v6294
        %v6393 = vsub.f32 1.0, %v6295
        %v6394 = vsub.f32 1.0, %v6296
        %v6395 = vsub.f32 1.0, %v6297
        %v6396 = vsub.f32 1.0, %v6298
        %v6397 = vsub.f32 1.0, %v6299
        %v6398 = vsub.f32 1.0, %v6300
        %v6399 = vsub.f32 1.0, %v6301
        %v6400 = vsub.f32 1.0, %v6302
        %v6401 = vsub.f32 1.0, %v6303
        %v6402 = vsub.f32 1.0, %v6304
        %v6403 = vsub.f32 1.0, %v6305
        %v6404 = vsub.f32 1.0, %v6306
        %v6405 = vsub.f32 1.0, %v6307
        %v6406 = vsub.f32 1.0, %v6308
        %v6407 = vsub.f32 1.0, %v6309
        %v6408 = vmax.f32 %v6310, 0.0
        %v6409 = vmax.f32 %v6311, 0.0
        %v6410 = vmax.f32 %v6312, 0.0
        %v6411 = vmax.f32 %v6313, 0.0
        %v6412 = vmax.f32 %v6314, 0.0
        %v6413 = vmax.f32 %v6315, 0.0
        %v6414 = vmax.f32 %v6316, 0.0
        %v6415 = vmax.f32 %v6317, 0.0
        %v6416 = vmax.f32 %v6318, 0.0
        %v6417 = vmax.f32 %v6319, 0.0
        %v6418 = vmax.f32 %v6320, 0.0
        %v6419 = vmax.f32 %v6321, 0.0
        %v6420 = vmax.f32 %v6322, 0.0
        %v6421 = vmax.f32 %v6323, 0.0
        %v6422 = vmax.f32 %v6324, 0.0
        %v6423 = vmax.f32 %v6325, 0.0
        %v6424 = vmax.f32 %v6326, 0.0
        %v6425 = vmax.f32 %v6327, 0.0
        %v6426 = vmax.f32 %v6328, 0.0
        %v6427 = vmax.f32 %v6329, 0.0
        %v6428 = vmax.f32 %v6330, 0.0
        %v6429 = vmax.f32 %v6331, 0.0
        %v6430 = vmax.f32 %v6332, 0.0
        %v6431 = vmax.f32 %v6333, 0.0
        %v6432 = vmax.f32 %v6334, 0.0
        %v6433 = vmax.f32 %v6335, 0.0
        %v6434 = vmax.f32 %v6336, 0.0
        %v6435 = vmax.f32 %v6337, 0.0
        %v6436 = vmax.f32 %v6338, 0.0
        %v6437 = vmax.f32 %v6339, 0.0
        %v6438 = vmax.f32 %v6340, 0.0
        %v6439 = vmax.f32 %v6341, 0.0
        %v6440 = vmax.f32 %v6342, 0.0
        %v6441 = vmax.f32 %v6343, 0.0
        %v6442 = vmax.f32 %v6344, 0.0
        %v6443 = vmax.f32 %v6345, 0.0
        %v6444 = vmax.f32 %v6346, 0.0
        %v6445 = vmax.f32 %v6347, 0.0
        %v6446 = vmax.f32 %v6348, 0.0
        %v6447 = vmax.f32 %v6349, 0.0
        %v6448 = vmax.f32 %v6350, 0.0
        %v6449 = vmax.f32 %v6351, 0.0
        %v6450 = vmax.f32 %v6352, 0.0
        %v6451 = vmax.f32 %v6353, 0.0
        %v6452 = vmax.f32 %v6354, 0.0
        %v6453 = vmax.f32 %v6355, 0.0
        %v6454 = vmax.f32 %v6356, 0.0
        %v6455 = vmax.f32 %v6357, 0.0
        %v6456 = vmax.f32 %v6358, 0.0
        %v6457 = vmax.f32 %v6359, 0.0
        %v6458 = vmax.f32 %v6360, 0.0
        %v6459 = vmax.f32 %v6361, 0.0
        %v6460 = vmax.f32 %v6362, 0.0
        %v6461 = vmax.f32 %v6363, 0.0
        %v6462 = vmax.f32 %v6364, 0.0
        %v6463 = vmax.f32 %v6365, 0.0
        %v6464 = vmax.f32 %v6366, 0.0
        %v6465 = vmax.f32 %v6367, 0.0
        %v6466 = vmax.f32 %v6368, 0.0
        %v6467 = vmax.f32 %v6369, 0.0
        %v6468 = vmax.f32 %v6370, 0.0
        %v6469 = vmax.f32 %v6371, 0.0
        %v6470 = vmax.f32 %v6372, 0.0
        %v6471 = vmax.f32 %v6373, 0.0
        %v6472 = vmax.f32 %v6374, 0.0
        %v6473 = vmax.f32 %v6375, 0.0
        %v6474 = vmax.f32 %v6376, 0.0
        %v6475 = vmax.f32 %v6377, 0.0
        %v6476 = vmax.f32 %v6378, 0.0
        %v6477 = vmax.f32 %v6379, 0.0
        %v6478 = vmax.f32 %v6380, 0.0
        %v6479 = vmax.f32 %v6381, 0.0
        %v6480 = vmax.f32 %v6382, 0.0
        %v6481 = vmax.f32 %v6383, 0.0
        %v6482 = vmax.f32 %v6384, 0.0
        %v6483 = vmax.f32 %v6385, 0.0
        %v6484 = vmax.f32 %v6386, 0.0
        %v6485 = vmax.f32 %v6387, 0.0
        %v6486 = vmax.f32 %v6388, 0.0
        %v6487 = vmax.f32 %v6389, 0.0
        %v6488 = vmax.f32 %v6390, 0.0
        %v6489 = vmax.f32 %v6391, 0.0
        %v6490 = vmax.f32 %v6392, 0.0
        %v6491 = vmax.f32 %v6393, 0.0
        %v6492 = vmax.f32 %v6394, 0.0
        %v6493 = vmax.f32 %v6395, 0.0
        %v6494 = vmax.f32 %v6396, 0.0
        %v6495 = vmax.f32 %v6397, 0.0
        %v6496 = vmax.f32 %v6398, 0.0
        %v6497 = vmax.f32 %v6399, 0.0
        %v6498 = vmax.f32 %v6400, 0.0
        %v6499 = vmax.f32 %v6401, 0.0
        %v6500 = vmax.f32 %v6402, 0.0
        %v6501 = vmax.f32 %v6403, 0.0
        %v6502 = vmax.f32 %v6404, 0.0
        %v6503 = vmax.f32 %v6405, 0.0
        %v6504 = vmax.f32 %v6406, 0.0
        %v6505 = vmax.f32 %v6407, 0.0
        %6506 = vset.pattern.permute.xlu0 7
        %6507 = vperm.xlu0 %6506, %v324
        %v6508 = vpop.permute.xlu0 %6507
        %6510 = vset.pattern.permute.xlu0 7
        %6511 = vperm.xlu0 %6510, %v325
        %v6512 = vpop.permute.xlu0 %6511
        %6514 = vset.pattern.permute.xlu0 7
        %6515 = vperm.xlu0 %6514, %v326
        %v6516 = vpop.permute.xlu0 %6515
        %6518 = vset.pattern.permute.xlu0 7
        %6519 = vperm.xlu0 %6518, %v327
        %v6520 = vpop.permute.xlu0 %6519
        %6522 = vset.pattern.permute.xlu0 7
        %6523 = vperm.xlu0 %6522, %v328
        %v6524 = vpop.permute.xlu0 %6523
        %6526 = vset.pattern.permute.xlu0 7
        %6527 = vperm.xlu0 %6526, %v329
        %v6528 = vpop.permute.xlu0 %6527
        %6530 = vset.pattern.permute.xlu0 7
        %6531 = vperm.xlu0 %6530, %v330
        %v6532 = vpop.permute.xlu0 %6531
        %6534 = vset.pattern.permute.xlu0 7
        %6535 = vperm.xlu0 %6534, %v331
        %v6536 = vpop.permute.xlu0 %6535
        %6538 = vset.pattern.permute.xlu0 7
        %6539 = vperm.xlu0 %6538, %v332
        %v6540 = vpop.permute.xlu0 %6539
        %6542 = vset.pattern.permute.xlu0 7
        %6543 = vperm.xlu0 %6542, %v333
        %v6544 = vpop.permute.xlu0 %6543
        %6546 = vset.pattern.permute.xlu0 7
        %6547 = vperm.xlu0 %6546, %v334
        %v6548 = vpop.permute.xlu0 %6547
        %6550 = vset.pattern.permute.xlu0 7
        %6551 = vperm.xlu0 %6550, %v335
        %v6552 = vpop.permute.xlu0 %6551
        %6554 = vset.pattern.permute.xlu0 7
        %6555 = vperm.xlu0 %6554, %v336
        %v6556 = vpop.permute.xlu0 %6555
        %6558 = vset.pattern.permute.xlu0 7
        %6559 = vperm.xlu0 %6558, %v337
        %v6560 = vpop.permute.xlu0 %6559
        %6562 = vset.pattern.permute.xlu0 7
        %6563 = vperm.xlu0 %6562, %v338
        %v6564 = vpop.permute.xlu0 %6563
        %6566 = vset.pattern.permute.xlu0 7
        %6567 = vperm.xlu0 %6566, %v339
        %v6568 = vpop.permute.xlu0 %6567
        %6570 = vset.pattern.permute.xlu0 7
        %6571 = vperm.xlu0 %6570, %v340
        %v6572 = vpop.permute.xlu0 %6571
        %6574 = vset.pattern.permute.xlu0 7
        %6575 = vperm.xlu0 %6574, %v341
        %v6576 = vpop.permute.xlu0 %6575
        %6578 = vset.pattern.permute.xlu0 7
        %6579 = vperm.xlu0 %6578, %v342
        %v6580 = vpop.permute.xlu0 %6579
        %6582 = vset.pattern.permute.xlu0 7
        %6583 = vperm.xlu0 %6582, %v343
        %v6584 = vpop.permute.xlu0 %6583
        %6586 = vset.pattern.permute.xlu0 7
        %6587 = vperm.xlu0 %6586, %v344
        %v6588 = vpop.permute.xlu0 %6587
        %6590 = vset.pattern.permute.xlu0 7
        %6591 = vperm.xlu0 %6590, %v345
        %v6592 = vpop.permute.xlu0 %6591
        %6594 = vset.pattern.permute.xlu0 7
        %6595 = vperm.xlu0 %6594, %v346
        %v6596 = vpop.permute.xlu0 %6595
        %6598 = vset.pattern.permute.xlu0 7
        %6599 = vperm.xlu0 %6598, %v347
        %v6600 = vpop.permute.xlu0 %6599
        %6602 = vset.pattern.permute.xlu0 7
        %6603 = vperm.xlu0 %6602, %v348
        %v6604 = vpop.permute.xlu0 %6603
        %6606 = vset.pattern.permute.xlu0 7
        %6607 = vperm.xlu0 %6606, %v349
        %v6608 = vpop.permute.xlu0 %6607
        %6610 = vset.pattern.permute.xlu0 7
        %6611 = vperm.xlu0 %6610, %v350
        %v6612 = vpop.permute.xlu0 %6611
        %6614 = vset.pattern.permute.xlu0 7
        %6615 = vperm.xlu0 %6614, %v351
        %v6616 = vpop.permute.xlu0 %6615
        %6618 = vset.pattern.permute.xlu0 7
        %6619 = vperm.xlu0 %6618, %v352
        %v6620 = vpop.permute.xlu0 %6619
        %6622 = vset.pattern.permute.xlu0 7
        %6623 = vperm.xlu0 %6622, %v353
        %v6624 = vpop.permute.xlu0 %6623
        %6626 = vset.pattern.permute.xlu0 7
        %6627 = vperm.xlu0 %6626, %v354
        %v6628 = vpop.permute.xlu0 %6627
        %6630 = vset.pattern.permute.xlu0 7
        %6631 = vperm.xlu0 %6630, %v355
        %v6632 = vpop.permute.xlu0 %6631
        %6634 = vset.pattern.permute.xlu0 7
        %6635 = vperm.xlu0 %6634, %v356
        %v6636 = vpop.permute.xlu0 %6635
        %6638 = vset.pattern.permute.xlu0 7
        %6639 = vperm.xlu0 %6638, %v357
        %v6640 = vpop.permute.xlu0 %6639
        %6642 = vset.pattern.permute.xlu0 7
        %6643 = vperm.xlu0 %6642, %v358
        %v6644 = vpop.permute.xlu0 %6643
        %6646 = vset.pattern.permute.xlu0 7
        %6647 = vperm.xlu0 %6646, %v359
        %v6648 = vpop.permute.xlu0 %6647
        %6650 = vset.pattern.permute.xlu0 7
        %6651 = vperm.xlu0 %6650, %v360
        %v6652 = vpop.permute.xlu0 %6651
        %6654 = vset.pattern.permute.xlu0 7
        %6655 = vperm.xlu0 %6654, %v361
        %v6656 = vpop.permute.xlu0 %6655
        %6658 = vset.pattern.permute.xlu0 7
        %6659 = vperm.xlu0 %6658, %v362
        %v6660 = vpop.permute.xlu0 %6659
        %6662 = vset.pattern.permute.xlu0 7
        %6663 = vperm.xlu0 %6662, %v363
        %v6664 = vpop.permute.xlu0 %6663
        %6666 = vset.pattern.permute.xlu0 7
        %6667 = vperm.xlu0 %6666, %v364
        %v6668 = vpop.permute.xlu0 %6667
        %6670 = vset.pattern.permute.xlu0 7
        %6671 = vperm.xlu0 %6670, %v365
        %v6672 = vpop.permute.xlu0 %6671
        %6674 = vset.pattern.permute.xlu0 7
        %6675 = vperm.xlu0 %6674, %v366
        %v6676 = vpop.permute.xlu0 %6675
        %6678 = vset.pattern.permute.xlu0 7
        %6679 = vperm.xlu0 %6678, %v367
        %v6680 = vpop.permute.xlu0 %6679
        %6682 = vset.pattern.permute.xlu0 7
        %6683 = vperm.xlu0 %6682, %v368
        %v6684 = vpop.permute.xlu0 %6683
        %6686 = vset.pattern.permute.xlu0 7
        %6687 = vperm.xlu0 %6686, %v369
        %v6688 = vpop.permute.xlu0 %6687
        %6690 = vset.pattern.permute.xlu0 7
        %6691 = vperm.xlu0 %6690, %v370
        %v6692 = vpop.permute.xlu0 %6691
        %6694 = vset.pattern.permute.xlu0 7
        %6695 = vperm.xlu0 %6694, %v371
        %v6696 = vpop.permute.xlu0 %6695
        %6698 = vset.pattern.permute.xlu0 7
        %6699 = vperm.xlu0 %6698, %v372
        %v6700 = vpop.permute.xlu0 %6699
        %6702 = vset.pattern.permute.xlu0 7
        %6703 = vperm.xlu0 %6702, %v373
        %v6704 = vpop.permute.xlu0 %6703
        %6706 = vset.pattern.permute.xlu0 7
        %6707 = vperm.xlu0 %6706, %v374
        %v6708 = vpop.permute.xlu0 %6707
        %6710 = vset.pattern.permute.xlu0 7
        %6711 = vperm.xlu0 %6710, %v375
        %v6712 = vpop.permute.xlu0 %6711
        %6714 = vset.pattern.permute.xlu0 7
        %6715 = vperm.xlu0 %6714, %v376
        %v6716 = vpop.permute.xlu0 %6715
        %6718 = vset.pattern.permute.xlu0 7
        %6719 = vperm.xlu0 %6718, %v377
        %v6720 = vpop.permute.xlu0 %6719
        %6722 = vset.pattern.permute.xlu0 7
        %6723 = vperm.xlu0 %6722, %v378
        %v6724 = vpop.permute.xlu0 %6723
        %6726 = vset.pattern.permute.xlu0 7
        %6727 = vperm.xlu0 %6726, %v379
        %v6728 = vpop.permute.xlu0 %6727
        %6730 = vset.pattern.permute.xlu0 7
        %6731 = vperm.xlu0 %6730, %v380
        %v6732 = vpop.permute.xlu0 %6731
        %6734 = vset.pattern.permute.xlu0 7
        %6735 = vperm.xlu0 %6734, %v381
        %v6736 = vpop.permute.xlu0 %6735
        %6738 = vset.pattern.permute.xlu0 7
        %6739 = vperm.xlu0 %6738, %v382
        %v6740 = vpop.permute.xlu0 %6739
        %6742 = vset.pattern.permute.xlu0 7
        %6743 = vperm.xlu0 %6742, %v383
        %v6744 = vpop.permute.xlu0 %6743
        %6746 = vset.pattern.permute.xlu0 7
        %6747 = vperm.xlu0 %6746, %v384
        %v6748 = vpop.permute.xlu0 %6747
        %6750 = vset.pattern.permute.xlu0 7
        %6751 = vperm.xlu0 %6750, %v385
        %v6752 = vpop.permute.xlu0 %6751
        %6754 = vset.pattern.permute.xlu0 7
        %6755 = vperm.xlu0 %6754, %v386
        %v6756 = vpop.permute.xlu0 %6755
        %6758 = vset.pattern.permute.xlu0 7
        %6759 = vperm.xlu0 %6758, %v387
        %v6760 = vpop.permute.xlu0 %6759
        %6762 = vset.pattern.permute.xlu0 7
        %6763 = vperm.xlu0 %6762, %v388
        %v6764 = vpop.permute.xlu0 %6763
        %6766 = vset.pattern.permute.xlu0 7
        %6767 = vperm.xlu0 %6766, %v389
        %v6768 = vpop.permute.xlu0 %6767
        %6770 = vset.pattern.permute.xlu0 7
        %6771 = vperm.xlu0 %6770, %v390
        %v6772 = vpop.permute.xlu0 %6771
        %6774 = vset.pattern.permute.xlu0 7
        %6775 = vperm.xlu0 %6774, %v391
        %v6776 = vpop.permute.xlu0 %6775
        %6778 = vset.pattern.permute.xlu0 7
        %6779 = vperm.xlu0 %6778, %v392
        %v6780 = vpop.permute.xlu0 %6779
        %6782 = vset.pattern.permute.xlu0 7
        %6783 = vperm.xlu0 %6782, %v393
        %v6784 = vpop.permute.xlu0 %6783
        %6786 = vset.pattern.permute.xlu0 7
        %6787 = vperm.xlu0 %6786, %v394
        %v6788 = vpop.permute.xlu0 %6787
        %6790 = vset.pattern.permute.xlu0 7
        %6791 = vperm.xlu0 %6790, %v395
        %v6792 = vpop.permute.xlu0 %6791
        %6794 = vset.pattern.permute.xlu0 7
        %6795 = vperm.xlu0 %6794, %v396
        %v6796 = vpop.permute.xlu0 %6795
        %6798 = vset.pattern.permute.xlu0 7
        %6799 = vperm.xlu0 %6798, %v397
        %v6800 = vpop.permute.xlu0 %6799
        %6802 = vset.pattern.permute.xlu0 7
        %6803 = vperm.xlu0 %6802, %v398
        %v6804 = vpop.permute.xlu0 %6803
        %6806 = vset.pattern.permute.xlu0 7
        %6807 = vperm.xlu0 %6806, %v399
        %v6808 = vpop.permute.xlu0 %6807
        %6810 = vset.pattern.permute.xlu0 7
        %6811 = vperm.xlu0 %6810, %v400
        %v6812 = vpop.permute.xlu0 %6811
        %6814 = vset.pattern.permute.xlu0 7
        %6815 = vperm.xlu0 %6814, %v401
        %v6816 = vpop.permute.xlu0 %6815
        %6818 = vset.pattern.permute.xlu0 7
        %6819 = vperm.xlu0 %6818, %v402
        %v6820 = vpop.permute.xlu0 %6819
        %6822 = vset.pattern.permute.xlu0 7
        %6823 = vperm.xlu0 %6822, %v403
        %v6824 = vpop.permute.xlu0 %6823
        %6826 = vset.pattern.permute.xlu0 7
        %6827 = vperm.xlu0 %6826, %v404
        %v6828 = vpop.permute.xlu0 %6827
        %6830 = vset.pattern.permute.xlu0 7
        %6831 = vperm.xlu0 %6830, %v405
        %v6832 = vpop.permute.xlu0 %6831
        %6834 = vset.pattern.permute.xlu0 7
        %6835 = vperm.xlu0 %6834, %v406
        %v6836 = vpop.permute.xlu0 %6835
        %6838 = vset.pattern.permute.xlu0 7
        %6839 = vperm.xlu0 %6838, %v407
        %v6840 = vpop.permute.xlu0 %6839
        %6842 = vset.pattern.permute.xlu0 7
        %6843 = vperm.xlu0 %6842, %v408
        %v6844 = vpop.permute.xlu0 %6843
        %6846 = vset.pattern.permute.xlu0 7
        %6847 = vperm.xlu0 %6846, %v409
        %v6848 = vpop.permute.xlu0 %6847
        %6850 = vset.pattern.permute.xlu0 7
        %6851 = vperm.xlu0 %6850, %v410
        %v6852 = vpop.permute.xlu0 %6851
        %6854 = vset.pattern.permute.xlu0 7
        %6855 = vperm.xlu0 %6854, %v411
        %v6856 = vpop.permute.xlu0 %6855
        %6858 = vset.pattern.permute.xlu0 7
        %6859 = vperm.xlu0 %6858, %v412
        %v6860 = vpop.permute.xlu0 %6859
        %6862 = vset.pattern.permute.xlu0 7
        %6863 = vperm.xlu0 %6862, %v413
        %v6864 = vpop.permute.xlu0 %6863
        %6866 = vset.pattern.permute.xlu0 7
        %6867 = vperm.xlu0 %6866, %v414
        %v6868 = vpop.permute.xlu0 %6867
        %6870 = vset.pattern.permute.xlu0 7
        %6871 = vperm.xlu0 %6870, %v415
        %v6872 = vpop.permute.xlu0 %6871
        %6874 = vset.pattern.permute.xlu0 7
        %6875 = vperm.xlu0 %6874, %v416
        %v6876 = vpop.permute.xlu0 %6875
        %6878 = vset.pattern.permute.xlu0 7
        %6879 = vperm.xlu0 %6878, %v417
        %v6880 = vpop.permute.xlu0 %6879
        %6882 = vset.pattern.permute.xlu0 7
        %6883 = vperm.xlu0 %6882, %v418
        %v6884 = vpop.permute.xlu0 %6883
        %6886 = vset.pattern.permute.xlu0 7
        %6887 = vperm.xlu0 %6886, %v419
        %v6888 = vpop.permute.xlu0 %6887
        %6890 = vset.pattern.permute.xlu0 7
        %6891 = vperm.xlu0 %6890, %v420
        %v6892 = vpop.permute.xlu0 %6891
        %6894 = vset.pattern.permute.xlu0 7
        %6895 = vperm.xlu0 %6894, %v421
        %v6896 = vpop.permute.xlu0 %6895
        %v6898 = vsub.f32 %v6508, %v1703
        %v6899 = vsub.f32 %v6512, %v1703
        %v6900 = vsub.f32 %v6516, %v1703
        %v6901 = vsub.f32 %v6520, %v1703
        %v6902 = vsub.f32 %v6524, %v1703
        %v6903 = vsub.f32 %v6528, %v1703
        %v6904 = vsub.f32 %v6532, %v1703
        %v6905 = vsub.f32 %v6536, %v1703
        %v6906 = vsub.f32 %v6540, %v1703
        %v6907 = vsub.f32 %v6544, %v1703
        %v6908 = vsub.f32 %v6548, %v1703
        %v6909 = vsub.f32 %v6552, %v1703
        %v6910 = vsub.f32 %v6556, %v1703
        %v6911 = vsub.f32 %v6560, %v1703
        %v6912 = vsub.f32 %v6564, %v1703
        %v6913 = vsub.f32 %v6568, %v1703
        %v6914 = vsub.f32 %v6572, %v1703
        %v6915 = vsub.f32 %v6576, %v1703
        %v6916 = vsub.f32 %v6580, %v1703
        %v6917 = vsub.f32 %v6584, %v1703
        %v6918 = vsub.f32 %v6588, %v1703
        %v6919 = vsub.f32 %v6592, %v1703
        %v6920 = vsub.f32 %v6596, %v1703
        %v6921 = vsub.f32 %v6600, %v1703
        %v6922 = vsub.f32 %v6604, %v1703
        %v6923 = vsub.f32 %v6608, %v1703
        %v6924 = vsub.f32 %v6612, %v1703
        %v6925 = vsub.f32 %v6616, %v1703
        %v6926 = vsub.f32 %v6620, %v1703
        %v6927 = vsub.f32 %v6624, %v1703
        %v6928 = vsub.f32 %v6628, %v1703
        %v6929 = vsub.f32 %v6632, %v1703
        %v6930 = vsub.f32 %v6636, %v1703
        %v6931 = vsub.f32 %v6640, %v1703
        %v6932 = vsub.f32 %v6644, %v1703
        %v6933 = vsub.f32 %v6648, %v1703
        %v6934 = vsub.f32 %v6652, %v1703
        %v6935 = vsub.f32 %v6656, %v1703
        %v6936 = vsub.f32 %v6660, %v1703
        %v6937 = vsub.f32 %v6664, %v1703
        %v6938 = vsub.f32 %v6668, %v1703
        %v6939 = vsub.f32 %v6672, %v1703
        %v6940 = vsub.f32 %v6676, %v1703
        %v6941 = vsub.f32 %v6680, %v1703
        %v6942 = vsub.f32 %v6684, %v1703
        %v6943 = vsub.f32 %v6688, %v1703
        %v6944 = vsub.f32 %v6692, %v1703
        %v6945 = vsub.f32 %v6696, %v1703
        %v6946 = vsub.f32 %v6700, %v1703
        %v6947 = vsub.f32 %v6704, %v1703
        %v6948 = vsub.f32 %v6708, %v1703
        %v6949 = vsub.f32 %v6712, %v1703
        %v6950 = vsub.f32 %v6716, %v1703
        %v6951 = vsub.f32 %v6720, %v1703
        %v6952 = vsub.f32 %v6724, %v1703
        %v6953 = vsub.f32 %v6728, %v1703
        %v6954 = vsub.f32 %v6732, %v1703
        %v6955 = vsub.f32 %v6736, %v1703
        %v6956 = vsub.f32 %v6740, %v1703
        %v6957 = vsub.f32 %v6744, %v1703
        %v6958 = vsub.f32 %v6748, %v1703
        %v6959 = vsub.f32 %v6752, %v1703
        %v6960 = vsub.f32 %v6756, %v1703
        %v6961 = vsub.f32 %v6760, %v1703
        %v6962 = vsub.f32 %v6764, %v1703
        %v6963 = vsub.f32 %v6768, %v1703
        %v6964 = vsub.f32 %v6772, %v1703
        %v6965 = vsub.f32 %v6776, %v1703
        %v6966 = vsub.f32 %v6780, %v1703
        %v6967 = vsub.f32 %v6784, %v1703
        %v6968 = vsub.f32 %v6788, %v1703
        %v6969 = vsub.f32 %v6792, %v1703
        %v6970 = vsub.f32 %v6796, %v1703
        %v6971 = vsub.f32 %v6800, %v1703
        %v6972 = vsub.f32 %v6804, %v1703
        %v6973 = vsub.f32 %v6808, %v1703
        %v6974 = vsub.f32 %v6812, %v1703
        %v6975 = vsub.f32 %v6816, %v1703
        %v6976 = vsub.f32 %v6820, %v1703
        %v6977 = vsub.f32 %v6824, %v1703
        %v6978 = vsub.f32 %v6828, %v1703
        %v6979 = vsub.f32 %v6832, %v1703
        %v6980 = vsub.f32 %v6836, %v1703
        %v6981 = vsub.f32 %v6840, %v1703
        %v6982 = vsub.f32 %v6844, %v1703
        %v6983 = vsub.f32 %v6848, %v1703
        %v6984 = vsub.f32 %v6852, %v1703
        %v6985 = vsub.f32 %v6856, %v1703
        %v6986 = vsub.f32 %v6860, %v1703
        %v6987 = vsub.f32 %v6864, %v1703
        %v6988 = vsub.f32 %v6868, %v1703
        %v6989 = vsub.f32 %v6872, %v1703
        %v6990 = vsub.f32 %v6876, %v1703
        %v6991 = vsub.f32 %v6880, %v1703
        %v6992 = vsub.f32 %v6884, %v1703
        %v6993 = vsub.f32 %v6888, %v1703
        %v6994 = vsub.f32 %v6892, %v1703
        %v6995 = vsub.f32 %v6896, %v1703
        %v6996 = vand.u32 2147483647, %v6898
        %v6997 = vand.u32 2147483647, %v6899
        %v6998 = vand.u32 2147483647, %v6900
        %v6999 = vand.u32 2147483647, %v6901
        %v7000 = vand.u32 2147483647, %v6902
        %v7001 = vand.u32 2147483647, %v6903
        %v7002 = vand.u32 2147483647, %v6904
        %v7003 = vand.u32 2147483647, %v6905
        %v7004 = vand.u32 2147483647, %v6906
        %v7005 = vand.u32 2147483647, %v6907
        %v7006 = vand.u32 2147483647, %v6908
        %v7007 = vand.u32 2147483647, %v6909
        %v7008 = vand.u32 2147483647, %v6910
        %v7009 = vand.u32 2147483647, %v6911
        %v7010 = vand.u32 2147483647, %v6912
        %v7011 = vand.u32 2147483647, %v6913
        %v7012 = vand.u32 2147483647, %v6914
        %v7013 = vand.u32 2147483647, %v6915
        %v7014 = vand.u32 2147483647, %v6916
        %v7015 = vand.u32 2147483647, %v6917
        %v7016 = vand.u32 2147483647, %v6918
        %v7017 = vand.u32 2147483647, %v6919
        %v7018 = vand.u32 2147483647, %v6920
        %v7019 = vand.u32 2147483647, %v6921
        %v7020 = vand.u32 2147483647, %v6922
        %v7021 = vand.u32 2147483647, %v6923
        %v7022 = vand.u32 2147483647, %v6924
        %v7023 = vand.u32 2147483647, %v6925
        %v7024 = vand.u32 2147483647, %v6926
        %v7025 = vand.u32 2147483647, %v6927
        %v7026 = vand.u32 2147483647, %v6928
        %v7027 = vand.u32 2147483647, %v6929
        %v7028 = vand.u32 2147483647, %v6930
        %v7029 = vand.u32 2147483647, %v6931
        %v7030 = vand.u32 2147483647, %v6932
        %v7031 = vand.u32 2147483647, %v6933
        %v7032 = vand.u32 2147483647, %v6934
        %v7033 = vand.u32 2147483647, %v6935
        %v7034 = vand.u32 2147483647, %v6936
        %v7035 = vand.u32 2147483647, %v6937
        %v7036 = vand.u32 2147483647, %v6938
        %v7037 = vand.u32 2147483647, %v6939
        %v7038 = vand.u32 2147483647, %v6940
        %v7039 = vand.u32 2147483647, %v6941
        %v7040 = vand.u32 2147483647, %v6942
        %v7041 = vand.u32 2147483647, %v6943
        %v7042 = vand.u32 2147483647, %v6944
        %v7043 = vand.u32 2147483647, %v6945
        %v7044 = vand.u32 2147483647, %v6946
        %v7045 = vand.u32 2147483647, %v6947
        %v7046 = vand.u32 2147483647, %v6948
        %v7047 = vand.u32 2147483647, %v6949
        %v7048 = vand.u32 2147483647, %v6950
        %v7049 = vand.u32 2147483647, %v6951
        %v7050 = vand.u32 2147483647, %v6952
        %v7051 = vand.u32 2147483647, %v6953
        %v7052 = vand.u32 2147483647, %v6954
        %v7053 = vand.u32 2147483647, %v6955
        %v7054 = vand.u32 2147483647, %v6956
        %v7055 = vand.u32 2147483647, %v6957
        %v7056 = vand.u32 2147483647, %v6958
        %v7057 = vand.u32 2147483647, %v6959
        %v7058 = vand.u32 2147483647, %v6960
        %v7059 = vand.u32 2147483647, %v6961
        %v7060 = vand.u32 2147483647, %v6962
        %v7061 = vand.u32 2147483647, %v6963
        %v7062 = vand.u32 2147483647, %v6964
        %v7063 = vand.u32 2147483647, %v6965
        %v7064 = vand.u32 2147483647, %v6966
        %v7065 = vand.u32 2147483647, %v6967
        %v7066 = vand.u32 2147483647, %v6968
        %v7067 = vand.u32 2147483647, %v6969
        %v7068 = vand.u32 2147483647, %v6970
        %v7069 = vand.u32 2147483647, %v6971
        %v7070 = vand.u32 2147483647, %v6972
        %v7071 = vand.u32 2147483647, %v6973
        %v7072 = vand.u32 2147483647, %v6974
        %v7073 = vand.u32 2147483647, %v6975
        %v7074 = vand.u32 2147483647, %v6976
        %v7075 = vand.u32 2147483647, %v6977
        %v7076 = vand.u32 2147483647, %v6978
        %v7077 = vand.u32 2147483647, %v6979
        %v7078 = vand.u32 2147483647, %v6980
        %v7079 = vand.u32 2147483647, %v6981
        %v7080 = vand.u32 2147483647, %v6982
        %v7081 = vand.u32 2147483647, %v6983
        %v7082 = vand.u32 2147483647, %v6984
        %v7083 = vand.u32 2147483647, %v6985
        %v7084 = vand.u32 2147483647, %v6986
        %v7085 = vand.u32 2147483647, %v6987
        %v7086 = vand.u32 2147483647, %v6988
        %v7087 = vand.u32 2147483647, %v6989
        %v7088 = vand.u32 2147483647, %v6990
        %v7089 = vand.u32 2147483647, %v6991
        %v7090 = vand.u32 2147483647, %v6992
        %v7091 = vand.u32 2147483647, %v6993
        %v7092 = vand.u32 2147483647, %v6994
        %v7093 = vand.u32 2147483647, %v6995
        %v7094 = vsub.f32 1.0, %v6996
        %v7095 = vsub.f32 1.0, %v6997
        %v7096 = vsub.f32 1.0, %v6998
        %v7097 = vsub.f32 1.0, %v6999
        %v7098 = vsub.f32 1.0, %v7000
        %v7099 = vsub.f32 1.0, %v7001
        %v7100 = vsub.f32 1.0, %v7002
        %v7101 = vsub.f32 1.0, %v7003
        %v7102 = vsub.f32 1.0, %v7004
        %v7103 = vsub.f32 1.0, %v7005
        %v7104 = vsub.f32 1.0, %v7006
        %v7105 = vsub.f32 1.0, %v7007
        %v7106 = vsub.f32 1.0, %v7008
        %v7107 = vsub.f32 1.0, %v7009
        %v7108 = vsub.f32 1.0, %v7010
        %v7109 = vsub.f32 1.0, %v7011
        %v7110 = vsub.f32 1.0, %v7012
        %v7111 = vsub.f32 1.0, %v7013
        %v7112 = vsub.f32 1.0, %v7014
        %v7113 = vsub.f32 1.0, %v7015
        %v7114 = vsub.f32 1.0, %v7016
        %v7115 = vsub.f32 1.0, %v7017
        %v7116 = vsub.f32 1.0, %v7018
        %v7117 = vsub.f32 1.0, %v7019
        %v7118 = vsub.f32 1.0, %v7020
        %v7119 = vsub.f32 1.0, %v7021
        %v7120 = vsub.f32 1.0, %v7022
        %v7121 = vsub.f32 1.0, %v7023
        %v7122 = vsub.f32 1.0, %v7024
        %v7123 = vsub.f32 1.0, %v7025
        %v7124 = vsub.f32 1.0, %v7026
        %v7125 = vsub.f32 1.0, %v7027
        %v7126 = vsub.f32 1.0, %v7028
        %v7127 = vsub.f32 1.0, %v7029
        %v7128 = vsub.f32 1.0, %v7030
        %v7129 = vsub.f32 1.0, %v7031
        %v7130 = vsub.f32 1.0, %v7032
        %v7131 = vsub.f32 1.0, %v7033
        %v7132 = vsub.f32 1.0, %v7034
        %v7133 = vsub.f32 1.0, %v7035
        %v7134 = vsub.f32 1.0, %v7036
        %v7135 = vsub.f32 1.0, %v7037
        %v7136 = vsub.f32 1.0, %v7038
        %v7137 = vsub.f32 1.0, %v7039
        %v7138 = vsub.f32 1.0, %v7040
        %v7139 = vsub.f32 1.0, %v7041
        %v7140 = vsub.f32 1.0, %v7042
        %v7141 = vsub.f32 1.0, %v7043
        %v7142 = vsub.f32 1.0, %v7044
        %v7143 = vsub.f32 1.0, %v7045
        %v7144 = vsub.f32 1.0, %v7046
        %v7145 = vsub.f32 1.0, %v7047
        %v7146 = vsub.f32 1.0, %v7048
        %v7147 = vsub.f32 1.0, %v7049
        %v7148 = vsub.f32 1.0, %v7050
        %v7149 = vsub.f32 1.0, %v7051
        %v7150 = vsub.f32 1.0, %v7052
        %v7151 = vsub.f32 1.0, %v7053
        %v7152 = vsub.f32 1.0, %v7054
        %v7153 = vsub.f32 1.0, %v7055
        %v7154 = vsub.f32 1.0, %v7056
        %v7155 = vsub.f32 1.0, %v7057
        %v7156 = vsub.f32 1.0, %v7058
        %v7157 = vsub.f32 1.0, %v7059
        %v7158 = vsub.f32 1.0, %v7060
        %v7159 = vsub.f32 1.0, %v7061
        %v7160 = vsub.f32 1.0, %v7062
        %v7161 = vsub.f32 1.0, %v7063
        %v7162 = vsub.f32 1.0, %v7064
        %v7163 = vsub.f32 1.0, %v7065
        %v7164 = vsub.f32 1.0, %v7066
        %v7165 = vsub.f32 1.0, %v7067
        %v7166 = vsub.f32 1.0, %v7068
        %v7167 = vsub.f32 1.0, %v7069
        %v7168 = vsub.f32 1.0, %v7070
        %v7169 = vsub.f32 1.0, %v7071
        %v7170 = vsub.f32 1.0, %v7072
        %v7171 = vsub.f32 1.0, %v7073
        %v7172 = vsub.f32 1.0, %v7074
        %v7173 = vsub.f32 1.0, %v7075
        %v7174 = vsub.f32 1.0, %v7076
        %v7175 = vsub.f32 1.0, %v7077
        %v7176 = vsub.f32 1.0, %v7078
        %v7177 = vsub.f32 1.0, %v7079
        %v7178 = vsub.f32 1.0, %v7080
        %v7179 = vsub.f32 1.0, %v7081
        %v7180 = vsub.f32 1.0, %v7082
        %v7181 = vsub.f32 1.0, %v7083
        %v7182 = vsub.f32 1.0, %v7084
        %v7183 = vsub.f32 1.0, %v7085
        %v7184 = vsub.f32 1.0, %v7086
        %v7185 = vsub.f32 1.0, %v7087
        %v7186 = vsub.f32 1.0, %v7088
        %v7187 = vsub.f32 1.0, %v7089
        %v7188 = vsub.f32 1.0, %v7090
        %v7189 = vsub.f32 1.0, %v7091
        %v7190 = vsub.f32 1.0, %v7092
        %v7191 = vsub.f32 1.0, %v7093
        %v7192 = vmax.f32 %v7094, 0.0
        %v7193 = vmax.f32 %v7095, 0.0
        %v7194 = vmax.f32 %v7096, 0.0
        %v7195 = vmax.f32 %v7097, 0.0
        %v7196 = vmax.f32 %v7098, 0.0
        %v7197 = vmax.f32 %v7099, 0.0
        %v7198 = vmax.f32 %v7100, 0.0
        %v7199 = vmax.f32 %v7101, 0.0
        %v7200 = vmax.f32 %v7102, 0.0
        %v7201 = vmax.f32 %v7103, 0.0
        %v7202 = vmax.f32 %v7104, 0.0
        %v7203 = vmax.f32 %v7105, 0.0
        %v7204 = vmax.f32 %v7106, 0.0
        %v7205 = vmax.f32 %v7107, 0.0
        %v7206 = vmax.f32 %v7108, 0.0
        %v7207 = vmax.f32 %v7109, 0.0
        %v7208 = vmax.f32 %v7110, 0.0
        %v7209 = vmax.f32 %v7111, 0.0
        %v7210 = vmax.f32 %v7112, 0.0
        %v7211 = vmax.f32 %v7113, 0.0
        %v7212 = vmax.f32 %v7114, 0.0
        %v7213 = vmax.f32 %v7115, 0.0
        %v7214 = vmax.f32 %v7116, 0.0
        %v7215 = vmax.f32 %v7117, 0.0
        %v7216 = vmax.f32 %v7118, 0.0
        %v7217 = vmax.f32 %v7119, 0.0
        %v7218 = vmax.f32 %v7120, 0.0
        %v7219 = vmax.f32 %v7121, 0.0
        %v7220 = vmax.f32 %v7122, 0.0
        %v7221 = vmax.f32 %v7123, 0.0
        %v7222 = vmax.f32 %v7124, 0.0
        %v7223 = vmax.f32 %v7125, 0.0
        %v7224 = vmax.f32 %v7126, 0.0
        %v7225 = vmax.f32 %v7127, 0.0
        %v7226 = vmax.f32 %v7128, 0.0
        %v7227 = vmax.f32 %v7129, 0.0
        %v7228 = vmax.f32 %v7130, 0.0
        %v7229 = vmax.f32 %v7131, 0.0
        %v7230 = vmax.f32 %v7132, 0.0
        %v7231 = vmax.f32 %v7133, 0.0
        %v7232 = vmax.f32 %v7134, 0.0
        %v7233 = vmax.f32 %v7135, 0.0
        %v7234 = vmax.f32 %v7136, 0.0
        %v7235 = vmax.f32 %v7137, 0.0
        %v7236 = vmax.f32 %v7138, 0.0
        %v7237 = vmax.f32 %v7139, 0.0
        %v7238 = vmax.f32 %v7140, 0.0
        %v7239 = vmax.f32 %v7141, 0.0
        %v7240 = vmax.f32 %v7142, 0.0
        %v7241 = vmax.f32 %v7143, 0.0
        %v7242 = vmax.f32 %v7144, 0.0
        %v7243 = vmax.f32 %v7145, 0.0
        %v7244 = vmax.f32 %v7146, 0.0
        %v7245 = vmax.f32 %v7147, 0.0
        %v7246 = vmax.f32 %v7148, 0.0
        %v7247 = vmax.f32 %v7149, 0.0
        %v7248 = vmax.f32 %v7150, 0.0
        %v7249 = vmax.f32 %v7151, 0.0
        %v7250 = vmax.f32 %v7152, 0.0
        %v7251 = vmax.f32 %v7153, 0.0
        %v7252 = vmax.f32 %v7154, 0.0
        %v7253 = vmax.f32 %v7155, 0.0
        %v7254 = vmax.f32 %v7156, 0.0
        %v7255 = vmax.f32 %v7157, 0.0
        %v7256 = vmax.f32 %v7158, 0.0
        %v7257 = vmax.f32 %v7159, 0.0
        %v7258 = vmax.f32 %v7160, 0.0
        %v7259 = vmax.f32 %v7161, 0.0
        %v7260 = vmax.f32 %v7162, 0.0
        %v7261 = vmax.f32 %v7163, 0.0
        %v7262 = vmax.f32 %v7164, 0.0
        %v7263 = vmax.f32 %v7165, 0.0
        %v7264 = vmax.f32 %v7166, 0.0
        %v7265 = vmax.f32 %v7167, 0.0
        %v7266 = vmax.f32 %v7168, 0.0
        %v7267 = vmax.f32 %v7169, 0.0
        %v7268 = vmax.f32 %v7170, 0.0
        %v7269 = vmax.f32 %v7171, 0.0
        %v7270 = vmax.f32 %v7172, 0.0
        %v7271 = vmax.f32 %v7173, 0.0
        %v7272 = vmax.f32 %v7174, 0.0
        %v7273 = vmax.f32 %v7175, 0.0
        %v7274 = vmax.f32 %v7176, 0.0
        %v7275 = vmax.f32 %v7177, 0.0
        %v7276 = vmax.f32 %v7178, 0.0
        %v7277 = vmax.f32 %v7179, 0.0
        %v7278 = vmax.f32 %v7180, 0.0
        %v7279 = vmax.f32 %v7181, 0.0
        %v7280 = vmax.f32 %v7182, 0.0
        %v7281 = vmax.f32 %v7183, 0.0
        %v7282 = vmax.f32 %v7184, 0.0
        %v7283 = vmax.f32 %v7185, 0.0
        %v7284 = vmax.f32 %v7186, 0.0
        %v7285 = vmax.f32 %v7187, 0.0
        %v7286 = vmax.f32 %v7188, 0.0
        %v7287 = vmax.f32 %v7189, 0.0
        %v7288 = vmax.f32 %v7190, 0.0
        %v7289 = vmax.f32 %v7191, 0.0
        %v7290 = vmul.f32 %v6408, %v7192
        %v7291 = vmul.f32 %v6409, %v7193
        %v7292 = vmul.f32 %v6410, %v7194
        %v7293 = vmul.f32 %v6411, %v7195
        %v7294 = vmul.f32 %v6412, %v7196
        %v7295 = vmul.f32 %v6413, %v7197
        %v7296 = vmul.f32 %v6414, %v7198
        %v7297 = vmul.f32 %v6415, %v7199
        %v7298 = vmul.f32 %v6416, %v7200
        %v7299 = vmul.f32 %v6417, %v7201
        %v7300 = vmul.f32 %v6418, %v7202
        %v7301 = vmul.f32 %v6419, %v7203
        %v7302 = vmul.f32 %v6420, %v7204
        %v7303 = vmul.f32 %v6421, %v7205
        %v7304 = vmul.f32 %v6422, %v7206
        %v7305 = vmul.f32 %v6423, %v7207
        %v7306 = vmul.f32 %v6424, %v7208
        %v7307 = vmul.f32 %v6425, %v7209
        %v7308 = vmul.f32 %v6426, %v7210
        %v7309 = vmul.f32 %v6427, %v7211
        %v7310 = vmul.f32 %v6428, %v7212
        %v7311 = vmul.f32 %v6429, %v7213
        %v7312 = vmul.f32 %v6430, %v7214
        %v7313 = vmul.f32 %v6431, %v7215
        %v7314 = vmul.f32 %v6432, %v7216
        %v7315 = vmul.f32 %v6433, %v7217
        %v7316 = vmul.f32 %v6434, %v7218
        %v7317 = vmul.f32 %v6435, %v7219
        %v7318 = vmul.f32 %v6436, %v7220
        %v7319 = vmul.f32 %v6437, %v7221
        %v7320 = vmul.f32 %v6438, %v7222
        %v7321 = vmul.f32 %v6439, %v7223
        %v7322 = vmul.f32 %v6440, %v7224
        %v7323 = vmul.f32 %v6441, %v7225
        %v7324 = vmul.f32 %v6442, %v7226
        %v7325 = vmul.f32 %v6443, %v7227
        %v7326 = vmul.f32 %v6444, %v7228
        %v7327 = vmul.f32 %v6445, %v7229
        %v7328 = vmul.f32 %v6446, %v7230
        %v7329 = vmul.f32 %v6447, %v7231
        %v7330 = vmul.f32 %v6448, %v7232
        %v7331 = vmul.f32 %v6449, %v7233
        %v7332 = vmul.f32 %v6450, %v7234
        %v7333 = vmul.f32 %v6451, %v7235
        %v7334 = vmul.f32 %v6452, %v7236
        %v7335 = vmul.f32 %v6453, %v7237
        %v7336 = vmul.f32 %v6454, %v7238
        %v7337 = vmul.f32 %v6455, %v7239
        %v7338 = vmul.f32 %v6456, %v7240
        %v7339 = vmul.f32 %v6457, %v7241
        %v7340 = vmul.f32 %v6458, %v7242
        %v7341 = vmul.f32 %v6459, %v7243
        %v7342 = vmul.f32 %v6460, %v7244
        %v7343 = vmul.f32 %v6461, %v7245
        %v7344 = vmul.f32 %v6462, %v7246
        %v7345 = vmul.f32 %v6463, %v7247
        %v7346 = vmul.f32 %v6464, %v7248
        %v7347 = vmul.f32 %v6465, %v7249
        %v7348 = vmul.f32 %v6466, %v7250
        %v7349 = vmul.f32 %v6467, %v7251
        %v7350 = vmul.f32 %v6468, %v7252
        %v7351 = vmul.f32 %v6469, %v7253
        %v7352 = vmul.f32 %v6470, %v7254
        %v7353 = vmul.f32 %v6471, %v7255
        %v7354 = vmul.f32 %v6472, %v7256
        %v7355 = vmul.f32 %v6473, %v7257
        %v7356 = vmul.f32 %v6474, %v7258
        %v7357 = vmul.f32 %v6475, %v7259
        %v7358 = vmul.f32 %v6476, %v7260
        %v7359 = vmul.f32 %v6477, %v7261
        %v7360 = vmul.f32 %v6478, %v7262
        %v7361 = vmul.f32 %v6479, %v7263
        %v7362 = vmul.f32 %v6480, %v7264
        %v7363 = vmul.f32 %v6481, %v7265
        %v7364 = vmul.f32 %v6482, %v7266
        %v7365 = vmul.f32 %v6483, %v7267
        %v7366 = vmul.f32 %v6484, %v7268
        %v7367 = vmul.f32 %v6485, %v7269
        %v7368 = vmul.f32 %v6486, %v7270
        %v7369 = vmul.f32 %v6487, %v7271
        %v7370 = vmul.f32 %v6488, %v7272
        %v7371 = vmul.f32 %v6489, %v7273
        %v7372 = vmul.f32 %v6490, %v7274
        %v7373 = vmul.f32 %v6491, %v7275
        %v7374 = vmul.f32 %v6492, %v7276
        %v7375 = vmul.f32 %v6493, %v7277
        %v7376 = vmul.f32 %v6494, %v7278
        %v7377 = vmul.f32 %v6495, %v7279
        %v7378 = vmul.f32 %v6496, %v7280
        %v7379 = vmul.f32 %v6497, %v7281
        %v7380 = vmul.f32 %v6498, %v7282
        %v7381 = vmul.f32 %v6499, %v7283
        %v7382 = vmul.f32 %v6500, %v7284
        %v7383 = vmul.f32 %v6501, %v7285
        %v7384 = vmul.f32 %v6502, %v7286
        %v7385 = vmul.f32 %v6503, %v7287
        %v7386 = vmul.f32 %v6504, %v7288
        %v7387 = vmul.f32 %v6505, %v7289
        %v7388 = vadd.f32 %v5624, %v7290
        %v7389 = vadd.f32 %v5625, %v7291
        %v7390 = vadd.f32 %v5626, %v7292
        %v7391 = vadd.f32 %v5627, %v7293
        %v7392 = vadd.f32 %v5628, %v7294
        %v7393 = vadd.f32 %v5629, %v7295
        %v7394 = vadd.f32 %v5630, %v7296
        %v7395 = vadd.f32 %v5631, %v7297
        %v7396 = vadd.f32 %v5632, %v7298
        %v7397 = vadd.f32 %v5633, %v7299
        %v7398 = vadd.f32 %v5634, %v7300
        %v7399 = vadd.f32 %v5635, %v7301
        %v7400 = vadd.f32 %v5636, %v7302
        %v7401 = vadd.f32 %v5637, %v7303
        %v7402 = vadd.f32 %v5638, %v7304
        %v7403 = vadd.f32 %v5639, %v7305
        %v7404 = vadd.f32 %v5640, %v7306
        %v7405 = vadd.f32 %v5641, %v7307
        %v7406 = vadd.f32 %v5642, %v7308
        %v7407 = vadd.f32 %v5643, %v7309
        %v7408 = vadd.f32 %v5644, %v7310
        %v7409 = vadd.f32 %v5645, %v7311
        %v7410 = vadd.f32 %v5646, %v7312
        %v7411 = vadd.f32 %v5647, %v7313
        %v7412 = vadd.f32 %v5648, %v7314
        %v7413 = vadd.f32 %v5649, %v7315
        %v7414 = vadd.f32 %v5650, %v7316
        %v7415 = vadd.f32 %v5651, %v7317
        %v7416 = vadd.f32 %v5652, %v7318
        %v7417 = vadd.f32 %v5653, %v7319
        %v7418 = vadd.f32 %v5654, %v7320
        %v7419 = vadd.f32 %v5655, %v7321
        %v7420 = vadd.f32 %v5656, %v7322
        %v7421 = vadd.f32 %v5657, %v7323
        %v7422 = vadd.f32 %v5658, %v7324
        %v7423 = vadd.f32 %v5659, %v7325
        %v7424 = vadd.f32 %v5660, %v7326
        %v7425 = vadd.f32 %v5661, %v7327
        %v7426 = vadd.f32 %v5662, %v7328
        %v7427 = vadd.f32 %v5663, %v7329
        %v7428 = vadd.f32 %v5664, %v7330
        %v7429 = vadd.f32 %v5665, %v7331
        %v7430 = vadd.f32 %v5666, %v7332
        %v7431 = vadd.f32 %v5667, %v7333
        %v7432 = vadd.f32 %v5668, %v7334
        %v7433 = vadd.f32 %v5669, %v7335
        %v7434 = vadd.f32 %v5670, %v7336
        %v7435 = vadd.f32 %v5671, %v7337
        %v7436 = vadd.f32 %v5672, %v7338
        %v7437 = vadd.f32 %v5673, %v7339
        %v7438 = vadd.f32 %v5674, %v7340
        %v7439 = vadd.f32 %v5675, %v7341
        %v7440 = vadd.f32 %v5676, %v7342
        %v7441 = vadd.f32 %v5677, %v7343
        %v7442 = vadd.f32 %v5678, %v7344
        %v7443 = vadd.f32 %v5679, %v7345
        %v7444 = vadd.f32 %v5680, %v7346
        %v7445 = vadd.f32 %v5681, %v7347
        %v7446 = vadd.f32 %v5682, %v7348
        %v7447 = vadd.f32 %v5683, %v7349
        %v7448 = vadd.f32 %v5684, %v7350
        %v7449 = vadd.f32 %v5685, %v7351
        %v7450 = vadd.f32 %v5686, %v7352
        %v7451 = vadd.f32 %v5687, %v7353
        %v7452 = vadd.f32 %v5688, %v7354
        %v7453 = vadd.f32 %v5689, %v7355
        %v7454 = vadd.f32 %v5690, %v7356
        %v7455 = vadd.f32 %v5691, %v7357
        %v7456 = vadd.f32 %v5692, %v7358
        %v7457 = vadd.f32 %v5693, %v7359
        %v7458 = vadd.f32 %v5694, %v7360
        %v7459 = vadd.f32 %v5695, %v7361
        %v7460 = vadd.f32 %v5696, %v7362
        %v7461 = vadd.f32 %v5697, %v7363
        %v7462 = vadd.f32 %v5698, %v7364
        %v7463 = vadd.f32 %v5699, %v7365
        %v7464 = vadd.f32 %v5700, %v7366
        %v7465 = vadd.f32 %v5701, %v7367
        %v7466 = vadd.f32 %v5702, %v7368
        %v7467 = vadd.f32 %v5703, %v7369
        %v7468 = vadd.f32 %v5704, %v7370
        %v7469 = vadd.f32 %v5705, %v7371
        %v7470 = vadd.f32 %v5706, %v7372
        %v7471 = vadd.f32 %v5707, %v7373
        %v7472 = vadd.f32 %v5708, %v7374
        %v7473 = vadd.f32 %v5709, %v7375
        %v7474 = vadd.f32 %v5710, %v7376
        %v7475 = vadd.f32 %v5711, %v7377
        %v7476 = vadd.f32 %v5712, %v7378
        %v7477 = vadd.f32 %v5713, %v7379
        %v7478 = vadd.f32 %v5714, %v7380
        %v7479 = vadd.f32 %v5715, %v7381
        %v7480 = vadd.f32 %v5716, %v7382
        %v7481 = vadd.f32 %v5717, %v7383
        %v7482 = vadd.f32 %v5718, %v7384
        %v7483 = vadd.f32 %v5719, %v7385
        %v7484 = vadd.f32 %v5720, %v7386
        %v7485 = vadd.f32 %v5721, %v7387
        %v7486 = vpack.c.bf16 %v7389, %v7388
        %v7487 = vpack.c.bf16 %v7391, %v7390
        %v7488 = vpack.c.bf16 %v7393, %v7392
        %v7489 = vpack.c.bf16 %v7395, %v7394
        %v7490 = vpack.c.bf16 %v7397, %v7396
        %v7491 = vpack.c.bf16 %v7399, %v7398
        %v7492 = vpack.c.bf16 %v7401, %v7400
        %v7493 = vpack.c.bf16 %v7403, %v7402
        %v7494 = vpack.c.bf16 %v7405, %v7404
        %v7495 = vpack.c.bf16 %v7407, %v7406
        %v7496 = vpack.c.bf16 %v7409, %v7408
        %v7497 = vpack.c.bf16 %v7411, %v7410
        %v7498 = vpack.c.bf16 %v7413, %v7412
        %v7499 = vpack.c.bf16 %v7415, %v7414
        %v7500 = vpack.c.bf16 %v7417, %v7416
        %v7501 = vpack.c.bf16 %v7419, %v7418
        %v7502 = vpack.c.bf16 %v7421, %v7420
        %v7503 = vpack.c.bf16 %v7423, %v7422
        %v7504 = vpack.c.bf16 %v7425, %v7424
        %v7505 = vpack.c.bf16 %v7427, %v7426
        %v7506 = vpack.c.bf16 %v7429, %v7428
        %v7507 = vpack.c.bf16 %v7431, %v7430
        %v7508 = vpack.c.bf16 %v7433, %v7432
        %v7509 = vpack.c.bf16 %v7435, %v7434
        %v7510 = vpack.c.bf16 %v7437, %v7436
        %v7511 = vpack.c.bf16 %v7439, %v7438
        %v7512 = vpack.c.bf16 %v7441, %v7440
        %v7513 = vpack.c.bf16 %v7443, %v7442
        %v7514 = vpack.c.bf16 %v7445, %v7444
        %v7515 = vpack.c.bf16 %v7447, %v7446
        %v7516 = vpack.c.bf16 %v7449, %v7448
        %v7517 = vpack.c.bf16 %v7451, %v7450
        %v7518 = vpack.c.bf16 %v7453, %v7452
        %v7519 = vpack.c.bf16 %v7455, %v7454
        %v7520 = vpack.c.bf16 %v7457, %v7456
        %v7521 = vpack.c.bf16 %v7459, %v7458
        %v7522 = vpack.c.bf16 %v7461, %v7460
        %v7523 = vpack.c.bf16 %v7463, %v7462
        %v7524 = vpack.c.bf16 %v7465, %v7464
        %v7525 = vpack.c.bf16 %v7467, %v7466
        %v7526 = vpack.c.bf16 %v7469, %v7468
        %v7527 = vpack.c.bf16 %v7471, %v7470
        %v7528 = vpack.c.bf16 %v7473, %v7472
        %v7529 = vpack.c.bf16 %v7475, %v7474
        %v7530 = vpack.c.bf16 %v7477, %v7476
        %v7531 = vpack.c.bf16 %v7479, %v7478
        %v7532 = vpack.c.bf16 %v7481, %v7480
        %v7533 = vpack.c.bf16 %v7483, %v7482
        %v7534 = vpack.c.bf16 %v7485, %v7484
        %v7535 = vld [vmem:[%s304] sm:$0xf]
        %v7536 = vld [vmem:[%s304 + $0x4] sm:$0xf]
        %v7537 = vld [vmem:[%s304 + $0x8] sm:$0xf]
        %v7538 = vld [vmem:[%s304 + $0xc] sm:$0xf]
        %v7539 = vld [vmem:[%s304 + $0x10] sm:$0xf]
        %v7540 = vld [vmem:[%s304 + $0x14] sm:$0xf]
        %v7541 = vld [vmem:[%s304 + $0x18] sm:$0xf]
        %v7542 = vld [vmem:[%s304 + $0x1c] sm:$0xf]
        %v7543 = vld [vmem:[%s304 + $0x20] sm:$0xf]
        %v7544 = vld [vmem:[%s304 + $0x24] sm:$0xf]
        %v7545 = vld [vmem:[%s304 + $0x28] sm:$0xf]
        %v7546 = vld [vmem:[%s304 + $0x2c] sm:$0xf]
        %v7547 = vld [vmem:[%s304 + $0x30] sm:$0xf]
        %v7548 = vld [vmem:[%s304 + $0x34] sm:$0xf]
        %v7549 = vld [vmem:[%s304 + $0x38] sm:$0xf]
        %v7550 = vld [vmem:[%s304 + $0x3c] sm:$0xf]
        %v7567 = vunpack.c.l.b16 %v7535
        %v7568 = vunpack.c.l.b16 %v7536
        %v7569 = vunpack.c.l.b16 %v7537
        %v7570 = vunpack.c.l.b16 %v7538
        %v7571 = vunpack.c.l.b16 %v7539
        %v7572 = vunpack.c.l.b16 %v7540
        %v7573 = vunpack.c.l.b16 %v7541
        %v7574 = vunpack.c.l.b16 %v7542
        %v7575 = vunpack.c.l.b16 %v7543
        %v7576 = vunpack.c.l.b16 %v7544
        %v7577 = vunpack.c.l.b16 %v7545
        %v7578 = vunpack.c.l.b16 %v7546
        %v7579 = vunpack.c.l.b16 %v7547
        %v7580 = vunpack.c.l.b16 %v7548
        %v7581 = vunpack.c.l.b16 %v7549
        %v7582 = vunpack.c.l.b16 %v7550
        %v7583 = vpack.c.b16 %v7568, %v7567
        %v7584 = vpack.c.b16 %v7570, %v7569
        %v7585 = vpack.c.b16 %v7572, %v7571
        %v7586 = vpack.c.b16 %v7574, %v7573
        %v7587 = vpack.c.b16 %v7576, %v7575
        %v7588 = vpack.c.b16 %v7578, %v7577
        %v7589 = vpack.c.b16 %v7580, %v7579
        %v7590 = vpack.c.b16 %v7582, %v7581
        %7599 = vmatprep.subr.bf16.mxu0 0
        %7600 = vmatpush1.bf16.msra.mxu0 %v7590
        %7601 = vmatprep.subr.bf16.mxu0 0
        %7602 = vmatpush1.bf16.msra.mxu0 %v7589
        %7603 = vmatprep.subr.bf16.mxu0 0
        %7604 = vmatpush1.bf16.msra.mxu0 %v7588
        %7605 = vmatprep.subr.bf16.mxu0 0
        %7606 = vmatpush1.bf16.msra.mxu0 %v7587
        %7607 = vmatprep.subr.bf16.mxu0 0
        %7608 = vmatpush1.bf16.msra.mxu0 %v7586
        %7609 = vmatprep.subr.bf16.mxu0 0
        %7610 = vmatpush1.bf16.msra.mxu0 %v7585
        %7611 = vmatprep.subr.bf16.mxu0 0
        %7612 = vmatpush1.bf16.msra.mxu0 %v7584
        %7613 = vmatprep.subr.bf16.mxu0 0
        %7614 = vmatpush1.bf16.msra.mxu0 %v7583
        %7615 = vmatprep.subr.bf16.mxu0 0
        %7616 = vmatpush2.bf16.msra.mxu0 0
        %7617 = vmatprep.subr.bf16.mxu0 0
        %7618 = vmatpush2.bf16.msra.mxu0 0
        %7619 = vmatprep.subr.bf16.mxu0 0
        %7620 = vmatpush2.bf16.msra.mxu0 0
        %7621 = vmatprep.subr.bf16.mxu0 0
        %7622 = vmatpush2.bf16.msra.mxu0 0
        %7623 = vmatprep.subr.bf16.mxu0 0
        %7624 = vmatpush2.bf16.msra.mxu0 0
        %7625 = vmatprep.subr.bf16.mxu0 0
        %7626 = vmatpush2.bf16.msra.mxu0 0
        %7627 = vmatprep.subr.bf16.mxu0 0
        %7628 = vmatpush2.bf16.msra.mxu0 0
        %7629 = vmatprep.subr.bf16.mxu0 0
        %7630 = vmatpush2.bf16.msra.mxu0 0
        %7631 = vmatprep.mubr.bf16.mxu0 0
        %7632 = vmatmul.mubr.bf16.gmra.mxu0 %v7486
        %v7633 = vpop.f32.mrf.mxu0
        %v7634 = vadd.f32 0.0, %v7633
        %v7635 = vpop.f32.mrf.mxu0
        %v7636 = vpop.f32.mrf.mxu0
        %v7637 = vadd.f32 0.0, %v7636
        %v7638 = vpop.f32.mrf.mxu0
        %7639 = vmatprep.mubr.bf16.mxu0 0
        %7640 = vmatmul.mubr.bf16.gmra.mxu0 %v7487
        %v7641 = vpop.f32.mrf.mxu0
        %v7642 = vadd.f32 0.0, %v7641
        %v7643 = vpop.f32.mrf.mxu0
        %v7644 = vpop.f32.mrf.mxu0
        %v7645 = vadd.f32 0.0, %v7644
        %v7646 = vpop.f32.mrf.mxu0
        %7647 = vmatprep.mubr.bf16.mxu0 0
        %7648 = vmatmul.mubr.bf16.gmra.mxu0 %v7488
        %v7649 = vpop.f32.mrf.mxu0
        %v7650 = vadd.f32 0.0, %v7649
        %v7651 = vpop.f32.mrf.mxu0
        %v7652 = vpop.f32.mrf.mxu0
        %v7653 = vadd.f32 0.0, %v7652
        %v7654 = vpop.f32.mrf.mxu0
        %7655 = vmatprep.mubr.bf16.mxu0 0
        %7656 = vmatmul.mubr.bf16.gmra.mxu0 %v7489
        %v7657 = vpop.f32.mrf.mxu0
        %v7658 = vadd.f32 0.0, %v7657
        %v7659 = vpop.f32.mrf.mxu0
        %v7660 = vpop.f32.mrf.mxu0
        %v7661 = vadd.f32 0.0, %v7660
        %v7662 = vpop.f32.mrf.mxu0
        %7663 = vmatprep.mubr.bf16.mxu0 0
        %7664 = vmatmul.mubr.bf16.gmra.mxu0 %v7490
        %v7665 = vpop.f32.mrf.mxu0
        %v7666 = vadd.f32 0.0, %v7665
        %v7667 = vpop.f32.mrf.mxu0
        %v7668 = vpop.f32.mrf.mxu0
        %v7669 = vadd.f32 0.0, %v7668
        %v7670 = vpop.f32.mrf.mxu0
        %7671 = vmatprep.mubr.bf16.mxu0 0
        %7672 = vmatmul.mubr.bf16.gmra.mxu0 %v7491
        %v7673 = vpop.f32.mrf.mxu0
        %v7674 = vadd.f32 0.0, %v7673
        %v7675 = vpop.f32.mrf.mxu0
        %v7676 = vpop.f32.mrf.mxu0
        %v7677 = vadd.f32 0.0, %v7676
        %v7678 = vpop.f32.mrf.mxu0
        %7679 = vmatprep.mubr.bf16.mxu0 0
        %7680 = vmatmul.mubr.bf16.gmra.mxu0 %v7492
        %v7681 = vpop.f32.mrf.mxu0
        %v7682 = vadd.f32 0.0, %v7681
        %v7683 = vpop.f32.mrf.mxu0
        %v7684 = vpop.f32.mrf.mxu0
        %v7685 = vadd.f32 0.0, %v7684
        %v7686 = vpop.f32.mrf.mxu0
        %7687 = vmatprep.mubr.bf16.mxu0 0
        %7688 = vmatmul.mubr.bf16.gmra.mxu0 %v7493
        %v7689 = vpop.f32.mrf.mxu0
        %v7690 = vadd.f32 0.0, %v7689
        %v7691 = vpop.f32.mrf.mxu0
        %v7692 = vpop.f32.mrf.mxu0
        %v7693 = vadd.f32 0.0, %v7692
        %v7694 = vpop.f32.mrf.mxu0
        %7695 = vmatprep.mubr.bf16.mxu0 0
        %7696 = vmatmul.mubr.bf16.gmra.mxu0 %v7494
        %v7697 = vpop.f32.mrf.mxu0
        %v7698 = vadd.f32 0.0, %v7697
        %v7699 = vpop.f32.mrf.mxu0
        %v7700 = vpop.f32.mrf.mxu0
        %v7701 = vadd.f32 0.0, %v7700
        %v7702 = vpop.f32.mrf.mxu0
        %7703 = vmatprep.mubr.bf16.mxu0 0
        %7704 = vmatmul.mubr.bf16.gmra.mxu0 %v7495
        %v7705 = vpop.f32.mrf.mxu0
        %v7706 = vadd.f32 0.0, %v7705
        %v7707 = vpop.f32.mrf.mxu0
        %v7708 = vpop.f32.mrf.mxu0
        %v7709 = vadd.f32 0.0, %v7708
        %v7710 = vpop.f32.mrf.mxu0
        %7711 = vmatprep.mubr.bf16.mxu0 0
        %7712 = vmatmul.mubr.bf16.gmra.mxu0 %v7496
        %v7713 = vpop.f32.mrf.mxu0
        %v7714 = vadd.f32 0.0, %v7713
        %v7715 = vpop.f32.mrf.mxu0
        %v7716 = vpop.f32.mrf.mxu0
        %v7717 = vadd.f32 0.0, %v7716
        %v7718 = vpop.f32.mrf.mxu0
        %7719 = vmatprep.mubr.bf16.mxu0 0
        %7720 = vmatmul.mubr.bf16.gmra.mxu0 %v7497
        %v7721 = vpop.f32.mrf.mxu0
        %v7722 = vadd.f32 0.0, %v7721
        %v7723 = vpop.f32.mrf.mxu0
        %v7724 = vpop.f32.mrf.mxu0
        %v7725 = vadd.f32 0.0, %v7724
        %v7726 = vpop.f32.mrf.mxu0
        %7727 = vmatprep.mubr.bf16.mxu0 0
        %7728 = vmatmul.mubr.bf16.gmra.mxu0 %v7498
        %v7729 = vpop.f32.mrf.mxu0
        %v7730 = vadd.f32 0.0, %v7729
        %v7731 = vpop.f32.mrf.mxu0
        %v7732 = vpop.f32.mrf.mxu0
        %v7733 = vadd.f32 0.0, %v7732
        %v7734 = vpop.f32.mrf.mxu0
        %7735 = vmatprep.mubr.bf16.mxu0 0
        %7736 = vmatmul.mubr.bf16.gmra.mxu0 %v7499
        %v7737 = vpop.f32.mrf.mxu0
        %v7738 = vadd.f32 0.0, %v7737
        %v7739 = vpop.f32.mrf.mxu0
        %v7740 = vpop.f32.mrf.mxu0
        %v7741 = vadd.f32 0.0, %v7740
        %v7742 = vpop.f32.mrf.mxu0
        %7743 = vmatprep.mubr.bf16.mxu0 0
        %7744 = vmatmul.mubr.bf16.gmra.mxu0 %v7500
        %v7745 = vpop.f32.mrf.mxu0
        %v7746 = vadd.f32 0.0, %v7745
        %v7747 = vpop.f32.mrf.mxu0
        %v7748 = vpop.f32.mrf.mxu0
        %v7749 = vadd.f32 0.0, %v7748
        %v7750 = vpop.f32.mrf.mxu0
        %7751 = vmatprep.mubr.bf16.mxu0 0
        %7752 = vmatmul.mubr.bf16.gmra.mxu0 %v7501
        %v7753 = vpop.f32.mrf.mxu0
        %v7754 = vadd.f32 0.0, %v7753
        %v7755 = vpop.f32.mrf.mxu0
        %v7756 = vpop.f32.mrf.mxu0
        %v7757 = vadd.f32 0.0, %v7756
        %v7758 = vpop.f32.mrf.mxu0
        %7759 = vmatprep.mubr.bf16.mxu0 0
        %7760 = vmatmul.mubr.bf16.gmra.mxu0 %v7502
        %v7761 = vpop.f32.mrf.mxu0
        %v7762 = vadd.f32 0.0, %v7761
        %v7763 = vpop.f32.mrf.mxu0
        %v7764 = vpop.f32.mrf.mxu0
        %v7765 = vadd.f32 0.0, %v7764
        %v7766 = vpop.f32.mrf.mxu0
        %7767 = vmatprep.mubr.bf16.mxu0 0
        %7768 = vmatmul.mubr.bf16.gmra.mxu0 %v7503
        %v7769 = vpop.f32.mrf.mxu0
        %v7770 = vadd.f32 0.0, %v7769
        %v7771 = vpop.f32.mrf.mxu0
        %v7772 = vpop.f32.mrf.mxu0
        %v7773 = vadd.f32 0.0, %v7772
        %v7774 = vpop.f32.mrf.mxu0
        %7775 = vmatprep.mubr.bf16.mxu0 0
        %7776 = vmatmul.mubr.bf16.gmra.mxu0 %v7504
        %v7777 = vpop.f32.mrf.mxu0
        %v7778 = vadd.f32 0.0, %v7777
        %v7779 = vpop.f32.mrf.mxu0
        %v7780 = vpop.f32.mrf.mxu0
        %v7781 = vadd.f32 0.0, %v7780
        %v7782 = vpop.f32.mrf.mxu0
        %7783 = vmatprep.mubr.bf16.mxu0 0
        %7784 = vmatmul.mubr.bf16.gmra.mxu0 %v7505
        %v7785 = vpop.f32.mrf.mxu0
        %v7786 = vadd.f32 0.0, %v7785
        %v7787 = vpop.f32.mrf.mxu0
        %v7788 = vpop.f32.mrf.mxu0
        %v7789 = vadd.f32 0.0, %v7788
        %v7790 = vpop.f32.mrf.mxu0
        %7791 = vmatprep.mubr.bf16.mxu0 0
        %7792 = vmatmul.mubr.bf16.gmra.mxu0 %v7506
        %v7793 = vpop.f32.mrf.mxu0
        %v7794 = vadd.f32 0.0, %v7793
        %v7795 = vpop.f32.mrf.mxu0
        %v7796 = vpop.f32.mrf.mxu0
        %v7797 = vadd.f32 0.0, %v7796
        %v7798 = vpop.f32.mrf.mxu0
        %7799 = vmatprep.mubr.bf16.mxu0 0
        %7800 = vmatmul.mubr.bf16.gmra.mxu0 %v7507
        %v7801 = vpop.f32.mrf.mxu0
        %v7802 = vadd.f32 0.0, %v7801
        %v7803 = vpop.f32.mrf.mxu0
        %v7804 = vpop.f32.mrf.mxu0
        %v7805 = vadd.f32 0.0, %v7804
        %v7806 = vpop.f32.mrf.mxu0
        %7807 = vmatprep.mubr.bf16.mxu0 0
        %7808 = vmatmul.mubr.bf16.gmra.mxu0 %v7508
        %v7809 = vpop.f32.mrf.mxu0
        %v7810 = vadd.f32 0.0, %v7809
        %v7811 = vpop.f32.mrf.mxu0
        %v7812 = vpop.f32.mrf.mxu0
        %v7813 = vadd.f32 0.0, %v7812
        %v7814 = vpop.f32.mrf.mxu0
        %7815 = vmatprep.mubr.bf16.mxu0 0
        %7816 = vmatmul.mubr.bf16.gmra.mxu0 %v7509
        %v7817 = vpop.f32.mrf.mxu0
        %v7818 = vadd.f32 0.0, %v7817
        %v7819 = vpop.f32.mrf.mxu0
        %v7820 = vpop.f32.mrf.mxu0
        %v7821 = vadd.f32 0.0, %v7820
        %v7822 = vpop.f32.mrf.mxu0
        %7823 = vmatprep.mubr.bf16.mxu0 0
        %7824 = vmatmul.mubr.bf16.gmra.mxu0 %v7510
        %v7825 = vpop.f32.mrf.mxu0
        %v7826 = vadd.f32 0.0, %v7825
        %v7827 = vpop.f32.mrf.mxu0
        %v7828 = vpop.f32.mrf.mxu0
        %v7829 = vadd.f32 0.0, %v7828
        %v7830 = vpop.f32.mrf.mxu0
        %7831 = vmatprep.mubr.bf16.mxu0 0
        %7832 = vmatmul.mubr.bf16.gmra.mxu0 %v7511
        %v7833 = vpop.f32.mrf.mxu0
        %v7834 = vadd.f32 0.0, %v7833
        %v7835 = vpop.f32.mrf.mxu0
        %v7836 = vpop.f32.mrf.mxu0
        %v7837 = vadd.f32 0.0, %v7836
        %v7838 = vpop.f32.mrf.mxu0
        %7839 = vmatprep.mubr.bf16.mxu0 0
        %7840 = vmatmul.mubr.bf16.gmra.mxu0 %v7512
        %v7841 = vpop.f32.mrf.mxu0
        %v7842 = vadd.f32 0.0, %v7841
        %v7843 = vpop.f32.mrf.mxu0
        %v7844 = vpop.f32.mrf.mxu0
        %v7845 = vadd.f32 0.0, %v7844
        %v7846 = vpop.f32.mrf.mxu0
        %7847 = vmatprep.mubr.bf16.mxu0 0
        %7848 = vmatmul.mubr.bf16.gmra.mxu0 %v7513
        %v7849 = vpop.f32.mrf.mxu0
        %v7850 = vadd.f32 0.0, %v7849
        %v7851 = vpop.f32.mrf.mxu0
        %v7852 = vpop.f32.mrf.mxu0
        %v7853 = vadd.f32 0.0, %v7852
        %v7854 = vpop.f32.mrf.mxu0
        %7855 = vmatprep.mubr.bf16.mxu0 0
        %7856 = vmatmul.mubr.bf16.gmra.mxu0 %v7514
        %v7857 = vpop.f32.mrf.mxu0
        %v7858 = vadd.f32 0.0, %v7857
        %v7859 = vpop.f32.mrf.mxu0
        %v7860 = vpop.f32.mrf.mxu0
        %v7861 = vadd.f32 0.0, %v7860
        %v7862 = vpop.f32.mrf.mxu0
        %7863 = vmatprep.mubr.bf16.mxu0 0
        %7864 = vmatmul.mubr.bf16.gmra.mxu0 %v7515
        %v7865 = vpop.f32.mrf.mxu0
        %v7866 = vadd.f32 0.0, %v7865
        %v7867 = vpop.f32.mrf.mxu0
        %v7868 = vpop.f32.mrf.mxu0
        %v7869 = vadd.f32 0.0, %v7868
        %v7870 = vpop.f32.mrf.mxu0
        %7871 = vmatprep.mubr.bf16.mxu0 0
        %7872 = vmatmul.mubr.bf16.gmra.mxu0 %v7516
        %v7873 = vpop.f32.mrf.mxu0
        %v7874 = vadd.f32 0.0, %v7873
        %v7875 = vpop.f32.mrf.mxu0
        %v7876 = vpop.f32.mrf.mxu0
        %v7877 = vadd.f32 0.0, %v7876
        %v7878 = vpop.f32.mrf.mxu0
        %7879 = vmatprep.mubr.bf16.mxu0 0
        %7880 = vmatmul.mubr.bf16.gmra.mxu0 %v7517
        %v7881 = vpop.f32.mrf.mxu0
        %v7882 = vadd.f32 0.0, %v7881
        %v7883 = vpop.f32.mrf.mxu0
        %v7884 = vpop.f32.mrf.mxu0
        %v7885 = vadd.f32 0.0, %v7884
        %v7886 = vpop.f32.mrf.mxu0
        %7887 = vmatprep.mubr.bf16.mxu0 0
        %7888 = vmatmul.mubr.bf16.gmra.mxu0 %v7518
        %v7889 = vpop.f32.mrf.mxu0
        %v7890 = vadd.f32 0.0, %v7889
        %v7891 = vpop.f32.mrf.mxu0
        %v7892 = vpop.f32.mrf.mxu0
        %v7893 = vadd.f32 0.0, %v7892
        %v7894 = vpop.f32.mrf.mxu0
        %7895 = vmatprep.mubr.bf16.mxu0 0
        %7896 = vmatmul.mubr.bf16.gmra.mxu0 %v7519
        %v7897 = vpop.f32.mrf.mxu0
        %v7898 = vadd.f32 0.0, %v7897
        %v7899 = vpop.f32.mrf.mxu0
        %v7900 = vpop.f32.mrf.mxu0
        %v7901 = vadd.f32 0.0, %v7900
        %v7902 = vpop.f32.mrf.mxu0
        %7903 = vmatprep.mubr.bf16.mxu0 0
        %7904 = vmatmul.mubr.bf16.gmra.mxu0 %v7520
        %v7905 = vpop.f32.mrf.mxu0
        %v7906 = vadd.f32 0.0, %v7905
        %v7907 = vpop.f32.mrf.mxu0
        %v7908 = vpop.f32.mrf.mxu0
        %v7909 = vadd.f32 0.0, %v7908
        %v7910 = vpop.f32.mrf.mxu0
        %7911 = vmatprep.mubr.bf16.mxu0 0
        %7912 = vmatmul.mubr.bf16.gmra.mxu0 %v7521
        %v7913 = vpop.f32.mrf.mxu0
        %v7914 = vadd.f32 0.0, %v7913
        %v7915 = vpop.f32.mrf.mxu0
        %v7916 = vpop.f32.mrf.mxu0
        %v7917 = vadd.f32 0.0, %v7916
        %v7918 = vpop.f32.mrf.mxu0
        %7919 = vmatprep.mubr.bf16.mxu0 0
        %7920 = vmatmul.mubr.bf16.gmra.mxu0 %v7522
        %v7921 = vpop.f32.mrf.mxu0
        %v7922 = vadd.f32 0.0, %v7921
        %v7923 = vpop.f32.mrf.mxu0
        %v7924 = vpop.f32.mrf.mxu0
        %v7925 = vadd.f32 0.0, %v7924
        %v7926 = vpop.f32.mrf.mxu0
        %7927 = vmatprep.mubr.bf16.mxu0 0
        %7928 = vmatmul.mubr.bf16.gmra.mxu0 %v7523
        %v7929 = vpop.f32.mrf.mxu0
        %v7930 = vadd.f32 0.0, %v7929
        %v7931 = vpop.f32.mrf.mxu0
        %v7932 = vpop.f32.mrf.mxu0
        %v7933 = vadd.f32 0.0, %v7932
        %v7934 = vpop.f32.mrf.mxu0
        %7935 = vmatprep.mubr.bf16.mxu0 0
        %7936 = vmatmul.mubr.bf16.gmra.mxu0 %v7524
        %v7937 = vpop.f32.mrf.mxu0
        %v7938 = vadd.f32 0.0, %v7937
        %v7939 = vpop.f32.mrf.mxu0
        %v7940 = vpop.f32.mrf.mxu0
        %v7941 = vadd.f32 0.0, %v7940
        %v7942 = vpop.f32.mrf.mxu0
        %7943 = vmatprep.mubr.bf16.mxu0 0
        %7944 = vmatmul.mubr.bf16.gmra.mxu0 %v7525
        %v7945 = vpop.f32.mrf.mxu0
        %v7946 = vadd.f32 0.0, %v7945
        %v7947 = vpop.f32.mrf.mxu0
        %v7948 = vpop.f32.mrf.mxu0
        %v7949 = vadd.f32 0.0, %v7948
        %v7950 = vpop.f32.mrf.mxu0
        %7951 = vmatprep.mubr.bf16.mxu0 0
        %7952 = vmatmul.mubr.bf16.gmra.mxu0 %v7526
        %v7953 = vpop.f32.mrf.mxu0
        %v7954 = vadd.f32 0.0, %v7953
        %v7955 = vpop.f32.mrf.mxu0
        %v7956 = vpop.f32.mrf.mxu0
        %v7957 = vadd.f32 0.0, %v7956
        %v7958 = vpop.f32.mrf.mxu0
        %7959 = vmatprep.mubr.bf16.mxu0 0
        %7960 = vmatmul.mubr.bf16.gmra.mxu0 %v7527
        %v7961 = vpop.f32.mrf.mxu0
        %v7962 = vadd.f32 0.0, %v7961
        %v7963 = vpop.f32.mrf.mxu0
        %v7964 = vpop.f32.mrf.mxu0
        %v7965 = vadd.f32 0.0, %v7964
        %v7966 = vpop.f32.mrf.mxu0
        %7967 = vmatprep.mubr.bf16.mxu0 0
        %7968 = vmatmul.mubr.bf16.gmra.mxu0 %v7528
        %v7969 = vpop.f32.mrf.mxu0
        %v7970 = vadd.f32 0.0, %v7969
        %v7971 = vpop.f32.mrf.mxu0
        %v7972 = vpop.f32.mrf.mxu0
        %v7973 = vadd.f32 0.0, %v7972
        %v7974 = vpop.f32.mrf.mxu0
        %7975 = vmatprep.mubr.bf16.mxu0 0
        %7976 = vmatmul.mubr.bf16.gmra.mxu0 %v7529
        %v7977 = vpop.f32.mrf.mxu0
        %v7978 = vadd.f32 0.0, %v7977
        %v7979 = vpop.f32.mrf.mxu0
        %v7980 = vpop.f32.mrf.mxu0
        %v7981 = vadd.f32 0.0, %v7980
        %v7982 = vpop.f32.mrf.mxu0
        %7983 = vmatprep.mubr.bf16.mxu0 0
        %7984 = vmatmul.mubr.bf16.gmra.mxu0 %v7530
        %v7985 = vpop.f32.mrf.mxu0
        %v7986 = vadd.f32 0.0, %v7985
        %v7987 = vpop.f32.mrf.mxu0
        %v7988 = vpop.f32.mrf.mxu0
        %v7989 = vadd.f32 0.0, %v7988
        %v7990 = vpop.f32.mrf.mxu0
        %7991 = vmatprep.mubr.bf16.mxu0 0
        %7992 = vmatmul.mubr.bf16.gmra.mxu0 %v7531
        %v7993 = vpop.f32.mrf.mxu0
        %v7994 = vadd.f32 0.0, %v7993
        %v7995 = vpop.f32.mrf.mxu0
        %v7996 = vpop.f32.mrf.mxu0
        %v7997 = vadd.f32 0.0, %v7996
        %v7998 = vpop.f32.mrf.mxu0
        %7999 = vmatprep.mubr.bf16.mxu0 0
        %8000 = vmatmul.mubr.bf16.gmra.mxu0 %v7532
        %v8001 = vpop.f32.mrf.mxu0
        %v8002 = vadd.f32 0.0, %v8001
        %v8003 = vpop.f32.mrf.mxu0
        %v8004 = vpop.f32.mrf.mxu0
        %v8005 = vadd.f32 0.0, %v8004
        %v8006 = vpop.f32.mrf.mxu0
        %8007 = vmatprep.mubr.bf16.mxu0 0
        %8008 = vmatmul.mubr.bf16.gmra.mxu0 %v7533
        %v8009 = vpop.f32.mrf.mxu0
        %v8010 = vadd.f32 0.0, %v8009
        %v8011 = vpop.f32.mrf.mxu0
        %v8012 = vpop.f32.mrf.mxu0
        %v8013 = vadd.f32 0.0, %v8012
        %v8014 = vpop.f32.mrf.mxu0
        %8015 = vmatprep.mubr.bf16.mxu0 0
        %8016 = vmatmul.mubr.bf16.gmra.mxu0 %v7534
        %v8017 = vpop.f32.mrf.mxu0
        %v8018 = vadd.f32 0.0, %v8017
        %v8019 = vpop.f32.mrf.mxu0
        %v8020 = vpop.f32.mrf.mxu0
        %v8021 = vadd.f32 0.0, %v8020
        %v8022 = vpop.f32.mrf.mxu0
        %8023 = vdwg.mxu0
        %p8024 = scmp.eq.s32.totalorder %s36, 0
        // Predicated region
        $region37: #{tpu_custom_call.1} parent=35 // pred_check
          %p8025 = pneg %p8024
        $region38: #{tpu_custom_call.1} parent=35 // pred_check_branch
          %8027 = sbr.rel (%p8025) target = $region40
        $region39: #{tpu_custom_call.1} parent=35 // pred_region
          %vm8028 = vcmask 261120
          %8029 = vst.msk [vmem:[%s315] sm:$0xff] %vm8028, %v7634
          %8030 = vst.msk [vmem:[%s315 + $0x8] sm:$0xff] %vm8028, %v7637
          %8031 = vst.msk [vmem:[%s315 + $0x10] sm:$0xff] %vm8028, %v7642
          %8032 = vst.msk [vmem:[%s315 + $0x18] sm:$0xff] %vm8028, %v7645
          %8033 = vst.msk [vmem:[%s315 + $0x20] sm:$0xff] %vm8028, %v7650
          %8034 = vst.msk [vmem:[%s315 + $0x28] sm:$0xff] %vm8028, %v7653
          %8035 = vst.msk [vmem:[%s315 + $0x30] sm:$0xff] %vm8028, %v7658
          %8036 = vst.msk [vmem:[%s315 + $0x38] sm:$0xff] %vm8028, %v7661
          %8037 = vst.msk [vmem:[%s315 + $0x40] sm:$0xff] %vm8028, %v7666
          %8038 = vst.msk [vmem:[%s315 + $0x48] sm:$0xff] %vm8028, %v7669
          %8039 = vst.msk [vmem:[%s315 + $0x50] sm:$0xff] %vm8028, %v7674
          %8040 = vst.msk [vmem:[%s315 + $0x58] sm:$0xff] %vm8028, %v7677
          %8041 = vst.msk [vmem:[%s315 + $0x60] sm:$0xff] %vm8028, %v7682
          %8042 = vst.msk [vmem:[%s315 + $0x68] sm:$0xff] %vm8028, %v7685
          %8043 = vst.msk [vmem:[%s315 + $0x70] sm:$0xff] %vm8028, %v7690
          %8044 = vst.msk [vmem:[%s315 + $0x78] sm:$0xff] %vm8028, %v7693
          %8045 = vst.msk [vmem:[%s315 + $0x80] sm:$0xff] %vm8028, %v7698
          %8046 = vst.msk [vmem:[%s315 + $0x88] sm:$0xff] %vm8028, %v7701
          %8047 = vst.msk [vmem:[%s315 + $0x90] sm:$0xff] %vm8028, %v7706
          %8048 = vst.msk [vmem:[%s315 + $0x98] sm:$0xff] %vm8028, %v7709
          %8049 = vst.msk [vmem:[%s315 + $0xa0] sm:$0xff] %vm8028, %v7714
          %8050 = vst.msk [vmem:[%s315 + $0xa8] sm:$0xff] %vm8028, %v7717
          %8051 = vst.msk [vmem:[%s315 + $0xb0] sm:$0xff] %vm8028, %v7722
          %8052 = vst.msk [vmem:[%s315 + $0xb8] sm:$0xff] %vm8028, %v7725
          %8053 = vst.msk [vmem:[%s315 + $0xc0] sm:$0xff] %vm8028, %v7730
          %8054 = vst.msk [vmem:[%s315 + $0xc8] sm:$0xff] %vm8028, %v7733
          %8055 = vst.msk [vmem:[%s315 + $0xd0] sm:$0xff] %vm8028, %v7738
          %8056 = vst.msk [vmem:[%s315 + $0xd8] sm:$0xff] %vm8028, %v7741
          %8057 = vst.msk [vmem:[%s315 + $0xe0] sm:$0xff] %vm8028, %v7746
          %8058 = vst.msk [vmem:[%s315 + $0xe8] sm:$0xff] %vm8028, %v7749
          %8059 = vst.msk [vmem:[%s315 + $0xf0] sm:$0xff] %vm8028, %v7754
          %8060 = vst.msk [vmem:[%s315 + $0xf8] sm:$0xff] %vm8028, %v7757
          %8061 = vst.msk [vmem:[%s315 + $0x100] sm:$0xff] %vm8028, %v7762
          %8062 = vst.msk [vmem:[%s315 + $0x108] sm:$0xff] %vm8028, %v7765
          %8063 = vst.msk [vmem:[%s315 + $0x110] sm:$0xff] %vm8028, %v7770
          %8064 = vst.msk [vmem:[%s315 + $0x118] sm:$0xff] %vm8028, %v7773
          %8065 = vst.msk [vmem:[%s315 + $0x120] sm:$0xff] %vm8028, %v7778
          %8066 = vst.msk [vmem:[%s315 + $0x128] sm:$0xff] %vm8028, %v7781
          %8067 = vst.msk [vmem:[%s315 + $0x130] sm:$0xff] %vm8028, %v7786
          %8068 = vst.msk [vmem:[%s315 + $0x138] sm:$0xff] %vm8028, %v7789
          %8069 = vst.msk [vmem:[%s315 + $0x140] sm:$0xff] %vm8028, %v7794
          %8070 = vst.msk [vmem:[%s315 + $0x148] sm:$0xff] %vm8028, %v7797
          %8071 = vst.msk [vmem:[%s315 + $0x150] sm:$0xff] %vm8028, %v7802
          %8072 = vst.msk [vmem:[%s315 + $0x158] sm:$0xff] %vm8028, %v7805
          %8073 = vst.msk [vmem:[%s315 + $0x160] sm:$0xff] %vm8028, %v7810
          %8074 = vst.msk [vmem:[%s315 + $0x168] sm:$0xff] %vm8028, %v7813
          %8075 = vst.msk [vmem:[%s315 + $0x170] sm:$0xff] %vm8028, %v7818
          %8076 = vst.msk [vmem:[%s315 + $0x178] sm:$0xff] %vm8028, %v7821
          %8077 = vst.msk [vmem:[%s315 + $0x180] sm:$0xff] %vm8028, %v7826
          %8078 = vst.msk [vmem:[%s315 + $0x188] sm:$0xff] %vm8028, %v7829
          %8079 = vst.msk [vmem:[%s315 + $0x190] sm:$0xff] %vm8028, %v7834
          %8080 = vst.msk [vmem:[%s315 + $0x198] sm:$0xff] %vm8028, %v7837
          %8081 = vst.msk [vmem:[%s315 + $0x1a0] sm:$0xff] %vm8028, %v7842
          %8082 = vst.msk [vmem:[%s315 + $0x1a8] sm:$0xff] %vm8028, %v7845
          %8083 = vst.msk [vmem:[%s315 + $0x1b0] sm:$0xff] %vm8028, %v7850
          %8084 = vst.msk [vmem:[%s315 + $0x1b8] sm:$0xff] %vm8028, %v7853
          %8085 = vst.msk [vmem:[%s315 + $0x1c0] sm:$0xff] %vm8028, %v7858
          %8086 = vst.msk [vmem:[%s315 + $0x1c8] sm:$0xff] %vm8028, %v7861
          %8087 = vst.msk [vmem:[%s315 + $0x1d0] sm:$0xff] %vm8028, %v7866
          %8088 = vst.msk [vmem:[%s315 + $0x1d8] sm:$0xff] %vm8028, %v7869
          %8089 = vst.msk [vmem:[%s315 + $0x1e0] sm:$0xff] %vm8028, %v7874
          %8090 = vst.msk [vmem:[%s315 + $0x1e8] sm:$0xff] %vm8028, %v7877
          %8091 = vst.msk [vmem:[%s315 + $0x1f0] sm:$0xff] %vm8028, %v7882
          %8092 = vst.msk [vmem:[%s315 + $0x1f8] sm:$0xff] %vm8028, %v7885
          %8093 = vst.msk [vmem:[%s315 + $0x200] sm:$0xff] %vm8028, %v7890
          %8094 = vst.msk [vmem:[%s315 + $0x208] sm:$0xff] %vm8028, %v7893
          %8095 = vst.msk [vmem:[%s315 + $0x210] sm:$0xff] %vm8028, %v7898
          %8096 = vst.msk [vmem:[%s315 + $0x218] sm:$0xff] %vm8028, %v7901
          %8097 = vst.msk [vmem:[%s315 + $0x220] sm:$0xff] %vm8028, %v7906
          %8098 = vst.msk [vmem:[%s315 + $0x228] sm:$0xff] %vm8028, %v7909
          %8099 = vst.msk [vmem:[%s315 + $0x230] sm:$0xff] %vm8028, %v7914
          %8100 = vst.msk [vmem:[%s315 + $0x238] sm:$0xff] %vm8028, %v7917
          %8101 = vst.msk [vmem:[%s315 + $0x240] sm:$0xff] %vm8028, %v7922
          %8102 = vst.msk [vmem:[%s315 + $0x248] sm:$0xff] %vm8028, %v7925
          %8103 = vst.msk [vmem:[%s315 + $0x250] sm:$0xff] %vm8028, %v7930
          %8104 = vst.msk [vmem:[%s315 + $0x258] sm:$0xff] %vm8028, %v7933
          %8105 = vst.msk [vmem:[%s315 + $0x260] sm:$0xff] %vm8028, %v7938
          %8106 = vst.msk [vmem:[%s315 + $0x268] sm:$0xff] %vm8028, %v7941
          %8107 = vst.msk [vmem:[%s315 + $0x270] sm:$0xff] %vm8028, %v7946
          %8108 = vst.msk [vmem:[%s315 + $0x278] sm:$0xff] %vm8028, %v7949
          %8109 = vst.msk [vmem:[%s315 + $0x280] sm:$0xff] %vm8028, %v7954
          %8110 = vst.msk [vmem:[%s315 + $0x288] sm:$0xff] %vm8028, %v7957
          %8111 = vst.msk [vmem:[%s315 + $0x290] sm:$0xff] %vm8028, %v7962
          %8112 = vst.msk [vmem:[%s315 + $0x298] sm:$0xff] %vm8028, %v7965
          %8113 = vst.msk [vmem:[%s315 + $0x2a0] sm:$0xff] %vm8028, %v7970
          %8114 = vst.msk [vmem:[%s315 + $0x2a8] sm:$0xff] %vm8028, %v7973
          %8115 = vst.msk [vmem:[%s315 + $0x2b0] sm:$0xff] %vm8028, %v7978
          %8116 = vst.msk [vmem:[%s315 + $0x2b8] sm:$0xff] %vm8028, %v7981
          %8117 = vst.msk [vmem:[%s315 + $0x2c0] sm:$0xff] %vm8028, %v7986
          %8118 = vst.msk [vmem:[%s315 + $0x2c8] sm:$0xff] %vm8028, %v7989
          %8119 = vst.msk [vmem:[%s315 + $0x2d0] sm:$0xff] %vm8028, %v7994
          %8120 = vst.msk [vmem:[%s315 + $0x2d8] sm:$0xff] %vm8028, %v7997
          %8121 = vst.msk [vmem:[%s315 + $0x2e0] sm:$0xff] %vm8028, %v8002
          %8122 = vst.msk [vmem:[%s315 + $0x2e8] sm:$0xff] %vm8028, %v8005
          %8123 = vst.msk [vmem:[%s315 + $0x2f0] sm:$0xff] %vm8028, %v8010
          %8124 = vst.msk [vmem:[%s315 + $0x2f8] sm:$0xff] %vm8028, %v8013
          %8125 = vst.msk [vmem:[%s315 + $0x300] sm:$0xff] %vm8028, %v8018
          %8126 = vst.msk [vmem:[%s315 + $0x308] sm:$0xff] %vm8028, %v8021
        $region40: #{tpu_custom_call.1} parent=35 // pred_fallthru
          _
        %p8127 = scmp.ne.s32.totalorder %s36, 0
        // Predicated region
        $region41: #{tpu_custom_call.1} parent=35 // pred_check
          %p8128 = pneg %p8127
        $region42: #{tpu_custom_call.1} parent=35 // pred_check_branch
          %8130 = sbr.rel (%p8128) target = $region44
        $region43: #{tpu_custom_call.1} parent=35 // pred_region
          %v8131 = vld [vmem:[%s315] sm:$0xff]
          %v8132 = vld [vmem:[%s315 + $0x8] sm:$0xff]
          %v8133 = vld [vmem:[%s315 + $0x10] sm:$0xff]
          %v8134 = vld [vmem:[%s315 + $0x18] sm:$0xff]
          %v8135 = vld [vmem:[%s315 + $0x20] sm:$0xff]
          %v8136 = vld [vmem:[%s315 + $0x28] sm:$0xff]
          %v8137 = vld [vmem:[%s315 + $0x30] sm:$0xff]
          %v8138 = vld [vmem:[%s315 + $0x38] sm:$0xff]
          %v8139 = vld [vmem:[%s315 + $0x40] sm:$0xff]
          %v8140 = vld [vmem:[%s315 + $0x48] sm:$0xff]
          %v8141 = vld [vmem:[%s315 + $0x50] sm:$0xff]
          %v8142 = vld [vmem:[%s315 + $0x58] sm:$0xff]
          %v8143 = vld [vmem:[%s315 + $0x60] sm:$0xff]
          %v8144 = vld [vmem:[%s315 + $0x68] sm:$0xff]
          %v8145 = vld [vmem:[%s315 + $0x70] sm:$0xff]
          %v8146 = vld [vmem:[%s315 + $0x78] sm:$0xff]
          %v8147 = vld [vmem:[%s315 + $0x80] sm:$0xff]
          %v8148 = vld [vmem:[%s315 + $0x88] sm:$0xff]
          %v8149 = vld [vmem:[%s315 + $0x90] sm:$0xff]
          %v8150 = vld [vmem:[%s315 + $0x98] sm:$0xff]
          %v8151 = vld [vmem:[%s315 + $0xa0] sm:$0xff]
          %v8152 = vld [vmem:[%s315 + $0xa8] sm:$0xff]
          %v8153 = vld [vmem:[%s315 + $0xb0] sm:$0xff]
          %v8154 = vld [vmem:[%s315 + $0xb8] sm:$0xff]
          %v8155 = vld [vmem:[%s315 + $0xc0] sm:$0xff]
          %v8156 = vld [vmem:[%s315 + $0xc8] sm:$0xff]
          %v8157 = vld [vmem:[%s315 + $0xd0] sm:$0xff]
          %v8158 = vld [vmem:[%s315 + $0xd8] sm:$0xff]
          %v8159 = vld [vmem:[%s315 + $0xe0] sm:$0xff]
          %v8160 = vld [vmem:[%s315 + $0xe8] sm:$0xff]
          %v8161 = vld [vmem:[%s315 + $0xf0] sm:$0xff]
          %v8162 = vld [vmem:[%s315 + $0xf8] sm:$0xff]
          %v8163 = vld [vmem:[%s315 + $0x100] sm:$0xff]
          %v8164 = vld [vmem:[%s315 + $0x108] sm:$0xff]
          %v8165 = vld [vmem:[%s315 + $0x110] sm:$0xff]
          %v8166 = vld [vmem:[%s315 + $0x118] sm:$0xff]
          %v8167 = vld [vmem:[%s315 + $0x120] sm:$0xff]
          %v8168 = vld [vmem:[%s315 + $0x128] sm:$0xff]
          %v8169 = vld [vmem:[%s315 + $0x130] sm:$0xff]
          %v8170 = vld [vmem:[%s315 + $0x138] sm:$0xff]
          %v8171 = vld [vmem:[%s315 + $0x140] sm:$0xff]
          %v8172 = vld [vmem:[%s315 + $0x148] sm:$0xff]
          %v8173 = vld [vmem:[%s315 + $0x150] sm:$0xff]
          %v8174 = vld [vmem:[%s315 + $0x158] sm:$0xff]
          %v8175 = vld [vmem:[%s315 + $0x160] sm:$0xff]
          %v8176 = vld [vmem:[%s315 + $0x168] sm:$0xff]
          %v8177 = vld [vmem:[%s315 + $0x170] sm:$0xff]
          %v8178 = vld [vmem:[%s315 + $0x178] sm:$0xff]
          %v8179 = vld [vmem:[%s315 + $0x180] sm:$0xff]
          %v8180 = vld [vmem:[%s315 + $0x188] sm:$0xff]
          %v8181 = vld [vmem:[%s315 + $0x190] sm:$0xff]
          %v8182 = vld [vmem:[%s315 + $0x198] sm:$0xff]
          %v8183 = vld [vmem:[%s315 + $0x1a0] sm:$0xff]
          %v8184 = vld [vmem:[%s315 + $0x1a8] sm:$0xff]
          %v8185 = vld [vmem:[%s315 + $0x1b0] sm:$0xff]
          %v8186 = vld [vmem:[%s315 + $0x1b8] sm:$0xff]
          %v8187 = vld [vmem:[%s315 + $0x1c0] sm:$0xff]
          %v8188 = vld [vmem:[%s315 + $0x1c8] sm:$0xff]
          %v8189 = vld [vmem:[%s315 + $0x1d0] sm:$0xff]
          %v8190 = vld [vmem:[%s315 + $0x1d8] sm:$0xff]
          %v8191 = vld [vmem:[%s315 + $0x1e0] sm:$0xff]
          %v8192 = vld [vmem:[%s315 + $0x1e8] sm:$0xff]
          %v8193 = vld [vmem:[%s315 + $0x1f0] sm:$0xff]
          %v8194 = vld [vmem:[%s315 + $0x1f8] sm:$0xff]
          %v8195 = vld [vmem:[%s315 + $0x200] sm:$0xff]
          %v8196 = vld [vmem:[%s315 + $0x208] sm:$0xff]
          %v8197 = vld [vmem:[%s315 + $0x210] sm:$0xff]
          %v8198 = vld [vmem:[%s315 + $0x218] sm:$0xff]
          %v8199 = vld [vmem:[%s315 + $0x220] sm:$0xff]
          %v8200 = vld [vmem:[%s315 + $0x228] sm:$0xff]
          %v8201 = vld [vmem:[%s315 + $0x230] sm:$0xff]
          %v8202 = vld [vmem:[%s315 + $0x238] sm:$0xff]
          %v8203 = vld [vmem:[%s315 + $0x240] sm:$0xff]
          %v8204 = vld [vmem:[%s315 + $0x248] sm:$0xff]
          %v8205 = vld [vmem:[%s315 + $0x250] sm:$0xff]
          %v8206 = vld [vmem:[%s315 + $0x258] sm:$0xff]
          %v8207 = vld [vmem:[%s315 + $0x260] sm:$0xff]
          %v8208 = vld [vmem:[%s315 + $0x268] sm:$0xff]
          %v8209 = vld [vmem:[%s315 + $0x270] sm:$0xff]
          %v8210 = vld [vmem:[%s315 + $0x278] sm:$0xff]
          %v8211 = vld [vmem:[%s315 + $0x280] sm:$0xff]
          %v8212 = vld [vmem:[%s315 + $0x288] sm:$0xff]
          %v8213 = vld [vmem:[%s315 + $0x290] sm:$0xff]
          %v8214 = vld [vmem:[%s315 + $0x298] sm:$0xff]
          %v8215 = vld [vmem:[%s315 + $0x2a0] sm:$0xff]
          %v8216 = vld [vmem:[%s315 + $0x2a8] sm:$0xff]
          %v8217 = vld [vmem:[%s315 + $0x2b0] sm:$0xff]
          %v8218 = vld [vmem:[%s315 + $0x2b8] sm:$0xff]
          %v8219 = vld [vmem:[%s315 + $0x2c0] sm:$0xff]
          %v8220 = vld [vmem:[%s315 + $0x2c8] sm:$0xff]
          %v8221 = vld [vmem:[%s315 + $0x2d0] sm:$0xff]
          %v8222 = vld [vmem:[%s315 + $0x2d8] sm:$0xff]
          %v8223 = vld [vmem:[%s315 + $0x2e0] sm:$0xff]
          %v8224 = vld [vmem:[%s315 + $0x2e8] sm:$0xff]
          %v8225 = vld [vmem:[%s315 + $0x2f0] sm:$0xff]
          %v8226 = vld [vmem:[%s315 + $0x2f8] sm:$0xff]
          %v8227 = vld [vmem:[%s315 + $0x300] sm:$0xff]
          %v8228 = vld [vmem:[%s315 + $0x308] sm:$0xff]
          %v8229 = vadd.f32 %v8131, %v7634
          %v8230 = vadd.f32 %v8132, %v7637
          %v8231 = vadd.f32 %v8133, %v7642
          %v8232 = vadd.f32 %v8134, %v7645
          %v8233 = vadd.f32 %v8135, %v7650
          %v8234 = vadd.f32 %v8136, %v7653
          %v8235 = vadd.f32 %v8137, %v7658
          %v8236 = vadd.f32 %v8138, %v7661
          %v8237 = vadd.f32 %v8139, %v7666
          %v8238 = vadd.f32 %v8140, %v7669
          %v8239 = vadd.f32 %v8141, %v7674
          %v8240 = vadd.f32 %v8142, %v7677
          %v8241 = vadd.f32 %v8143, %v7682
          %v8242 = vadd.f32 %v8144, %v7685
          %v8243 = vadd.f32 %v8145, %v7690
          %v8244 = vadd.f32 %v8146, %v7693
          %v8245 = vadd.f32 %v8147, %v7698
          %v8246 = vadd.f32 %v8148, %v7701
          %v8247 = vadd.f32 %v8149, %v7706
          %v8248 = vadd.f32 %v8150, %v7709
          %v8249 = vadd.f32 %v8151, %v7714
          %v8250 = vadd.f32 %v8152, %v7717
          %v8251 = vadd.f32 %v8153, %v7722
          %v8252 = vadd.f32 %v8154, %v7725
          %v8253 = vadd.f32 %v8155, %v7730
          %v8254 = vadd.f32 %v8156, %v7733
          %v8255 = vadd.f32 %v8157, %v7738
          %v8256 = vadd.f32 %v8158, %v7741
          %v8257 = vadd.f32 %v8159, %v7746
          %v8258 = vadd.f32 %v8160, %v7749
          %v8259 = vadd.f32 %v8161, %v7754
          %v8260 = vadd.f32 %v8162, %v7757
          %v8261 = vadd.f32 %v8163, %v7762
          %v8262 = vadd.f32 %v8164, %v7765
          %v8263 = vadd.f32 %v8165, %v7770
          %v8264 = vadd.f32 %v8166, %v7773
          %v8265 = vadd.f32 %v8167, %v7778
          %v8266 = vadd.f32 %v8168, %v7781
          %v8267 = vadd.f32 %v8169, %v7786
          %v8268 = vadd.f32 %v8170, %v7789
          %v8269 = vadd.f32 %v8171, %v7794
          %v8270 = vadd.f32 %v8172, %v7797
          %v8271 = vadd.f32 %v8173, %v7802
          %v8272 = vadd.f32 %v8174, %v7805
          %v8273 = vadd.f32 %v8175, %v7810
          %v8274 = vadd.f32 %v8176, %v7813
          %v8275 = vadd.f32 %v8177, %v7818
          %v8276 = vadd.f32 %v8178, %v7821
          %v8277 = vadd.f32 %v8179, %v7826
          %v8278 = vadd.f32 %v8180, %v7829
          %v8279 = vadd.f32 %v8181, %v7834
          %v8280 = vadd.f32 %v8182, %v7837
          %v8281 = vadd.f32 %v8183, %v7842
          %v8282 = vadd.f32 %v8184, %v7845
          %v8283 = vadd.f32 %v8185, %v7850
          %v8284 = vadd.f32 %v8186, %v7853
          %v8285 = vadd.f32 %v8187, %v7858
          %v8286 = vadd.f32 %v8188, %v7861
          %v8287 = vadd.f32 %v8189, %v7866
          %v8288 = vadd.f32 %v8190, %v7869
          %v8289 = vadd.f32 %v8191, %v7874
          %v8290 = vadd.f32 %v8192, %v7877
          %v8291 = vadd.f32 %v8193, %v7882
          %v8292 = vadd.f32 %v8194, %v7885
          %v8293 = vadd.f32 %v8195, %v7890
          %v8294 = vadd.f32 %v8196, %v7893
          %v8295 = vadd.f32 %v8197, %v7898
          %v8296 = vadd.f32 %v8198, %v7901
          %v8297 = vadd.f32 %v8199, %v7906
          %v8298 = vadd.f32 %v8200, %v7909
          %v8299 = vadd.f32 %v8201, %v7914
          %v8300 = vadd.f32 %v8202, %v7917
          %v8301 = vadd.f32 %v8203, %v7922
          %v8302 = vadd.f32 %v8204, %v7925
          %v8303 = vadd.f32 %v8205, %v7930
          %v8304 = vadd.f32 %v8206, %v7933
          %v8305 = vadd.f32 %v8207, %v7938
          %v8306 = vadd.f32 %v8208, %v7941
          %v8307 = vadd.f32 %v8209, %v7946
          %v8308 = vadd.f32 %v8210, %v7949
          %v8309 = vadd.f32 %v8211, %v7954
          %v8310 = vadd.f32 %v8212, %v7957
          %v8311 = vadd.f32 %v8213, %v7962
          %v8312 = vadd.f32 %v8214, %v7965
          %v8313 = vadd.f32 %v8215, %v7970
          %v8314 = vadd.f32 %v8216, %v7973
          %v8315 = vadd.f32 %v8217, %v7978
          %v8316 = vadd.f32 %v8218, %v7981
          %v8317 = vadd.f32 %v8219, %v7986
          %v8318 = vadd.f32 %v8220, %v7989
          %v8319 = vadd.f32 %v8221, %v7994
          %v8320 = vadd.f32 %v8222, %v7997
          %v8321 = vadd.f32 %v8223, %v8002
          %v8322 = vadd.f32 %v8224, %v8005
          %v8323 = vadd.f32 %v8225, %v8010
          %v8324 = vadd.f32 %v8226, %v8013
          %v8325 = vadd.f32 %v8227, %v8018
          %v8326 = vadd.f32 %v8228, %v8021
          %vm8327 = vcmask 261120
          %8328 = vst.msk [vmem:[%s315] sm:$0xff] %vm8327, %v8229
          %8329 = vst.msk [vmem:[%s315 + $0x8] sm:$0xff] %vm8327, %v8230
          %8330 = vst.msk [vmem:[%s315 + $0x10] sm:$0xff] %vm8327, %v8231
          %8331 = vst.msk [vmem:[%s315 + $0x18] sm:$0xff] %vm8327, %v8232
          %8332 = vst.msk [vmem:[%s315 + $0x20] sm:$0xff] %vm8327, %v8233
          %8333 = vst.msk [vmem:[%s315 + $0x28] sm:$0xff] %vm8327, %v8234
          %8334 = vst.msk [vmem:[%s315 + $0x30] sm:$0xff] %vm8327, %v8235
          %8335 = vst.msk [vmem:[%s315 + $0x38] sm:$0xff] %vm8327, %v8236
          %8336 = vst.msk [vmem:[%s315 + $0x40] sm:$0xff] %vm8327, %v8237
          %8337 = vst.msk [vmem:[%s315 + $0x48] sm:$0xff] %vm8327, %v8238
          %8338 = vst.msk [vmem:[%s315 + $0x50] sm:$0xff] %vm8327, %v8239
          %8339 = vst.msk [vmem:[%s315 + $0x58] sm:$0xff] %vm8327, %v8240
          %8340 = vst.msk [vmem:[%s315 + $0x60] sm:$0xff] %vm8327, %v8241
          %8341 = vst.msk [vmem:[%s315 + $0x68] sm:$0xff] %vm8327, %v8242
          %8342 = vst.msk [vmem:[%s315 + $0x70] sm:$0xff] %vm8327, %v8243
          %8343 = vst.msk [vmem:[%s315 + $0x78] sm:$0xff] %vm8327, %v8244
          %8344 = vst.msk [vmem:[%s315 + $0x80] sm:$0xff] %vm8327, %v8245
          %8345 = vst.msk [vmem:[%s315 + $0x88] sm:$0xff] %vm8327, %v8246
          %8346 = vst.msk [vmem:[%s315 + $0x90] sm:$0xff] %vm8327, %v8247
          %8347 = vst.msk [vmem:[%s315 + $0x98] sm:$0xff] %vm8327, %v8248
          %8348 = vst.msk [vmem:[%s315 + $0xa0] sm:$0xff] %vm8327, %v8249
          %8349 = vst.msk [vmem:[%s315 + $0xa8] sm:$0xff] %vm8327, %v8250
          %8350 = vst.msk [vmem:[%s315 + $0xb0] sm:$0xff] %vm8327, %v8251
          %8351 = vst.msk [vmem:[%s315 + $0xb8] sm:$0xff] %vm8327, %v8252
          %8352 = vst.msk [vmem:[%s315 + $0xc0] sm:$0xff] %vm8327, %v8253
          %8353 = vst.msk [vmem:[%s315 + $0xc8] sm:$0xff] %vm8327, %v8254
          %8354 = vst.msk [vmem:[%s315 + $0xd0] sm:$0xff] %vm8327, %v8255
          %8355 = vst.msk [vmem:[%s315 + $0xd8] sm:$0xff] %vm8327, %v8256
          %8356 = vst.msk [vmem:[%s315 + $0xe0] sm:$0xff] %vm8327, %v8257
          %8357 = vst.msk [vmem:[%s315 + $0xe8] sm:$0xff] %vm8327, %v8258
          %8358 = vst.msk [vmem:[%s315 + $0xf0] sm:$0xff] %vm8327, %v8259
          %8359 = vst.msk [vmem:[%s315 + $0xf8] sm:$0xff] %vm8327, %v8260
          %8360 = vst.msk [vmem:[%s315 + $0x100] sm:$0xff] %vm8327, %v8261
          %8361 = vst.msk [vmem:[%s315 + $0x108] sm:$0xff] %vm8327, %v8262
          %8362 = vst.msk [vmem:[%s315 + $0x110] sm:$0xff] %vm8327, %v8263
          %8363 = vst.msk [vmem:[%s315 + $0x118] sm:$0xff] %vm8327, %v8264
          %8364 = vst.msk [vmem:[%s315 + $0x120] sm:$0xff] %vm8327, %v8265
          %8365 = vst.msk [vmem:[%s315 + $0x128] sm:$0xff] %vm8327, %v8266
          %8366 = vst.msk [vmem:[%s315 + $0x130] sm:$0xff] %vm8327, %v8267
          %8367 = vst.msk [vmem:[%s315 + $0x138] sm:$0xff] %vm8327, %v8268
          %8368 = vst.msk [vmem:[%s315 + $0x140] sm:$0xff] %vm8327, %v8269
          %8369 = vst.msk [vmem:[%s315 + $0x148] sm:$0xff] %vm8327, %v8270
          %8370 = vst.msk [vmem:[%s315 + $0x150] sm:$0xff] %vm8327, %v8271
          %8371 = vst.msk [vmem:[%s315 + $0x158] sm:$0xff] %vm8327, %v8272
          %8372 = vst.msk [vmem:[%s315 + $0x160] sm:$0xff] %vm8327, %v8273
          %8373 = vst.msk [vmem:[%s315 + $0x168] sm:$0xff] %vm8327, %v8274
          %8374 = vst.msk [vmem:[%s315 + $0x170] sm:$0xff] %vm8327, %v8275
          %8375 = vst.msk [vmem:[%s315 + $0x178] sm:$0xff] %vm8327, %v8276
          %8376 = vst.msk [vmem:[%s315 + $0x180] sm:$0xff] %vm8327, %v8277
          %8377 = vst.msk [vmem:[%s315 + $0x188] sm:$0xff] %vm8327, %v8278
          %8378 = vst.msk [vmem:[%s315 + $0x190] sm:$0xff] %vm8327, %v8279
          %8379 = vst.msk [vmem:[%s315 + $0x198] sm:$0xff] %vm8327, %v8280
          %8380 = vst.msk [vmem:[%s315 + $0x1a0] sm:$0xff] %vm8327, %v8281
          %8381 = vst.msk [vmem:[%s315 + $0x1a8] sm:$0xff] %vm8327, %v8282
          %8382 = vst.msk [vmem:[%s315 + $0x1b0] sm:$0xff] %vm8327, %v8283
          %8383 = vst.msk [vmem:[%s315 + $0x1b8] sm:$0xff] %vm8327, %v8284
          %8384 = vst.msk [vmem:[%s315 + $0x1c0] sm:$0xff] %vm8327, %v8285
          %8385 = vst.msk [vmem:[%s315 + $0x1c8] sm:$0xff] %vm8327, %v8286
          %8386 = vst.msk [vmem:[%s315 + $0x1d0] sm:$0xff] %vm8327, %v8287
          %8387 = vst.msk [vmem:[%s315 + $0x1d8] sm:$0xff] %vm8327, %v8288
          %8388 = vst.msk [vmem:[%s315 + $0x1e0] sm:$0xff] %vm8327, %v8289
          %8389 = vst.msk [vmem:[%s315 + $0x1e8] sm:$0xff] %vm8327, %v8290
          %8390 = vst.msk [vmem:[%s315 + $0x1f0] sm:$0xff] %vm8327, %v8291
          %8391 = vst.msk [vmem:[%s315 + $0x1f8] sm:$0xff] %vm8327, %v8292
          %8392 = vst.msk [vmem:[%s315 + $0x200] sm:$0xff] %vm8327, %v8293
          %8393 = vst.msk [vmem:[%s315 + $0x208] sm:$0xff] %vm8327, %v8294
          %8394 = vst.msk [vmem:[%s315 + $0x210] sm:$0xff] %vm8327, %v8295
          %8395 = vst.msk [vmem:[%s315 + $0x218] sm:$0xff] %vm8327, %v8296
          %8396 = vst.msk [vmem:[%s315 + $0x220] sm:$0xff] %vm8327, %v8297
          %8397 = vst.msk [vmem:[%s315 + $0x228] sm:$0xff] %vm8327, %v8298
          %8398 = vst.msk [vmem:[%s315 + $0x230] sm:$0xff] %vm8327, %v8299
          %8399 = vst.msk [vmem:[%s315 + $0x238] sm:$0xff] %vm8327, %v8300
          %8400 = vst.msk [vmem:[%s315 + $0x240] sm:$0xff] %vm8327, %v8301
          %8401 = vst.msk [vmem:[%s315 + $0x248] sm:$0xff] %vm8327, %v8302
          %8402 = vst.msk [vmem:[%s315 + $0x250] sm:$0xff] %vm8327, %v8303
          %8403 = vst.msk [vmem:[%s315 + $0x258] sm:$0xff] %vm8327, %v8304
          %8404 = vst.msk [vmem:[%s315 + $0x260] sm:$0xff] %vm8327, %v8305
          %8405 = vst.msk [vmem:[%s315 + $0x268] sm:$0xff] %vm8327, %v8306
          %8406 = vst.msk [vmem:[%s315 + $0x270] sm:$0xff] %vm8327, %v8307
          %8407 = vst.msk [vmem:[%s315 + $0x278] sm:$0xff] %vm8327, %v8308
          %8408 = vst.msk [vmem:[%s315 + $0x280] sm:$0xff] %vm8327, %v8309
          %8409 = vst.msk [vmem:[%s315 + $0x288] sm:$0xff] %vm8327, %v8310
          %8410 = vst.msk [vmem:[%s315 + $0x290] sm:$0xff] %vm8327, %v8311
          %8411 = vst.msk [vmem:[%s315 + $0x298] sm:$0xff] %vm8327, %v8312
          %8412 = vst.msk [vmem:[%s315 + $0x2a0] sm:$0xff] %vm8327, %v8313
          %8413 = vst.msk [vmem:[%s315 + $0x2a8] sm:$0xff] %vm8327, %v8314
          %8414 = vst.msk [vmem:[%s315 + $0x2b0] sm:$0xff] %vm8327, %v8315
          %8415 = vst.msk [vmem:[%s315 + $0x2b8] sm:$0xff] %vm8327, %v8316
          %8416 = vst.msk [vmem:[%s315 + $0x2c0] sm:$0xff] %vm8327, %v8317
          %8417 = vst.msk [vmem:[%s315 + $0x2c8] sm:$0xff] %vm8327, %v8318
          %8418 = vst.msk [vmem:[%s315 + $0x2d0] sm:$0xff] %vm8327, %v8319
          %8419 = vst.msk [vmem:[%s315 + $0x2d8] sm:$0xff] %vm8327, %v8320
          %8420 = vst.msk [vmem:[%s315 + $0x2e0] sm:$0xff] %vm8327, %v8321
          %8421 = vst.msk [vmem:[%s315 + $0x2e8] sm:$0xff] %vm8327, %v8322
          %8422 = vst.msk [vmem:[%s315 + $0x2f0] sm:$0xff] %vm8327, %v8323
          %8423 = vst.msk [vmem:[%s315 + $0x2f8] sm:$0xff] %vm8327, %v8324
          %8424 = vst.msk [vmem:[%s315 + $0x300] sm:$0xff] %vm8327, %v8325
          %8425 = vst.msk [vmem:[%s315 + $0x308] sm:$0xff] %vm8327, %v8326
        $region44: #{tpu_custom_call.1} parent=35 // pred_fallthru
          _
      $region36: #{tpu_custom_call.1} parent=31 // pred_fallthru
        _
      %p8426 = scmp.lt.s32.totalorder %s35, 1
      %s8427 = scalar_select %p8426, %s35, 1
      %s8428 = smul.addr %s8427, 98
      %s8429 = smul.addr %s8428, 8
      %s8430 = scalar_lea.vmem %s6, %s8429
      // Predicated region
      $region45: #{tpu_custom_call.1} parent=31 // pred_check
        %p8431 = pneg %p159
      $region46: #{tpu_custom_call.1} parent=31 // pred_check_branch
        %8433 = sbr.rel (%p8431) target = $region48
      $region47: #{tpu_custom_call.1} parent=31 // pred_region
        _
      $region48: #{tpu_custom_call.1} parent=31 // pred_fallthru
        _
    $region32: #{tpu_custom_call.1} parent=5 // pred_fallthru
      _
    %p8434 = scmp.le.s32.totalorder 2, %s26
    // Predicated region
    $region49: #{tpu_custom_call.1} parent=5 // pred_check
      %p8435 = pneg %p8434
    $region50: #{tpu_custom_call.1} parent=5 // pred_check_branch
      %8437 = sbr.rel (%p8435) target = $region52
    $region51: #{tpu_custom_call.1} parent=5 // pred_region
      %s8438 = ssub.s32 %s26, 2
      // Predicated region
      $region53: #{tpu_custom_call.1} parent=51 // pred_check
        %p8439 = pneg %p165
      $region54: #{tpu_custom_call.1} parent=51 // pred_check_branch
        %8441 = sbr.rel (%p8439) target = $region56
      $region55: #{tpu_custom_call.1} parent=51 // pred_region
        %p8442 = scmp.lt.s32.totalorder %s37, 1
        %s8443 = scalar_select %p8442, %s37, 1
        %s8444 = smul.addr %s8443, 98
        %s8445 = smul.addr %s8444, 8
        %s8446 = scalar_lea.vmem %s6, %s8445
      $region56: #{tpu_custom_call.1} parent=51 // pred_fallthru
        _
    $region52: #{tpu_custom_call.1} parent=5 // pred_fallthru
      _
  $region6: #{tpu_custom_call.1} parent=0 // loop_footer
    %s30 = sadd.s32 1, %s26
  $region7: #{tpu_custom_call.1} parent=0 // loop_footer_branch
    %25 = sbr.rel target = $region3
  $region8: #{tpu_custom_call.1} parent=0 // loop_exit
    _

</llo_original>
